<compile_context>
chip_gen: v7x
topology: tpu7x:2x2x1
jax: 0.10.0
libtpu: 0.0.40
codegen_flags: <defaults>
</compile_context>

<pallas_src>
import numpy as np
import jax
import jax.numpy as jnp
from jax.experimental import pallas as pl
from jax.experimental.pallas import tpu as pltpu

# ---- constants from the PyTorch module ----
HIDDEN_DIM = 5
OUTPUT_DIM = 1
NUM_QUBITS = 4
INPUT_DIM = 1
VT_DIM = INPUT_DIM + HIDDEN_DIM          # 6
DEPTH = 2
NUM_VQC = 6                              # forget, input, update, output, hidden, y_layer
DIM16 = 2 ** NUM_QUBITS                  # 16
PAD_OUT = VT_DIM                         # pad scaler-out widths (6,6,6,6,5,1) to 6
GATE_ORDER = (0, 1, 3, 2)                # forget, input, output, update (sigmoid gates first)
NG = 4                                   # number of fused LSTM gates


# ---------------- circuit unitary construction (setup glue, plain numpy) ----------------
def _rot_gate(phi, theta, omega):
    rz1 = np.diag([np.exp(-1j * phi / 2), np.exp(1j * phi / 2)])
    ry = np.array([[np.cos(theta / 2), -np.sin(theta / 2)],
                   [np.sin(theta / 2), np.cos(theta / 2)]], dtype=np.complex128)
    rz2 = np.diag([np.exp(-1j * omega / 2), np.exp(1j * omega / 2)])
    return rz2 @ ry @ rz1


def _single_qubit_full(gate, q, n):
    mats = [np.eye(2, dtype=np.complex128)] * n
    mats[q] = gate
    U = mats[0]
    for m in mats[1:]:
        U = np.kron(U, m)
    return U


def _cnot_full(c, t, n):
    dim = 2 ** n
    U = np.zeros((dim, dim), dtype=np.complex128)
    for i in range(dim):
        cb = (i >> (n - 1 - c)) & 1
        j = i ^ ((1 << (n - 1 - t)) if cb else 0)
        U[j, i] = 1.0
    return U


def _build_vqc_unitary(W):
    """W: (DEPTH, NUM_QUBITS, 3) -> 16x16 complex unitary for the post-embedding circuit."""
    n = NUM_QUBITS
    U = np.eye(2 ** n, dtype=np.complex128)
    for d in range(W.shape[0]):
        for q in range(n):
            U = _single_qubit_full(_rot_gate(*W[d, q]), q, n) @ U
        for q in range(n):
            U = _cnot_full(q, (q + 1) % n, n) @ U
    return U


def make_params(seed=0):
    """Original (unfused) parameter set, mirrors the PyTorch module's layers."""
    rng = np.random.default_rng(seed)
    nq = NUM_QUBITS
    lim_in = 1.0 / np.sqrt(VT_DIM)
    win = rng.uniform(-lim_in, lim_in, size=(NUM_VQC, VT_DIM, nq))
    bin_ = rng.uniform(-lim_in, lim_in, size=(NUM_VQC, 1, nq))
    out_dims = [VT_DIM, VT_DIM, VT_DIM, VT_DIM, HIDDEN_DIM, OUTPUT_DIM]
    lim_out = 1.0 / np.sqrt(nq)
    wout = np.zeros((NUM_VQC, nq, PAD_OUT))
    bout = np.zeros((NUM_VQC, 1, PAD_OUT))
    for i, d in enumerate(out_dims):
        wout[i, :, :d] = rng.uniform(-lim_out, lim_out, size=(nq, d))
        bout[i, 0, :d] = rng.uniform(-lim_out, lim_out, size=(d,))
    urT = np.zeros((NUM_VQC, DIM16, DIM16))
    uiT = np.zeros((NUM_VQC, DIM16, DIM16))
    for i in range(NUM_VQC):
        W = rng.uniform(0.0, 2 * np.pi, size=(DEPTH, nq, 3))
        U = _build_vqc_unitary(W)
        urT[i] = U.real.T
        uiT[i] = U.imag.T
    idx = np.arange(DIM16)
    zmat = np.stack([1.0 - 2.0 * ((idx >> (nq - 1 - q)) & 1) for q in range(nq)], axis=1)
    return (win.astype(np.float32), bin_.astype(np.float32), urT.astype(np.float32),
            uiT.astype(np.float32), zmat.astype(np.float32), wout.astype(np.float32),
            bout.astype(np.float32))


def _bit(i, q):
    return (i >> (NUM_QUBITS - 1 - q)) & 1


def build_fused(params):
    """Precompute lane-dense fused/block-diagonal matrices for the kernel (host-side)."""
    win, bin_, urT, uiT, zmat, wout, bout = [np.asarray(p, np.float32) for p in params]
    half_pi = np.float32(np.pi / 2)

    # ---- fused scaler-in for the 4 gates (cos/sin trick: second half is shifted by -pi/2) ----
    winx_cat = np.concatenate([win[g][:INPUT_DIM, :] for g in GATE_ORDER], axis=1)   # (1,16)
    winh_cat = np.concatenate([win[g][INPUT_DIM:, :] for g in GATE_ORDER], axis=1)   # (5,16)
    b_cat = np.concatenate([bin_[g] for g in GATE_ORDER], axis=1)                    # (1,16)
    gzwx = 0.5 * np.concatenate([winx_cat, winx_cat], axis=1)                        # (1,32)
    gzwh = 0.5 * np.concatenate([winh_cat, winh_cat], axis=1)                        # (5,32)
    gzb = np.concatenate([0.5 * b_cat, 0.5 * b_cat - half_pi], axis=1)               # (1,32)

    # ---- selection matrix: cs (B,32) -> per-qubit amplitude factors (B, 4*64) ----
    gsel = np.zeros((2 * NG * NUM_QUBITS, NUM_QUBITS * NG * DIM16), np.float32)      # (32,256)
    for q in range(NUM_QUBITS):
        for g in range(NG):
            for i in range(DIM16):
                row = (16 if _bit(i, q) else 0) + 4 * g + q
                gsel[row, 64 * q + 16 * g + i] = 1.0

    # ---- block-diagonal circuit unitaries [Re | Im] (64,128) and PauliZ proj (128,16) ----
    gu = np.zeros((NG * DIM16, 2 * NG * DIM16), np.float32)
    gz = np.zeros((2 * NG * DIM16, NG * NUM_QUBITS), np.float32)
    for gi, g in enumerate(GATE_ORDER):
        gu[16 * gi:16 * gi + 16, 16 * gi:16 * gi + 16] = urT[g]
        gu[16 * gi:16 * gi + 16, 64 + 16 * gi:64 + 16 * gi + 16] = uiT[g]
        gz[16 * gi:16 * gi + 16, 4 * gi:4 * gi + 4] = zmat
        gz[64 + 16 * gi:64 + 16 * gi + 16, 4 * gi:4 * gi + 4] = zmat

    # ---- block-diagonal scaler-out for the 4 gates (16,24) ----
    gwout = np.zeros((NG * NUM_QUBITS, NG * VT_DIM), np.float32)
    gbout = np.zeros((1, NG * VT_DIM), np.float32)
    for gi, g in enumerate(GATE_ORDER):
        gwout[4 * gi:4 * gi + 4, VT_DIM * gi:VT_DIM * gi + VT_DIM] = wout[g][:, :VT_DIM]
        gbout[0, VT_DIM * gi:VT_DIM * gi + VT_DIM] = bout[g][0, :VT_DIM]

    # ---- single-circuit (hidden / y) fused pieces ----
    def single(idx, out_dim):
        zw = 0.5 * np.concatenate([win[idx], win[idx]], axis=1)                      # (6,8)
        zb = np.concatenate([0.5 * bin_[idx], 0.5 * bin_[idx] - half_pi], axis=1)    # (1,8)
        u = np.concatenate([urT[idx], uiT[idx]], axis=1)                             # (16,32)
        return zw, zb, u, wout[idx][:, :out_dim].copy(), bout[idx][:1, :out_dim].copy()

    hzw, hzb, hu, hwout, hbout = single(4, HIDDEN_DIM)
    yzw, yzb, yu, ywout, ybout = single(5, OUTPUT_DIM)

    hsel = np.zeros((2 * NUM_QUBITS, NUM_QUBITS * DIM16), np.float32)                # (8,64)
    for q in range(NUM_QUBITS):
        for i in range(DIM16):
            hsel[(4 if _bit(i, q) else 0) + q, 16 * q + i] = 1.0
    hz = np.concatenate([zmat, zmat], axis=0)                                        # (32,4)

    arrs = (gzwx, gzwh, gzb, gsel, gu, gz, gwout, gbout,
            hzw, hzb, hsel, hu, hz, hwout, hbout,
            yzw, yzb, yu, ywout, ybout)
    return tuple(jnp.asarray(a, jnp.float32) for a in arrs)


# ---------------- Pallas kernel ----------------
def hybrid_qlstm_kernel(x_ref,
                        gzwx_ref, gzwh_ref, gzb_ref, gsel_ref, gu_ref, gz_ref,
                        gwout_ref, gbout_ref,
                        hzw_ref, hzb_ref, hsel_ref, hu_ref, hz_ref, hwout_ref, hbout_ref,
                        yzw_ref, yzb_ref, yu_ref, ywout_ref, ybout_ref,
                        y_ref):
    f32 = jnp.float32
    T = x_ref.shape[0]
    B = x_ref.shape[1]

    # Load all (tiny) weights once; they stay live across the whole time loop.
    gzwx = gzwx_ref[...]; gzwh = gzwh_ref[...]; gzb = gzb_ref[...]
    gsel = gsel_ref[...]; gu = gu_ref[...]; gz = gz_ref[...]
    gwout = gwout_ref[...]; gbout = gbout_ref[...]
    hzw = hzw_ref[...]; hzb = hzb_ref[...]; hsel = hsel_ref[...]
    hu = hu_ref[...]; hz = hz_ref[...]; hwout = hwout_ref[...]; hbout = hbout_ref[...]

    def expect(cs, sel, u, zproj):
        """cs=[cos|sin] angles -> PauliZ expectation values (all circuits fused/block-diag)."""
        fac = jnp.dot(cs, sel, preferred_element_type=f32)        # per-qubit factors
        s = fac.shape[1] // 2
        p = fac[:, :s] * fac[:, s:]                               # combine qubits {0,2} & {1,3}
        h = s // 2
        state = p[:, :h] * p[:, h:]                               # product state(s)
        psi = jnp.dot(state, u, preferred_element_type=f32)       # [Re | Im] amplitudes
        sq = psi * psi
        return jnp.dot(sq, zproj, preferred_element_type=f32)     # <Z_q> per qubit

    def step(t, carry):
        ct, ht, _ = carry
        x = x_ref[t]                                                            # (B, 1)
        # fused scaler-in for 4 gates; x enters via broadcast-mul (K=1 dot avoided)
        zz = x * gzwx + jnp.dot(ht, gzwh, preferred_element_type=f32) + gzb     # (B, 32)
        ev = expect(jnp.cos(zz), gsel, gu, gz)                                  # (B, 16)
        pre = jnp.dot(ev, gwout, preferred_element_type=f32) + gbout            # (B, 24)
        act = jax.nn.sigmoid(pre)
        ft = act[:, 0:VT_DIM]
        it = act[:, VT_DIM:2 * VT_DIM]
        ot = act[:, 2 * VT_DIM:3 * VT_DIM]
        gt = jnp.tanh(pre[:, 3 * VT_DIM:4 * VT_DIM])
        ct_new = ft * ct + it * gt                                              # (B, 6)
        h_in = ot * jnp.tanh(ct_new)                                            # (B, 6)
        # hidden VQC -> next ht
        zz_h = jnp.dot(h_in, hzw, preferred_element_type=f32) + hzb             # (B, 8)
        ev_h = expect(jnp.cos(zz_h), hsel, hu, hz)                              # (B, 4)
        ht_new = jnp.dot(ev_h, hwout, preferred_element_type=f32) + hbout       # (B, 5)
        return ct_new, ht_new, h_in

    ct0 = jnp.zeros((B, VT_DIM), f32)
    ht0 = jnp.zeros((B, HIDDEN_DIM), f32)
    hin0 = jnp.zeros((B, VT_DIM), f32)
    _, _, h_in = jax.lax.fori_loop(0, T, step, (ct0, ht0, hin0), unroll=min(T, 8))

    # y-layer VQC evaluated exactly once, on the final h_in (PyTorch keeps only y_seq[-1]).
    zz_y = jnp.dot(h_in, yzw_ref[...], preferred_element_type=f32) + yzb_ref[...]
    ev_y = expect(jnp.cos(zz_y), hsel, yu_ref[...], hz)
    y_ref[...] = jnp.dot(ev_y, ywout_ref[...], preferred_element_type=f32) + ybout_ref[...]


def hybrid_qlstm_forward(input_seq, fused):
    B, T, F = input_seq.shape
    assert F == INPUT_DIM and T >= 1
    x_tmaj = jnp.transpose(input_seq, (1, 0, 2)).astype(jnp.float32)   # (T, B, F)

    # Batch-block grid axis ("parallel"): shards batch across TensorCores on v7x.
    if B <= 8:
        bb = B
    else:
        assert B % 8 == 0, "batch > 8 must be a multiple of 8"
        bb = 8
    nb = B // bb

    w_specs = [pl.BlockSpec(w.shape, lambda b: (0, 0)) for w in fused]
    grid_spec = pltpu.PrefetchScalarGridSpec(
        num_scalar_prefetch=0,
        grid=(nb,),
        in_specs=[pl.BlockSpec((T, bb, F), lambda b: (0, b, 0))] + w_specs,
        out_specs=pl.BlockSpec((bb, OUTPUT_DIM), lambda b: (b, 0)),
    )
    return pl.pallas_call(
        hybrid_qlstm_kernel,
        out_shape=jax.ShapeDtypeStruct((B, OUTPUT_DIM), jnp.float32),
        grid_spec=grid_spec,
        compiler_params=pltpu.CompilerParams(dimension_semantics=("parallel",)),
    )(x_tmaj, *fused)


# ---------------- pure numpy reference (original, unfused math) ----------------
def ref_forward(input_seq, params):
    win, bin_, urT, uiT, zmat, wout, bout = [np.asarray(p, np.float32) for p in params]
    x_seq = np.asarray(input_seq, np.float32)
    B, T, _ = x_seq.shape
    ct = np.zeros((B, VT_DIM), np.float32)
    ht = np.zeros((B, HIDDEN_DIM), np.float32)
    idx = np.arange(DIM16)
    sigmoid = lambda v: 1.0 / (1.0 + np.exp(-v))

    def vqc(i, vt):
        z = vt @ win[i] + bin_[i, 0]
        c = np.cos(0.5 * z)
        s = np.sin(0.5 * z)
        state = np.ones((B, DIM16), np.float32)
        for q in range(NUM_QUBITS):
            bit = ((idx >> (NUM_QUBITS - 1 - q)) & 1).astype(np.float32)
            state = state * (c[:, q:q + 1] * (1.0 - bit) + s[:, q:q + 1] * bit)
        pr = state @ urT[i]
        pi = state @ uiT[i]
        ev = (pr * pr + pi * pi) @ zmat
        return ev @ wout[i] + bout[i, 0]

    y = None
    for t in range(T):
        x = x_seq[:, t, :]
        vt = np.concatenate([x, ht], axis=1)
        ft = sigmoid(vqc(0, vt)[:, :VT_DIM])
        it = sigmoid(vqc(1, vt)[:, :VT_DIM])
        gt = np.tanh(vqc(2, vt)[:, :VT_DIM])
        ot = sigmoid(vqc(3, vt)[:, :VT_DIM])
        ct = ft * ct + it * gt
        h_in = ot * np.tanh(ct)
        ht = vqc(4, h_in)[:, :HIDDEN_DIM]
        y = vqc(5, h_in)[:, :OUTPUT_DIM]
    return y


if __name__ == "__main__":
    B, T = 2, 8
    key = jax.random.PRNGKey(0)
    input_seq = jax.random.normal(key, (B, T, INPUT_DIM), dtype=jnp.float32)

    params = make_params(seed=0)
    fused = build_fused(params)

    y = hybrid_qlstm_forward(input_seq, fused)
    y = jax.block_until_ready(y)

    y_ref = ref_forward(np.asarray(input_seq), params)
    assert y.shape == (B, OUTPUT_DIM)
    np.testing.assert_allclose(np.asarray(y), y_ref, rtol=2e-3, atol=2e-4)
    print("KERNEL_OK")
</pallas_src>

<mosaic_0001>
module attributes {stable_mosaic.version = 11 : i64} {
  func.func @hybrid_qlstm_kernel(%arg0: i32, %arg1: memref<8x2x1xf32, #tpu.memory_space<vmem>>, %arg2: memref<1x32xf32, #tpu.memory_space<vmem>>, %arg3: memref<5x32xf32, #tpu.memory_space<vmem>>, %arg4: memref<1x32xf32, #tpu.memory_space<vmem>>, %arg5: memref<32x256xf32, #tpu.memory_space<vmem>>, %arg6: memref<64x128xf32, #tpu.memory_space<vmem>>, %arg7: memref<128x16xf32, #tpu.memory_space<vmem>>, %arg8: memref<16x24xf32, #tpu.memory_space<vmem>>, %arg9: memref<1x24xf32, #tpu.memory_space<vmem>>, %arg10: memref<6x8xf32, #tpu.memory_space<vmem>>, %arg11: memref<1x8xf32, #tpu.memory_space<vmem>>, %arg12: memref<8x64xf32, #tpu.memory_space<vmem>>, %arg13: memref<16x32xf32, #tpu.memory_space<vmem>>, %arg14: memref<32x4xf32, #tpu.memory_space<vmem>>, %arg15: memref<4x5xf32, #tpu.memory_space<vmem>>, %arg16: memref<1x5xf32, #tpu.memory_space<vmem>>, %arg17: memref<6x8xf32, #tpu.memory_space<vmem>>, %arg18: memref<1x8xf32, #tpu.memory_space<vmem>>, %arg19: memref<16x32xf32, #tpu.memory_space<vmem>>, %arg20: memref<4x1xf32, #tpu.memory_space<vmem>>, %arg21: memref<1x1xf32, #tpu.memory_space<vmem>>, %arg22: memref<2x1xf32, #tpu.memory_space<vmem>>) attributes {dimension_semantics = [#tpu.dimension_semantics<parallel>], iteration_bounds = array<i64: 1>, scalar_prefetch = 0 : i64, scratch_operands = 0 : i64, tpu.core_type = #tpu.core_type<tc>, window_params = [{transform_indices = @transform_0, window_bounds = array<i64: 8, 2, 1>}, {pipeline_mode = #tpu.pipeline_mode<synchronous>, transform_indices = @transform_1, window_bounds = array<i64: 1, 32>}, {pipeline_mode = #tpu.pipeline_mode<synchronous>, transform_indices = @transform_2, window_bounds = array<i64: 5, 32>}, {pipeline_mode = #tpu.pipeline_mode<synchronous>, transform_indices = @transform_3, window_bounds = array<i64: 1, 32>}, {pipeline_mode = #tpu.pipeline_mode<synchronous>, transform_indices = @transform_4, window_bounds = array<i64: 32, 256>}, {pipeline_mode = #tpu.pipeline_mode<synchronous>, transform_indices = @transform_5, window_bounds = array<i64: 64, 128>}, {pipeline_mode = #tpu.pipeline_mode<synchronous>, transform_indices = @transform_6, window_bounds = array<i64: 128, 16>}, {pipeline_mode = #tpu.pipeline_mode<synchronous>, transform_indices = @transform_7, window_bounds = array<i64: 16, 24>}, {pipeline_mode = #tpu.pipeline_mode<synchronous>, transform_indices = @transform_8, window_bounds = array<i64: 1, 24>}, {pipeline_mode = #tpu.pipeline_mode<synchronous>, transform_indices = @transform_9, window_bounds = array<i64: 6, 8>}, {pipeline_mode = #tpu.pipeline_mode<synchronous>, transform_indices = @transform_10, window_bounds = array<i64: 1, 8>}, {pipeline_mode = #tpu.pipeline_mode<synchronous>, transform_indices = @transform_11, window_bounds = array<i64: 8, 64>}, {pipeline_mode = #tpu.pipeline_mode<synchronous>, transform_indices = @transform_12, window_bounds = array<i64: 16, 32>}, {pipeline_mode = #tpu.pipeline_mode<synchronous>, transform_indices = @transform_13, window_bounds = array<i64: 32, 4>}, {pipeline_mode = #tpu.pipeline_mode<synchronous>, transform_indices = @transform_14, window_bounds = array<i64: 4, 5>}, {pipeline_mode = #tpu.pipeline_mode<synchronous>, transform_indices = @transform_15, window_bounds = array<i64: 1, 5>}, {pipeline_mode = #tpu.pipeline_mode<synchronous>, transform_indices = @transform_16, window_bounds = array<i64: 6, 8>}, {pipeline_mode = #tpu.pipeline_mode<synchronous>, transform_indices = @transform_17, window_bounds = array<i64: 1, 8>}, {pipeline_mode = #tpu.pipeline_mode<synchronous>, transform_indices = @transform_18, window_bounds = array<i64: 16, 32>}, {pipeline_mode = #tpu.pipeline_mode<synchronous>, transform_indices = @transform_19, window_bounds = array<i64: 4, 1>}, {pipeline_mode = #tpu.pipeline_mode<synchronous>, transform_indices = @transform_20, window_bounds = array<i64: 1, 1>}, {transform_indices = @transform_21, window_bounds = array<i64: 2, 1>}]} {
    %c0 = arith.constant 0 : index
    %c0_0 = arith.constant 0 : index
    %0 = vector.load %arg2[%c0, %c0_0] : memref<1x32xf32, #tpu.memory_space<vmem>>, vector<1x32xf32>
    %c0_1 = arith.constant 0 : index
    %c0_2 = arith.constant 0 : index
    %1 = vector.load %arg3[%c0_1, %c0_2] : memref<5x32xf32, #tpu.memory_space<vmem>>, vector<5x32xf32>
    %c0_3 = arith.constant 0 : index
    %c0_4 = arith.constant 0 : index
    %2 = vector.load %arg4[%c0_3, %c0_4] : memref<1x32xf32, #tpu.memory_space<vmem>>, vector<1x32xf32>
    %c0_5 = arith.constant 0 : index
    %c0_6 = arith.constant 0 : index
    %3 = vector.load %arg5[%c0_5, %c0_6] : memref<32x256xf32, #tpu.memory_space<vmem>>, vector<32x256xf32>
    %c0_7 = arith.constant 0 : index
    %c0_8 = arith.constant 0 : index
    %4 = vector.load %arg6[%c0_7, %c0_8] : memref<64x128xf32, #tpu.memory_space<vmem>>, vector<64x128xf32>
    %c0_9 = arith.constant 0 : index
    %c0_10 = arith.constant 0 : index
    %5 = vector.load %arg7[%c0_9, %c0_10] : memref<128x16xf32, #tpu.memory_space<vmem>>, vector<128x16xf32>
    %c0_11 = arith.constant 0 : index
    %c0_12 = arith.constant 0 : index
    %6 = vector.load %arg8[%c0_11, %c0_12] : memref<16x24xf32, #tpu.memory_space<vmem>>, vector<16x24xf32>
    %c0_13 = arith.constant 0 : index
    %c0_14 = arith.constant 0 : index
    %7 = vector.load %arg9[%c0_13, %c0_14] : memref<1x24xf32, #tpu.memory_space<vmem>>, vector<1x24xf32>
    %c0_15 = arith.constant 0 : index
    %c0_16 = arith.constant 0 : index
    %8 = vector.load %arg10[%c0_15, %c0_16] : memref<6x8xf32, #tpu.memory_space<vmem>>, vector<6x8xf32>
    %c0_17 = arith.constant 0 : index
    %c0_18 = arith.constant 0 : index
    %9 = vector.load %arg11[%c0_17, %c0_18] : memref<1x8xf32, #tpu.memory_space<vmem>>, vector<1x8xf32>
    %c0_19 = arith.constant 0 : index
    %c0_20 = arith.constant 0 : index
    %10 = vector.load %arg12[%c0_19, %c0_20] : memref<8x64xf32, #tpu.memory_space<vmem>>, vector<8x64xf32>
    %c0_21 = arith.constant 0 : index
    %c0_22 = arith.constant 0 : index
    %11 = vector.load %arg13[%c0_21, %c0_22] : memref<16x32xf32, #tpu.memory_space<vmem>>, vector<16x32xf32>
    %c0_23 = arith.constant 0 : index
    %c0_24 = arith.constant 0 : index
    %12 = vector.load %arg14[%c0_23, %c0_24] : memref<32x4xf32, #tpu.memory_space<vmem>>, vector<32x4xf32>
    %c0_25 = arith.constant 0 : index
    %c0_26 = arith.constant 0 : index
    %13 = vector.load %arg15[%c0_25, %c0_26] : memref<4x5xf32, #tpu.memory_space<vmem>>, vector<4x5xf32>
    %c0_27 = arith.constant 0 : index
    %c0_28 = arith.constant 0 : index
    %14 = vector.load %arg16[%c0_27, %c0_28] : memref<1x5xf32, #tpu.memory_space<vmem>>, vector<1x5xf32>
    %cst = arith.constant 0.000000e+00 : f32
    %15 = vector.broadcast %cst : f32 to vector<2x6xf32>
    %cst_29 = arith.constant 0.000000e+00 : f32
    %16 = vector.broadcast %cst_29 : f32 to vector<2x5xf32>
    %cst_30 = arith.constant 0.000000e+00 : f32
    %17 = vector.broadcast %cst_30 : f32 to vector<2x6xf32>
    %c0_i32 = arith.constant 0 : i32
    %18 = arith.index_cast %c0_i32 : i32 to index
    %c0_31 = arith.constant 0 : index
    %c0_32 = arith.constant 0 : index
    %19 = vector.load %arg1[%18, %c0_31, %c0_32] : memref<8x2x1xf32, #tpu.memory_space<vmem>>, vector<1x2x1xf32>
    %20 = vector.shape_cast %19 : vector<1x2x1xf32> to vector<2x1xf32>
    %21 = vector.broadcast %20 : vector<2x1xf32> to vector<2x32xf32>
    %22 = vector.broadcast %0 : vector<1x32xf32> to vector<2x32xf32>
    %23 = arith.mulf %21, %22 : vector<2x32xf32>
    %cst_33 = arith.constant dense<0.000000e+00> : vector<2x32xf32>
    %24 = tpu.matmul %16, %1, %cst_33 {dimension_numbers = #tpu.dot_dimension_numbers<[1], [0], [0], [1], [0, 0, 1, 1], [], []>} : vector<2x5xf32>, vector<5x32xf32>, vector<2x32xf32> -> vector<2x32xf32>
    %25 = arith.addf %23, %24 : vector<2x32xf32>
    %26 = vector.broadcast %2 : vector<1x32xf32> to vector<2x32xf32>
    %27 = arith.addf %25, %26 : vector<2x32xf32>
    %28 = math.cos %27 : vector<2x32xf32>
    %cst_34 = arith.constant dense<0.000000e+00> : vector<2x256xf32>
    %29 = tpu.matmul %28, %3, %cst_34 {dimension_numbers = #tpu.dot_dimension_numbers<[1], [0], [0], [1], [0, 0, 1, 1], [], []>} : vector<2x32xf32>, vector<32x256xf32>, vector<2x256xf32> -> vector<2x256xf32>
    %30 = vector.extract_strided_slice %29 {offsets = [0, 0], sizes = [2, 128], strides = [1, 1]} : vector<2x256xf32> to vector<2x128xf32>
    %31 = vector.extract_strided_slice %29 {offsets = [0, 128], sizes = [2, 128], strides = [1, 1]} : vector<2x256xf32> to vector<2x128xf32>
    %32 = arith.mulf %30, %31 : vector<2x128xf32>
    %33 = vector.extract_strided_slice %32 {offsets = [0, 0], sizes = [2, 64], strides = [1, 1]} : vector<2x128xf32> to vector<2x64xf32>
    %34 = vector.extract_strided_slice %32 {offsets = [0, 64], sizes = [2, 64], strides = [1, 1]} : vector<2x128xf32> to vector<2x64xf32>
    %35 = arith.mulf %33, %34 : vector<2x64xf32>
    %cst_35 = arith.constant dense<0.000000e+00> : vector<2x128xf32>
    %36 = tpu.matmul %35, %4, %cst_35 {dimension_numbers = #tpu.dot_dimension_numbers<[1], [0], [0], [1], [0, 0, 1, 1], [], []>} : vector<2x64xf32>, vector<64x128xf32>, vector<2x128xf32> -> vector<2x128xf32>
    %37 = arith.mulf %36, %36 : vector<2x128xf32>
    %cst_36 = arith.constant dense<0.000000e+00> : vector<2x16xf32>
    %38 = tpu.matmul %37, %5, %cst_36 {dimension_numbers = #tpu.dot_dimension_numbers<[1], [0], [0], [1], [0, 0, 1, 1], [], []>} : vector<2x128xf32>, vector<128x16xf32>, vector<2x16xf32> -> vector<2x16xf32>
    %cst_37 = arith.constant dense<0.000000e+00> : vector<2x24xf32>
    %39 = tpu.matmul %38, %6, %cst_37 {dimension_numbers = #tpu.dot_dimension_numbers<[1], [0], [0], [1], [0, 0, 1, 1], [], []>} : vector<2x16xf32>, vector<16x24xf32>, vector<2x24xf32> -> vector<2x24xf32>
    %40 = vector.broadcast %7 : vector<1x24xf32> to vector<2x24xf32>
    %41 = arith.addf %39, %40 : vector<2x24xf32>
    %42 = arith.negf %41 : vector<2x24xf32>
    %43 = math.exp %42 : vector<2x24xf32>
    %cst_38 = arith.constant 1.000000e+00 : f32
    %44 = vector.broadcast %cst_38 : f32 to vector<2x24xf32>
    %45 = arith.addf %44, %43 : vector<2x24xf32>
    %46 = arith.divf %44, %45 : vector<2x24xf32>
    %47 = vector.extract_strided_slice %46 {offsets = [0, 0], sizes = [2, 6], strides = [1, 1]} : vector<2x24xf32> to vector<2x6xf32>
    %48 = vector.extract_strided_slice %46 {offsets = [0, 6], sizes = [2, 6], strides = [1, 1]} : vector<2x24xf32> to vector<2x6xf32>
    %49 = vector.extract_strided_slice %46 {offsets = [0, 12], sizes = [2, 6], strides = [1, 1]} : vector<2x24xf32> to vector<2x6xf32>
    %50 = vector.extract_strided_slice %41 {offsets = [0, 18], sizes = [2, 6], strides = [1, 1]} : vector<2x24xf32> to vector<2x6xf32>
    %51 = math.tanh %50 : vector<2x6xf32>
    %52 = arith.mulf %47, %15 : vector<2x6xf32>
    %53 = arith.mulf %48, %51 : vector<2x6xf32>
    %54 = arith.addf %52, %53 : vector<2x6xf32>
    %55 = math.tanh %54 : vector<2x6xf32>
    %56 = arith.mulf %49, %55 : vector<2x6xf32>
    %cst_39 = arith.constant dense<0.000000e+00> : vector<2x8xf32>
    %57 = tpu.matmul %56, %8, %cst_39 {dimension_numbers = #tpu.dot_dimension_numbers<[1], [0], [0], [1], [0, 0, 1, 1], [], []>} : vector<2x6xf32>, vector<6x8xf32>, vector<2x8xf32> -> vector<2x8xf32>
    %58 = vector.broadcast %9 : vector<1x8xf32> to vector<2x8xf32>
    %59 = arith.addf %57, %58 : vector<2x8xf32>
    %60 = math.cos %59 : vector<2x8xf32>
    %cst_40 = arith.constant dense<0.000000e+00> : vector<2x64xf32>
    %61 = tpu.matmul %60, %10, %cst_40 {dimension_numbers = #tpu.dot_dimension_numbers<[1], [0], [0], [1], [0, 0, 1, 1], [], []>} : vector<2x8xf32>, vector<8x64xf32>, vector<2x64xf32> -> vector<2x64xf32>
    %62 = vector.extract_strided_slice %61 {offsets = [0, 0], sizes = [2, 32], strides = [1, 1]} : vector<2x64xf32> to vector<2x32xf32>
    %63 = vector.extract_strided_slice %61 {offsets = [0, 32], sizes = [2, 32], strides = [1, 1]} : vector<2x64xf32> to vector<2x32xf32>
    %64 = arith.mulf %62, %63 : vector<2x32xf32>
    %65 = vector.extract_strided_slice %64 {offsets = [0, 0], sizes = [2, 16], strides = [1, 1]} : vector<2x32xf32> to vector<2x16xf32>
    %66 = vector.extract_strided_slice %64 {offsets = [0, 16], sizes = [2, 16], strides = [1, 1]} : vector<2x32xf32> to vector<2x16xf32>
    %67 = arith.mulf %65, %66 : vector<2x16xf32>
    %cst_41 = arith.constant dense<0.000000e+00> : vector<2x32xf32>
    %68 = tpu.matmul %67, %11, %cst_41 {dimension_numbers = #tpu.dot_dimension_numbers<[1], [0], [0], [1], [0, 0, 1, 1], [], []>} : vector<2x16xf32>, vector<16x32xf32>, vector<2x32xf32> -> vector<2x32xf32>
    %69 = arith.mulf %68, %68 : vector<2x32xf32>
    %cst_42 = arith.constant dense<0.000000e+00> : vector<2x4xf32>
    %70 = tpu.matmul %69, %12, %cst_42 {dimension_numbers = #tpu.dot_dimension_numbers<[1], [0], [0], [1], [0, 0, 1, 1], [], []>} : vector<2x32xf32>, vector<32x4xf32>, vector<2x4xf32> -> vector<2x4xf32>
    %cst_43 = arith.constant dense<0.000000e+00> : vector<2x5xf32>
    %71 = tpu.matmul %70, %13, %cst_43 {dimension_numbers = #tpu.dot_dimension_numbers<[1], [0], [0], [1], [0, 0, 1, 1], [], []>} : vector<2x4xf32>, vector<4x5xf32>, vector<2x5xf32> -> vector<2x5xf32>
    %72 = vector.broadcast %14 : vector<1x5xf32> to vector<2x5xf32>
    %73 = arith.addf %71, %72 : vector<2x5xf32>
    %c1_i32 = arith.constant 1 : i32
    %74 = arith.index_cast %c1_i32 : i32 to index
    %c0_44 = arith.constant 0 : index
    %c0_45 = arith.constant 0 : index
    %75 = vector.load %arg1[%74, %c0_44, %c0_45] : memref<8x2x1xf32, #tpu.memory_space<vmem>>, vector<1x2x1xf32>
    %76 = vector.shape_cast %75 : vector<1x2x1xf32> to vector<2x1xf32>
    %77 = vector.broadcast %76 : vector<2x1xf32> to vector<2x32xf32>
    %78 = vector.broadcast %0 : vector<1x32xf32> to vector<2x32xf32>
    %79 = arith.mulf %77, %78 : vector<2x32xf32>
    %cst_46 = arith.constant dense<0.000000e+00> : vector<2x32xf32>
    %80 = tpu.matmul %73, %1, %cst_46 {dimension_numbers = #tpu.dot_dimension_numbers<[1], [0], [0], [1], [0, 0, 1, 1], [], []>} : vector<2x5xf32>, vector<5x32xf32>, vector<2x32xf32> -> vector<2x32xf32>
    %81 = arith.addf %79, %80 : vector<2x32xf32>
    %82 = vector.broadcast %2 : vector<1x32xf32> to vector<2x32xf32>
    %83 = arith.addf %81, %82 : vector<2x32xf32>
    %84 = math.cos %83 : vector<2x32xf32>
    %cst_47 = arith.constant dense<0.000000e+00> : vector<2x256xf32>
    %85 = tpu.matmul %84, %3, %cst_47 {dimension_numbers = #tpu.dot_dimension_numbers<[1], [0], [0], [1], [0, 0, 1, 1], [], []>} : vector<2x32xf32>, vector<32x256xf32>, vector<2x256xf32> -> vector<2x256xf32>
    %86 = vector.extract_strided_slice %85 {offsets = [0, 0], sizes = [2, 128], strides = [1, 1]} : vector<2x256xf32> to vector<2x128xf32>
    %87 = vector.extract_strided_slice %85 {offsets = [0, 128], sizes = [2, 128], strides = [1, 1]} : vector<2x256xf32> to vector<2x128xf32>
    %88 = arith.mulf %86, %87 : vector<2x128xf32>
    %89 = vector.extract_strided_slice %88 {offsets = [0, 0], sizes = [2, 64], strides = [1, 1]} : vector<2x128xf32> to vector<2x64xf32>
    %90 = vector.extract_strided_slice %88 {offsets = [0, 64], sizes = [2, 64], strides = [1, 1]} : vector<2x128xf32> to vector<2x64xf32>
    %91 = arith.mulf %89, %90 : vector<2x64xf32>
    %cst_48 = arith.constant dense<0.000000e+00> : vector<2x128xf32>
    %92 = tpu.matmul %91, %4, %cst_48 {dimension_numbers = #tpu.dot_dimension_numbers<[1], [0], [0], [1], [0, 0, 1, 1], [], []>} : vector<2x64xf32>, vector<64x128xf32>, vector<2x128xf32> -> vector<2x128xf32>
    %93 = arith.mulf %92, %92 : vector<2x128xf32>
    %cst_49 = arith.constant dense<0.000000e+00> : vector<2x16xf32>
    %94 = tpu.matmul %93, %5, %cst_49 {dimension_numbers = #tpu.dot_dimension_numbers<[1], [0], [0], [1], [0, 0, 1, 1], [], []>} : vector<2x128xf32>, vector<128x16xf32>, vector<2x16xf32> -> vector<2x16xf32>
    %cst_50 = arith.constant dense<0.000000e+00> : vector<2x24xf32>
    %95 = tpu.matmul %94, %6, %cst_50 {dimension_numbers = #tpu.dot_dimension_numbers<[1], [0], [0], [1], [0, 0, 1, 1], [], []>} : vector<2x16xf32>, vector<16x24xf32>, vector<2x24xf32> -> vector<2x24xf32>
    %96 = vector.broadcast %7 : vector<1x24xf32> to vector<2x24xf32>
    %97 = arith.addf %95, %96 : vector<2x24xf32>
    %98 = arith.negf %97 : vector<2x24xf32>
    %99 = math.exp %98 : vector<2x24xf32>
    %cst_51 = arith.constant 1.000000e+00 : f32
    %100 = vector.broadcast %cst_51 : f32 to vector<2x24xf32>
    %101 = arith.addf %100, %99 : vector<2x24xf32>
    %102 = arith.divf %100, %101 : vector<2x24xf32>
    %103 = vector.extract_strided_slice %102 {offsets = [0, 0], sizes = [2, 6], strides = [1, 1]} : vector<2x24xf32> to vector<2x6xf32>
    %104 = vector.extract_strided_slice %102 {offsets = [0, 6], sizes = [2, 6], strides = [1, 1]} : vector<2x24xf32> to vector<2x6xf32>
    %105 = vector.extract_strided_slice %102 {offsets = [0, 12], sizes = [2, 6], strides = [1, 1]} : vector<2x24xf32> to vector<2x6xf32>
    %106 = vector.extract_strided_slice %97 {offsets = [0, 18], sizes = [2, 6], strides = [1, 1]} : vector<2x24xf32> to vector<2x6xf32>
    %107 = math.tanh %106 : vector<2x6xf32>
    %108 = arith.mulf %103, %54 : vector<2x6xf32>
    %109 = arith.mulf %104, %107 : vector<2x6xf32>
    %110 = arith.addf %108, %109 : vector<2x6xf32>
    %111 = math.tanh %110 : vector<2x6xf32>
    %112 = arith.mulf %105, %111 : vector<2x6xf32>
    %cst_52 = arith.constant dense<0.000000e+00> : vector<2x8xf32>
    %113 = tpu.matmul %112, %8, %cst_52 {dimension_numbers = #tpu.dot_dimension_numbers<[1], [0], [0], [1], [0, 0, 1, 1], [], []>} : vector<2x6xf32>, vector<6x8xf32>, vector<2x8xf32> -> vector<2x8xf32>
    %114 = vector.broadcast %9 : vector<1x8xf32> to vector<2x8xf32>
    %115 = arith.addf %113, %114 : vector<2x8xf32>
    %116 = math.cos %115 : vector<2x8xf32>
    %cst_53 = arith.constant dense<0.000000e+00> : vector<2x64xf32>
    %117 = tpu.matmul %116, %10, %cst_53 {dimension_numbers = #tpu.dot_dimension_numbers<[1], [0], [0], [1], [0, 0, 1, 1], [], []>} : vector<2x8xf32>, vector<8x64xf32>, vector<2x64xf32> -> vector<2x64xf32>
    %118 = vector.extract_strided_slice %117 {offsets = [0, 0], sizes = [2, 32], strides = [1, 1]} : vector<2x64xf32> to vector<2x32xf32>
    %119 = vector.extract_strided_slice %117 {offsets = [0, 32], sizes = [2, 32], strides = [1, 1]} : vector<2x64xf32> to vector<2x32xf32>
    %120 = arith.mulf %118, %119 : vector<2x32xf32>
    %121 = vector.extract_strided_slice %120 {offsets = [0, 0], sizes = [2, 16], strides = [1, 1]} : vector<2x32xf32> to vector<2x16xf32>
    %122 = vector.extract_strided_slice %120 {offsets = [0, 16], sizes = [2, 16], strides = [1, 1]} : vector<2x32xf32> to vector<2x16xf32>
    %123 = arith.mulf %121, %122 : vector<2x16xf32>
    %cst_54 = arith.constant dense<0.000000e+00> : vector<2x32xf32>
    %124 = tpu.matmul %123, %11, %cst_54 {dimension_numbers = #tpu.dot_dimension_numbers<[1], [0], [0], [1], [0, 0, 1, 1], [], []>} : vector<2x16xf32>, vector<16x32xf32>, vector<2x32xf32> -> vector<2x32xf32>
    %125 = arith.mulf %124, %124 : vector<2x32xf32>
    %cst_55 = arith.constant dense<0.000000e+00> : vector<2x4xf32>
    %126 = tpu.matmul %125, %12, %cst_55 {dimension_numbers = #tpu.dot_dimension_numbers<[1], [0], [0], [1], [0, 0, 1, 1], [], []>} : vector<2x32xf32>, vector<32x4xf32>, vector<2x4xf32> -> vector<2x4xf32>
    %cst_56 = arith.constant dense<0.000000e+00> : vector<2x5xf32>
    %127 = tpu.matmul %126, %13, %cst_56 {dimension_numbers = #tpu.dot_dimension_numbers<[1], [0], [0], [1], [0, 0, 1, 1], [], []>} : vector<2x4xf32>, vector<4x5xf32>, vector<2x5xf32> -> vector<2x5xf32>
    %128 = vector.broadcast %14 : vector<1x5xf32> to vector<2x5xf32>
    %129 = arith.addf %127, %128 : vector<2x5xf32>
    %c2_i32 = arith.constant 2 : i32
    %130 = arith.index_cast %c2_i32 : i32 to index
    %c0_57 = arith.constant 0 : index
    %c0_58 = arith.constant 0 : index
    %131 = vector.load %arg1[%130, %c0_57, %c0_58] : memref<8x2x1xf32, #tpu.memory_space<vmem>>, vector<1x2x1xf32>
    %132 = vector.shape_cast %131 : vector<1x2x1xf32> to vector<2x1xf32>
    %133 = vector.broadcast %132 : vector<2x1xf32> to vector<2x32xf32>
    %134 = vector.broadcast %0 : vector<1x32xf32> to vector<2x32xf32>
    %135 = arith.mulf %133, %134 : vector<2x32xf32>
    %cst_59 = arith.constant dense<0.000000e+00> : vector<2x32xf32>
    %136 = tpu.matmul %129, %1, %cst_59 {dimension_numbers = #tpu.dot_dimension_numbers<[1], [0], [0], [1], [0, 0, 1, 1], [], []>} : vector<2x5xf32>, vector<5x32xf32>, vector<2x32xf32> -> vector<2x32xf32>
    %137 = arith.addf %135, %136 : vector<2x32xf32>
    %138 = vector.broadcast %2 : vector<1x32xf32> to vector<2x32xf32>
    %139 = arith.addf %137, %138 : vector<2x32xf32>
    %140 = math.cos %139 : vector<2x32xf32>
    %cst_60 = arith.constant dense<0.000000e+00> : vector<2x256xf32>
    %141 = tpu.matmul %140, %3, %cst_60 {dimension_numbers = #tpu.dot_dimension_numbers<[1], [0], [0], [1], [0, 0, 1, 1], [], []>} : vector<2x32xf32>, vector<32x256xf32>, vector<2x256xf32> -> vector<2x256xf32>
    %142 = vector.extract_strided_slice %141 {offsets = [0, 0], sizes = [2, 128], strides = [1, 1]} : vector<2x256xf32> to vector<2x128xf32>
    %143 = vector.extract_strided_slice %141 {offsets = [0, 128], sizes = [2, 128], strides = [1, 1]} : vector<2x256xf32> to vector<2x128xf32>
    %144 = arith.mulf %142, %143 : vector<2x128xf32>
    %145 = vector.extract_strided_slice %144 {offsets = [0, 0], sizes = [2, 64], strides = [1, 1]} : vector<2x128xf32> to vector<2x64xf32>
    %146 = vector.extract_strided_slice %144 {offsets = [0, 64], sizes = [2, 64], strides = [1, 1]} : vector<2x128xf32> to vector<2x64xf32>
    %147 = arith.mulf %145, %146 : vector<2x64xf32>
    %cst_61 = arith.constant dense<0.000000e+00> : vector<2x128xf32>
    %148 = tpu.matmul %147, %4, %cst_61 {dimension_numbers = #tpu.dot_dimension_numbers<[1], [0], [0], [1], [0, 0, 1, 1], [], []>} : vector<2x64xf32>, vector<64x128xf32>, vector<2x128xf32> -> vector<2x128xf32>
    %149 = arith.mulf %148, %148 : vector<2x128xf32>
    %cst_62 = arith.constant dense<0.000000e+00> : vector<2x16xf32>
    %150 = tpu.matmul %149, %5, %cst_62 {dimension_numbers = #tpu.dot_dimension_numbers<[1], [0], [0], [1], [0, 0, 1, 1], [], []>} : vector<2x128xf32>, vector<128x16xf32>, vector<2x16xf32> -> vector<2x16xf32>
    %cst_63 = arith.constant dense<0.000000e+00> : vector<2x24xf32>
    %151 = tpu.matmul %150, %6, %cst_63 {dimension_numbers = #tpu.dot_dimension_numbers<[1], [0], [0], [1], [0, 0, 1, 1], [], []>} : vector<2x16xf32>, vector<16x24xf32>, vector<2x24xf32> -> vector<2x24xf32>
    %152 = vector.broadcast %7 : vector<1x24xf32> to vector<2x24xf32>
    %153 = arith.addf %151, %152 : vector<2x24xf32>
    %154 = arith.negf %153 : vector<2x24xf32>
    %155 = math.exp %154 : vector<2x24xf32>
    %cst_64 = arith.constant 1.000000e+00 : f32
    %156 = vector.broadcast %cst_64 : f32 to vector<2x24xf32>
    %157 = arith.addf %156, %155 : vector<2x24xf32>
    %158 = arith.divf %156, %157 : vector<2x24xf32>
    %159 = vector.extract_strided_slice %158 {offsets = [0, 0], sizes = [2, 6], strides = [1, 1]} : vector<2x24xf32> to vector<2x6xf32>
    %160 = vector.extract_strided_slice %158 {offsets = [0, 6], sizes = [2, 6], strides = [1, 1]} : vector<2x24xf32> to vector<2x6xf32>
    %161 = vector.extract_strided_slice %158 {offsets = [0, 12], sizes = [2, 6], strides = [1, 1]} : vector<2x24xf32> to vector<2x6xf32>
    %162 = vector.extract_strided_slice %153 {offsets = [0, 18], sizes = [2, 6], strides = [1, 1]} : vector<2x24xf32> to vector<2x6xf32>
    %163 = math.tanh %162 : vector<2x6xf32>
    %164 = arith.mulf %159, %110 : vector<2x6xf32>
    %165 = arith.mulf %160, %163 : vector<2x6xf32>
    %166 = arith.addf %164, %165 : vector<2x6xf32>
    %167 = math.tanh %166 : vector<2x6xf32>
    %168 = arith.mulf %161, %167 : vector<2x6xf32>
    %cst_65 = arith.constant dense<0.000000e+00> : vector<2x8xf32>
    %169 = tpu.matmul %168, %8, %cst_65 {dimension_numbers = #tpu.dot_dimension_numbers<[1], [0], [0], [1], [0, 0, 1, 1], [], []>} : vector<2x6xf32>, vector<6x8xf32>, vector<2x8xf32> -> vector<2x8xf32>
    %170 = vector.broadcast %9 : vector<1x8xf32> to vector<2x8xf32>
    %171 = arith.addf %169, %170 : vector<2x8xf32>
    %172 = math.cos %171 : vector<2x8xf32>
    %cst_66 = arith.constant dense<0.000000e+00> : vector<2x64xf32>
    %173 = tpu.matmul %172, %10, %cst_66 {dimension_numbers = #tpu.dot_dimension_numbers<[1], [0], [0], [1], [0, 0, 1, 1], [], []>} : vector<2x8xf32>, vector<8x64xf32>, vector<2x64xf32> -> vector<2x64xf32>
    %174 = vector.extract_strided_slice %173 {offsets = [0, 0], sizes = [2, 32], strides = [1, 1]} : vector<2x64xf32> to vector<2x32xf32>
    %175 = vector.extract_strided_slice %173 {offsets = [0, 32], sizes = [2, 32], strides = [1, 1]} : vector<2x64xf32> to vector<2x32xf32>
    %176 = arith.mulf %174, %175 : vector<2x32xf32>
    %177 = vector.extract_strided_slice %176 {offsets = [0, 0], sizes = [2, 16], strides = [1, 1]} : vector<2x32xf32> to vector<2x16xf32>
    %178 = vector.extract_strided_slice %176 {offsets = [0, 16], sizes = [2, 16], strides = [1, 1]} : vector<2x32xf32> to vector<2x16xf32>
    %179 = arith.mulf %177, %178 : vector<2x16xf32>
    %cst_67 = arith.constant dense<0.000000e+00> : vector<2x32xf32>
    %180 = tpu.matmul %179, %11, %cst_67 {dimension_numbers = #tpu.dot_dimension_numbers<[1], [0], [0], [1], [0, 0, 1, 1], [], []>} : vector<2x16xf32>, vector<16x32xf32>, vector<2x32xf32> -> vector<2x32xf32>
    %181 = arith.mulf %180, %180 : vector<2x32xf32>
    %cst_68 = arith.constant dense<0.000000e+00> : vector<2x4xf32>
    %182 = tpu.matmul %181, %12, %cst_68 {dimension_numbers = #tpu.dot_dimension_numbers<[1], [0], [0], [1], [0, 0, 1, 1], [], []>} : vector<2x32xf32>, vector<32x4xf32>, vector<2x4xf32> -> vector<2x4xf32>
    %cst_69 = arith.constant dense<0.000000e+00> : vector<2x5xf32>
    %183 = tpu.matmul %182, %13, %cst_69 {dimension_numbers = #tpu.dot_dimension_numbers<[1], [0], [0], [1], [0, 0, 1, 1], [], []>} : vector<2x4xf32>, vector<4x5xf32>, vector<2x5xf32> -> vector<2x5xf32>
    %184 = vector.broadcast %14 : vector<1x5xf32> to vector<2x5xf32>
    %185 = arith.addf %183, %184 : vector<2x5xf32>
    %c3_i32 = arith.constant 3 : i32
    %186 = arith.index_cast %c3_i32 : i32 to index
    %c0_70 = arith.constant 0 : index
    %c0_71 = arith.constant 0 : index
    %187 = vector.load %arg1[%186, %c0_70, %c0_71] : memref<8x2x1xf32, #tpu.memory_space<vmem>>, vector<1x2x1xf32>
    %188 = vector.shape_cast %187 : vector<1x2x1xf32> to vector<2x1xf32>
    %189 = vector.broadcast %188 : vector<2x1xf32> to vector<2x32xf32>
    %190 = vector.broadcast %0 : vector<1x32xf32> to vector<2x32xf32>
    %191 = arith.mulf %189, %190 : vector<2x32xf32>
    %cst_72 = arith.constant dense<0.000000e+00> : vector<2x32xf32>
    %192 = tpu.matmul %185, %1, %cst_72 {dimension_numbers = #tpu.dot_dimension_numbers<[1], [0], [0], [1], [0, 0, 1, 1], [], []>} : vector<2x5xf32>, vector<5x32xf32>, vector<2x32xf32> -> vector<2x32xf32>
    %193 = arith.addf %191, %192 : vector<2x32xf32>
    %194 = vector.broadcast %2 : vector<1x32xf32> to vector<2x32xf32>
    %195 = arith.addf %193, %194 : vector<2x32xf32>
    %196 = math.cos %195 : vector<2x32xf32>
    %cst_73 = arith.constant dense<0.000000e+00> : vector<2x256xf32>
    %197 = tpu.matmul %196, %3, %cst_73 {dimension_numbers = #tpu.dot_dimension_numbers<[1], [0], [0], [1], [0, 0, 1, 1], [], []>} : vector<2x32xf32>, vector<32x256xf32>, vector<2x256xf32> -> vector<2x256xf32>
    %198 = vector.extract_strided_slice %197 {offsets = [0, 0], sizes = [2, 128], strides = [1, 1]} : vector<2x256xf32> to vector<2x128xf32>
    %199 = vector.extract_strided_slice %197 {offsets = [0, 128], sizes = [2, 128], strides = [1, 1]} : vector<2x256xf32> to vector<2x128xf32>
    %200 = arith.mulf %198, %199 : vector<2x128xf32>
    %201 = vector.extract_strided_slice %200 {offsets = [0, 0], sizes = [2, 64], strides = [1, 1]} : vector<2x128xf32> to vector<2x64xf32>
    %202 = vector.extract_strided_slice %200 {offsets = [0, 64], sizes = [2, 64], strides = [1, 1]} : vector<2x128xf32> to vector<2x64xf32>
    %203 = arith.mulf %201, %202 : vector<2x64xf32>
    %cst_74 = arith.constant dense<0.000000e+00> : vector<2x128xf32>
    %204 = tpu.matmul %203, %4, %cst_74 {dimension_numbers = #tpu.dot_dimension_numbers<[1], [0], [0], [1], [0, 0, 1, 1], [], []>} : vector<2x64xf32>, vector<64x128xf32>, vector<2x128xf32> -> vector<2x128xf32>
    %205 = arith.mulf %204, %204 : vector<2x128xf32>
    %cst_75 = arith.constant dense<0.000000e+00> : vector<2x16xf32>
    %206 = tpu.matmul %205, %5, %cst_75 {dimension_numbers = #tpu.dot_dimension_numbers<[1], [0], [0], [1], [0, 0, 1, 1], [], []>} : vector<2x128xf32>, vector<128x16xf32>, vector<2x16xf32> -> vector<2x16xf32>
    %cst_76 = arith.constant dense<0.000000e+00> : vector<2x24xf32>
    %207 = tpu.matmul %206, %6, %cst_76 {dimension_numbers = #tpu.dot_dimension_numbers<[1], [0], [0], [1], [0, 0, 1, 1], [], []>} : vector<2x16xf32>, vector<16x24xf32>, vector<2x24xf32> -> vector<2x24xf32>
    %208 = vector.broadcast %7 : vector<1x24xf32> to vector<2x24xf32>
    %209 = arith.addf %207, %208 : vector<2x24xf32>
    %210 = arith.negf %209 : vector<2x24xf32>
    %211 = math.exp %210 : vector<2x24xf32>
    %cst_77 = arith.constant 1.000000e+00 : f32
    %212 = vector.broadcast %cst_77 : f32 to vector<2x24xf32>
    %213 = arith.addf %212, %211 : vector<2x24xf32>
    %214 = arith.divf %212, %213 : vector<2x24xf32>
    %215 = vector.extract_strided_slice %214 {offsets = [0, 0], sizes = [2, 6], strides = [1, 1]} : vector<2x24xf32> to vector<2x6xf32>
    %216 = vector.extract_strided_slice %214 {offsets = [0, 6], sizes = [2, 6], strides = [1, 1]} : vector<2x24xf32> to vector<2x6xf32>
    %217 = vector.extract_strided_slice %214 {offsets = [0, 12], sizes = [2, 6], strides = [1, 1]} : vector<2x24xf32> to vector<2x6xf32>
    %218 = vector.extract_strided_slice %209 {offsets = [0, 18], sizes = [2, 6], strides = [1, 1]} : vector<2x24xf32> to vector<2x6xf32>
    %219 = math.tanh %218 : vector<2x6xf32>
    %220 = arith.mulf %215, %166 : vector<2x6xf32>
    %221 = arith.mulf %216, %219 : vector<2x6xf32>
    %222 = arith.addf %220, %221 : vector<2x6xf32>
    %223 = math.tanh %222 : vector<2x6xf32>
    %224 = arith.mulf %217, %223 : vector<2x6xf32>
    %cst_78 = arith.constant dense<0.000000e+00> : vector<2x8xf32>
    %225 = tpu.matmul %224, %8, %cst_78 {dimension_numbers = #tpu.dot_dimension_numbers<[1], [0], [0], [1], [0, 0, 1, 1], [], []>} : vector<2x6xf32>, vector<6x8xf32>, vector<2x8xf32> -> vector<2x8xf32>
    %226 = vector.broadcast %9 : vector<1x8xf32> to vector<2x8xf32>
    %227 = arith.addf %225, %226 : vector<2x8xf32>
    %228 = math.cos %227 : vector<2x8xf32>
    %cst_79 = arith.constant dense<0.000000e+00> : vector<2x64xf32>
    %229 = tpu.matmul %228, %10, %cst_79 {dimension_numbers = #tpu.dot_dimension_numbers<[1], [0], [0], [1], [0, 0, 1, 1], [], []>} : vector<2x8xf32>, vector<8x64xf32>, vector<2x64xf32> -> vector<2x64xf32>
    %230 = vector.extract_strided_slice %229 {offsets = [0, 0], sizes = [2, 32], strides = [1, 1]} : vector<2x64xf32> to vector<2x32xf32>
    %231 = vector.extract_strided_slice %229 {offsets = [0, 32], sizes = [2, 32], strides = [1, 1]} : vector<2x64xf32> to vector<2x32xf32>
    %232 = arith.mulf %230, %231 : vector<2x32xf32>
    %233 = vector.extract_strided_slice %232 {offsets = [0, 0], sizes = [2, 16], strides = [1, 1]} : vector<2x32xf32> to vector<2x16xf32>
    %234 = vector.extract_strided_slice %232 {offsets = [0, 16], sizes = [2, 16], strides = [1, 1]} : vector<2x32xf32> to vector<2x16xf32>
    %235 = arith.mulf %233, %234 : vector<2x16xf32>
    %cst_80 = arith.constant dense<0.000000e+00> : vector<2x32xf32>
    %236 = tpu.matmul %235, %11, %cst_80 {dimension_numbers = #tpu.dot_dimension_numbers<[1], [0], [0], [1], [0, 0, 1, 1], [], []>} : vector<2x16xf32>, vector<16x32xf32>, vector<2x32xf32> -> vector<2x32xf32>
    %237 = arith.mulf %236, %236 : vector<2x32xf32>
    %cst_81 = arith.constant dense<0.000000e+00> : vector<2x4xf32>
    %238 = tpu.matmul %237, %12, %cst_81 {dimension_numbers = #tpu.dot_dimension_numbers<[1], [0], [0], [1], [0, 0, 1, 1], [], []>} : vector<2x32xf32>, vector<32x4xf32>, vector<2x4xf32> -> vector<2x4xf32>
    %cst_82 = arith.constant dense<0.000000e+00> : vector<2x5xf32>
    %239 = tpu.matmul %238, %13, %cst_82 {dimension_numbers = #tpu.dot_dimension_numbers<[1], [0], [0], [1], [0, 0, 1, 1], [], []>} : vector<2x4xf32>, vector<4x5xf32>, vector<2x5xf32> -> vector<2x5xf32>
    %240 = vector.broadcast %14 : vector<1x5xf32> to vector<2x5xf32>
    %241 = arith.addf %239, %240 : vector<2x5xf32>
    %c4_i32 = arith.constant 4 : i32
    %242 = arith.index_cast %c4_i32 : i32 to index
    %c0_83 = arith.constant 0 : index
    %c0_84 = arith.constant 0 : index
    %243 = vector.load %arg1[%242, %c0_83, %c0_84] : memref<8x2x1xf32, #tpu.memory_space<vmem>>, vector<1x2x1xf32>
    %244 = vector.shape_cast %243 : vector<1x2x1xf32> to vector<2x1xf32>
    %245 = vector.broadcast %244 : vector<2x1xf32> to vector<2x32xf32>
    %246 = vector.broadcast %0 : vector<1x32xf32> to vector<2x32xf32>
    %247 = arith.mulf %245, %246 : vector<2x32xf32>
    %cst_85 = arith.constant dense<0.000000e+00> : vector<2x32xf32>
    %248 = tpu.matmul %241, %1, %cst_85 {dimension_numbers = #tpu.dot_dimension_numbers<[1], [0], [0], [1], [0, 0, 1, 1], [], []>} : vector<2x5xf32>, vector<5x32xf32>, vector<2x32xf32> -> vector<2x32xf32>
    %249 = arith.addf %247, %248 : vector<2x32xf32>
    %250 = vector.broadcast %2 : vector<1x32xf32> to vector<2x32xf32>
    %251 = arith.addf %249, %250 : vector<2x32xf32>
    %252 = math.cos %251 : vector<2x32xf32>
    %cst_86 = arith.constant dense<0.000000e+00> : vector<2x256xf32>
    %253 = tpu.matmul %252, %3, %cst_86 {dimension_numbers = #tpu.dot_dimension_numbers<[1], [0], [0], [1], [0, 0, 1, 1], [], []>} : vector<2x32xf32>, vector<32x256xf32>, vector<2x256xf32> -> vector<2x256xf32>
    %254 = vector.extract_strided_slice %253 {offsets = [0, 0], sizes = [2, 128], strides = [1, 1]} : vector<2x256xf32> to vector<2x128xf32>
    %255 = vector.extract_strided_slice %253 {offsets = [0, 128], sizes = [2, 128], strides = [1, 1]} : vector<2x256xf32> to vector<2x128xf32>
    %256 = arith.mulf %254, %255 : vector<2x128xf32>
    %257 = vector.extract_strided_slice %256 {offsets = [0, 0], sizes = [2, 64], strides = [1, 1]} : vector<2x128xf32> to vector<2x64xf32>
    %258 = vector.extract_strided_slice %256 {offsets = [0, 64], sizes = [2, 64], strides = [1, 1]} : vector<2x128xf32> to vector<2x64xf32>
    %259 = arith.mulf %257, %258 : vector<2x64xf32>
    %cst_87 = arith.constant dense<0.000000e+00> : vector<2x128xf32>
    %260 = tpu.matmul %259, %4, %cst_87 {dimension_numbers = #tpu.dot_dimension_numbers<[1], [0], [0], [1], [0, 0, 1, 1], [], []>} : vector<2x64xf32>, vector<64x128xf32>, vector<2x128xf32> -> vector<2x128xf32>
    %261 = arith.mulf %260, %260 : vector<2x128xf32>
    %cst_88 = arith.constant dense<0.000000e+00> : vector<2x16xf32>
    %262 = tpu.matmul %261, %5, %cst_88 {dimension_numbers = #tpu.dot_dimension_numbers<[1], [0], [0], [1], [0, 0, 1, 1], [], []>} : vector<2x128xf32>, vector<128x16xf32>, vector<2x16xf32> -> vector<2x16xf32>
    %cst_89 = arith.constant dense<0.000000e+00> : vector<2x24xf32>
    %263 = tpu.matmul %262, %6, %cst_89 {dimension_numbers = #tpu.dot_dimension_numbers<[1], [0], [0], [1], [0, 0, 1, 1], [], []>} : vector<2x16xf32>, vector<16x24xf32>, vector<2x24xf32> -> vector<2x24xf32>
    %264 = vector.broadcast %7 : vector<1x24xf32> to vector<2x24xf32>
    %265 = arith.addf %263, %264 : vector<2x24xf32>
    %266 = arith.negf %265 : vector<2x24xf32>
    %267 = math.exp %266 : vector<2x24xf32>
    %cst_90 = arith.constant 1.000000e+00 : f32
    %268 = vector.broadcast %cst_90 : f32 to vector<2x24xf32>
    %269 = arith.addf %268, %267 : vector<2x24xf32>
    %270 = arith.divf %268, %269 : vector<2x24xf32>
    %271 = vector.extract_strided_slice %270 {offsets = [0, 0], sizes = [2, 6], strides = [1, 1]} : vector<2x24xf32> to vector<2x6xf32>
    %272 = vector.extract_strided_slice %270 {offsets = [0, 6], sizes = [2, 6], strides = [1, 1]} : vector<2x24xf32> to vector<2x6xf32>
    %273 = vector.extract_strided_slice %270 {offsets = [0, 12], sizes = [2, 6], strides = [1, 1]} : vector<2x24xf32> to vector<2x6xf32>
    %274 = vector.extract_strided_slice %265 {offsets = [0, 18], sizes = [2, 6], strides = [1, 1]} : vector<2x24xf32> to vector<2x6xf32>
    %275 = math.tanh %274 : vector<2x6xf32>
    %276 = arith.mulf %271, %222 : vector<2x6xf32>
    %277 = arith.mulf %272, %275 : vector<2x6xf32>
    %278 = arith.addf %276, %277 : vector<2x6xf32>
    %279 = math.tanh %278 : vector<2x6xf32>
    %280 = arith.mulf %273, %279 : vector<2x6xf32>
    %cst_91 = arith.constant dense<0.000000e+00> : vector<2x8xf32>
    %281 = tpu.matmul %280, %8, %cst_91 {dimension_numbers = #tpu.dot_dimension_numbers<[1], [0], [0], [1], [0, 0, 1, 1], [], []>} : vector<2x6xf32>, vector<6x8xf32>, vector<2x8xf32> -> vector<2x8xf32>
    %282 = vector.broadcast %9 : vector<1x8xf32> to vector<2x8xf32>
    %283 = arith.addf %281, %282 : vector<2x8xf32>
    %284 = math.cos %283 : vector<2x8xf32>
    %cst_92 = arith.constant dense<0.000000e+00> : vector<2x64xf32>
    %285 = tpu.matmul %284, %10, %cst_92 {dimension_numbers = #tpu.dot_dimension_numbers<[1], [0], [0], [1], [0, 0, 1, 1], [], []>} : vector<2x8xf32>, vector<8x64xf32>, vector<2x64xf32> -> vector<2x64xf32>
    %286 = vector.extract_strided_slice %285 {offsets = [0, 0], sizes = [2, 32], strides = [1, 1]} : vector<2x64xf32> to vector<2x32xf32>
    %287 = vector.extract_strided_slice %285 {offsets = [0, 32], sizes = [2, 32], strides = [1, 1]} : vector<2x64xf32> to vector<2x32xf32>
    %288 = arith.mulf %286, %287 : vector<2x32xf32>
    %289 = vector.extract_strided_slice %288 {offsets = [0, 0], sizes = [2, 16], strides = [1, 1]} : vector<2x32xf32> to vector<2x16xf32>
    %290 = vector.extract_strided_slice %288 {offsets = [0, 16], sizes = [2, 16], strides = [1, 1]} : vector<2x32xf32> to vector<2x16xf32>
    %291 = arith.mulf %289, %290 : vector<2x16xf32>
    %cst_93 = arith.constant dense<0.000000e+00> : vector<2x32xf32>
    %292 = tpu.matmul %291, %11, %cst_93 {dimension_numbers = #tpu.dot_dimension_numbers<[1], [0], [0], [1], [0, 0, 1, 1], [], []>} : vector<2x16xf32>, vector<16x32xf32>, vector<2x32xf32> -> vector<2x32xf32>
    %293 = arith.mulf %292, %292 : vector<2x32xf32>
    %cst_94 = arith.constant dense<0.000000e+00> : vector<2x4xf32>
    %294 = tpu.matmul %293, %12, %cst_94 {dimension_numbers = #tpu.dot_dimension_numbers<[1], [0], [0], [1], [0, 0, 1, 1], [], []>} : vector<2x32xf32>, vector<32x4xf32>, vector<2x4xf32> -> vector<2x4xf32>
    %cst_95 = arith.constant dense<0.000000e+00> : vector<2x5xf32>
    %295 = tpu.matmul %294, %13, %cst_95 {dimension_numbers = #tpu.dot_dimension_numbers<[1], [0], [0], [1], [0, 0, 1, 1], [], []>} : vector<2x4xf32>, vector<4x5xf32>, vector<2x5xf32> -> vector<2x5xf32>
    %296 = vector.broadcast %14 : vector<1x5xf32> to vector<2x5xf32>
    %297 = arith.addf %295, %296 : vector<2x5xf32>
    %c5_i32 = arith.constant 5 : i32
    %298 = arith.index_cast %c5_i32 : i32 to index
    %c0_96 = arith.constant 0 : index
    %c0_97 = arith.constant 0 : index
    %299 = vector.load %arg1[%298, %c0_96, %c0_97] : memref<8x2x1xf32, #tpu.memory_space<vmem>>, vector<1x2x1xf32>
    %300 = vector.shape_cast %299 : vector<1x2x1xf32> to vector<2x1xf32>
    %301 = vector.broadcast %300 : vector<2x1xf32> to vector<2x32xf32>
    %302 = vector.broadcast %0 : vector<1x32xf32> to vector<2x32xf32>
    %303 = arith.mulf %301, %302 : vector<2x32xf32>
    %cst_98 = arith.constant dense<0.000000e+00> : vector<2x32xf32>
    %304 = tpu.matmul %297, %1, %cst_98 {dimension_numbers = #tpu.dot_dimension_numbers<[1], [0], [0], [1], [0, 0, 1, 1], [], []>} : vector<2x5xf32>, vector<5x32xf32>, vector<2x32xf32> -> vector<2x32xf32>
    %305 = arith.addf %303, %304 : vector<2x32xf32>
    %306 = vector.broadcast %2 : vector<1x32xf32> to vector<2x32xf32>
    %307 = arith.addf %305, %306 : vector<2x32xf32>
    %308 = math.cos %307 : vector<2x32xf32>
    %cst_99 = arith.constant dense<0.000000e+00> : vector<2x256xf32>
    %309 = tpu.matmul %308, %3, %cst_99 {dimension_numbers = #tpu.dot_dimension_numbers<[1], [0], [0], [1], [0, 0, 1, 1], [], []>} : vector<2x32xf32>, vector<32x256xf32>, vector<2x256xf32> -> vector<2x256xf32>
    %310 = vector.extract_strided_slice %309 {offsets = [0, 0], sizes = [2, 128], strides = [1, 1]} : vector<2x256xf32> to vector<2x128xf32>
    %311 = vector.extract_strided_slice %309 {offsets = [0, 128], sizes = [2, 128], strides = [1, 1]} : vector<2x256xf32> to vector<2x128xf32>
    %312 = arith.mulf %310, %311 : vector<2x128xf32>
    %313 = vector.extract_strided_slice %312 {offsets = [0, 0], sizes = [2, 64], strides = [1, 1]} : vector<2x128xf32> to vector<2x64xf32>
    %314 = vector.extract_strided_slice %312 {offsets = [0, 64], sizes = [2, 64], strides = [1, 1]} : vector<2x128xf32> to vector<2x64xf32>
    %315 = arith.mulf %313, %314 : vector<2x64xf32>
    %cst_100 = arith.constant dense<0.000000e+00> : vector<2x128xf32>
    %316 = tpu.matmul %315, %4, %cst_100 {dimension_numbers = #tpu.dot_dimension_numbers<[1], [0], [0], [1], [0, 0, 1, 1], [], []>} : vector<2x64xf32>, vector<64x128xf32>, vector<2x128xf32> -> vector<2x128xf32>
    %317 = arith.mulf %316, %316 : vector<2x128xf32>
    %cst_101 = arith.constant dense<0.000000e+00> : vector<2x16xf32>
    %318 = tpu.matmul %317, %5, %cst_101 {dimension_numbers = #tpu.dot_dimension_numbers<[1], [0], [0], [1], [0, 0, 1, 1], [], []>} : vector<2x128xf32>, vector<128x16xf32>, vector<2x16xf32> -> vector<2x16xf32>
    %cst_102 = arith.constant dense<0.000000e+00> : vector<2x24xf32>
    %319 = tpu.matmul %318, %6, %cst_102 {dimension_numbers = #tpu.dot_dimension_numbers<[1], [0], [0], [1], [0, 0, 1, 1], [], []>} : vector<2x16xf32>, vector<16x24xf32>, vector<2x24xf32> -> vector<2x24xf32>
    %320 = vector.broadcast %7 : vector<1x24xf32> to vector<2x24xf32>
    %321 = arith.addf %319, %320 : vector<2x24xf32>
    %322 = arith.negf %321 : vector<2x24xf32>
    %323 = math.exp %322 : vector<2x24xf32>
    %cst_103 = arith.constant 1.000000e+00 : f32
    %324 = vector.broadcast %cst_103 : f32 to vector<2x24xf32>
    %325 = arith.addf %324, %323 : vector<2x24xf32>
    %326 = arith.divf %324, %325 : vector<2x24xf32>
    %327 = vector.extract_strided_slice %326 {offsets = [0, 0], sizes = [2, 6], strides = [1, 1]} : vector<2x24xf32> to vector<2x6xf32>
    %328 = vector.extract_strided_slice %326 {offsets = [0, 6], sizes = [2, 6], strides = [1, 1]} : vector<2x24xf32> to vector<2x6xf32>
    %329 = vector.extract_strided_slice %326 {offsets = [0, 12], sizes = [2, 6], strides = [1, 1]} : vector<2x24xf32> to vector<2x6xf32>
    %330 = vector.extract_strided_slice %321 {offsets = [0, 18], sizes = [2, 6], strides = [1, 1]} : vector<2x24xf32> to vector<2x6xf32>
    %331 = math.tanh %330 : vector<2x6xf32>
    %332 = arith.mulf %327, %278 : vector<2x6xf32>
    %333 = arith.mulf %328, %331 : vector<2x6xf32>
    %334 = arith.addf %332, %333 : vector<2x6xf32>
    %335 = math.tanh %334 : vector<2x6xf32>
    %336 = arith.mulf %329, %335 : vector<2x6xf32>
    %cst_104 = arith.constant dense<0.000000e+00> : vector<2x8xf32>
    %337 = tpu.matmul %336, %8, %cst_104 {dimension_numbers = #tpu.dot_dimension_numbers<[1], [0], [0], [1], [0, 0, 1, 1], [], []>} : vector<2x6xf32>, vector<6x8xf32>, vector<2x8xf32> -> vector<2x8xf32>
    %338 = vector.broadcast %9 : vector<1x8xf32> to vector<2x8xf32>
    %339 = arith.addf %337, %338 : vector<2x8xf32>
    %340 = math.cos %339 : vector<2x8xf32>
    %cst_105 = arith.constant dense<0.000000e+00> : vector<2x64xf32>
    %341 = tpu.matmul %340, %10, %cst_105 {dimension_numbers = #tpu.dot_dimension_numbers<[1], [0], [0], [1], [0, 0, 1, 1], [], []>} : vector<2x8xf32>, vector<8x64xf32>, vector<2x64xf32> -> vector<2x64xf32>
    %342 = vector.extract_strided_slice %341 {offsets = [0, 0], sizes = [2, 32], strides = [1, 1]} : vector<2x64xf32> to vector<2x32xf32>
    %343 = vector.extract_strided_slice %341 {offsets = [0, 32], sizes = [2, 32], strides = [1, 1]} : vector<2x64xf32> to vector<2x32xf32>
    %344 = arith.mulf %342, %343 : vector<2x32xf32>
    %345 = vector.extract_strided_slice %344 {offsets = [0, 0], sizes = [2, 16], strides = [1, 1]} : vector<2x32xf32> to vector<2x16xf32>
    %346 = vector.extract_strided_slice %344 {offsets = [0, 16], sizes = [2, 16], strides = [1, 1]} : vector<2x32xf32> to vector<2x16xf32>
    %347 = arith.mulf %345, %346 : vector<2x16xf32>
    %cst_106 = arith.constant dense<0.000000e+00> : vector<2x32xf32>
    %348 = tpu.matmul %347, %11, %cst_106 {dimension_numbers = #tpu.dot_dimension_numbers<[1], [0], [0], [1], [0, 0, 1, 1], [], []>} : vector<2x16xf32>, vector<16x32xf32>, vector<2x32xf32> -> vector<2x32xf32>
    %349 = arith.mulf %348, %348 : vector<2x32xf32>
    %cst_107 = arith.constant dense<0.000000e+00> : vector<2x4xf32>
    %350 = tpu.matmul %349, %12, %cst_107 {dimension_numbers = #tpu.dot_dimension_numbers<[1], [0], [0], [1], [0, 0, 1, 1], [], []>} : vector<2x32xf32>, vector<32x4xf32>, vector<2x4xf32> -> vector<2x4xf32>
    %cst_108 = arith.constant dense<0.000000e+00> : vector<2x5xf32>
    %351 = tpu.matmul %350, %13, %cst_108 {dimension_numbers = #tpu.dot_dimension_numbers<[1], [0], [0], [1], [0, 0, 1, 1], [], []>} : vector<2x4xf32>, vector<4x5xf32>, vector<2x5xf32> -> vector<2x5xf32>
    %352 = vector.broadcast %14 : vector<1x5xf32> to vector<2x5xf32>
    %353 = arith.addf %351, %352 : vector<2x5xf32>
    %c6_i32 = arith.constant 6 : i32
    %354 = arith.index_cast %c6_i32 : i32 to index
    %c0_109 = arith.constant 0 : index
    %c0_110 = arith.constant 0 : index
    %355 = vector.load %arg1[%354, %c0_109, %c0_110] : memref<8x2x1xf32, #tpu.memory_space<vmem>>, vector<1x2x1xf32>
    %356 = vector.shape_cast %355 : vector<1x2x1xf32> to vector<2x1xf32>
    %357 = vector.broadcast %356 : vector<2x1xf32> to vector<2x32xf32>
    %358 = vector.broadcast %0 : vector<1x32xf32> to vector<2x32xf32>
    %359 = arith.mulf %357, %358 : vector<2x32xf32>
    %cst_111 = arith.constant dense<0.000000e+00> : vector<2x32xf32>
    %360 = tpu.matmul %353, %1, %cst_111 {dimension_numbers = #tpu.dot_dimension_numbers<[1], [0], [0], [1], [0, 0, 1, 1], [], []>} : vector<2x5xf32>, vector<5x32xf32>, vector<2x32xf32> -> vector<2x32xf32>
    %361 = arith.addf %359, %360 : vector<2x32xf32>
    %362 = vector.broadcast %2 : vector<1x32xf32> to vector<2x32xf32>
    %363 = arith.addf %361, %362 : vector<2x32xf32>
    %364 = math.cos %363 : vector<2x32xf32>
    %cst_112 = arith.constant dense<0.000000e+00> : vector<2x256xf32>
    %365 = tpu.matmul %364, %3, %cst_112 {dimension_numbers = #tpu.dot_dimension_numbers<[1], [0], [0], [1], [0, 0, 1, 1], [], []>} : vector<2x32xf32>, vector<32x256xf32>, vector<2x256xf32> -> vector<2x256xf32>
    %366 = vector.extract_strided_slice %365 {offsets = [0, 0], sizes = [2, 128], strides = [1, 1]} : vector<2x256xf32> to vector<2x128xf32>
    %367 = vector.extract_strided_slice %365 {offsets = [0, 128], sizes = [2, 128], strides = [1, 1]} : vector<2x256xf32> to vector<2x128xf32>
    %368 = arith.mulf %366, %367 : vector<2x128xf32>
    %369 = vector.extract_strided_slice %368 {offsets = [0, 0], sizes = [2, 64], strides = [1, 1]} : vector<2x128xf32> to vector<2x64xf32>
    %370 = vector.extract_strided_slice %368 {offsets = [0, 64], sizes = [2, 64], strides = [1, 1]} : vector<2x128xf32> to vector<2x64xf32>
    %371 = arith.mulf %369, %370 : vector<2x64xf32>
    %cst_113 = arith.constant dense<0.000000e+00> : vector<2x128xf32>
    %372 = tpu.matmul %371, %4, %cst_113 {dimension_numbers = #tpu.dot_dimension_numbers<[1], [0], [0], [1], [0, 0, 1, 1], [], []>} : vector<2x64xf32>, vector<64x128xf32>, vector<2x128xf32> -> vector<2x128xf32>
    %373 = arith.mulf %372, %372 : vector<2x128xf32>
    %cst_114 = arith.constant dense<0.000000e+00> : vector<2x16xf32>
    %374 = tpu.matmul %373, %5, %cst_114 {dimension_numbers = #tpu.dot_dimension_numbers<[1], [0], [0], [1], [0, 0, 1, 1], [], []>} : vector<2x128xf32>, vector<128x16xf32>, vector<2x16xf32> -> vector<2x16xf32>
    %cst_115 = arith.constant dense<0.000000e+00> : vector<2x24xf32>
    %375 = tpu.matmul %374, %6, %cst_115 {dimension_numbers = #tpu.dot_dimension_numbers<[1], [0], [0], [1], [0, 0, 1, 1], [], []>} : vector<2x16xf32>, vector<16x24xf32>, vector<2x24xf32> -> vector<2x24xf32>
    %376 = vector.broadcast %7 : vector<1x24xf32> to vector<2x24xf32>
    %377 = arith.addf %375, %376 : vector<2x24xf32>
    %378 = arith.negf %377 : vector<2x24xf32>
    %379 = math.exp %378 : vector<2x24xf32>
    %cst_116 = arith.constant 1.000000e+00 : f32
    %380 = vector.broadcast %cst_116 : f32 to vector<2x24xf32>
    %381 = arith.addf %380, %379 : vector<2x24xf32>
    %382 = arith.divf %380, %381 : vector<2x24xf32>
    %383 = vector.extract_strided_slice %382 {offsets = [0, 0], sizes = [2, 6], strides = [1, 1]} : vector<2x24xf32> to vector<2x6xf32>
    %384 = vector.extract_strided_slice %382 {offsets = [0, 6], sizes = [2, 6], strides = [1, 1]} : vector<2x24xf32> to vector<2x6xf32>
    %385 = vector.extract_strided_slice %382 {offsets = [0, 12], sizes = [2, 6], strides = [1, 1]} : vector<2x24xf32> to vector<2x6xf32>
    %386 = vector.extract_strided_slice %377 {offsets = [0, 18], sizes = [2, 6], strides = [1, 1]} : vector<2x24xf32> to vector<2x6xf32>
    %387 = math.tanh %386 : vector<2x6xf32>
    %388 = arith.mulf %383, %334 : vector<2x6xf32>
    %389 = arith.mulf %384, %387 : vector<2x6xf32>
    %390 = arith.addf %388, %389 : vector<2x6xf32>
    %391 = math.tanh %390 : vector<2x6xf32>
    %392 = arith.mulf %385, %391 : vector<2x6xf32>
    %cst_117 = arith.constant dense<0.000000e+00> : vector<2x8xf32>
    %393 = tpu.matmul %392, %8, %cst_117 {dimension_numbers = #tpu.dot_dimension_numbers<[1], [0], [0], [1], [0, 0, 1, 1], [], []>} : vector<2x6xf32>, vector<6x8xf32>, vector<2x8xf32> -> vector<2x8xf32>
    %394 = vector.broadcast %9 : vector<1x8xf32> to vector<2x8xf32>
    %395 = arith.addf %393, %394 : vector<2x8xf32>
    %396 = math.cos %395 : vector<2x8xf32>
    %cst_118 = arith.constant dense<0.000000e+00> : vector<2x64xf32>
    %397 = tpu.matmul %396, %10, %cst_118 {dimension_numbers = #tpu.dot_dimension_numbers<[1], [0], [0], [1], [0, 0, 1, 1], [], []>} : vector<2x8xf32>, vector<8x64xf32>, vector<2x64xf32> -> vector<2x64xf32>
    %398 = vector.extract_strided_slice %397 {offsets = [0, 0], sizes = [2, 32], strides = [1, 1]} : vector<2x64xf32> to vector<2x32xf32>
    %399 = vector.extract_strided_slice %397 {offsets = [0, 32], sizes = [2, 32], strides = [1, 1]} : vector<2x64xf32> to vector<2x32xf32>
    %400 = arith.mulf %398, %399 : vector<2x32xf32>
    %401 = vector.extract_strided_slice %400 {offsets = [0, 0], sizes = [2, 16], strides = [1, 1]} : vector<2x32xf32> to vector<2x16xf32>
    %402 = vector.extract_strided_slice %400 {offsets = [0, 16], sizes = [2, 16], strides = [1, 1]} : vector<2x32xf32> to vector<2x16xf32>
    %403 = arith.mulf %401, %402 : vector<2x16xf32>
    %cst_119 = arith.constant dense<0.000000e+00> : vector<2x32xf32>
    %404 = tpu.matmul %403, %11, %cst_119 {dimension_numbers = #tpu.dot_dimension_numbers<[1], [0], [0], [1], [0, 0, 1, 1], [], []>} : vector<2x16xf32>, vector<16x32xf32>, vector<2x32xf32> -> vector<2x32xf32>
    %405 = arith.mulf %404, %404 : vector<2x32xf32>
    %cst_120 = arith.constant dense<0.000000e+00> : vector<2x4xf32>
    %406 = tpu.matmul %405, %12, %cst_120 {dimension_numbers = #tpu.dot_dimension_numbers<[1], [0], [0], [1], [0, 0, 1, 1], [], []>} : vector<2x32xf32>, vector<32x4xf32>, vector<2x4xf32> -> vector<2x4xf32>
    %cst_121 = arith.constant dense<0.000000e+00> : vector<2x5xf32>
    %407 = tpu.matmul %406, %13, %cst_121 {dimension_numbers = #tpu.dot_dimension_numbers<[1], [0], [0], [1], [0, 0, 1, 1], [], []>} : vector<2x4xf32>, vector<4x5xf32>, vector<2x5xf32> -> vector<2x5xf32>
    %408 = vector.broadcast %14 : vector<1x5xf32> to vector<2x5xf32>
    %409 = arith.addf %407, %408 : vector<2x5xf32>
    %c7_i32 = arith.constant 7 : i32
    %410 = arith.index_cast %c7_i32 : i32 to index
    %c0_122 = arith.constant 0 : index
    %c0_123 = arith.constant 0 : index
    %411 = vector.load %arg1[%410, %c0_122, %c0_123] : memref<8x2x1xf32, #tpu.memory_space<vmem>>, vector<1x2x1xf32>
    %412 = vector.shape_cast %411 : vector<1x2x1xf32> to vector<2x1xf32>
    %413 = vector.broadcast %412 : vector<2x1xf32> to vector<2x32xf32>
    %414 = vector.broadcast %0 : vector<1x32xf32> to vector<2x32xf32>
    %415 = arith.mulf %413, %414 : vector<2x32xf32>
    %cst_124 = arith.constant dense<0.000000e+00> : vector<2x32xf32>
    %416 = tpu.matmul %409, %1, %cst_124 {dimension_numbers = #tpu.dot_dimension_numbers<[1], [0], [0], [1], [0, 0, 1, 1], [], []>} : vector<2x5xf32>, vector<5x32xf32>, vector<2x32xf32> -> vector<2x32xf32>
    %417 = arith.addf %415, %416 : vector<2x32xf32>
    %418 = vector.broadcast %2 : vector<1x32xf32> to vector<2x32xf32>
    %419 = arith.addf %417, %418 : vector<2x32xf32>
    %420 = math.cos %419 : vector<2x32xf32>
    %cst_125 = arith.constant dense<0.000000e+00> : vector<2x256xf32>
    %421 = tpu.matmul %420, %3, %cst_125 {dimension_numbers = #tpu.dot_dimension_numbers<[1], [0], [0], [1], [0, 0, 1, 1], [], []>} : vector<2x32xf32>, vector<32x256xf32>, vector<2x256xf32> -> vector<2x256xf32>
    %422 = vector.extract_strided_slice %421 {offsets = [0, 0], sizes = [2, 128], strides = [1, 1]} : vector<2x256xf32> to vector<2x128xf32>
    %423 = vector.extract_strided_slice %421 {offsets = [0, 128], sizes = [2, 128], strides = [1, 1]} : vector<2x256xf32> to vector<2x128xf32>
    %424 = arith.mulf %422, %423 : vector<2x128xf32>
    %425 = vector.extract_strided_slice %424 {offsets = [0, 0], sizes = [2, 64], strides = [1, 1]} : vector<2x128xf32> to vector<2x64xf32>
    %426 = vector.extract_strided_slice %424 {offsets = [0, 64], sizes = [2, 64], strides = [1, 1]} : vector<2x128xf32> to vector<2x64xf32>
    %427 = arith.mulf %425, %426 : vector<2x64xf32>
    %cst_126 = arith.constant dense<0.000000e+00> : vector<2x128xf32>
    %428 = tpu.matmul %427, %4, %cst_126 {dimension_numbers = #tpu.dot_dimension_numbers<[1], [0], [0], [1], [0, 0, 1, 1], [], []>} : vector<2x64xf32>, vector<64x128xf32>, vector<2x128xf32> -> vector<2x128xf32>
    %429 = arith.mulf %428, %428 : vector<2x128xf32>
    %cst_127 = arith.constant dense<0.000000e+00> : vector<2x16xf32>
    %430 = tpu.matmul %429, %5, %cst_127 {dimension_numbers = #tpu.dot_dimension_numbers<[1], [0], [0], [1], [0, 0, 1, 1], [], []>} : vector<2x128xf32>, vector<128x16xf32>, vector<2x16xf32> -> vector<2x16xf32>
    %cst_128 = arith.constant dense<0.000000e+00> : vector<2x24xf32>
    %431 = tpu.matmul %430, %6, %cst_128 {dimension_numbers = #tpu.dot_dimension_numbers<[1], [0], [0], [1], [0, 0, 1, 1], [], []>} : vector<2x16xf32>, vector<16x24xf32>, vector<2x24xf32> -> vector<2x24xf32>
    %432 = vector.broadcast %7 : vector<1x24xf32> to vector<2x24xf32>
    %433 = arith.addf %431, %432 : vector<2x24xf32>
    %434 = arith.negf %433 : vector<2x24xf32>
    %435 = math.exp %434 : vector<2x24xf32>
    %cst_129 = arith.constant 1.000000e+00 : f32
    %436 = vector.broadcast %cst_129 : f32 to vector<2x24xf32>
    %437 = arith.addf %436, %435 : vector<2x24xf32>
    %438 = arith.divf %436, %437 : vector<2x24xf32>
    %439 = vector.extract_strided_slice %438 {offsets = [0, 0], sizes = [2, 6], strides = [1, 1]} : vector<2x24xf32> to vector<2x6xf32>
    %440 = vector.extract_strided_slice %438 {offsets = [0, 6], sizes = [2, 6], strides = [1, 1]} : vector<2x24xf32> to vector<2x6xf32>
    %441 = vector.extract_strided_slice %438 {offsets = [0, 12], sizes = [2, 6], strides = [1, 1]} : vector<2x24xf32> to vector<2x6xf32>
    %442 = vector.extract_strided_slice %433 {offsets = [0, 18], sizes = [2, 6], strides = [1, 1]} : vector<2x24xf32> to vector<2x6xf32>
    %443 = math.tanh %442 : vector<2x6xf32>
    %444 = arith.mulf %439, %390 : vector<2x6xf32>
    %445 = arith.mulf %440, %443 : vector<2x6xf32>
    %446 = arith.addf %444, %445 : vector<2x6xf32>
    %447 = math.tanh %446 : vector<2x6xf32>
    %448 = arith.mulf %441, %447 : vector<2x6xf32>
    %cst_130 = arith.constant dense<0.000000e+00> : vector<2x8xf32>
    %449 = tpu.matmul %448, %8, %cst_130 {dimension_numbers = #tpu.dot_dimension_numbers<[1], [0], [0], [1], [0, 0, 1, 1], [], []>} : vector<2x6xf32>, vector<6x8xf32>, vector<2x8xf32> -> vector<2x8xf32>
    %450 = vector.broadcast %9 : vector<1x8xf32> to vector<2x8xf32>
    %451 = arith.addf %449, %450 : vector<2x8xf32>
    %452 = math.cos %451 : vector<2x8xf32>
    %cst_131 = arith.constant dense<0.000000e+00> : vector<2x64xf32>
    %453 = tpu.matmul %452, %10, %cst_131 {dimension_numbers = #tpu.dot_dimension_numbers<[1], [0], [0], [1], [0, 0, 1, 1], [], []>} : vector<2x8xf32>, vector<8x64xf32>, vector<2x64xf32> -> vector<2x64xf32>
    %454 = vector.extract_strided_slice %453 {offsets = [0, 0], sizes = [2, 32], strides = [1, 1]} : vector<2x64xf32> to vector<2x32xf32>
    %455 = vector.extract_strided_slice %453 {offsets = [0, 32], sizes = [2, 32], strides = [1, 1]} : vector<2x64xf32> to vector<2x32xf32>
    %456 = arith.mulf %454, %455 : vector<2x32xf32>
    %457 = vector.extract_strided_slice %456 {offsets = [0, 0], sizes = [2, 16], strides = [1, 1]} : vector<2x32xf32> to vector<2x16xf32>
    %458 = vector.extract_strided_slice %456 {offsets = [0, 16], sizes = [2, 16], strides = [1, 1]} : vector<2x32xf32> to vector<2x16xf32>
    %459 = arith.mulf %457, %458 : vector<2x16xf32>
    %cst_132 = arith.constant dense<0.000000e+00> : vector<2x32xf32>
    %460 = tpu.matmul %459, %11, %cst_132 {dimension_numbers = #tpu.dot_dimension_numbers<[1], [0], [0], [1], [0, 0, 1, 1], [], []>} : vector<2x16xf32>, vector<16x32xf32>, vector<2x32xf32> -> vector<2x32xf32>
    %461 = arith.mulf %460, %460 : vector<2x32xf32>
    %cst_133 = arith.constant dense<0.000000e+00> : vector<2x4xf32>
    %462 = tpu.matmul %461, %12, %cst_133 {dimension_numbers = #tpu.dot_dimension_numbers<[1], [0], [0], [1], [0, 0, 1, 1], [], []>} : vector<2x32xf32>, vector<32x4xf32>, vector<2x4xf32> -> vector<2x4xf32>
    %cst_134 = arith.constant dense<0.000000e+00> : vector<2x5xf32>
    %463 = tpu.matmul %462, %13, %cst_134 {dimension_numbers = #tpu.dot_dimension_numbers<[1], [0], [0], [1], [0, 0, 1, 1], [], []>} : vector<2x4xf32>, vector<4x5xf32>, vector<2x5xf32> -> vector<2x5xf32>
    %464 = vector.broadcast %14 : vector<1x5xf32> to vector<2x5xf32>
    %465 = arith.addf %463, %464 : vector<2x5xf32>
    %c8_i32 = arith.constant 8 : i32
    %c0_135 = arith.constant 0 : index
    %c0_136 = arith.constant 0 : index
    %466 = vector.load %arg17[%c0_135, %c0_136] : memref<6x8xf32, #tpu.memory_space<vmem>>, vector<6x8xf32>
    %cst_137 = arith.constant dense<0.000000e+00> : vector<2x8xf32>
    %467 = tpu.matmul %448, %466, %cst_137 {dimension_numbers = #tpu.dot_dimension_numbers<[1], [0], [0], [1], [0, 0, 1, 1], [], []>} : vector<2x6xf32>, vector<6x8xf32>, vector<2x8xf32> -> vector<2x8xf32>
    %c0_138 = arith.constant 0 : index
    %c0_139 = arith.constant 0 : index
    %468 = vector.load %arg18[%c0_138, %c0_139] : memref<1x8xf32, #tpu.memory_space<vmem>>, vector<1x8xf32>
    %469 = vector.broadcast %468 : vector<1x8xf32> to vector<2x8xf32>
    %470 = arith.addf %467, %469 : vector<2x8xf32>
    %471 = math.cos %470 : vector<2x8xf32>
    %c0_140 = arith.constant 0 : index
    %c0_141 = arith.constant 0 : index
    %472 = vector.load %arg19[%c0_140, %c0_141] : memref<16x32xf32, #tpu.memory_space<vmem>>, vector<16x32xf32>
    %cst_142 = arith.constant dense<0.000000e+00> : vector<2x64xf32>
    %473 = tpu.matmul %471, %10, %cst_142 {dimension_numbers = #tpu.dot_dimension_numbers<[1], [0], [0], [1], [0, 0, 1, 1], [], []>} : vector<2x8xf32>, vector<8x64xf32>, vector<2x64xf32> -> vector<2x64xf32>
    %474 = vector.extract_strided_slice %473 {offsets = [0, 0], sizes = [2, 32], strides = [1, 1]} : vector<2x64xf32> to vector<2x32xf32>
    %475 = vector.extract_strided_slice %473 {offsets = [0, 32], sizes = [2, 32], strides = [1, 1]} : vector<2x64xf32> to vector<2x32xf32>
    %476 = arith.mulf %474, %475 : vector<2x32xf32>
    %477 = vector.extract_strided_slice %476 {offsets = [0, 0], sizes = [2, 16], strides = [1, 1]} : vector<2x32xf32> to vector<2x16xf32>
    %478 = vector.extract_strided_slice %476 {offsets = [0, 16], sizes = [2, 16], strides = [1, 1]} : vector<2x32xf32> to vector<2x16xf32>
    %479 = arith.mulf %477, %478 : vector<2x16xf32>
    %cst_143 = arith.constant dense<0.000000e+00> : vector<2x32xf32>
    %480 = tpu.matmul %479, %472, %cst_143 {dimension_numbers = #tpu.dot_dimension_numbers<[1], [0], [0], [1], [0, 0, 1, 1], [], []>} : vector<2x16xf32>, vector<16x32xf32>, vector<2x32xf32> -> vector<2x32xf32>
    %481 = arith.mulf %480, %480 : vector<2x32xf32>
    %cst_144 = arith.constant dense<0.000000e+00> : vector<2x4xf32>
    %482 = tpu.matmul %481, %12, %cst_144 {dimension_numbers = #tpu.dot_dimension_numbers<[1], [0], [0], [1], [0, 0, 1, 1], [], []>} : vector<2x32xf32>, vector<32x4xf32>, vector<2x4xf32> -> vector<2x4xf32>
    %c0_145 = arith.constant 0 : index
    %c0_146 = arith.constant 0 : index
    %483 = vector.load %arg20[%c0_145, %c0_146] : memref<4x1xf32, #tpu.memory_space<vmem>>, vector<4x1xf32>
    %cst_147 = arith.constant dense<0.000000e+00> : vector<2x1xf32>
    %484 = tpu.matmul %482, %483, %cst_147 {dimension_numbers = #tpu.dot_dimension_numbers<[1], [0], [0], [1], [0, 0, 1, 1], [], []>} : vector<2x4xf32>, vector<4x1xf32>, vector<2x1xf32> -> vector<2x1xf32>
    %c0_148 = arith.constant 0 : index
    %c0_149 = arith.constant 0 : index
    %485 = vector.load %arg21[%c0_148, %c0_149] : memref<1x1xf32, #tpu.memory_space<vmem>>, vector<1x1xf32>
    %486 = vector.broadcast %485 : vector<1x1xf32> to vector<2x1xf32>
    %487 = arith.addf %484, %486 : vector<2x1xf32>
    %c0_150 = arith.constant 0 : index
    %c0_151 = arith.constant 0 : index
    %488 = vector.load %arg22[%c0_150, %c0_151] : memref<2x1xf32, #tpu.memory_space<vmem>>, vector<2x1xf32>
    tpu.vector_store %arg22[%c0_150, %c0_151], %487 {strides = array<i32>} : memref<2x1xf32, #tpu.memory_space<vmem>>, vector<2x1xf32>,
    return
  }
  func.func @transform_0(%arg0: i32) -> (i32, i32, i32) {
    %c0_i32 = arith.constant 0 : i32
    %c0_i32_0 = arith.constant 0 : i32
    %c0_i32_1 = arith.constant 0 : i32
    return %c0_i32, %arg0, %c0_i32_0 : i32, i32, i32
  }
  func.func @transform_1(%arg0: i32) -> (i32, i32) {
    %c0_i32 = arith.constant 0 : i32
    %c0_i32_0 = arith.constant 0 : i32
    %c0_i32_1 = arith.constant 0 : i32
    return %c0_i32, %c0_i32_0 : i32, i32
  }
  func.func @transform_2(%arg0: i32) -> (i32, i32) {
    %c0_i32 = arith.constant 0 : i32
    %c0_i32_0 = arith.constant 0 : i32
    %c0_i32_1 = arith.constant 0 : i32
    return %c0_i32, %c0_i32_0 : i32, i32
  }
  func.func @transform_3(%arg0: i32) -> (i32, i32) {
    %c0_i32 = arith.constant 0 : i32
    %c0_i32_0 = arith.constant 0 : i32
    %c0_i32_1 = arith.constant 0 : i32
    return %c0_i32, %c0_i32_0 : i32, i32
  }
  func.func @transform_4(%arg0: i32) -> (i32, i32) {
    %c0_i32 = arith.constant 0 : i32
    %c0_i32_0 = arith.constant 0 : i32
    %c0_i32_1 = arith.constant 0 : i32
    return %c0_i32, %c0_i32_0 : i32, i32
  }
  func.func @transform_5(%arg0: i32) -> (i32, i32) {
    %c0_i32 = arith.constant 0 : i32
    %c0_i32_0 = arith.constant 0 : i32
    %c0_i32_1 = arith.constant 0 : i32
    return %c0_i32, %c0_i32_0 : i32, i32
  }
  func.func @transform_6(%arg0: i32) -> (i32, i32) {
    %c0_i32 = arith.constant 0 : i32
    %c0_i32_0 = arith.constant 0 : i32
    %c0_i32_1 = arith.constant 0 : i32
    return %c0_i32, %c0_i32_0 : i32, i32
  }
  func.func @transform_7(%arg0: i32) -> (i32, i32) {
    %c0_i32 = arith.constant 0 : i32
    %c0_i32_0 = arith.constant 0 : i32
    %c0_i32_1 = arith.constant 0 : i32
    return %c0_i32, %c0_i32_0 : i32, i32
  }
  func.func @transform_8(%arg0: i32) -> (i32, i32) {
    %c0_i32 = arith.constant 0 : i32
    %c0_i32_0 = arith.constant 0 : i32
    %c0_i32_1 = arith.constant 0 : i32
    return %c0_i32, %c0_i32_0 : i32, i32
  }
  func.func @transform_9(%arg0: i32) -> (i32, i32) {
    %c0_i32 = arith.constant 0 : i32
    %c0_i32_0 = arith.constant 0 : i32
    %c0_i32_1 = arith.constant 0 : i32
    return %c0_i32, %c0_i32_0 : i32, i32
  }
  func.func @transform_10(%arg0: i32) -> (i32, i32) {
    %c0_i32 = arith.constant 0 : i32
    %c0_i32_0 = arith.constant 0 : i32
    %c0_i32_1 = arith.constant 0 : i32
    return %c0_i32, %c0_i32_0 : i32, i32
  }
  func.func @transform_11(%arg0: i32) -> (i32, i32) {
    %c0_i32 = arith.constant 0 : i32
    %c0_i32_0 = arith.constant 0 : i32
    %c0_i32_1 = arith.constant 0 : i32
    return %c0_i32, %c0_i32_0 : i32, i32
  }
  func.func @transform_12(%arg0: i32) -> (i32, i32) {
    %c0_i32 = arith.constant 0 : i32
    %c0_i32_0 = arith.constant 0 : i32
    %c0_i32_1 = arith.constant 0 : i32
    return %c0_i32, %c0_i32_0 : i32, i32
  }
  func.func @transform_13(%arg0: i32) -> (i32, i32) {
    %c0_i32 = arith.constant 0 : i32
    %c0_i32_0 = arith.constant 0 : i32
    %c0_i32_1 = arith.constant 0 : i32
    return %c0_i32, %c0_i32_0 : i32, i32
  }
  func.func @transform_14(%arg0: i32) -> (i32, i32) {
    %c0_i32 = arith.constant 0 : i32
    %c0_i32_0 = arith.constant 0 : i32
    %c0_i32_1 = arith.constant 0 : i32
    return %c0_i32, %c0_i32_0 : i32, i32
  }
  func.func @transform_15(%arg0: i32) -> (i32, i32) {
    %c0_i32 = arith.constant 0 : i32
    %c0_i32_0 = arith.constant 0 : i32
    %c0_i32_1 = arith.constant 0 : i32
    return %c0_i32, %c0_i32_0 : i32, i32
  }
  func.func @transform_16(%arg0: i32) -> (i32, i32) {
    %c0_i32 = arith.constant 0 : i32
    %c0_i32_0 = arith.constant 0 : i32
    %c0_i32_1 = arith.constant 0 : i32
    return %c0_i32, %c0_i32_0 : i32, i32
  }
  func.func @transform_17(%arg0: i32) -> (i32, i32) {
    %c0_i32 = arith.constant 0 : i32
    %c0_i32_0 = arith.constant 0 : i32
    %c0_i32_1 = arith.constant 0 : i32
    return %c0_i32, %c0_i32_0 : i32, i32
  }
  func.func @transform_18(%arg0: i32) -> (i32, i32) {
    %c0_i32 = arith.constant 0 : i32
    %c0_i32_0 = arith.constant 0 : i32
    %c0_i32_1 = arith.constant 0 : i32
    return %c0_i32, %c0_i32_0 : i32, i32
  }
  func.func @transform_19(%arg0: i32) -> (i32, i32) {
    %c0_i32 = arith.constant 0 : i32
    %c0_i32_0 = arith.constant 0 : i32
    %c0_i32_1 = arith.constant 0 : i32
    return %c0_i32, %c0_i32_0 : i32, i32
  }
  func.func @transform_20(%arg0: i32) -> (i32, i32) {
    %c0_i32 = arith.constant 0 : i32
    %c0_i32_0 = arith.constant 0 : i32
    %c0_i32_1 = arith.constant 0 : i32
    return %c0_i32, %c0_i32_0 : i32, i32
  }
  func.func @transform_21(%arg0: i32) -> (i32, i32) {
    %c0_i32 = arith.constant 0 : i32
    %c0_i32_0 = arith.constant 0 : i32
    return %arg0, %c0_i32 : i32, i32
  }
}

</mosaic_0001>

<llo_original>
// kernel: tpu_custom_call.1
$region0: #{tpu_custom_call.1}
  #allocation0 [shape = 'u32[]', space=smem, size = 0x4, offset = 0x4, fixed_abs, tag = 'smem constant byte address 0x4 - core index']
  #allocation1 [shape = 'u32[144,128]{1,0:T(1,128)}', space=vmem, size = 0x12000, scoped, tag = 'internal scratch']
  #allocation2 [shape = 'f32[1,1]{1,0:T(1,128)S(1)}', space=vmem, size = 0x200, scoped, tag = 'scoped memory for tpu_custom_call.1']
  %s0 = inlined_call_operand.vmem [shape: f32[8,2,1], index: 0, kind: input, shape index: {}]
  %s1 = inlined_call_operand.vmem [shape: f32[1,32], index: 1, kind: input, shape index: {}]
  %s2 = inlined_call_operand.vmem [shape: f32[5,32], index: 2, kind: input, shape index: {}]
  %s3 = inlined_call_operand.hbm [shape: f32[1,32], index: 3, kind: input, shape index: {}]
  %s4 = inlined_call_operand.vmem [shape: f32[32,256], index: 4, kind: input, shape index: {}]
  %s5 = inlined_call_operand.vmem [shape: f32[64,128], index: 5, kind: input, shape index: {}]
  %s6 = inlined_call_operand.vmem [shape: f32[128,16], index: 6, kind: input, shape index: {}]
  %s7 = inlined_call_operand.vmem [shape: f32[16,24], index: 7, kind: input, shape index: {}]
  %s8 = inlined_call_operand.vmem [shape: f32[1,24], index: 8, kind: input, shape index: {}]
  %s9 = inlined_call_operand.vmem [shape: f32[6,8], index: 9, kind: input, shape index: {}]
  %s10 = inlined_call_operand.vmem [shape: f32[1,8], index: 10, kind: input, shape index: {}]
  %s11 = inlined_call_operand.vmem [shape: f32[8,64], index: 11, kind: input, shape index: {}]
  %s12 = inlined_call_operand.vmem [shape: f32[16,32], index: 12, kind: input, shape index: {}]
  %s13 = inlined_call_operand.vmem [shape: f32[32,4], index: 13, kind: input, shape index: {}]
  %s14 = inlined_call_operand.vmem [shape: f32[4,5], index: 14, kind: input, shape index: {}]
  %s15 = inlined_call_operand.vmem [shape: f32[1,5], index: 15, kind: input, shape index: {}]
  %s16 = inlined_call_operand.vmem [shape: f32[6,8], index: 16, kind: input, shape index: {}]
  %s17 = inlined_call_operand.vmem [shape: f32[1,8], index: 17, kind: input, shape index: {}]
  %s18 = inlined_call_operand.vmem [shape: f32[16,32], index: 18, kind: input, shape index: {}]
  %s19 = inlined_call_operand.vmem [shape: f32[4,1], index: 19, kind: input, shape index: {}]
  %s20 = inlined_call_operand.<no memory space> [shape: f32[1,1], index: 20, kind: input, shape index: {}]
  %s21 = inlined_call_operand.vmem [shape: f32[2,1], index: 21, kind: output, shape index: {}]
  %s22 = sld [smem:[#allocation0]]
  $region98: #{tpu_custom_call.1} parent=0
    _
  %s24 = ssub.s32 1, %s22
  %s25 = scalar_select 0, %s24, %s22
  %v26 = vstv %s20
  %27 = vst [vmem:[#allocation2] sm:$0x1] %v26
  $region1: #{tpu_custom_call.1} parent=0
    #allocation3 [shape = 'u8[512]{0}', space=vmem, size = 0x400, scoped, tag = 'input window, operand 3, single buffered']
    #allocation4 [shape = 's32[1]{0}', space=sflag, size = 0x4, scoped, tag = 'scoped memory for tpu_custom_call.1']
    %28 = vsyncpa [#allocation4], 0
    // Predicated region
    $region2: #{tpu_custom_call.1} parent=1 // pred_check
      _
    $region3: #{tpu_custom_call.1} parent=1 // pred_check_branch
      %30 = sbr.rel (0) target = $region5
    $region4: #{tpu_custom_call.1} parent=1 // pred_region
      _
    $region5: #{tpu_custom_call.1} parent=1 // pred_fallthru
      _
    // Predicated region
    $region6: #{tpu_custom_call.1} parent=1 // pred_check
      _
    $region7: #{tpu_custom_call.1} parent=1 // pred_check_branch
      %32 = sbr.rel (0) target = $region9
    $region8: #{tpu_custom_call.1} parent=1 // pred_region
      _
    $region9: #{tpu_custom_call.1} parent=1 // pred_fallthru
      _
    // Predicated region
    $region10: #{tpu_custom_call.1} parent=1 // pred_check
      _
    $region11: #{tpu_custom_call.1} parent=1 // pred_check_branch
      %34 = sbr.rel (0) target = $region13
    $region12: #{tpu_custom_call.1} parent=1 // pred_region
      _
    $region13: #{tpu_custom_call.1} parent=1 // pred_fallthru
      _
    // Predicated region
    $region14: #{tpu_custom_call.1} parent=1 // pred_check
      _
    $region15: #{tpu_custom_call.1} parent=1 // pred_check_branch
      %36 = sbr.rel (0) target = $region17
    $region16: #{tpu_custom_call.1} parent=1 // pred_region
      %s38 = ssub.s32 16, 16
      %39 = vsyncadd [#allocation4], %s38
      %s41 = sshll.u32 [#allocation3], 4
      %s42 = int_to_ptr.vmem [resolvable:$true] %s41
      %44 = dma.hbm_to_vmem [thread:$0]  %s3, 16, %s42, [#allocation4]
    $region17: #{tpu_custom_call.1} parent=1 // pred_fallthru
      _
    // Predicated region
    $region18: #{tpu_custom_call.1} parent=1 // pred_check
      _
    $region19: #{tpu_custom_call.1} parent=1 // pred_check_branch
      %46 = sbr.rel (0) target = $region21
    $region20: #{tpu_custom_call.1} parent=1 // pred_region
      _
    $region21: #{tpu_custom_call.1} parent=1 // pred_fallthru
      _
    // Predicated region
    $region22: #{tpu_custom_call.1} parent=1 // pred_check
      _
    $region23: #{tpu_custom_call.1} parent=1 // pred_check_branch
      %48 = sbr.rel (0) target = $region25
    $region24: #{tpu_custom_call.1} parent=1 // pred_region
      _
    $region25: #{tpu_custom_call.1} parent=1 // pred_fallthru
      _
    // Predicated region
    $region26: #{tpu_custom_call.1} parent=1 // pred_check
      _
    $region27: #{tpu_custom_call.1} parent=1 // pred_check_branch
      %50 = sbr.rel (0) target = $region29
    $region28: #{tpu_custom_call.1} parent=1 // pred_region
      _
    $region29: #{tpu_custom_call.1} parent=1 // pred_fallthru
      _
    // Predicated region
    $region30: #{tpu_custom_call.1} parent=1 // pred_check
      _
    $region31: #{tpu_custom_call.1} parent=1 // pred_check_branch
      %52 = sbr.rel (0) target = $region33
    $region32: #{tpu_custom_call.1} parent=1 // pred_region
      _
    $region33: #{tpu_custom_call.1} parent=1 // pred_fallthru
      _
    // Predicated region
    $region34: #{tpu_custom_call.1} parent=1 // pred_check
      _
    $region35: #{tpu_custom_call.1} parent=1 // pred_check_branch
      %54 = sbr.rel (0) target = $region37
    $region36: #{tpu_custom_call.1} parent=1 // pred_region
      _
    $region37: #{tpu_custom_call.1} parent=1 // pred_fallthru
      _
    // Predicated region
    $region38: #{tpu_custom_call.1} parent=1 // pred_check
      _
    $region39: #{tpu_custom_call.1} parent=1 // pred_check_branch
      %56 = sbr.rel (0) target = $region41
    $region40: #{tpu_custom_call.1} parent=1 // pred_region
      _
    $region41: #{tpu_custom_call.1} parent=1 // pred_fallthru
      _
    // Predicated region
    $region42: #{tpu_custom_call.1} parent=1 // pred_check
      _
    $region43: #{tpu_custom_call.1} parent=1 // pred_check_branch
      %58 = sbr.rel (0) target = $region45
    $region44: #{tpu_custom_call.1} parent=1 // pred_region
      _
    $region45: #{tpu_custom_call.1} parent=1 // pred_fallthru
      _
    // Predicated region
    $region46: #{tpu_custom_call.1} parent=1 // pred_check
      _
    $region47: #{tpu_custom_call.1} parent=1 // pred_check_branch
      %60 = sbr.rel (0) target = $region49
    $region48: #{tpu_custom_call.1} parent=1 // pred_region
      _
    $region49: #{tpu_custom_call.1} parent=1 // pred_fallthru
      _
    // Predicated region
    $region50: #{tpu_custom_call.1} parent=1 // pred_check
      _
    $region51: #{tpu_custom_call.1} parent=1 // pred_check_branch
      %62 = sbr.rel (0) target = $region53
    $region52: #{tpu_custom_call.1} parent=1 // pred_region
      _
    $region53: #{tpu_custom_call.1} parent=1 // pred_fallthru
      _
    // Predicated region
    $region54: #{tpu_custom_call.1} parent=1 // pred_check
      _
    $region55: #{tpu_custom_call.1} parent=1 // pred_check_branch
      %64 = sbr.rel (0) target = $region57
    $region56: #{tpu_custom_call.1} parent=1 // pred_region
      _
    $region57: #{tpu_custom_call.1} parent=1 // pred_fallthru
      _
    // Predicated region
    $region58: #{tpu_custom_call.1} parent=1 // pred_check
      _
    $region59: #{tpu_custom_call.1} parent=1 // pred_check_branch
      %66 = sbr.rel (0) target = $region61
    $region60: #{tpu_custom_call.1} parent=1 // pred_region
      _
    $region61: #{tpu_custom_call.1} parent=1 // pred_fallthru
      _
    // Predicated region
    $region62: #{tpu_custom_call.1} parent=1 // pred_check
      _
    $region63: #{tpu_custom_call.1} parent=1 // pred_check_branch
      %68 = sbr.rel (0) target = $region65
    $region64: #{tpu_custom_call.1} parent=1 // pred_region
      _
    $region65: #{tpu_custom_call.1} parent=1 // pred_fallthru
      _
    // Predicated region
    $region66: #{tpu_custom_call.1} parent=1 // pred_check
      _
    $region67: #{tpu_custom_call.1} parent=1 // pred_check_branch
      %70 = sbr.rel (0) target = $region69
    $region68: #{tpu_custom_call.1} parent=1 // pred_region
      _
    $region69: #{tpu_custom_call.1} parent=1 // pred_fallthru
      _
    // Predicated region
    $region70: #{tpu_custom_call.1} parent=1 // pred_check
      _
    $region71: #{tpu_custom_call.1} parent=1 // pred_check_branch
      %72 = sbr.rel (0) target = $region73
    $region72: #{tpu_custom_call.1} parent=1 // pred_region
      _
    $region73: #{tpu_custom_call.1} parent=1 // pred_fallthru
      _
    // Predicated region
    $region74: #{tpu_custom_call.1} parent=1 // pred_check
      _
    $region75: #{tpu_custom_call.1} parent=1 // pred_check_branch
      %74 = sbr.rel (0) target = $region77
    $region76: #{tpu_custom_call.1} parent=1 // pred_region
      _
    $region77: #{tpu_custom_call.1} parent=1 // pred_fallthru
      _
    // Predicated region
    $region78: #{tpu_custom_call.1} parent=1 // pred_check
      _
    $region79: #{tpu_custom_call.1} parent=1 // pred_check_branch
      %76 = sbr.rel (0) target = $region81
    $region80: #{tpu_custom_call.1} parent=1 // pred_region
      _
    $region81: #{tpu_custom_call.1} parent=1 // pred_fallthru
      _
    // Predicated region
    $region82: #{tpu_custom_call.1} parent=1 // pred_check
      _
    $region83: #{tpu_custom_call.1} parent=1 // pred_check_branch
      %78 = sbr.rel (0) target = $region85
    $region84: #{tpu_custom_call.1} parent=1 // pred_region
      _
    $region85: #{tpu_custom_call.1} parent=1 // pred_fallthru
      _
    // Predicated region
    $region86: #{tpu_custom_call.1} parent=1 // pred_check
      _
    $region87: #{tpu_custom_call.1} parent=1 // pred_check_branch
      %80 = sbr.rel (0) target = $region89
    $region88: #{tpu_custom_call.1} parent=1 // pred_region
      %81 = dma.done [#allocation4], 16
    $region89: #{tpu_custom_call.1} parent=1 // pred_fallthru
      _
    %v82 = vld [vmem:[%s1] sm:$0x1]
    %v83 = vld [vmem:[%s2] sm:$0x1f]
    %v84 = vld [vmem:[#allocation3] sm:$0x1]
    %v85 = vld [vmem:[%s4] sm:$0xff]
    %v86 = vld [vmem:[%s4 + $0x8] sm:$0xff]
    %v87 = vld [vmem:[%s4 + $0x10] sm:$0xff]
    %v88 = vld [vmem:[%s4 + $0x18] sm:$0xff]
    %v89 = vld [vmem:[%s4 + $0x20] sm:$0xff]
    %v90 = vld [vmem:[%s4 + $0x28] sm:$0xff]
    %v91 = vld [vmem:[%s4 + $0x30] sm:$0xff]
    %v92 = vld [vmem:[%s4 + $0x38] sm:$0xff]
    %v93 = vld [vmem:[%s5] sm:$0xff]
    %v94 = vld [vmem:[%s5 + $0x8] sm:$0xff]
    %v95 = vld [vmem:[%s5 + $0x10] sm:$0xff]
    %v96 = vld [vmem:[%s5 + $0x18] sm:$0xff]
    %v97 = vld [vmem:[%s5 + $0x20] sm:$0xff]
    %v98 = vld [vmem:[%s5 + $0x28] sm:$0xff]
    %v99 = vld [vmem:[%s5 + $0x30] sm:$0xff]
    %v100 = vld [vmem:[%s5 + $0x38] sm:$0xff]
    %v101 = vld [vmem:[%s6] sm:$0xff]
    %v102 = vld [vmem:[%s6 + $0x8] sm:$0xff]
    %v103 = vld [vmem:[%s6 + $0x10] sm:$0xff]
    %v104 = vld [vmem:[%s6 + $0x18] sm:$0xff]
    %v105 = vld [vmem:[%s6 + $0x20] sm:$0xff]
    %v106 = vld [vmem:[%s6 + $0x28] sm:$0xff]
    %v107 = vld [vmem:[%s6 + $0x30] sm:$0xff]
    %v108 = vld [vmem:[%s6 + $0x38] sm:$0xff]
    %v109 = vld [vmem:[%s6 + $0x40] sm:$0xff]
    %v110 = vld [vmem:[%s6 + $0x48] sm:$0xff]
    %v111 = vld [vmem:[%s6 + $0x50] sm:$0xff]
    %v112 = vld [vmem:[%s6 + $0x58] sm:$0xff]
    %v113 = vld [vmem:[%s6 + $0x60] sm:$0xff]
    %v114 = vld [vmem:[%s6 + $0x68] sm:$0xff]
    %v115 = vld [vmem:[%s6 + $0x70] sm:$0xff]
    %v116 = vld [vmem:[%s6 + $0x78] sm:$0xff]
    %v117 = vld [vmem:[%s7] sm:$0xff]
    %v118 = vld [vmem:[%s7 + $0x8] sm:$0xff]
    %v119 = vld [vmem:[%s8] sm:$0x1]
    %v120 = vld [vmem:[%s9] sm:$0x3f]
    %v121 = vld [vmem:[%s10] sm:$0x1]
    %v122 = vld [vmem:[%s11] sm:$0xff]
    %v123 = vld [vmem:[%s12] sm:$0xff]
    %v124 = vld [vmem:[%s12 + $0x8] sm:$0xff]
    %v125 = vld [vmem:[%s13] sm:$0xff]
    %v126 = vld [vmem:[%s13 + $0x8] sm:$0xff]
    %v127 = vld [vmem:[%s13 + $0x10] sm:$0xff]
    %v128 = vld [vmem:[%s13 + $0x18] sm:$0xff]
    %v129 = vld [vmem:[%s14] sm:$0xf]
    %v130 = vld [vmem:[%s15] sm:$0x1]
    %v131 = vld [vmem:[%s0] sm:$0x3]
    %133 = vset.pattern.permute.xlu0 0
    %134 = vperm.xlu0 %133, %v131
    %v135 = vpop.permute.xlu0 %134
    %v138 = vlaneseq
    %v139 = vshrl.u32 %v138, 7
    %v140 = vsub.s32 0, %v139
    %v141 = vrot.slane %v82, %v140
    %v143 = vmul.f32 %v135, %v141
    %vm144 = vcmask 39936
    %v146 = vsel %vm144, 0.0, 0
    %vm148 = vcmask 1044480
    %v150 = vsel %vm148, %v83, 0
    %152 = vmatprep.subr.mxu0 0.0
    %153 = vmatpush1.msra.mxu0 %v150
    %154 = vmatprep.subr.mxu0 0.0
    %155 = vmatpush1.msra.mxu0 0.0
    %156 = vmatprep.subr.mxu0 0.0
    %157 = vmatpush1.msra.mxu0 0.0
    %158 = vmatprep.subr.mxu0 0.0
    %159 = vmatpush1.msra.mxu0 0.0
    %160 = vmatprep.subr.mxu0 0.0
    %161 = vmatpush1.msra.mxu0 0.0
    %162 = vmatprep.subr.mxu0 0.0
    %163 = vmatpush1.msra.mxu0 0.0
    %164 = vmatprep.subr.mxu0 0.0
    %165 = vmatpush1.msra.mxu0 0.0
    %166 = vmatprep.subr.mxu0 0.0
    %167 = vmatpush1.msra.mxu0 0.0
    %168 = vmatprep.subr.mxu0 0.0
    %169 = vmatpush1.msra.mxu0 0.0
    %170 = vmatprep.subr.mxu0 0.0
    %171 = vmatpush1.msra.mxu0 0.0
    %172 = vmatprep.subr.mxu0 0.0
    %173 = vmatpush1.msra.mxu0 0.0
    %174 = vmatprep.subr.mxu0 0.0
    %175 = vmatpush1.msra.mxu0 0.0
    %176 = vmatprep.subr.mxu0 0.0
    %177 = vmatpush1.msra.mxu0 0.0
    %178 = vmatprep.subr.mxu0 0.0
    %179 = vmatpush1.msra.mxu0 0.0
    %180 = vmatprep.subr.mxu0 0.0
    %181 = vmatpush1.msra.mxu0 0.0
    %182 = vmatprep.subr.mxu0 0.0
    %183 = vmatpush1.msra.mxu0 0.0
    %184 = vmatprep.subr.mxu0 0.0
    %185 = vmatpush1.msra.mxu0 0.0
    %186 = vmatprep.subr.mxu0 0.0
    %187 = vmatpush1.msra.mxu0 0.0
    %188 = vmatprep.subr.mxu0 0.0
    %189 = vmatpush1.msra.mxu0 0.0
    %190 = vmatprep.subr.mxu0 0.0
    %191 = vmatpush1.msra.mxu0 0.0
    %192 = vmatprep.subr.mxu0 0.0
    %193 = vmatpush1.msra.mxu0 0.0
    %194 = vmatprep.subr.mxu0 0.0
    %195 = vmatpush1.msra.mxu0 0.0
    %196 = vmatprep.subr.mxu0 0.0
    %197 = vmatpush1.msra.mxu0 0.0
    %198 = vmatprep.subr.mxu0 0.0
    %199 = vmatpush1.msra.mxu0 0.0
    %200 = vmatprep.subr.mxu0 0.0
    %201 = vmatpush1.msra.mxu0 0.0
    %202 = vmatprep.subr.mxu0 0.0
    %203 = vmatpush1.msra.mxu0 0.0
    %204 = vmatprep.subr.mxu0 0.0
    %205 = vmatpush1.msra.mxu0 0.0
    %206 = vmatprep.subr.mxu0 0.0
    %207 = vmatpush1.msra.mxu0 0.0
    %208 = vmatprep.subr.mxu0 0.0
    %209 = vmatpush1.msra.mxu0 0.0
    %210 = vmatprep.subr.mxu0 0.0
    %211 = vmatpush1.msra.mxu0 0.0
    %212 = vmatprep.subr.mxu0 0.0
    %213 = vmatpush1.msra.mxu0 0.0
    %214 = vmatprep.subr.mxu0 0.0
    %215 = vmatpush1.msra.mxu0 0.0
    %216 = vmatprep.mubr.f32.mxu0 0.0
    %217 = vmatmul.mubr.f32.gmra.mrb[0].mxu0 %v146
    %v218 = vpop.f32.mrb[0].mxu0
    %v219 = vadd.f32 0.0, %v218
    %v220 = vpop.f32.mrb[0].mxu0
    %221 = vdwg.mxu0
    %v222 = vadd.f32 %v143, %v219
    %v224 = vlaneseq
    %v225 = vshrl.u32 %v224, 7
    %v226 = vsub.s32 0, %v225
    %v227 = vrot.slane %v84, %v226
    %v229 = vadd.f32 %v222, %v227
    %v230 = vand.u32 2147483647, %v229
    %vm231 = vcmp.le.f32.partialorder %v230, 0.7853982
    %vm232 = vcmp.lt.s32.totalorder %v229, 0
    %v233 = vand.u32 %v229, 2139095040
    %v234 = vshrl.u32 %v233, 23
    %v235 = vsub.s32 %v234, 127
    %v236 = vand.u32 2147483647, %v229
    %v237 = vand.u32 %v236, 8388607
    %v238 = vor.u32 %v237, 8388608
    %v239 = vsub.s32 0, %v238
    %v240 = vadd.s32 %v235, 1
    %vm241 = vcmp.gt.s32.totalorder %v240, 0
    %v242 = vsel %vm241, %v240, 0
    %v243 = vshrl.u32 %v242, 5
    %v244 = vand.u32 %v242, 31
    %v245 = vsub.s32 32, %v244
    %v246 = vshrl.u32 683565275, %v245
    %v247 = vshll.u32 683565275, %v244
    %v248 = vshrl.u32 2475754826, %v245
    %v249 = vor.u32 %v247, %v248
    %v250 = vshll.u32 2475754826, %v244
    %v251 = vshrl.u32 2131351028, %v245
    %v252 = vor.u32 %v250, %v251
    %v253 = vshll.u32 2131351028, %v244
    %v254 = vshrl.u32 2102212464, %v245
    %v255 = vor.u32 %v253, %v254
    %v256 = vshll.u32 2102212464, %v244
    %v257 = vshrl.u32 920167782, %v245
    %v258 = vor.u32 %v256, %v257
    %v259 = vshll.u32 920167782, %v244
    %v260 = vshrl.u32 1326507024, %v245
    %v261 = vor.u32 %v259, %v260
    %vm262 = vcmp.lt.s32.totalorder %v243, 1
    %vm263 = vcmp.lt.s32.totalorder %v243, 2
    %vm264 = vcmp.lt.s32.totalorder %v243, 3
    %vm265 = vcmp.lt.s32.totalorder %v243, 4
    %v266 = vsel %vm262, %v246, %v249
    %v267 = vsel %vm265, %v255, 2102212464
    %v268 = vsel %vm264, %v252, %v267
    %v269 = vsel %vm263, %v266, %v268
    %v270 = vsel %vm262, %v249, %v252
    %v271 = vsel %vm265, %v258, 920167782
    %v272 = vsel %vm264, %v255, %v271
    %v273 = vsel %vm263, %v270, %v272
    %v274 = vsel %vm262, %v252, %v255
    %v275 = vsel %vm265, %v261, 1326507024
    %v276 = vsel %vm264, %v258, %v275
    %v277 = vsel %vm263, %v274, %v276
    %v278 = vshll.u32 %v238, 8
    %v279 = vmul.u32.u64.compose %v278, %v277
    %v280 = vextract.low.u32 %v279
    %v281 = vextract.high.u32 %v279
    %v282 = vmul.u32.u64.compose %v278, %v273
    %v283 = vextract.low.u32 %v282
    %v284 = vextract.high.u32 %v282
    %v285 = vmul.u32 %v278, %v269
    %v286 = vadd.s32 %v281, %v283
    %vm287 = vc.u32 %v281, %v283
    %v288 = vadd.s32 %v284, 1
    %v289 = vsel %vm287, %v288, %v284
    %v290 = vadd.s32 %v285, %v289
    %v291 = vadd.s32 %v290, 536870912
    %v292 = vshrl.u32 %v291, 30
    %v293 = vshll.u32 %v292, 30
    %v294 = vsub.s32 %v290, %v293
    %vm295 = vcmp.lt.s32.totalorder %v294, 0
    %v296 = vsub.s32 0, %v294
    %v297 = vsel %vm295, %v296, %v294
    %v298 = vclz %v297
    %v299 = vsub.s32 %v298, 2
    %vm300 = vcmp.gt.s32.totalorder 0, %v299
    %v301 = vsel %vm300, 0, %v299
    %v302 = vsub.s32 32, %v301
    %v303 = vshll.u32 %v294, %v301
    %v304 = vshrl.u32 %v286, %v302
    %v305 = vor.u32 %v303, %v304
    %v306 = vsub.s32 4294967266, %v301
    %v307 = vadd.s32 %v306, 127
    %v308 = vshll.u32 %v307, 23
    %v309 = vor.u32 4788187, %v308
    %v310 = vand.u32 2147483647, %v309
    %v312 = vcvt.s32.f32 %v305
    %v313 = vmul.f32 %v312, %v310
    %v314 = vxor.u32 %v313, 2147483648
    %v315 = vsel %vm232, %v314, %v313
    %v316 = vsub.s32 4, %v292
    %v317 = vsel %vm232, %v316, %v292
    %v318 = vsel %vm231, %v229, %v315
    %v319 = vsel %vm231, 0, %v317
    %v320 = vcosq.f32.pop %v318
    %v321 = vsinq.f32.pop %v318
    %vm322 = vweird.f32 %v229
    %v323 = vand.u32 %v319, 3
    %vm324 = vcmp.lt.s32.totalorder %v323, 2
    %vm325 = vcmp.eq.s32.totalorder %v323, 0
    %v326 = vxor.u32 %v321, 2147483648
    %v327 = vsel %vm325, %v320, %v326
    %vm328 = vcmp.eq.s32.totalorder %v323, 2
    %v329 = vxor.u32 %v320, 2147483648
    %v330 = vsel %vm328, %v329, %v321
    %v331 = vsel %vm324, %v327, %v330
    %v332 = vsel %vm322, nan, %v331
    %vm333 = vcmask 261120
    %v335 = vsel %vm333, %v332, 0
    %337 = vmatprep.subr.mxu0 %v86
    %338 = vmatpush1.msra.mxu0 %v85
    %339 = vmatprep.subr.mxu0 %v88
    %340 = vmatpush1.msra.mxu0 %v87
    %341 = vmatprep.subr.mxu0 %v90
    %342 = vmatpush1.msra.mxu0 %v89
    %343 = vmatprep.subr.mxu0 %v92
    %344 = vmatpush1.msra.mxu0 %v91
    %345 = vmatprep.subr.mxu0 0.0
    %346 = vmatpush1.msra.mxu0 0.0
    %347 = vmatprep.subr.mxu0 0.0
    %348 = vmatpush1.msra.mxu0 0.0
    %349 = vmatprep.subr.mxu0 0.0
    %350 = vmatpush1.msra.mxu0 0.0
    %351 = vmatprep.subr.mxu0 0.0
    %352 = vmatpush1.msra.mxu0 0.0
    %353 = vmatprep.subr.mxu0 0.0
    %354 = vmatpush1.msra.mxu0 0.0
    %355 = vmatprep.subr.mxu0 0.0
    %356 = vmatpush1.msra.mxu0 0.0
    %357 = vmatprep.subr.mxu0 0.0
    %358 = vmatpush1.msra.mxu0 0.0
    %359 = vmatprep.subr.mxu0 0.0
    %360 = vmatpush1.msra.mxu0 0.0
    %361 = vmatprep.subr.mxu0 0.0
    %362 = vmatpush1.msra.mxu0 0.0
    %363 = vmatprep.subr.mxu0 0.0
    %364 = vmatpush1.msra.mxu0 0.0
    %365 = vmatprep.subr.mxu0 0.0
    %366 = vmatpush1.msra.mxu0 0.0
    %367 = vmatprep.subr.mxu0 0.0
    %368 = vmatpush1.msra.mxu0 0.0
    %369 = vmatprep.subr.mxu0 0.0
    %370 = vmatpush1.msra.mxu0 0.0
    %371 = vmatprep.subr.mxu0 0.0
    %372 = vmatpush1.msra.mxu0 0.0
    %373 = vmatprep.subr.mxu0 0.0
    %374 = vmatpush1.msra.mxu0 0.0
    %375 = vmatprep.subr.mxu0 0.0
    %376 = vmatpush1.msra.mxu0 0.0
    %377 = vmatprep.subr.mxu0 0.0
    %378 = vmatpush1.msra.mxu0 0.0
    %379 = vmatprep.subr.mxu0 0.0
    %380 = vmatpush1.msra.mxu0 0.0
    %381 = vmatprep.subr.mxu0 0.0
    %382 = vmatpush1.msra.mxu0 0.0
    %383 = vmatprep.subr.mxu0 0.0
    %384 = vmatpush1.msra.mxu0 0.0
    %385 = vmatprep.subr.mxu0 0.0
    %386 = vmatpush1.msra.mxu0 0.0
    %387 = vmatprep.subr.mxu0 0.0
    %388 = vmatpush1.msra.mxu0 0.0
    %389 = vmatprep.subr.mxu0 0.0
    %390 = vmatpush1.msra.mxu0 0.0
    %391 = vmatprep.subr.mxu0 0.0
    %392 = vmatpush1.msra.mxu0 0.0
    %393 = vmatprep.subr.mxu0 0.0
    %394 = vmatpush1.msra.mxu0 0.0
    %395 = vmatprep.subr.mxu0 0.0
    %396 = vmatpush1.msra.mxu0 0.0
    %397 = vmatprep.subr.mxu0 0.0
    %398 = vmatpush1.msra.mxu0 0.0
    %399 = vmatprep.subr.mxu0 0.0
    %400 = vmatpush1.msra.mxu0 0.0
    %401 = vmatprep.mubr.f32.mxu0 0.0
    %402 = vmatmul.mubr.f32.gmra.mrb[0].mxu0 %v335
    %v403 = vpop.f32.mrb[0].mxu0
    %v404 = vadd.f32 0.0, %v403
    %v405 = vpop.f32.mrb[0].mxu0
    %v406 = vadd.f32 0.0, %v405
    %407 = vdwg.mxu0
    %v408 = vmul.f32 %v404, %v406
    %410 = vrot.lane.b32.xlu0 %v408, 64
    %v411 = vpop.permute.xlu0 %410
    %v413 = vmul.f32 %v408, %v411
    %vm414 = vcmask 523264
    %v416 = vsel %vm414, %v413, 0
    %418 = vmatprep.subr.mxu0 0.0
    %419 = vmatpush1.msra.mxu0 %v93
    %420 = vmatprep.subr.mxu0 0.0
    %421 = vmatpush1.msra.mxu0 %v94
    %422 = vmatprep.subr.mxu0 0.0
    %423 = vmatpush1.msra.mxu0 %v95
    %424 = vmatprep.subr.mxu0 0.0
    %425 = vmatpush1.msra.mxu0 %v96
    %426 = vmatprep.subr.mxu0 0.0
    %427 = vmatpush1.msra.mxu0 %v97
    %428 = vmatprep.subr.mxu0 0.0
    %429 = vmatpush1.msra.mxu0 %v98
    %430 = vmatprep.subr.mxu0 0.0
    %431 = vmatpush1.msra.mxu0 %v99
    %432 = vmatprep.subr.mxu0 0.0
    %433 = vmatpush1.msra.mxu0 %v100
    %434 = vmatprep.subr.mxu0 0.0
    %435 = vmatpush1.msra.mxu0 0.0
    %436 = vmatprep.subr.mxu0 0.0
    %437 = vmatpush1.msra.mxu0 0.0
    %438 = vmatprep.subr.mxu0 0.0
    %439 = vmatpush1.msra.mxu0 0.0
    %440 = vmatprep.subr.mxu0 0.0
    %441 = vmatpush1.msra.mxu0 0.0
    %442 = vmatprep.subr.mxu0 0.0
    %443 = vmatpush1.msra.mxu0 0.0
    %444 = vmatprep.subr.mxu0 0.0
    %445 = vmatpush1.msra.mxu0 0.0
    %446 = vmatprep.subr.mxu0 0.0
    %447 = vmatpush1.msra.mxu0 0.0
    %448 = vmatprep.subr.mxu0 0.0
    %449 = vmatpush1.msra.mxu0 0.0
    %450 = vmatprep.subr.mxu0 0.0
    %451 = vmatpush1.msra.mxu0 0.0
    %452 = vmatprep.subr.mxu0 0.0
    %453 = vmatpush1.msra.mxu0 0.0
    %454 = vmatprep.subr.mxu0 0.0
    %455 = vmatpush1.msra.mxu0 0.0
    %456 = vmatprep.subr.mxu0 0.0
    %457 = vmatpush1.msra.mxu0 0.0
    %458 = vmatprep.subr.mxu0 0.0
    %459 = vmatpush1.msra.mxu0 0.0
    %460 = vmatprep.subr.mxu0 0.0
    %461 = vmatpush1.msra.mxu0 0.0
    %462 = vmatprep.subr.mxu0 0.0
    %463 = vmatpush1.msra.mxu0 0.0
    %464 = vmatprep.subr.mxu0 0.0
    %465 = vmatpush1.msra.mxu0 0.0
    %466 = vmatprep.subr.mxu0 0.0
    %467 = vmatpush1.msra.mxu0 0.0
    %468 = vmatprep.subr.mxu0 0.0
    %469 = vmatpush1.msra.mxu0 0.0
    %470 = vmatprep.subr.mxu0 0.0
    %471 = vmatpush1.msra.mxu0 0.0
    %472 = vmatprep.subr.mxu0 0.0
    %473 = vmatpush1.msra.mxu0 0.0
    %474 = vmatprep.subr.mxu0 0.0
    %475 = vmatpush1.msra.mxu0 0.0
    %476 = vmatprep.subr.mxu0 0.0
    %477 = vmatpush1.msra.mxu0 0.0
    %478 = vmatprep.subr.mxu0 0.0
    %479 = vmatpush1.msra.mxu0 0.0
    %480 = vmatprep.subr.mxu0 0.0
    %481 = vmatpush1.msra.mxu0 0.0
    %482 = vmatprep.mubr.f32.mxu0 0.0
    %483 = vmatmul.mubr.f32.gmra.mrb[0].mxu0 %v416
    %v484 = vpop.f32.mrb[0].mxu0
    %v485 = vadd.f32 0.0, %v484
    %v486 = vpop.f32.mrb[0].mxu0
    %487 = vdwg.mxu0
    %v488 = vmul.f32 %v485, %v485
    %489 = vmatprep.subr.mxu0 0.0
    %490 = vmatpush1.msra.mxu0 %v101
    %491 = vmatprep.subr.mxu0 0.0
    %492 = vmatpush1.msra.mxu0 %v102
    %493 = vmatprep.subr.mxu0 0.0
    %494 = vmatpush1.msra.mxu0 %v103
    %495 = vmatprep.subr.mxu0 0.0
    %496 = vmatpush1.msra.mxu0 %v104
    %497 = vmatprep.subr.mxu0 0.0
    %498 = vmatpush1.msra.mxu0 %v105
    %499 = vmatprep.subr.mxu0 0.0
    %500 = vmatpush1.msra.mxu0 %v106
    %501 = vmatprep.subr.mxu0 0.0
    %502 = vmatpush1.msra.mxu0 %v107
    %503 = vmatprep.subr.mxu0 0.0
    %504 = vmatpush1.msra.mxu0 %v108
    %505 = vmatprep.subr.mxu0 0.0
    %506 = vmatpush1.msra.mxu0 %v109
    %507 = vmatprep.subr.mxu0 0.0
    %508 = vmatpush1.msra.mxu0 %v110
    %509 = vmatprep.subr.mxu0 0.0
    %510 = vmatpush1.msra.mxu0 %v111
    %511 = vmatprep.subr.mxu0 0.0
    %512 = vmatpush1.msra.mxu0 %v112
    %513 = vmatprep.subr.mxu0 0.0
    %514 = vmatpush1.msra.mxu0 %v113
    %515 = vmatprep.subr.mxu0 0.0
    %516 = vmatpush1.msra.mxu0 %v114
    %517 = vmatprep.subr.mxu0 0.0
    %518 = vmatpush1.msra.mxu0 %v115
    %519 = vmatprep.subr.mxu0 0.0
    %520 = vmatpush1.msra.mxu0 %v116
    %521 = vmatprep.subr.mxu0 0.0
    %522 = vmatpush1.msra.mxu0 0.0
    %523 = vmatprep.subr.mxu0 0.0
    %524 = vmatpush1.msra.mxu0 0.0
    %525 = vmatprep.subr.mxu0 0.0
    %526 = vmatpush1.msra.mxu0 0.0
    %527 = vmatprep.subr.mxu0 0.0
    %528 = vmatpush1.msra.mxu0 0.0
    %529 = vmatprep.subr.mxu0 0.0
    %530 = vmatpush1.msra.mxu0 0.0
    %531 = vmatprep.subr.mxu0 0.0
    %532 = vmatpush1.msra.mxu0 0.0
    %533 = vmatprep.subr.mxu0 0.0
    %534 = vmatpush1.msra.mxu0 0.0
    %535 = vmatprep.subr.mxu0 0.0
    %536 = vmatpush1.msra.mxu0 0.0
    %537 = vmatprep.subr.mxu0 0.0
    %538 = vmatpush1.msra.mxu0 0.0
    %539 = vmatprep.subr.mxu0 0.0
    %540 = vmatpush1.msra.mxu0 0.0
    %541 = vmatprep.subr.mxu0 0.0
    %542 = vmatpush1.msra.mxu0 0.0
    %543 = vmatprep.subr.mxu0 0.0
    %544 = vmatpush1.msra.mxu0 0.0
    %545 = vmatprep.subr.mxu0 0.0
    %546 = vmatpush1.msra.mxu0 0.0
    %547 = vmatprep.subr.mxu0 0.0
    %548 = vmatpush1.msra.mxu0 0.0
    %549 = vmatprep.subr.mxu0 0.0
    %550 = vmatpush1.msra.mxu0 0.0
    %551 = vmatprep.subr.mxu0 0.0
    %552 = vmatpush1.msra.mxu0 0.0
    %553 = vmatprep.mubr.f32.mxu0 0.0
    %554 = vmatmul.mubr.f32.gmra.mrb[0].mxu0 %v488
    %v555 = vpop.f32.mrb[0].mxu0
    %v556 = vadd.f32 0.0, %v555
    %v557 = vpop.f32.mrb[0].mxu0
    %558 = vdwg.mxu0
    %v560 = vlaneseq
    %v561 = vshrl.u32 %v560, 7
    %v562 = vsub.s32 0, %v561
    %v563 = vrot.slane %v119, %v562
    %vm565 = vcmask 130048
    %v567 = vsel %vm565, %v556, 0
    %569 = vmatprep.subr.mxu0 0.0
    %570 = vmatpush1.msra.mxu0 %v117
    %571 = vmatprep.subr.mxu0 0.0
    %572 = vmatpush1.msra.mxu0 %v118
    %573 = vmatprep.subr.mxu0 0.0
    %574 = vmatpush1.msra.mxu0 0.0
    %575 = vmatprep.subr.mxu0 0.0
    %576 = vmatpush1.msra.mxu0 0.0
    %577 = vmatprep.subr.mxu0 0.0
    %578 = vmatpush1.msra.mxu0 0.0
    %579 = vmatprep.subr.mxu0 0.0
    %580 = vmatpush1.msra.mxu0 0.0
    %581 = vmatprep.subr.mxu0 0.0
    %582 = vmatpush1.msra.mxu0 0.0
    %583 = vmatprep.subr.mxu0 0.0
    %584 = vmatpush1.msra.mxu0 0.0
    %585 = vmatprep.subr.mxu0 0.0
    %586 = vmatpush1.msra.mxu0 0.0
    %587 = vmatprep.subr.mxu0 0.0
    %588 = vmatpush1.msra.mxu0 0.0
    %589 = vmatprep.subr.mxu0 0.0
    %590 = vmatpush1.msra.mxu0 0.0
    %591 = vmatprep.subr.mxu0 0.0
    %592 = vmatpush1.msra.mxu0 0.0
    %593 = vmatprep.subr.mxu0 0.0
    %594 = vmatpush1.msra.mxu0 0.0
    %595 = vmatprep.subr.mxu0 0.0
    %596 = vmatpush1.msra.mxu0 0.0
    %597 = vmatprep.subr.mxu0 0.0
    %598 = vmatpush1.msra.mxu0 0.0
    %599 = vmatprep.subr.mxu0 0.0
    %600 = vmatpush1.msra.mxu0 0.0
    %601 = vmatprep.subr.mxu0 0.0
    %602 = vmatpush1.msra.mxu0 0.0
    %603 = vmatprep.subr.mxu0 0.0
    %604 = vmatpush1.msra.mxu0 0.0
    %605 = vmatprep.subr.mxu0 0.0
    %606 = vmatpush1.msra.mxu0 0.0
    %607 = vmatprep.subr.mxu0 0.0
    %608 = vmatpush1.msra.mxu0 0.0
    %609 = vmatprep.subr.mxu0 0.0
    %610 = vmatpush1.msra.mxu0 0.0
    %611 = vmatprep.subr.mxu0 0.0
    %612 = vmatpush1.msra.mxu0 0.0
    %613 = vmatprep.subr.mxu0 0.0
    %614 = vmatpush1.msra.mxu0 0.0
    %615 = vmatprep.subr.mxu0 0.0
    %616 = vmatpush1.msra.mxu0 0.0
    %617 = vmatprep.subr.mxu0 0.0
    %618 = vmatpush1.msra.mxu0 0.0
    %619 = vmatprep.subr.mxu0 0.0
    %620 = vmatpush1.msra.mxu0 0.0
    %621 = vmatprep.subr.mxu0 0.0
    %622 = vmatpush1.msra.mxu0 0.0
    %623 = vmatprep.subr.mxu0 0.0
    %624 = vmatpush1.msra.mxu0 0.0
    %625 = vmatprep.subr.mxu0 0.0
    %626 = vmatpush1.msra.mxu0 0.0
    %627 = vmatprep.subr.mxu0 0.0
    %628 = vmatpush1.msra.mxu0 0.0
    %629 = vmatprep.subr.mxu0 0.0
    %630 = vmatpush1.msra.mxu0 0.0
    %631 = vmatprep.subr.mxu0 0.0
    %632 = vmatpush1.msra.mxu0 0.0
    %633 = vmatprep.mubr.f32.mxu0 0.0
    %634 = vmatmul.mubr.f32.gmra.mrb[0].mxu0 %v567
    %v635 = vpop.f32.mrb[0].mxu0
    %v636 = vadd.f32 %v563, %v635
    %v637 = vpop.f32.mrb[0].mxu0
    %638 = vdwg.mxu0
    %v639 = vxor.u32 %v636, 2147483648
    %v640 = vmul.f32 %v639, 1.442695
    %v641 = vpow.pop %v640
    %v642 = vadd.f32 %v641, 1.0
    %v643 = vrcp.pop %v642
    %v644 = vmul.f32 1.0, %v643
    %v645 = vtanh.pop %v636
    %v646 = vmul.f32 %v644, 0.0
    %648 = vrot.lane.b32.xlu0 %v645, 116
    %v649 = vpop.permute.xlu0 %648
    %v651 = vmul.f32 %v644, %v649
    %653 = vrot.lane.b32.xlu0 %v651, 122
    %v654 = vpop.permute.xlu0 %653
    %v656 = vadd.f32 %v646, %v654
    %v657 = vtanh.pop %v656
    %659 = vrot.lane.b32.xlu0 %v657, 12
    %v660 = vpop.permute.xlu0 %659
    %v662 = vmul.f32 %v644, %v660
    %v664 = vlaneseq
    %v665 = vshrl.u32 %v664, 7
    %v666 = vsub.s32 0, %v665
    %v667 = vrot.slane %v121, %v666
    %670 = vrot.lane.b32.xlu0 %v662, 116
    %v671 = vpop.permute.xlu0 %670
    %vm672 = vcmask 48128
    %v673 = vsel %vm672, %v671, 0
    %vm675 = vcmask 1045504
    %v677 = vsel %vm675, %v120, 0
    %679 = vmatprep.subr.mxu0 0.0
    %680 = vmatpush1.msra.mxu0 %v677
    %681 = vmatprep.subr.mxu0 0.0
    %682 = vmatpush1.msra.mxu0 0.0
    %683 = vmatprep.subr.mxu0 0.0
    %684 = vmatpush1.msra.mxu0 0.0
    %685 = vmatprep.subr.mxu0 0.0
    %686 = vmatpush1.msra.mxu0 0.0
    %687 = vmatprep.subr.mxu0 0.0
    %688 = vmatpush1.msra.mxu0 0.0
    %689 = vmatprep.subr.mxu0 0.0
    %690 = vmatpush1.msra.mxu0 0.0
    %691 = vmatprep.subr.mxu0 0.0
    %692 = vmatpush1.msra.mxu0 0.0
    %693 = vmatprep.subr.mxu0 0.0
    %694 = vmatpush1.msra.mxu0 0.0
    %695 = vmatprep.subr.mxu0 0.0
    %696 = vmatpush1.msra.mxu0 0.0
    %697 = vmatprep.subr.mxu0 0.0
    %698 = vmatpush1.msra.mxu0 0.0
    %699 = vmatprep.subr.mxu0 0.0
    %700 = vmatpush1.msra.mxu0 0.0
    %701 = vmatprep.subr.mxu0 0.0
    %702 = vmatpush1.msra.mxu0 0.0
    %703 = vmatprep.subr.mxu0 0.0
    %704 = vmatpush1.msra.mxu0 0.0
    %705 = vmatprep.subr.mxu0 0.0
    %706 = vmatpush1.msra.mxu0 0.0
    %707 = vmatprep.subr.mxu0 0.0
    %708 = vmatpush1.msra.mxu0 0.0
    %709 = vmatprep.subr.mxu0 0.0
    %710 = vmatpush1.msra.mxu0 0.0
    %711 = vmatprep.subr.mxu0 0.0
    %712 = vmatpush1.msra.mxu0 0.0
    %713 = vmatprep.subr.mxu0 0.0
    %714 = vmatpush1.msra.mxu0 0.0
    %715 = vmatprep.subr.mxu0 0.0
    %716 = vmatpush1.msra.mxu0 0.0
    %717 = vmatprep.subr.mxu0 0.0
    %718 = vmatpush1.msra.mxu0 0.0
    %719 = vmatprep.subr.mxu0 0.0
    %720 = vmatpush1.msra.mxu0 0.0
    %721 = vmatprep.subr.mxu0 0.0
    %722 = vmatpush1.msra.mxu0 0.0
    %723 = vmatprep.subr.mxu0 0.0
    %724 = vmatpush1.msra.mxu0 0.0
    %725 = vmatprep.subr.mxu0 0.0
    %726 = vmatpush1.msra.mxu0 0.0
    %727 = vmatprep.subr.mxu0 0.0
    %728 = vmatpush1.msra.mxu0 0.0
    %729 = vmatprep.subr.mxu0 0.0
    %730 = vmatpush1.msra.mxu0 0.0
    %731 = vmatprep.subr.mxu0 0.0
    %732 = vmatpush1.msra.mxu0 0.0
    %733 = vmatprep.subr.mxu0 0.0
    %734 = vmatpush1.msra.mxu0 0.0
    %735 = vmatprep.subr.mxu0 0.0
    %736 = vmatpush1.msra.mxu0 0.0
    %737 = vmatprep.subr.mxu0 0.0
    %738 = vmatpush1.msra.mxu0 0.0
    %739 = vmatprep.subr.mxu0 0.0
    %740 = vmatpush1.msra.mxu0 0.0
    %741 = vmatprep.subr.mxu0 0.0
    %742 = vmatpush1.msra.mxu0 0.0
    %743 = vmatprep.mubr.f32.mxu0 0.0
    %744 = vmatmul.mubr.f32.gmra.mrb[0].mxu0 %v673
    %v745 = vpop.f32.mrb[0].mxu0
    %v746 = vadd.f32 %v667, %v745
    %v747 = vpop.f32.mrb[0].mxu0
    %748 = vdwg.mxu0
    %v749 = vand.u32 2147483647, %v746
    %vm750 = vcmp.le.f32.partialorder %v749, 0.7853982
    %vm751 = vcmp.lt.s32.totalorder %v746, 0
    %v752 = vand.u32 %v746, 2139095040
    %v753 = vshrl.u32 %v752, 23
    %v754 = vsub.s32 %v753, 127
    %v755 = vand.u32 2147483647, %v746
    %v756 = vand.u32 %v755, 8388607
    %v757 = vor.u32 %v756, 8388608
    %v758 = vsub.s32 0, %v757
    %v759 = vadd.s32 %v754, 1
    %vm760 = vcmp.gt.s32.totalorder %v759, 0
    %v761 = vsel %vm760, %v759, 0
    %v762 = vshrl.u32 %v761, 5
    %v763 = vand.u32 %v761, 31
    %v764 = vsub.s32 32, %v763
    %v765 = vshrl.u32 683565275, %v764
    %v766 = vshll.u32 683565275, %v763
    %v767 = vshrl.u32 2475754826, %v764
    %v768 = vor.u32 %v766, %v767
    %v769 = vshll.u32 2475754826, %v763
    %v770 = vshrl.u32 2131351028, %v764
    %v771 = vor.u32 %v769, %v770
    %v772 = vshll.u32 2131351028, %v763
    %v773 = vshrl.u32 2102212464, %v764
    %v774 = vor.u32 %v772, %v773
    %v775 = vshll.u32 2102212464, %v763
    %v776 = vshrl.u32 920167782, %v764
    %v777 = vor.u32 %v775, %v776
    %v778 = vshll.u32 920167782, %v763
    %v779 = vshrl.u32 1326507024, %v764
    %v780 = vor.u32 %v778, %v779
    %vm781 = vcmp.lt.s32.totalorder %v762, 1
    %vm782 = vcmp.lt.s32.totalorder %v762, 2
    %vm783 = vcmp.lt.s32.totalorder %v762, 3
    %vm784 = vcmp.lt.s32.totalorder %v762, 4
    %v785 = vsel %vm781, %v765, %v768
    %v786 = vsel %vm784, %v774, 2102212464
    %v787 = vsel %vm783, %v771, %v786
    %v788 = vsel %vm782, %v785, %v787
    %v789 = vsel %vm781, %v768, %v771
    %v790 = vsel %vm784, %v777, 920167782
    %v791 = vsel %vm783, %v774, %v790
    %v792 = vsel %vm782, %v789, %v791
    %v793 = vsel %vm781, %v771, %v774
    %v794 = vsel %vm784, %v780, 1326507024
    %v795 = vsel %vm783, %v777, %v794
    %v796 = vsel %vm782, %v793, %v795
    %v797 = vshll.u32 %v757, 8
    %v798 = vmul.u32.u64.compose %v797, %v796
    %v799 = vextract.low.u32 %v798
    %v800 = vextract.high.u32 %v798
    %v801 = vmul.u32.u64.compose %v797, %v792
    %v802 = vextract.low.u32 %v801
    %v803 = vextract.high.u32 %v801
    %v804 = vmul.u32 %v797, %v788
    %v805 = vadd.s32 %v800, %v802
    %vm806 = vc.u32 %v800, %v802
    %v807 = vadd.s32 %v803, 1
    %v808 = vsel %vm806, %v807, %v803
    %v809 = vadd.s32 %v804, %v808
    %v810 = vadd.s32 %v809, 536870912
    %v811 = vshrl.u32 %v810, 30
    %v812 = vshll.u32 %v811, 30
    %v813 = vsub.s32 %v809, %v812
    %vm814 = vcmp.lt.s32.totalorder %v813, 0
    %v815 = vsub.s32 0, %v813
    %v816 = vsel %vm814, %v815, %v813
    %v817 = vclz %v816
    %v818 = vsub.s32 %v817, 2
    %vm819 = vcmp.gt.s32.totalorder 0, %v818
    %v820 = vsel %vm819, 0, %v818
    %v821 = vsub.s32 32, %v820
    %v822 = vshll.u32 %v813, %v820
    %v823 = vshrl.u32 %v805, %v821
    %v824 = vor.u32 %v822, %v823
    %v825 = vsub.s32 4294967266, %v820
    %v826 = vadd.s32 %v825, 127
    %v827 = vshll.u32 %v826, 23
    %v828 = vor.u32 4788187, %v827
    %v829 = vand.u32 2147483647, %v828
    %v831 = vcvt.s32.f32 %v824
    %v832 = vmul.f32 %v831, %v829
    %v833 = vxor.u32 %v832, 2147483648
    %v834 = vsel %vm751, %v833, %v832
    %v835 = vsub.s32 4, %v811
    %v836 = vsel %vm751, %v835, %v811
    %v837 = vsel %vm750, %v746, %v834
    %v838 = vsel %vm750, 0, %v836
    %v839 = vcosq.f32.pop %v837
    %v840 = vsinq.f32.pop %v837
    %vm841 = vweird.f32 %v746
    %v842 = vand.u32 %v838, 3
    %vm843 = vcmp.lt.s32.totalorder %v842, 2
    %vm844 = vcmp.eq.s32.totalorder %v842, 0
    %v845 = vxor.u32 %v840, 2147483648
    %v846 = vsel %vm844, %v839, %v845
    %vm847 = vcmp.eq.s32.totalorder %v842, 2
    %v848 = vxor.u32 %v839, 2147483648
    %v849 = vsel %vm847, %v848, %v840
    %v850 = vsel %vm843, %v846, %v849
    %v851 = vsel %vm841, nan, %v850
    %vm852 = vcmask 64512
    %v854 = vsel %vm852, %v851, 0
    %856 = vmatprep.subr.mxu0 0.0
    %857 = vmatpush1.msra.mxu0 %v122
    %858 = vmatprep.subr.mxu0 0.0
    %859 = vmatpush1.msra.mxu0 0.0
    %860 = vmatprep.subr.mxu0 0.0
    %861 = vmatpush1.msra.mxu0 0.0
    %862 = vmatprep.subr.mxu0 0.0
    %863 = vmatpush1.msra.mxu0 0.0
    %864 = vmatprep.subr.mxu0 0.0
    %865 = vmatpush1.msra.mxu0 0.0
    %866 = vmatprep.subr.mxu0 0.0
    %867 = vmatpush1.msra.mxu0 0.0
    %868 = vmatprep.subr.mxu0 0.0
    %869 = vmatpush1.msra.mxu0 0.0
    %870 = vmatprep.subr.mxu0 0.0
    %871 = vmatpush1.msra.mxu0 0.0
    %872 = vmatprep.subr.mxu0 0.0
    %873 = vmatpush1.msra.mxu0 0.0
    %874 = vmatprep.subr.mxu0 0.0
    %875 = vmatpush1.msra.mxu0 0.0
    %876 = vmatprep.subr.mxu0 0.0
    %877 = vmatpush1.msra.mxu0 0.0
    %878 = vmatprep.subr.mxu0 0.0
    %879 = vmatpush1.msra.mxu0 0.0
    %880 = vmatprep.subr.mxu0 0.0
    %881 = vmatpush1.msra.mxu0 0.0
    %882 = vmatprep.subr.mxu0 0.0
    %883 = vmatpush1.msra.mxu0 0.0
    %884 = vmatprep.subr.mxu0 0.0
    %885 = vmatpush1.msra.mxu0 0.0
    %886 = vmatprep.subr.mxu0 0.0
    %887 = vmatpush1.msra.mxu0 0.0
    %888 = vmatprep.subr.mxu0 0.0
    %889 = vmatpush1.msra.mxu0 0.0
    %890 = vmatprep.subr.mxu0 0.0
    %891 = vmatpush1.msra.mxu0 0.0
    %892 = vmatprep.subr.mxu0 0.0
    %893 = vmatpush1.msra.mxu0 0.0
    %894 = vmatprep.subr.mxu0 0.0
    %895 = vmatpush1.msra.mxu0 0.0
    %896 = vmatprep.subr.mxu0 0.0
    %897 = vmatpush1.msra.mxu0 0.0
    %898 = vmatprep.subr.mxu0 0.0
    %899 = vmatpush1.msra.mxu0 0.0
    %900 = vmatprep.subr.mxu0 0.0
    %901 = vmatpush1.msra.mxu0 0.0
    %902 = vmatprep.subr.mxu0 0.0
    %903 = vmatpush1.msra.mxu0 0.0
    %904 = vmatprep.subr.mxu0 0.0
    %905 = vmatpush1.msra.mxu0 0.0
    %906 = vmatprep.subr.mxu0 0.0
    %907 = vmatpush1.msra.mxu0 0.0
    %908 = vmatprep.subr.mxu0 0.0
    %909 = vmatpush1.msra.mxu0 0.0
    %910 = vmatprep.subr.mxu0 0.0
    %911 = vmatpush1.msra.mxu0 0.0
    %912 = vmatprep.subr.mxu0 0.0
    %913 = vmatpush1.msra.mxu0 0.0
    %914 = vmatprep.subr.mxu0 0.0
    %915 = vmatpush1.msra.mxu0 0.0
    %916 = vmatprep.subr.mxu0 0.0
    %917 = vmatpush1.msra.mxu0 0.0
    %918 = vmatprep.subr.mxu0 0.0
    %919 = vmatpush1.msra.mxu0 0.0
    %920 = vmatprep.mubr.f32.mxu0 0.0
    %921 = vmatmul.mubr.f32.gmra.mrb[0].mxu0 %v854
    %v922 = vpop.f32.mrb[0].mxu0
    %v923 = vadd.f32 0.0, %v922
    %v924 = vpop.f32.mrb[0].mxu0
    %925 = vdwg.mxu0
    %927 = vrot.lane.b32.xlu0 %v923, 96
    %v928 = vpop.permute.xlu0 %927
    %v930 = vmul.f32 %v923, %v928
    %932 = vrot.lane.b32.xlu0 %v930, 112
    %v933 = vpop.permute.xlu0 %932
    %v935 = vmul.f32 %v930, %v933
    %v937 = vsel %vm565, %v935, 0
    %939 = vmatprep.subr.mxu0 0.0
    %940 = vmatpush1.msra.mxu0 %v123
    %941 = vmatprep.subr.mxu0 0.0
    %942 = vmatpush1.msra.mxu0 %v124
    %943 = vmatprep.subr.mxu0 0.0
    %944 = vmatpush1.msra.mxu0 0.0
    %945 = vmatprep.subr.mxu0 0.0
    %946 = vmatpush1.msra.mxu0 0.0
    %947 = vmatprep.subr.mxu0 0.0
    %948 = vmatpush1.msra.mxu0 0.0
    %949 = vmatprep.subr.mxu0 0.0
    %950 = vmatpush1.msra.mxu0 0.0
    %951 = vmatprep.subr.mxu0 0.0
    %952 = vmatpush1.msra.mxu0 0.0
    %953 = vmatprep.subr.mxu0 0.0
    %954 = vmatpush1.msra.mxu0 0.0
    %955 = vmatprep.subr.mxu0 0.0
    %956 = vmatpush1.msra.mxu0 0.0
    %957 = vmatprep.subr.mxu0 0.0
    %958 = vmatpush1.msra.mxu0 0.0
    %959 = vmatprep.subr.mxu0 0.0
    %960 = vmatpush1.msra.mxu0 0.0
    %961 = vmatprep.subr.mxu0 0.0
    %962 = vmatpush1.msra.mxu0 0.0
    %963 = vmatprep.subr.mxu0 0.0
    %964 = vmatpush1.msra.mxu0 0.0
    %965 = vmatprep.subr.mxu0 0.0
    %966 = vmatpush1.msra.mxu0 0.0
    %967 = vmatprep.subr.mxu0 0.0
    %968 = vmatpush1.msra.mxu0 0.0
    %969 = vmatprep.subr.mxu0 0.0
    %970 = vmatpush1.msra.mxu0 0.0
    %971 = vmatprep.subr.mxu0 0.0
    %972 = vmatpush1.msra.mxu0 0.0
    %973 = vmatprep.subr.mxu0 0.0
    %974 = vmatpush1.msra.mxu0 0.0
    %975 = vmatprep.subr.mxu0 0.0
    %976 = vmatpush1.msra.mxu0 0.0
    %977 = vmatprep.subr.mxu0 0.0
    %978 = vmatpush1.msra.mxu0 0.0
    %979 = vmatprep.subr.mxu0 0.0
    %980 = vmatpush1.msra.mxu0 0.0
    %981 = vmatprep.subr.mxu0 0.0
    %982 = vmatpush1.msra.mxu0 0.0
    %983 = vmatprep.subr.mxu0 0.0
    %984 = vmatpush1.msra.mxu0 0.0
    %985 = vmatprep.subr.mxu0 0.0
    %986 = vmatpush1.msra.mxu0 0.0
    %987 = vmatprep.subr.mxu0 0.0
    %988 = vmatpush1.msra.mxu0 0.0
    %989 = vmatprep.subr.mxu0 0.0
    %990 = vmatpush1.msra.mxu0 0.0
    %991 = vmatprep.subr.mxu0 0.0
    %992 = vmatpush1.msra.mxu0 0.0
    %993 = vmatprep.subr.mxu0 0.0
    %994 = vmatpush1.msra.mxu0 0.0
    %995 = vmatprep.subr.mxu0 0.0
    %996 = vmatpush1.msra.mxu0 0.0
    %997 = vmatprep.subr.mxu0 0.0
    %998 = vmatpush1.msra.mxu0 0.0
    %999 = vmatprep.subr.mxu0 0.0
    %1000 = vmatpush1.msra.mxu0 0.0
    %1001 = vmatprep.subr.mxu0 0.0
    %1002 = vmatpush1.msra.mxu0 0.0
    %1003 = vmatprep.mubr.f32.mxu0 0.0
    %1004 = vmatmul.mubr.f32.gmra.mrb[0].mxu0 %v937
    %v1005 = vpop.f32.mrb[0].mxu0
    %v1006 = vadd.f32 0.0, %v1005
    %v1007 = vpop.f32.mrb[0].mxu0
    %1008 = vdwg.mxu0
    %v1009 = vmul.f32 %v1006, %v1006
    %v1011 = vsel %vm333, %v1009, 0
    %1013 = vmatprep.subr.mxu0 0.0
    %1014 = vmatpush1.msra.mxu0 %v125
    %1015 = vmatprep.subr.mxu0 0.0
    %1016 = vmatpush1.msra.mxu0 %v126
    %1017 = vmatprep.subr.mxu0 0.0
    %1018 = vmatpush1.msra.mxu0 %v127
    %1019 = vmatprep.subr.mxu0 0.0
    %1020 = vmatpush1.msra.mxu0 %v128
    %1021 = vmatprep.subr.mxu0 0.0
    %1022 = vmatpush1.msra.mxu0 0.0
    %1023 = vmatprep.subr.mxu0 0.0
    %1024 = vmatpush1.msra.mxu0 0.0
    %1025 = vmatprep.subr.mxu0 0.0
    %1026 = vmatpush1.msra.mxu0 0.0
    %1027 = vmatprep.subr.mxu0 0.0
    %1028 = vmatpush1.msra.mxu0 0.0
    %1029 = vmatprep.subr.mxu0 0.0
    %1030 = vmatpush1.msra.mxu0 0.0
    %1031 = vmatprep.subr.mxu0 0.0
    %1032 = vmatpush1.msra.mxu0 0.0
    %1033 = vmatprep.subr.mxu0 0.0
    %1034 = vmatpush1.msra.mxu0 0.0
    %1035 = vmatprep.subr.mxu0 0.0
    %1036 = vmatpush1.msra.mxu0 0.0
    %1037 = vmatprep.subr.mxu0 0.0
    %1038 = vmatpush1.msra.mxu0 0.0
    %1039 = vmatprep.subr.mxu0 0.0
    %1040 = vmatpush1.msra.mxu0 0.0
    %1041 = vmatprep.subr.mxu0 0.0
    %1042 = vmatpush1.msra.mxu0 0.0
    %1043 = vmatprep.subr.mxu0 0.0
    %1044 = vmatpush1.msra.mxu0 0.0
    %1045 = vmatprep.subr.mxu0 0.0
    %1046 = vmatpush1.msra.mxu0 0.0
    %1047 = vmatprep.subr.mxu0 0.0
    %1048 = vmatpush1.msra.mxu0 0.0
    %1049 = vmatprep.subr.mxu0 0.0
    %1050 = vmatpush1.msra.mxu0 0.0
    %1051 = vmatprep.subr.mxu0 0.0
    %1052 = vmatpush1.msra.mxu0 0.0
    %1053 = vmatprep.subr.mxu0 0.0
    %1054 = vmatpush1.msra.mxu0 0.0
    %1055 = vmatprep.subr.mxu0 0.0
    %1056 = vmatpush1.msra.mxu0 0.0
    %1057 = vmatprep.subr.mxu0 0.0
    %1058 = vmatpush1.msra.mxu0 0.0
    %1059 = vmatprep.subr.mxu0 0.0
    %1060 = vmatpush1.msra.mxu0 0.0
    %1061 = vmatprep.subr.mxu0 0.0
    %1062 = vmatpush1.msra.mxu0 0.0
    %1063 = vmatprep.subr.mxu0 0.0
    %1064 = vmatpush1.msra.mxu0 0.0
    %1065 = vmatprep.subr.mxu0 0.0
    %1066 = vmatpush1.msra.mxu0 0.0
    %1067 = vmatprep.subr.mxu0 0.0
    %1068 = vmatpush1.msra.mxu0 0.0
    %1069 = vmatprep.subr.mxu0 0.0
    %1070 = vmatpush1.msra.mxu0 0.0
    %1071 = vmatprep.subr.mxu0 0.0
    %1072 = vmatpush1.msra.mxu0 0.0
    %1073 = vmatprep.subr.mxu0 0.0
    %1074 = vmatpush1.msra.mxu0 0.0
    %1075 = vmatprep.subr.mxu0 0.0
    %1076 = vmatpush1.msra.mxu0 0.0
    %1077 = vmatprep.mubr.f32.mxu0 0.0
    %1078 = vmatmul.mubr.f32.gmra.mrb[0].mxu0 %v1011
    %v1079 = vpop.f32.mrb[0].mxu0
    %v1080 = vadd.f32 0.0, %v1079
    %v1081 = vpop.f32.mrb[0].mxu0
    %1082 = vdwg.mxu0
    %v1084 = vlaneseq
    %v1085 = vshrl.u32 %v1084, 7
    %v1086 = vsub.s32 0, %v1085
    %v1087 = vrot.slane %v130, %v1086
    %vm1089 = vcmask 31744
    %v1091 = vsel %vm1089, %v1080, 0
    %vm1093 = vcmask 1043456
    %v1095 = vsel %vm1093, %v129, 0
    %1097 = vmatprep.subr.mxu0 0.0
    %1098 = vmatpush1.msra.mxu0 %v1095
    %1099 = vmatprep.subr.mxu0 0.0
    %1100 = vmatpush1.msra.mxu0 0.0
    %1101 = vmatprep.subr.mxu0 0.0
    %1102 = vmatpush1.msra.mxu0 0.0
    %1103 = vmatprep.subr.mxu0 0.0
    %1104 = vmatpush1.msra.mxu0 0.0
    %1105 = vmatprep.subr.mxu0 0.0
    %1106 = vmatpush1.msra.mxu0 0.0
    %1107 = vmatprep.subr.mxu0 0.0
    %1108 = vmatpush1.msra.mxu0 0.0
    %1109 = vmatprep.subr.mxu0 0.0
    %1110 = vmatpush1.msra.mxu0 0.0
    %1111 = vmatprep.subr.mxu0 0.0
    %1112 = vmatpush1.msra.mxu0 0.0
    %1113 = vmatprep.subr.mxu0 0.0
    %1114 = vmatpush1.msra.mxu0 0.0
    %1115 = vmatprep.subr.mxu0 0.0
    %1116 = vmatpush1.msra.mxu0 0.0
    %1117 = vmatprep.subr.mxu0 0.0
    %1118 = vmatpush1.msra.mxu0 0.0
    %1119 = vmatprep.subr.mxu0 0.0
    %1120 = vmatpush1.msra.mxu0 0.0
    %1121 = vmatprep.subr.mxu0 0.0
    %1122 = vmatpush1.msra.mxu0 0.0
    %1123 = vmatprep.subr.mxu0 0.0
    %1124 = vmatpush1.msra.mxu0 0.0
    %1125 = vmatprep.subr.mxu0 0.0
    %1126 = vmatpush1.msra.mxu0 0.0
    %1127 = vmatprep.subr.mxu0 0.0
    %1128 = vmatpush1.msra.mxu0 0.0
    %1129 = vmatprep.subr.mxu0 0.0
    %1130 = vmatpush1.msra.mxu0 0.0
    %1131 = vmatprep.subr.mxu0 0.0
    %1132 = vmatpush1.msra.mxu0 0.0
    %1133 = vmatprep.subr.mxu0 0.0
    %1134 = vmatpush1.msra.mxu0 0.0
    %1135 = vmatprep.subr.mxu0 0.0
    %1136 = vmatpush1.msra.mxu0 0.0
    %1137 = vmatprep.subr.mxu0 0.0
    %1138 = vmatpush1.msra.mxu0 0.0
    %1139 = vmatprep.subr.mxu0 0.0
    %1140 = vmatpush1.msra.mxu0 0.0
    %1141 = vmatprep.subr.mxu0 0.0
    %1142 = vmatpush1.msra.mxu0 0.0
    %1143 = vmatprep.subr.mxu0 0.0
    %1144 = vmatpush1.msra.mxu0 0.0
    %1145 = vmatprep.subr.mxu0 0.0
    %1146 = vmatpush1.msra.mxu0 0.0
    %1147 = vmatprep.subr.mxu0 0.0
    %1148 = vmatpush1.msra.mxu0 0.0
    %1149 = vmatprep.subr.mxu0 0.0
    %1150 = vmatpush1.msra.mxu0 0.0
    %1151 = vmatprep.subr.mxu0 0.0
    %1152 = vmatpush1.msra.mxu0 0.0
    %1153 = vmatprep.subr.mxu0 0.0
    %1154 = vmatpush1.msra.mxu0 0.0
    %1155 = vmatprep.subr.mxu0 0.0
    %1156 = vmatpush1.msra.mxu0 0.0
    %1157 = vmatprep.subr.mxu0 0.0
    %1158 = vmatpush1.msra.mxu0 0.0
    %1159 = vmatprep.subr.mxu0 0.0
    %1160 = vmatpush1.msra.mxu0 0.0
    %1161 = vmatprep.mubr.f32.mxu0 0.0
    %1162 = vmatmul.mubr.f32.gmra.mrb[0].mxu0 %v1091
    %v1163 = vpop.f32.mrb[0].mxu0
    %v1164 = vadd.f32 %v1087, %v1163
    %v1165 = vpop.f32.mrb[0].mxu0
    %1166 = vdwg.mxu0
    %s1167 = scalar_lea.vmem %s0, 2
    %v1168 = vld [vmem:[%s1167] sm:$0x3]
    %1170 = vset.pattern.permute.xlu0 0
    %1171 = vperm.xlu0 %1170, %v1168
    %v1172 = vpop.permute.xlu0 %1171
    %v1174 = vmul.f32 %v1172, %v141
    %v1176 = vsel %vm144, %v1164, 0
    %1178 = vmatprep.subr.mxu0 0.0
    %1179 = vmatpush1.msra.mxu0 %v150
    %1180 = vmatprep.subr.mxu0 0.0
    %1181 = vmatpush1.msra.mxu0 0.0
    %1182 = vmatprep.subr.mxu0 0.0
    %1183 = vmatpush1.msra.mxu0 0.0
    %1184 = vmatprep.subr.mxu0 0.0
    %1185 = vmatpush1.msra.mxu0 0.0
    %1186 = vmatprep.subr.mxu0 0.0
    %1187 = vmatpush1.msra.mxu0 0.0
    %1188 = vmatprep.subr.mxu0 0.0
    %1189 = vmatpush1.msra.mxu0 0.0
    %1190 = vmatprep.subr.mxu0 0.0
    %1191 = vmatpush1.msra.mxu0 0.0
    %1192 = vmatprep.subr.mxu0 0.0
    %1193 = vmatpush1.msra.mxu0 0.0
    %1194 = vmatprep.subr.mxu0 0.0
    %1195 = vmatpush1.msra.mxu0 0.0
    %1196 = vmatprep.subr.mxu0 0.0
    %1197 = vmatpush1.msra.mxu0 0.0
    %1198 = vmatprep.subr.mxu0 0.0
    %1199 = vmatpush1.msra.mxu0 0.0
    %1200 = vmatprep.subr.mxu0 0.0
    %1201 = vmatpush1.msra.mxu0 0.0
    %1202 = vmatprep.subr.mxu0 0.0
    %1203 = vmatpush1.msra.mxu0 0.0
    %1204 = vmatprep.subr.mxu0 0.0
    %1205 = vmatpush1.msra.mxu0 0.0
    %1206 = vmatprep.subr.mxu0 0.0
    %1207 = vmatpush1.msra.mxu0 0.0
    %1208 = vmatprep.subr.mxu0 0.0
    %1209 = vmatpush1.msra.mxu0 0.0
    %1210 = vmatprep.subr.mxu0 0.0
    %1211 = vmatpush1.msra.mxu0 0.0
    %1212 = vmatprep.subr.mxu0 0.0
    %1213 = vmatpush1.msra.mxu0 0.0
    %1214 = vmatprep.subr.mxu0 0.0
    %1215 = vmatpush1.msra.mxu0 0.0
    %1216 = vmatprep.subr.mxu0 0.0
    %1217 = vmatpush1.msra.mxu0 0.0
    %1218 = vmatprep.subr.mxu0 0.0
    %1219 = vmatpush1.msra.mxu0 0.0
    %1220 = vmatprep.subr.mxu0 0.0
    %1221 = vmatpush1.msra.mxu0 0.0
    %1222 = vmatprep.subr.mxu0 0.0
    %1223 = vmatpush1.msra.mxu0 0.0
    %1224 = vmatprep.subr.mxu0 0.0
    %1225 = vmatpush1.msra.mxu0 0.0
    %1226 = vmatprep.subr.mxu0 0.0
    %1227 = vmatpush1.msra.mxu0 0.0
    %1228 = vmatprep.subr.mxu0 0.0
    %1229 = vmatpush1.msra.mxu0 0.0
    %1230 = vmatprep.subr.mxu0 0.0
    %1231 = vmatpush1.msra.mxu0 0.0
    %1232 = vmatprep.subr.mxu0 0.0
    %1233 = vmatpush1.msra.mxu0 0.0
    %1234 = vmatprep.subr.mxu0 0.0
    %1235 = vmatpush1.msra.mxu0 0.0
    %1236 = vmatprep.subr.mxu0 0.0
    %1237 = vmatpush1.msra.mxu0 0.0
    %1238 = vmatprep.subr.mxu0 0.0
    %1239 = vmatpush1.msra.mxu0 0.0
    %1240 = vmatprep.subr.mxu0 0.0
    %1241 = vmatpush1.msra.mxu0 0.0
    %1242 = vmatprep.mubr.f32.mxu0 0.0
    %1243 = vmatmul.mubr.f32.gmra.mrb[0].mxu0 %v1176
    %v1244 = vpop.f32.mrb[0].mxu0
    %v1245 = vadd.f32 0.0, %v1244
    %v1246 = vpop.f32.mrb[0].mxu0
    %1247 = vdwg.mxu0
    %v1248 = vadd.f32 %v1174, %v1245
    %v1249 = vadd.f32 %v1248, %v227
    %v1250 = vand.u32 2147483647, %v1249
    %vm1251 = vcmp.le.f32.partialorder %v1250, 0.7853982
    %vm1252 = vcmp.lt.s32.totalorder %v1249, 0
    %v1253 = vand.u32 %v1249, 2139095040
    %v1254 = vshrl.u32 %v1253, 23
    %v1255 = vsub.s32 %v1254, 127
    %v1256 = vand.u32 2147483647, %v1249
    %v1257 = vand.u32 %v1256, 8388607
    %v1258 = vor.u32 %v1257, 8388608
    %v1259 = vsub.s32 0, %v1258
    %v1260 = vadd.s32 %v1255, 1
    %vm1261 = vcmp.gt.s32.totalorder %v1260, 0
    %v1262 = vsel %vm1261, %v1260, 0
    %v1263 = vshrl.u32 %v1262, 5
    %v1264 = vand.u32 %v1262, 31
    %v1265 = vsub.s32 32, %v1264
    %v1266 = vshrl.u32 683565275, %v1265
    %v1267 = vshll.u32 683565275, %v1264
    %v1268 = vshrl.u32 2475754826, %v1265
    %v1269 = vor.u32 %v1267, %v1268
    %v1270 = vshll.u32 2475754826, %v1264
    %v1271 = vshrl.u32 2131351028, %v1265
    %v1272 = vor.u32 %v1270, %v1271
    %v1273 = vshll.u32 2131351028, %v1264
    %v1274 = vshrl.u32 2102212464, %v1265
    %v1275 = vor.u32 %v1273, %v1274
    %v1276 = vshll.u32 2102212464, %v1264
    %v1277 = vshrl.u32 920167782, %v1265
    %v1278 = vor.u32 %v1276, %v1277
    %v1279 = vshll.u32 920167782, %v1264
    %v1280 = vshrl.u32 1326507024, %v1265
    %v1281 = vor.u32 %v1279, %v1280
    %vm1282 = vcmp.lt.s32.totalorder %v1263, 1
    %vm1283 = vcmp.lt.s32.totalorder %v1263, 2
    %vm1284 = vcmp.lt.s32.totalorder %v1263, 3
    %vm1285 = vcmp.lt.s32.totalorder %v1263, 4
    %v1286 = vsel %vm1282, %v1266, %v1269
    %v1287 = vsel %vm1285, %v1275, 2102212464
    %v1288 = vsel %vm1284, %v1272, %v1287
    %v1289 = vsel %vm1283, %v1286, %v1288
    %v1290 = vsel %vm1282, %v1269, %v1272
    %v1291 = vsel %vm1285, %v1278, 920167782
    %v1292 = vsel %vm1284, %v1275, %v1291
    %v1293 = vsel %vm1283, %v1290, %v1292
    %v1294 = vsel %vm1282, %v1272, %v1275
    %v1295 = vsel %vm1285, %v1281, 1326507024
    %v1296 = vsel %vm1284, %v1278, %v1295
    %v1297 = vsel %vm1283, %v1294, %v1296
    %v1298 = vshll.u32 %v1258, 8
    %v1299 = vmul.u32.u64.compose %v1298, %v1297
    %v1300 = vextract.low.u32 %v1299
    %v1301 = vextract.high.u32 %v1299
    %v1302 = vmul.u32.u64.compose %v1298, %v1293
    %v1303 = vextract.low.u32 %v1302
    %v1304 = vextract.high.u32 %v1302
    %v1305 = vmul.u32 %v1298, %v1289
    %v1306 = vadd.s32 %v1301, %v1303
    %vm1307 = vc.u32 %v1301, %v1303
    %v1308 = vadd.s32 %v1304, 1
    %v1309 = vsel %vm1307, %v1308, %v1304
    %v1310 = vadd.s32 %v1305, %v1309
    %v1311 = vadd.s32 %v1310, 536870912
    %v1312 = vshrl.u32 %v1311, 30
    %v1313 = vshll.u32 %v1312, 30
    %v1314 = vsub.s32 %v1310, %v1313
    %vm1315 = vcmp.lt.s32.totalorder %v1314, 0
    %v1316 = vsub.s32 0, %v1314
    %v1317 = vsel %vm1315, %v1316, %v1314
    %v1318 = vclz %v1317
    %v1319 = vsub.s32 %v1318, 2
    %vm1320 = vcmp.gt.s32.totalorder 0, %v1319
    %v1321 = vsel %vm1320, 0, %v1319
    %v1322 = vsub.s32 32, %v1321
    %v1323 = vshll.u32 %v1314, %v1321
    %v1324 = vshrl.u32 %v1306, %v1322
    %v1325 = vor.u32 %v1323, %v1324
    %v1326 = vsub.s32 4294967266, %v1321
    %v1327 = vadd.s32 %v1326, 127
    %v1328 = vshll.u32 %v1327, 23
    %v1329 = vor.u32 4788187, %v1328
    %v1330 = vand.u32 2147483647, %v1329
    %v1332 = vcvt.s32.f32 %v1325
    %v1333 = vmul.f32 %v1332, %v1330
    %v1334 = vxor.u32 %v1333, 2147483648
    %v1335 = vsel %vm1252, %v1334, %v1333
    %v1336 = vsub.s32 4, %v1312
    %v1337 = vsel %vm1252, %v1336, %v1312
    %v1338 = vsel %vm1251, %v1249, %v1335
    %v1339 = vsel %vm1251, 0, %v1337
    %v1340 = vcosq.f32.pop %v1338
    %v1341 = vsinq.f32.pop %v1338
    %vm1342 = vweird.f32 %v1249
    %v1343 = vand.u32 %v1339, 3
    %vm1344 = vcmp.lt.s32.totalorder %v1343, 2
    %vm1345 = vcmp.eq.s32.totalorder %v1343, 0
    %v1346 = vxor.u32 %v1341, 2147483648
    %v1347 = vsel %vm1345, %v1340, %v1346
    %vm1348 = vcmp.eq.s32.totalorder %v1343, 2
    %v1349 = vxor.u32 %v1340, 2147483648
    %v1350 = vsel %vm1348, %v1349, %v1341
    %v1351 = vsel %vm1344, %v1347, %v1350
    %v1352 = vsel %vm1342, nan, %v1351
    %v1354 = vsel %vm333, %v1352, 0
    %1356 = vmatprep.subr.mxu0 %v86
    %1357 = vmatpush1.msra.mxu0 %v85
    %1358 = vmatprep.subr.mxu0 %v88
    %1359 = vmatpush1.msra.mxu0 %v87
    %1360 = vmatprep.subr.mxu0 %v90
    %1361 = vmatpush1.msra.mxu0 %v89
    %1362 = vmatprep.subr.mxu0 %v92
    %1363 = vmatpush1.msra.mxu0 %v91
    %1364 = vmatprep.subr.mxu0 0.0
    %1365 = vmatpush1.msra.mxu0 0.0
    %1366 = vmatprep.subr.mxu0 0.0
    %1367 = vmatpush1.msra.mxu0 0.0
    %1368 = vmatprep.subr.mxu0 0.0
    %1369 = vmatpush1.msra.mxu0 0.0
    %1370 = vmatprep.subr.mxu0 0.0
    %1371 = vmatpush1.msra.mxu0 0.0
    %1372 = vmatprep.subr.mxu0 0.0
    %1373 = vmatpush1.msra.mxu0 0.0
    %1374 = vmatprep.subr.mxu0 0.0
    %1375 = vmatpush1.msra.mxu0 0.0
    %1376 = vmatprep.subr.mxu0 0.0
    %1377 = vmatpush1.msra.mxu0 0.0
    %1378 = vmatprep.subr.mxu0 0.0
    %1379 = vmatpush1.msra.mxu0 0.0
    %1380 = vmatprep.subr.mxu0 0.0
    %1381 = vmatpush1.msra.mxu0 0.0
    %1382 = vmatprep.subr.mxu0 0.0
    %1383 = vmatpush1.msra.mxu0 0.0
    %1384 = vmatprep.subr.mxu0 0.0
    %1385 = vmatpush1.msra.mxu0 0.0
    %1386 = vmatprep.subr.mxu0 0.0
    %1387 = vmatpush1.msra.mxu0 0.0
    %1388 = vmatprep.subr.mxu0 0.0
    %1389 = vmatpush1.msra.mxu0 0.0
    %1390 = vmatprep.subr.mxu0 0.0
    %1391 = vmatpush1.msra.mxu0 0.0
    %1392 = vmatprep.subr.mxu0 0.0
    %1393 = vmatpush1.msra.mxu0 0.0
    %1394 = vmatprep.subr.mxu0 0.0
    %1395 = vmatpush1.msra.mxu0 0.0
    %1396 = vmatprep.subr.mxu0 0.0
    %1397 = vmatpush1.msra.mxu0 0.0
    %1398 = vmatprep.subr.mxu0 0.0
    %1399 = vmatpush1.msra.mxu0 0.0
    %1400 = vmatprep.subr.mxu0 0.0
    %1401 = vmatpush1.msra.mxu0 0.0
    %1402 = vmatprep.subr.mxu0 0.0
    %1403 = vmatpush1.msra.mxu0 0.0
    %1404 = vmatprep.subr.mxu0 0.0
    %1405 = vmatpush1.msra.mxu0 0.0
    %1406 = vmatprep.subr.mxu0 0.0
    %1407 = vmatpush1.msra.mxu0 0.0
    %1408 = vmatprep.subr.mxu0 0.0
    %1409 = vmatpush1.msra.mxu0 0.0
    %1410 = vmatprep.subr.mxu0 0.0
    %1411 = vmatpush1.msra.mxu0 0.0
    %1412 = vmatprep.subr.mxu0 0.0
    %1413 = vmatpush1.msra.mxu0 0.0
    %1414 = vmatprep.subr.mxu0 0.0
    %1415 = vmatpush1.msra.mxu0 0.0
    %1416 = vmatprep.subr.mxu0 0.0
    %1417 = vmatpush1.msra.mxu0 0.0
    %1418 = vmatprep.subr.mxu0 0.0
    %1419 = vmatpush1.msra.mxu0 0.0
    %1420 = vmatprep.mubr.f32.mxu0 0.0
    %1421 = vmatmul.mubr.f32.gmra.mrb[0].mxu0 %v1354
    %v1422 = vpop.f32.mrb[0].mxu0
    %v1423 = vadd.f32 0.0, %v1422
    %v1424 = vpop.f32.mrb[0].mxu0
    %v1425 = vadd.f32 0.0, %v1424
    %1426 = vdwg.mxu0
    %v1427 = vmul.f32 %v1423, %v1425
    %1429 = vrot.lane.b32.xlu0 %v1427, 64
    %v1430 = vpop.permute.xlu0 %1429
    %v1432 = vmul.f32 %v1427, %v1430
    %v1434 = vsel %vm414, %v1432, 0
    %1436 = vmatprep.subr.mxu0 0.0
    %1437 = vmatpush1.msra.mxu0 %v93
    %1438 = vmatprep.subr.mxu0 0.0
    %1439 = vmatpush1.msra.mxu0 %v94
    %1440 = vmatprep.subr.mxu0 0.0
    %1441 = vmatpush1.msra.mxu0 %v95
    %1442 = vmatprep.subr.mxu0 0.0
    %1443 = vmatpush1.msra.mxu0 %v96
    %1444 = vmatprep.subr.mxu0 0.0
    %1445 = vmatpush1.msra.mxu0 %v97
    %1446 = vmatprep.subr.mxu0 0.0
    %1447 = vmatpush1.msra.mxu0 %v98
    %1448 = vmatprep.subr.mxu0 0.0
    %1449 = vmatpush1.msra.mxu0 %v99
    %1450 = vmatprep.subr.mxu0 0.0
    %1451 = vmatpush1.msra.mxu0 %v100
    %1452 = vmatprep.subr.mxu0 0.0
    %1453 = vmatpush1.msra.mxu0 0.0
    %1454 = vmatprep.subr.mxu0 0.0
    %1455 = vmatpush1.msra.mxu0 0.0
    %1456 = vmatprep.subr.mxu0 0.0
    %1457 = vmatpush1.msra.mxu0 0.0
    %1458 = vmatprep.subr.mxu0 0.0
    %1459 = vmatpush1.msra.mxu0 0.0
    %1460 = vmatprep.subr.mxu0 0.0
    %1461 = vmatpush1.msra.mxu0 0.0
    %1462 = vmatprep.subr.mxu0 0.0
    %1463 = vmatpush1.msra.mxu0 0.0
    %1464 = vmatprep.subr.mxu0 0.0
    %1465 = vmatpush1.msra.mxu0 0.0
    %1466 = vmatprep.subr.mxu0 0.0
    %1467 = vmatpush1.msra.mxu0 0.0
    %1468 = vmatprep.subr.mxu0 0.0
    %1469 = vmatpush1.msra.mxu0 0.0
    %1470 = vmatprep.subr.mxu0 0.0
    %1471 = vmatpush1.msra.mxu0 0.0
    %1472 = vmatprep.subr.mxu0 0.0
    %1473 = vmatpush1.msra.mxu0 0.0
    %1474 = vmatprep.subr.mxu0 0.0
    %1475 = vmatpush1.msra.mxu0 0.0
    %1476 = vmatprep.subr.mxu0 0.0
    %1477 = vmatpush1.msra.mxu0 0.0
    %1478 = vmatprep.subr.mxu0 0.0
    %1479 = vmatpush1.msra.mxu0 0.0
    %1480 = vmatprep.subr.mxu0 0.0
    %1481 = vmatpush1.msra.mxu0 0.0
    %1482 = vmatprep.subr.mxu0 0.0
    %1483 = vmatpush1.msra.mxu0 0.0
    %1484 = vmatprep.subr.mxu0 0.0
    %1485 = vmatpush1.msra.mxu0 0.0
    %1486 = vmatprep.subr.mxu0 0.0
    %1487 = vmatpush1.msra.mxu0 0.0
    %1488 = vmatprep.subr.mxu0 0.0
    %1489 = vmatpush1.msra.mxu0 0.0
    %1490 = vmatprep.subr.mxu0 0.0
    %1491 = vmatpush1.msra.mxu0 0.0
    %1492 = vmatprep.subr.mxu0 0.0
    %1493 = vmatpush1.msra.mxu0 0.0
    %1494 = vmatprep.subr.mxu0 0.0
    %1495 = vmatpush1.msra.mxu0 0.0
    %1496 = vmatprep.subr.mxu0 0.0
    %1497 = vmatpush1.msra.mxu0 0.0
    %1498 = vmatprep.subr.mxu0 0.0
    %1499 = vmatpush1.msra.mxu0 0.0
    %1500 = vmatprep.mubr.f32.mxu0 0.0
    %1501 = vmatmul.mubr.f32.gmra.mrb[0].mxu0 %v1434
    %v1502 = vpop.f32.mrb[0].mxu0
    %v1503 = vadd.f32 0.0, %v1502
    %v1504 = vpop.f32.mrb[0].mxu0
    %1505 = vdwg.mxu0
    %v1506 = vmul.f32 %v1503, %v1503
    %1507 = vmatprep.subr.mxu0 0.0
    %1508 = vmatpush1.msra.mxu0 %v101
    %1509 = vmatprep.subr.mxu0 0.0
    %1510 = vmatpush1.msra.mxu0 %v102
    %1511 = vmatprep.subr.mxu0 0.0
    %1512 = vmatpush1.msra.mxu0 %v103
    %1513 = vmatprep.subr.mxu0 0.0
    %1514 = vmatpush1.msra.mxu0 %v104
    %1515 = vmatprep.subr.mxu0 0.0
    %1516 = vmatpush1.msra.mxu0 %v105
    %1517 = vmatprep.subr.mxu0 0.0
    %1518 = vmatpush1.msra.mxu0 %v106
    %1519 = vmatprep.subr.mxu0 0.0
    %1520 = vmatpush1.msra.mxu0 %v107
    %1521 = vmatprep.subr.mxu0 0.0
    %1522 = vmatpush1.msra.mxu0 %v108
    %1523 = vmatprep.subr.mxu0 0.0
    %1524 = vmatpush1.msra.mxu0 %v109
    %1525 = vmatprep.subr.mxu0 0.0
    %1526 = vmatpush1.msra.mxu0 %v110
    %1527 = vmatprep.subr.mxu0 0.0
    %1528 = vmatpush1.msra.mxu0 %v111
    %1529 = vmatprep.subr.mxu0 0.0
    %1530 = vmatpush1.msra.mxu0 %v112
    %1531 = vmatprep.subr.mxu0 0.0
    %1532 = vmatpush1.msra.mxu0 %v113
    %1533 = vmatprep.subr.mxu0 0.0
    %1534 = vmatpush1.msra.mxu0 %v114
    %1535 = vmatprep.subr.mxu0 0.0
    %1536 = vmatpush1.msra.mxu0 %v115
    %1537 = vmatprep.subr.mxu0 0.0
    %1538 = vmatpush1.msra.mxu0 %v116
    %1539 = vmatprep.subr.mxu0 0.0
    %1540 = vmatpush1.msra.mxu0 0.0
    %1541 = vmatprep.subr.mxu0 0.0
    %1542 = vmatpush1.msra.mxu0 0.0
    %1543 = vmatprep.subr.mxu0 0.0
    %1544 = vmatpush1.msra.mxu0 0.0
    %1545 = vmatprep.subr.mxu0 0.0
    %1546 = vmatpush1.msra.mxu0 0.0
    %1547 = vmatprep.subr.mxu0 0.0
    %1548 = vmatpush1.msra.mxu0 0.0
    %1549 = vmatprep.subr.mxu0 0.0
    %1550 = vmatpush1.msra.mxu0 0.0
    %1551 = vmatprep.subr.mxu0 0.0
    %1552 = vmatpush1.msra.mxu0 0.0
    %1553 = vmatprep.subr.mxu0 0.0
    %1554 = vmatpush1.msra.mxu0 0.0
    %1555 = vmatprep.subr.mxu0 0.0
    %1556 = vmatpush1.msra.mxu0 0.0
    %1557 = vmatprep.subr.mxu0 0.0
    %1558 = vmatpush1.msra.mxu0 0.0
    %1559 = vmatprep.subr.mxu0 0.0
    %1560 = vmatpush1.msra.mxu0 0.0
    %1561 = vmatprep.subr.mxu0 0.0
    %1562 = vmatpush1.msra.mxu0 0.0
    %1563 = vmatprep.subr.mxu0 0.0
    %1564 = vmatpush1.msra.mxu0 0.0
    %1565 = vmatprep.subr.mxu0 0.0
    %1566 = vmatpush1.msra.mxu0 0.0
    %1567 = vmatprep.subr.mxu0 0.0
    %1568 = vmatpush1.msra.mxu0 0.0
    %1569 = vmatprep.subr.mxu0 0.0
    %1570 = vmatpush1.msra.mxu0 0.0
    %1571 = vmatprep.mubr.f32.mxu0 0.0
    %1572 = vmatmul.mubr.f32.gmra.mrb[0].mxu0 %v1506
    %v1573 = vpop.f32.mrb[0].mxu0
    %v1574 = vadd.f32 0.0, %v1573
    %v1575 = vpop.f32.mrb[0].mxu0
    %1576 = vdwg.mxu0
    %v1578 = vsel %vm565, %v1574, 0
    %1580 = vmatprep.subr.mxu0 0.0
    %1581 = vmatpush1.msra.mxu0 %v117
    %1582 = vmatprep.subr.mxu0 0.0
    %1583 = vmatpush1.msra.mxu0 %v118
    %1584 = vmatprep.subr.mxu0 0.0
    %1585 = vmatpush1.msra.mxu0 0.0
    %1586 = vmatprep.subr.mxu0 0.0
    %1587 = vmatpush1.msra.mxu0 0.0
    %1588 = vmatprep.subr.mxu0 0.0
    %1589 = vmatpush1.msra.mxu0 0.0
    %1590 = vmatprep.subr.mxu0 0.0
    %1591 = vmatpush1.msra.mxu0 0.0
    %1592 = vmatprep.subr.mxu0 0.0
    %1593 = vmatpush1.msra.mxu0 0.0
    %1594 = vmatprep.subr.mxu0 0.0
    %1595 = vmatpush1.msra.mxu0 0.0
    %1596 = vmatprep.subr.mxu0 0.0
    %1597 = vmatpush1.msra.mxu0 0.0
    %1598 = vmatprep.subr.mxu0 0.0
    %1599 = vmatpush1.msra.mxu0 0.0
    %1600 = vmatprep.subr.mxu0 0.0
    %1601 = vmatpush1.msra.mxu0 0.0
    %1602 = vmatprep.subr.mxu0 0.0
    %1603 = vmatpush1.msra.mxu0 0.0
    %1604 = vmatprep.subr.mxu0 0.0
    %1605 = vmatpush1.msra.mxu0 0.0
    %1606 = vmatprep.subr.mxu0 0.0
    %1607 = vmatpush1.msra.mxu0 0.0
    %1608 = vmatprep.subr.mxu0 0.0
    %1609 = vmatpush1.msra.mxu0 0.0
    %1610 = vmatprep.subr.mxu0 0.0
    %1611 = vmatpush1.msra.mxu0 0.0
    %1612 = vmatprep.subr.mxu0 0.0
    %1613 = vmatpush1.msra.mxu0 0.0
    %1614 = vmatprep.subr.mxu0 0.0
    %1615 = vmatpush1.msra.mxu0 0.0
    %1616 = vmatprep.subr.mxu0 0.0
    %1617 = vmatpush1.msra.mxu0 0.0
    %1618 = vmatprep.subr.mxu0 0.0
    %1619 = vmatpush1.msra.mxu0 0.0
    %1620 = vmatprep.subr.mxu0 0.0
    %1621 = vmatpush1.msra.mxu0 0.0
    %1622 = vmatprep.subr.mxu0 0.0
    %1623 = vmatpush1.msra.mxu0 0.0
    %1624 = vmatprep.subr.mxu0 0.0
    %1625 = vmatpush1.msra.mxu0 0.0
    %1626 = vmatprep.subr.mxu0 0.0
    %1627 = vmatpush1.msra.mxu0 0.0
    %1628 = vmatprep.subr.mxu0 0.0
    %1629 = vmatpush1.msra.mxu0 0.0
    %1630 = vmatprep.subr.mxu0 0.0
    %1631 = vmatpush1.msra.mxu0 0.0
    %1632 = vmatprep.subr.mxu0 0.0
    %1633 = vmatpush1.msra.mxu0 0.0
    %1634 = vmatprep.subr.mxu0 0.0
    %1635 = vmatpush1.msra.mxu0 0.0
    %1636 = vmatprep.subr.mxu0 0.0
    %1637 = vmatpush1.msra.mxu0 0.0
    %1638 = vmatprep.subr.mxu0 0.0
    %1639 = vmatpush1.msra.mxu0 0.0
    %1640 = vmatprep.subr.mxu0 0.0
    %1641 = vmatpush1.msra.mxu0 0.0
    %1642 = vmatprep.subr.mxu0 0.0
    %1643 = vmatpush1.msra.mxu0 0.0
    %1644 = vmatprep.mubr.f32.mxu0 0.0
    %1645 = vmatmul.mubr.f32.gmra.mrb[0].mxu0 %v1578
    %v1646 = vpop.f32.mrb[0].mxu0
    %v1647 = vadd.f32 %v563, %v1646
    %v1648 = vpop.f32.mrb[0].mxu0
    %1649 = vdwg.mxu0
    %v1650 = vxor.u32 %v1647, 2147483648
    %v1651 = vmul.f32 %v1650, 1.442695
    %v1652 = vpow.pop %v1651
    %v1653 = vadd.f32 %v1652, 1.0
    %v1654 = vrcp.pop %v1653
    %v1655 = vmul.f32 1.0, %v1654
    %v1656 = vtanh.pop %v1647
    %v1657 = vmul.f32 %v1655, %v656
    %1659 = vrot.lane.b32.xlu0 %v1656, 116
    %v1660 = vpop.permute.xlu0 %1659
    %v1662 = vmul.f32 %v1655, %v1660
    %1664 = vrot.lane.b32.xlu0 %v1662, 122
    %v1665 = vpop.permute.xlu0 %1664
    %v1667 = vadd.f32 %v1657, %v1665
    %v1668 = vtanh.pop %v1667
    %1670 = vrot.lane.b32.xlu0 %v1668, 12
    %v1671 = vpop.permute.xlu0 %1670
    %v1673 = vmul.f32 %v1655, %v1671
    %1675 = vrot.lane.b32.xlu0 %v1673, 116
    %v1676 = vpop.permute.xlu0 %1675
    %v1677 = vsel %vm672, %v1676, 0
    %1679 = vmatprep.subr.mxu0 0.0
    %1680 = vmatpush1.msra.mxu0 %v677
    %1681 = vmatprep.subr.mxu0 0.0
    %1682 = vmatpush1.msra.mxu0 0.0
    %1683 = vmatprep.subr.mxu0 0.0
    %1684 = vmatpush1.msra.mxu0 0.0
    %1685 = vmatprep.subr.mxu0 0.0
    %1686 = vmatpush1.msra.mxu0 0.0
    %1687 = vmatprep.subr.mxu0 0.0
    %1688 = vmatpush1.msra.mxu0 0.0
    %1689 = vmatprep.subr.mxu0 0.0
    %1690 = vmatpush1.msra.mxu0 0.0
    %1691 = vmatprep.subr.mxu0 0.0
    %1692 = vmatpush1.msra.mxu0 0.0
    %1693 = vmatprep.subr.mxu0 0.0
    %1694 = vmatpush1.msra.mxu0 0.0
    %1695 = vmatprep.subr.mxu0 0.0
    %1696 = vmatpush1.msra.mxu0 0.0
    %1697 = vmatprep.subr.mxu0 0.0
    %1698 = vmatpush1.msra.mxu0 0.0
    %1699 = vmatprep.subr.mxu0 0.0
    %1700 = vmatpush1.msra.mxu0 0.0
    %1701 = vmatprep.subr.mxu0 0.0
    %1702 = vmatpush1.msra.mxu0 0.0
    %1703 = vmatprep.subr.mxu0 0.0
    %1704 = vmatpush1.msra.mxu0 0.0
    %1705 = vmatprep.subr.mxu0 0.0
    %1706 = vmatpush1.msra.mxu0 0.0
    %1707 = vmatprep.subr.mxu0 0.0
    %1708 = vmatpush1.msra.mxu0 0.0
    %1709 = vmatprep.subr.mxu0 0.0
    %1710 = vmatpush1.msra.mxu0 0.0
    %1711 = vmatprep.subr.mxu0 0.0
    %1712 = vmatpush1.msra.mxu0 0.0
    %1713 = vmatprep.subr.mxu0 0.0
    %1714 = vmatpush1.msra.mxu0 0.0
    %1715 = vmatprep.subr.mxu0 0.0
    %1716 = vmatpush1.msra.mxu0 0.0
    %1717 = vmatprep.subr.mxu0 0.0
    %1718 = vmatpush1.msra.mxu0 0.0
    %1719 = vmatprep.subr.mxu0 0.0
    %1720 = vmatpush1.msra.mxu0 0.0
    %1721 = vmatprep.subr.mxu0 0.0
    %1722 = vmatpush1.msra.mxu0 0.0
    %1723 = vmatprep.subr.mxu0 0.0
    %1724 = vmatpush1.msra.mxu0 0.0
    %1725 = vmatprep.subr.mxu0 0.0
    %1726 = vmatpush1.msra.mxu0 0.0
    %1727 = vmatprep.subr.mxu0 0.0
    %1728 = vmatpush1.msra.mxu0 0.0
    %1729 = vmatprep.subr.mxu0 0.0
    %1730 = vmatpush1.msra.mxu0 0.0
    %1731 = vmatprep.subr.mxu0 0.0
    %1732 = vmatpush1.msra.mxu0 0.0
    %1733 = vmatprep.subr.mxu0 0.0
    %1734 = vmatpush1.msra.mxu0 0.0
    %1735 = vmatprep.subr.mxu0 0.0
    %1736 = vmatpush1.msra.mxu0 0.0
    %1737 = vmatprep.subr.mxu0 0.0
    %1738 = vmatpush1.msra.mxu0 0.0
    %1739 = vmatprep.subr.mxu0 0.0
    %1740 = vmatpush1.msra.mxu0 0.0
    %1741 = vmatprep.subr.mxu0 0.0
    %1742 = vmatpush1.msra.mxu0 0.0
    %1743 = vmatprep.mubr.f32.mxu0 0.0
    %1744 = vmatmul.mubr.f32.gmra.mrb[0].mxu0 %v1677
    %v1745 = vpop.f32.mrb[0].mxu0
    %v1746 = vadd.f32 %v667, %v1745
    %v1747 = vpop.f32.mrb[0].mxu0
    %1748 = vdwg.mxu0
    %v1749 = vand.u32 2147483647, %v1746
    %vm1750 = vcmp.le.f32.partialorder %v1749, 0.7853982
    %vm1751 = vcmp.lt.s32.totalorder %v1746, 0
    %v1752 = vand.u32 %v1746, 2139095040
    %v1753 = vshrl.u32 %v1752, 23
    %v1754 = vsub.s32 %v1753, 127
    %v1755 = vand.u32 2147483647, %v1746
    %v1756 = vand.u32 %v1755, 8388607
    %v1757 = vor.u32 %v1756, 8388608
    %v1758 = vsub.s32 0, %v1757
    %v1759 = vadd.s32 %v1754, 1
    %vm1760 = vcmp.gt.s32.totalorder %v1759, 0
    %v1761 = vsel %vm1760, %v1759, 0
    %v1762 = vshrl.u32 %v1761, 5
    %v1763 = vand.u32 %v1761, 31
    %v1764 = vsub.s32 32, %v1763
    %v1765 = vshrl.u32 683565275, %v1764
    %v1766 = vshll.u32 683565275, %v1763
    %v1767 = vshrl.u32 2475754826, %v1764
    %v1768 = vor.u32 %v1766, %v1767
    %v1769 = vshll.u32 2475754826, %v1763
    %v1770 = vshrl.u32 2131351028, %v1764
    %v1771 = vor.u32 %v1769, %v1770
    %v1772 = vshll.u32 2131351028, %v1763
    %v1773 = vshrl.u32 2102212464, %v1764
    %v1774 = vor.u32 %v1772, %v1773
    %v1775 = vshll.u32 2102212464, %v1763
    %v1776 = vshrl.u32 920167782, %v1764
    %v1777 = vor.u32 %v1775, %v1776
    %v1778 = vshll.u32 920167782, %v1763
    %v1779 = vshrl.u32 1326507024, %v1764
    %v1780 = vor.u32 %v1778, %v1779
    %vm1781 = vcmp.lt.s32.totalorder %v1762, 1
    %vm1782 = vcmp.lt.s32.totalorder %v1762, 2
    %vm1783 = vcmp.lt.s32.totalorder %v1762, 3
    %vm1784 = vcmp.lt.s32.totalorder %v1762, 4
    %v1785 = vsel %vm1781, %v1765, %v1768
    %v1786 = vsel %vm1784, %v1774, 2102212464
    %v1787 = vsel %vm1783, %v1771, %v1786
    %v1788 = vsel %vm1782, %v1785, %v1787
    %v1789 = vsel %vm1781, %v1768, %v1771
    %v1790 = vsel %vm1784, %v1777, 920167782
    %v1791 = vsel %vm1783, %v1774, %v1790
    %v1792 = vsel %vm1782, %v1789, %v1791
    %v1793 = vsel %vm1781, %v1771, %v1774
    %v1794 = vsel %vm1784, %v1780, 1326507024
    %v1795 = vsel %vm1783, %v1777, %v1794
    %v1796 = vsel %vm1782, %v1793, %v1795
    %v1797 = vshll.u32 %v1757, 8
    %v1798 = vmul.u32.u64.compose %v1797, %v1796
    %v1799 = vextract.low.u32 %v1798
    %v1800 = vextract.high.u32 %v1798
    %v1801 = vmul.u32.u64.compose %v1797, %v1792
    %v1802 = vextract.low.u32 %v1801
    %v1803 = vextract.high.u32 %v1801
    %v1804 = vmul.u32 %v1797, %v1788
    %v1805 = vadd.s32 %v1800, %v1802
    %vm1806 = vc.u32 %v1800, %v1802
    %v1807 = vadd.s32 %v1803, 1
    %v1808 = vsel %vm1806, %v1807, %v1803
    %v1809 = vadd.s32 %v1804, %v1808
    %v1810 = vadd.s32 %v1809, 536870912
    %v1811 = vshrl.u32 %v1810, 30
    %v1812 = vshll.u32 %v1811, 30
    %v1813 = vsub.s32 %v1809, %v1812
    %vm1814 = vcmp.lt.s32.totalorder %v1813, 0
    %v1815 = vsub.s32 0, %v1813
    %v1816 = vsel %vm1814, %v1815, %v1813
    %v1817 = vclz %v1816
    %v1818 = vsub.s32 %v1817, 2
    %vm1819 = vcmp.gt.s32.totalorder 0, %v1818
    %v1820 = vsel %vm1819, 0, %v1818
    %v1821 = vsub.s32 32, %v1820
    %v1822 = vshll.u32 %v1813, %v1820
    %v1823 = vshrl.u32 %v1805, %v1821
    %v1824 = vor.u32 %v1822, %v1823
    %v1825 = vsub.s32 4294967266, %v1820
    %v1826 = vadd.s32 %v1825, 127
    %v1827 = vshll.u32 %v1826, 23
    %v1828 = vor.u32 4788187, %v1827
    %v1829 = vand.u32 2147483647, %v1828
    %v1831 = vcvt.s32.f32 %v1824
    %v1832 = vmul.f32 %v1831, %v1829
    %v1833 = vxor.u32 %v1832, 2147483648
    %v1834 = vsel %vm1751, %v1833, %v1832
    %v1835 = vsub.s32 4, %v1811
    %v1836 = vsel %vm1751, %v1835, %v1811
    %v1837 = vsel %vm1750, %v1746, %v1834
    %v1838 = vsel %vm1750, 0, %v1836
    %v1839 = vcosq.f32.pop %v1837
    %v1840 = vsinq.f32.pop %v1837
    %vm1841 = vweird.f32 %v1746
    %v1842 = vand.u32 %v1838, 3
    %vm1843 = vcmp.lt.s32.totalorder %v1842, 2
    %vm1844 = vcmp.eq.s32.totalorder %v1842, 0
    %v1845 = vxor.u32 %v1840, 2147483648
    %v1846 = vsel %vm1844, %v1839, %v1845
    %vm1847 = vcmp.eq.s32.totalorder %v1842, 2
    %v1848 = vxor.u32 %v1839, 2147483648
    %v1849 = vsel %vm1847, %v1848, %v1840
    %v1850 = vsel %vm1843, %v1846, %v1849
    %v1851 = vsel %vm1841, nan, %v1850
    %v1853 = vsel %vm852, %v1851, 0
    %1855 = vmatprep.subr.mxu0 0.0
    %1856 = vmatpush1.msra.mxu0 %v122
    %1857 = vmatprep.subr.mxu0 0.0
    %1858 = vmatpush1.msra.mxu0 0.0
    %1859 = vmatprep.subr.mxu0 0.0
    %1860 = vmatpush1.msra.mxu0 0.0
    %1861 = vmatprep.subr.mxu0 0.0
    %1862 = vmatpush1.msra.mxu0 0.0
    %1863 = vmatprep.subr.mxu0 0.0
    %1864 = vmatpush1.msra.mxu0 0.0
    %1865 = vmatprep.subr.mxu0 0.0
    %1866 = vmatpush1.msra.mxu0 0.0
    %1867 = vmatprep.subr.mxu0 0.0
    %1868 = vmatpush1.msra.mxu0 0.0
    %1869 = vmatprep.subr.mxu0 0.0
    %1870 = vmatpush1.msra.mxu0 0.0
    %1871 = vmatprep.subr.mxu0 0.0
    %1872 = vmatpush1.msra.mxu0 0.0
    %1873 = vmatprep.subr.mxu0 0.0
    %1874 = vmatpush1.msra.mxu0 0.0
    %1875 = vmatprep.subr.mxu0 0.0
    %1876 = vmatpush1.msra.mxu0 0.0
    %1877 = vmatprep.subr.mxu0 0.0
    %1878 = vmatpush1.msra.mxu0 0.0
    %1879 = vmatprep.subr.mxu0 0.0
    %1880 = vmatpush1.msra.mxu0 0.0
    %1881 = vmatprep.subr.mxu0 0.0
    %1882 = vmatpush1.msra.mxu0 0.0
    %1883 = vmatprep.subr.mxu0 0.0
    %1884 = vmatpush1.msra.mxu0 0.0
    %1885 = vmatprep.subr.mxu0 0.0
    %1886 = vmatpush1.msra.mxu0 0.0
    %1887 = vmatprep.subr.mxu0 0.0
    %1888 = vmatpush1.msra.mxu0 0.0
    %1889 = vmatprep.subr.mxu0 0.0
    %1890 = vmatpush1.msra.mxu0 0.0
    %1891 = vmatprep.subr.mxu0 0.0
    %1892 = vmatpush1.msra.mxu0 0.0
    %1893 = vmatprep.subr.mxu0 0.0
    %1894 = vmatpush1.msra.mxu0 0.0
    %1895 = vmatprep.subr.mxu0 0.0
    %1896 = vmatpush1.msra.mxu0 0.0
    %1897 = vmatprep.subr.mxu0 0.0
    %1898 = vmatpush1.msra.mxu0 0.0
    %1899 = vmatprep.subr.mxu0 0.0
    %1900 = vmatpush1.msra.mxu0 0.0
    %1901 = vmatprep.subr.mxu0 0.0
    %1902 = vmatpush1.msra.mxu0 0.0
    %1903 = vmatprep.subr.mxu0 0.0
    %1904 = vmatpush1.msra.mxu0 0.0
    %1905 = vmatprep.subr.mxu0 0.0
    %1906 = vmatpush1.msra.mxu0 0.0
    %1907 = vmatprep.subr.mxu0 0.0
    %1908 = vmatpush1.msra.mxu0 0.0
    %1909 = vmatprep.subr.mxu0 0.0
    %1910 = vmatpush1.msra.mxu0 0.0
    %1911 = vmatprep.subr.mxu0 0.0
    %1912 = vmatpush1.msra.mxu0 0.0
    %1913 = vmatprep.subr.mxu0 0.0
    %1914 = vmatpush1.msra.mxu0 0.0
    %1915 = vmatprep.subr.mxu0 0.0
    %1916 = vmatpush1.msra.mxu0 0.0
    %1917 = vmatprep.subr.mxu0 0.0
    %1918 = vmatpush1.msra.mxu0 0.0
    %1919 = vmatprep.mubr.f32.mxu0 0.0
    %1920 = vmatmul.mubr.f32.gmra.mrb[0].mxu0 %v1853
    %v1921 = vpop.f32.mrb[0].mxu0
    %v1922 = vadd.f32 0.0, %v1921
    %v1923 = vpop.f32.mrb[0].mxu0
    %1924 = vdwg.mxu0
    %1926 = vrot.lane.b32.xlu0 %v1922, 96
    %v1927 = vpop.permute.xlu0 %1926
    %v1929 = vmul.f32 %v1922, %v1927
    %1931 = vrot.lane.b32.xlu0 %v1929, 112
    %v1932 = vpop.permute.xlu0 %1931
    %v1934 = vmul.f32 %v1929, %v1932
    %v1936 = vsel %vm565, %v1934, 0
    %1938 = vmatprep.subr.mxu0 0.0
    %1939 = vmatpush1.msra.mxu0 %v123
    %1940 = vmatprep.subr.mxu0 0.0
    %1941 = vmatpush1.msra.mxu0 %v124
    %1942 = vmatprep.subr.mxu0 0.0
    %1943 = vmatpush1.msra.mxu0 0.0
    %1944 = vmatprep.subr.mxu0 0.0
    %1945 = vmatpush1.msra.mxu0 0.0
    %1946 = vmatprep.subr.mxu0 0.0
    %1947 = vmatpush1.msra.mxu0 0.0
    %1948 = vmatprep.subr.mxu0 0.0
    %1949 = vmatpush1.msra.mxu0 0.0
    %1950 = vmatprep.subr.mxu0 0.0
    %1951 = vmatpush1.msra.mxu0 0.0
    %1952 = vmatprep.subr.mxu0 0.0
    %1953 = vmatpush1.msra.mxu0 0.0
    %1954 = vmatprep.subr.mxu0 0.0
    %1955 = vmatpush1.msra.mxu0 0.0
    %1956 = vmatprep.subr.mxu0 0.0
    %1957 = vmatpush1.msra.mxu0 0.0
    %1958 = vmatprep.subr.mxu0 0.0
    %1959 = vmatpush1.msra.mxu0 0.0
    %1960 = vmatprep.subr.mxu0 0.0
    %1961 = vmatpush1.msra.mxu0 0.0
    %1962 = vmatprep.subr.mxu0 0.0
    %1963 = vmatpush1.msra.mxu0 0.0
    %1964 = vmatprep.subr.mxu0 0.0
    %1965 = vmatpush1.msra.mxu0 0.0
    %1966 = vmatprep.subr.mxu0 0.0
    %1967 = vmatpush1.msra.mxu0 0.0
    %1968 = vmatprep.subr.mxu0 0.0
    %1969 = vmatpush1.msra.mxu0 0.0
    %1970 = vmatprep.subr.mxu0 0.0
    %1971 = vmatpush1.msra.mxu0 0.0
    %1972 = vmatprep.subr.mxu0 0.0
    %1973 = vmatpush1.msra.mxu0 0.0
    %1974 = vmatprep.subr.mxu0 0.0
    %1975 = vmatpush1.msra.mxu0 0.0
    %1976 = vmatprep.subr.mxu0 0.0
    %1977 = vmatpush1.msra.mxu0 0.0
    %1978 = vmatprep.subr.mxu0 0.0
    %1979 = vmatpush1.msra.mxu0 0.0
    %1980 = vmatprep.subr.mxu0 0.0
    %1981 = vmatpush1.msra.mxu0 0.0
    %1982 = vmatprep.subr.mxu0 0.0
    %1983 = vmatpush1.msra.mxu0 0.0
    %1984 = vmatprep.subr.mxu0 0.0
    %1985 = vmatpush1.msra.mxu0 0.0
    %1986 = vmatprep.subr.mxu0 0.0
    %1987 = vmatpush1.msra.mxu0 0.0
    %1988 = vmatprep.subr.mxu0 0.0
    %1989 = vmatpush1.msra.mxu0 0.0
    %1990 = vmatprep.subr.mxu0 0.0
    %1991 = vmatpush1.msra.mxu0 0.0
    %1992 = vmatprep.subr.mxu0 0.0
    %1993 = vmatpush1.msra.mxu0 0.0
    %1994 = vmatprep.subr.mxu0 0.0
    %1995 = vmatpush1.msra.mxu0 0.0
    %1996 = vmatprep.subr.mxu0 0.0
    %1997 = vmatpush1.msra.mxu0 0.0
    %1998 = vmatprep.subr.mxu0 0.0
    %1999 = vmatpush1.msra.mxu0 0.0
    %2000 = vmatprep.subr.mxu0 0.0
    %2001 = vmatpush1.msra.mxu0 0.0
    %2002 = vmatprep.mubr.f32.mxu0 0.0
    %2003 = vmatmul.mubr.f32.gmra.mrb[0].mxu0 %v1936
    %v2004 = vpop.f32.mrb[0].mxu0
    %v2005 = vadd.f32 0.0, %v2004
    %v2006 = vpop.f32.mrb[0].mxu0
    %2007 = vdwg.mxu0
    %v2008 = vmul.f32 %v2005, %v2005
    %v2010 = vsel %vm333, %v2008, 0
    %2012 = vmatprep.subr.mxu0 0.0
    %2013 = vmatpush1.msra.mxu0 %v125
    %2014 = vmatprep.subr.mxu0 0.0
    %2015 = vmatpush1.msra.mxu0 %v126
    %2016 = vmatprep.subr.mxu0 0.0
    %2017 = vmatpush1.msra.mxu0 %v127
    %2018 = vmatprep.subr.mxu0 0.0
    %2019 = vmatpush1.msra.mxu0 %v128
    %2020 = vmatprep.subr.mxu0 0.0
    %2021 = vmatpush1.msra.mxu0 0.0
    %2022 = vmatprep.subr.mxu0 0.0
    %2023 = vmatpush1.msra.mxu0 0.0
    %2024 = vmatprep.subr.mxu0 0.0
    %2025 = vmatpush1.msra.mxu0 0.0
    %2026 = vmatprep.subr.mxu0 0.0
    %2027 = vmatpush1.msra.mxu0 0.0
    %2028 = vmatprep.subr.mxu0 0.0
    %2029 = vmatpush1.msra.mxu0 0.0
    %2030 = vmatprep.subr.mxu0 0.0
    %2031 = vmatpush1.msra.mxu0 0.0
    %2032 = vmatprep.subr.mxu0 0.0
    %2033 = vmatpush1.msra.mxu0 0.0
    %2034 = vmatprep.subr.mxu0 0.0
    %2035 = vmatpush1.msra.mxu0 0.0
    %2036 = vmatprep.subr.mxu0 0.0
    %2037 = vmatpush1.msra.mxu0 0.0
    %2038 = vmatprep.subr.mxu0 0.0
    %2039 = vmatpush1.msra.mxu0 0.0
    %2040 = vmatprep.subr.mxu0 0.0
    %2041 = vmatpush1.msra.mxu0 0.0
    %2042 = vmatprep.subr.mxu0 0.0
    %2043 = vmatpush1.msra.mxu0 0.0
    %2044 = vmatprep.subr.mxu0 0.0
    %2045 = vmatpush1.msra.mxu0 0.0
    %2046 = vmatprep.subr.mxu0 0.0
    %2047 = vmatpush1.msra.mxu0 0.0
    %2048 = vmatprep.subr.mxu0 0.0
    %2049 = vmatpush1.msra.mxu0 0.0
    %2050 = vmatprep.subr.mxu0 0.0
    %2051 = vmatpush1.msra.mxu0 0.0
    %2052 = vmatprep.subr.mxu0 0.0
    %2053 = vmatpush1.msra.mxu0 0.0
    %2054 = vmatprep.subr.mxu0 0.0
    %2055 = vmatpush1.msra.mxu0 0.0
    %2056 = vmatprep.subr.mxu0 0.0
    %2057 = vmatpush1.msra.mxu0 0.0
    %2058 = vmatprep.subr.mxu0 0.0
    %2059 = vmatpush1.msra.mxu0 0.0
    %2060 = vmatprep.subr.mxu0 0.0
    %2061 = vmatpush1.msra.mxu0 0.0
    %2062 = vmatprep.subr.mxu0 0.0
    %2063 = vmatpush1.msra.mxu0 0.0
    %2064 = vmatprep.subr.mxu0 0.0
    %2065 = vmatpush1.msra.mxu0 0.0
    %2066 = vmatprep.subr.mxu0 0.0
    %2067 = vmatpush1.msra.mxu0 0.0
    %2068 = vmatprep.subr.mxu0 0.0
    %2069 = vmatpush1.msra.mxu0 0.0
    %2070 = vmatprep.subr.mxu0 0.0
    %2071 = vmatpush1.msra.mxu0 0.0
    %2072 = vmatprep.subr.mxu0 0.0
    %2073 = vmatpush1.msra.mxu0 0.0
    %2074 = vmatprep.subr.mxu0 0.0
    %2075 = vmatpush1.msra.mxu0 0.0
    %2076 = vmatprep.mubr.f32.mxu0 0.0
    %2077 = vmatmul.mubr.f32.gmra.mrb[0].mxu0 %v2010
    %v2078 = vpop.f32.mrb[0].mxu0
    %v2079 = vadd.f32 0.0, %v2078
    %v2080 = vpop.f32.mrb[0].mxu0
    %2081 = vdwg.mxu0
    %v2083 = vsel %vm1089, %v2079, 0
    %2085 = vmatprep.subr.mxu0 0.0
    %2086 = vmatpush1.msra.mxu0 %v1095
    %2087 = vmatprep.subr.mxu0 0.0
    %2088 = vmatpush1.msra.mxu0 0.0
    %2089 = vmatprep.subr.mxu0 0.0
    %2090 = vmatpush1.msra.mxu0 0.0
    %2091 = vmatprep.subr.mxu0 0.0
    %2092 = vmatpush1.msra.mxu0 0.0
    %2093 = vmatprep.subr.mxu0 0.0
    %2094 = vmatpush1.msra.mxu0 0.0
    %2095 = vmatprep.subr.mxu0 0.0
    %2096 = vmatpush1.msra.mxu0 0.0
    %2097 = vmatprep.subr.mxu0 0.0
    %2098 = vmatpush1.msra.mxu0 0.0
    %2099 = vmatprep.subr.mxu0 0.0
    %2100 = vmatpush1.msra.mxu0 0.0
    %2101 = vmatprep.subr.mxu0 0.0
    %2102 = vmatpush1.msra.mxu0 0.0
    %2103 = vmatprep.subr.mxu0 0.0
    %2104 = vmatpush1.msra.mxu0 0.0
    %2105 = vmatprep.subr.mxu0 0.0
    %2106 = vmatpush1.msra.mxu0 0.0
    %2107 = vmatprep.subr.mxu0 0.0
    %2108 = vmatpush1.msra.mxu0 0.0
    %2109 = vmatprep.subr.mxu0 0.0
    %2110 = vmatpush1.msra.mxu0 0.0
    %2111 = vmatprep.subr.mxu0 0.0
    %2112 = vmatpush1.msra.mxu0 0.0
    %2113 = vmatprep.subr.mxu0 0.0
    %2114 = vmatpush1.msra.mxu0 0.0
    %2115 = vmatprep.subr.mxu0 0.0
    %2116 = vmatpush1.msra.mxu0 0.0
    %2117 = vmatprep.subr.mxu0 0.0
    %2118 = vmatpush1.msra.mxu0 0.0
    %2119 = vmatprep.subr.mxu0 0.0
    %2120 = vmatpush1.msra.mxu0 0.0
    %2121 = vmatprep.subr.mxu0 0.0
    %2122 = vmatpush1.msra.mxu0 0.0
    %2123 = vmatprep.subr.mxu0 0.0
    %2124 = vmatpush1.msra.mxu0 0.0
    %2125 = vmatprep.subr.mxu0 0.0
    %2126 = vmatpush1.msra.mxu0 0.0
    %2127 = vmatprep.subr.mxu0 0.0
    %2128 = vmatpush1.msra.mxu0 0.0
    %2129 = vmatprep.subr.mxu0 0.0
    %2130 = vmatpush1.msra.mxu0 0.0
    %2131 = vmatprep.subr.mxu0 0.0
    %2132 = vmatpush1.msra.mxu0 0.0
    %2133 = vmatprep.subr.mxu0 0.0
    %2134 = vmatpush1.msra.mxu0 0.0
    %2135 = vmatprep.subr.mxu0 0.0
    %2136 = vmatpush1.msra.mxu0 0.0
    %2137 = vmatprep.subr.mxu0 0.0
    %2138 = vmatpush1.msra.mxu0 0.0
    %2139 = vmatprep.subr.mxu0 0.0
    %2140 = vmatpush1.msra.mxu0 0.0
    %2141 = vmatprep.subr.mxu0 0.0
    %2142 = vmatpush1.msra.mxu0 0.0
    %2143 = vmatprep.subr.mxu0 0.0
    %2144 = vmatpush1.msra.mxu0 0.0
    %2145 = vmatprep.subr.mxu0 0.0
    %2146 = vmatpush1.msra.mxu0 0.0
    %2147 = vmatprep.subr.mxu0 0.0
    %2148 = vmatpush1.msra.mxu0 0.0
    %2149 = vmatprep.mubr.f32.mxu0 0.0
    %2150 = vmatmul.mubr.f32.gmra.mrb[0].mxu0 %v2083
    %v2151 = vpop.f32.mrb[0].mxu0
    %v2152 = vadd.f32 %v1087, %v2151
    %v2153 = vpop.f32.mrb[0].mxu0
    %2154 = vdwg.mxu0
    %s2155 = scalar_lea.vmem %s0, 4
    %v2156 = vld [vmem:[%s2155] sm:$0x3]
    %2158 = vset.pattern.permute.xlu0 0
    %2159 = vperm.xlu0 %2158, %v2156
    %v2160 = vpop.permute.xlu0 %2159
    %v2162 = vmul.f32 %v2160, %v141
    %v2164 = vsel %vm144, %v2152, 0
    %2166 = vmatprep.subr.mxu0 0.0
    %2167 = vmatpush1.msra.mxu0 %v150
    %2168 = vmatprep.subr.mxu0 0.0
    %2169 = vmatpush1.msra.mxu0 0.0
    %2170 = vmatprep.subr.mxu0 0.0
    %2171 = vmatpush1.msra.mxu0 0.0
    %2172 = vmatprep.subr.mxu0 0.0
    %2173 = vmatpush1.msra.mxu0 0.0
    %2174 = vmatprep.subr.mxu0 0.0
    %2175 = vmatpush1.msra.mxu0 0.0
    %2176 = vmatprep.subr.mxu0 0.0
    %2177 = vmatpush1.msra.mxu0 0.0
    %2178 = vmatprep.subr.mxu0 0.0
    %2179 = vmatpush1.msra.mxu0 0.0
    %2180 = vmatprep.subr.mxu0 0.0
    %2181 = vmatpush1.msra.mxu0 0.0
    %2182 = vmatprep.subr.mxu0 0.0
    %2183 = vmatpush1.msra.mxu0 0.0
    %2184 = vmatprep.subr.mxu0 0.0
    %2185 = vmatpush1.msra.mxu0 0.0
    %2186 = vmatprep.subr.mxu0 0.0
    %2187 = vmatpush1.msra.mxu0 0.0
    %2188 = vmatprep.subr.mxu0 0.0
    %2189 = vmatpush1.msra.mxu0 0.0
    %2190 = vmatprep.subr.mxu0 0.0
    %2191 = vmatpush1.msra.mxu0 0.0
    %2192 = vmatprep.subr.mxu0 0.0
    %2193 = vmatpush1.msra.mxu0 0.0
    %2194 = vmatprep.subr.mxu0 0.0
    %2195 = vmatpush1.msra.mxu0 0.0
    %2196 = vmatprep.subr.mxu0 0.0
    %2197 = vmatpush1.msra.mxu0 0.0
    %2198 = vmatprep.subr.mxu0 0.0
    %2199 = vmatpush1.msra.mxu0 0.0
    %2200 = vmatprep.subr.mxu0 0.0
    %2201 = vmatpush1.msra.mxu0 0.0
    %2202 = vmatprep.subr.mxu0 0.0
    %2203 = vmatpush1.msra.mxu0 0.0
    %2204 = vmatprep.subr.mxu0 0.0
    %2205 = vmatpush1.msra.mxu0 0.0
    %2206 = vmatprep.subr.mxu0 0.0
    %2207 = vmatpush1.msra.mxu0 0.0
    %2208 = vmatprep.subr.mxu0 0.0
    %2209 = vmatpush1.msra.mxu0 0.0
    %2210 = vmatprep.subr.mxu0 0.0
    %2211 = vmatpush1.msra.mxu0 0.0
    %2212 = vmatprep.subr.mxu0 0.0
    %2213 = vmatpush1.msra.mxu0 0.0
    %2214 = vmatprep.subr.mxu0 0.0
    %2215 = vmatpush1.msra.mxu0 0.0
    %2216 = vmatprep.subr.mxu0 0.0
    %2217 = vmatpush1.msra.mxu0 0.0
    %2218 = vmatprep.subr.mxu0 0.0
    %2219 = vmatpush1.msra.mxu0 0.0
    %2220 = vmatprep.subr.mxu0 0.0
    %2221 = vmatpush1.msra.mxu0 0.0
    %2222 = vmatprep.subr.mxu0 0.0
    %2223 = vmatpush1.msra.mxu0 0.0
    %2224 = vmatprep.subr.mxu0 0.0
    %2225 = vmatpush1.msra.mxu0 0.0
    %2226 = vmatprep.subr.mxu0 0.0
    %2227 = vmatpush1.msra.mxu0 0.0
    %2228 = vmatprep.subr.mxu0 0.0
    %2229 = vmatpush1.msra.mxu0 0.0
    %2230 = vmatprep.mubr.f32.mxu0 0.0
    %2231 = vmatmul.mubr.f32.gmra.mrb[0].mxu0 %v2164
    %v2232 = vpop.f32.mrb[0].mxu0
    %v2233 = vadd.f32 0.0, %v2232
    %v2234 = vpop.f32.mrb[0].mxu0
    %2235 = vdwg.mxu0
    %v2236 = vadd.f32 %v2162, %v2233
    %v2237 = vadd.f32 %v2236, %v227
    %v2238 = vand.u32 2147483647, %v2237
    %vm2239 = vcmp.le.f32.partialorder %v2238, 0.7853982
    %vm2240 = vcmp.lt.s32.totalorder %v2237, 0
    %v2241 = vand.u32 %v2237, 2139095040
    %v2242 = vshrl.u32 %v2241, 23
    %v2243 = vsub.s32 %v2242, 127
    %v2244 = vand.u32 2147483647, %v2237
    %v2245 = vand.u32 %v2244, 8388607
    %v2246 = vor.u32 %v2245, 8388608
    %v2247 = vsub.s32 0, %v2246
    %v2248 = vadd.s32 %v2243, 1
    %vm2249 = vcmp.gt.s32.totalorder %v2248, 0
    %v2250 = vsel %vm2249, %v2248, 0
    %v2251 = vshrl.u32 %v2250, 5
    %v2252 = vand.u32 %v2250, 31
    %v2253 = vsub.s32 32, %v2252
    %v2254 = vshrl.u32 683565275, %v2253
    %v2255 = vshll.u32 683565275, %v2252
    %v2256 = vshrl.u32 2475754826, %v2253
    %v2257 = vor.u32 %v2255, %v2256
    %v2258 = vshll.u32 2475754826, %v2252
    %v2259 = vshrl.u32 2131351028, %v2253
    %v2260 = vor.u32 %v2258, %v2259
    %v2261 = vshll.u32 2131351028, %v2252
    %v2262 = vshrl.u32 2102212464, %v2253
    %v2263 = vor.u32 %v2261, %v2262
    %v2264 = vshll.u32 2102212464, %v2252
    %v2265 = vshrl.u32 920167782, %v2253
    %v2266 = vor.u32 %v2264, %v2265
    %v2267 = vshll.u32 920167782, %v2252
    %v2268 = vshrl.u32 1326507024, %v2253
    %v2269 = vor.u32 %v2267, %v2268
    %vm2270 = vcmp.lt.s32.totalorder %v2251, 1
    %vm2271 = vcmp.lt.s32.totalorder %v2251, 2
    %vm2272 = vcmp.lt.s32.totalorder %v2251, 3
    %vm2273 = vcmp.lt.s32.totalorder %v2251, 4
    %v2274 = vsel %vm2270, %v2254, %v2257
    %v2275 = vsel %vm2273, %v2263, 2102212464
    %v2276 = vsel %vm2272, %v2260, %v2275
    %v2277 = vsel %vm2271, %v2274, %v2276
    %v2278 = vsel %vm2270, %v2257, %v2260
    %v2279 = vsel %vm2273, %v2266, 920167782
    %v2280 = vsel %vm2272, %v2263, %v2279
    %v2281 = vsel %vm2271, %v2278, %v2280
    %v2282 = vsel %vm2270, %v2260, %v2263
    %v2283 = vsel %vm2273, %v2269, 1326507024
    %v2284 = vsel %vm2272, %v2266, %v2283
    %v2285 = vsel %vm2271, %v2282, %v2284
    %v2286 = vshll.u32 %v2246, 8
    %v2287 = vmul.u32.u64.compose %v2286, %v2285
    %v2288 = vextract.low.u32 %v2287
    %v2289 = vextract.high.u32 %v2287
    %v2290 = vmul.u32.u64.compose %v2286, %v2281
    %v2291 = vextract.low.u32 %v2290
    %v2292 = vextract.high.u32 %v2290
    %v2293 = vmul.u32 %v2286, %v2277
    %v2294 = vadd.s32 %v2289, %v2291
    %vm2295 = vc.u32 %v2289, %v2291
    %v2296 = vadd.s32 %v2292, 1
    %v2297 = vsel %vm2295, %v2296, %v2292
    %v2298 = vadd.s32 %v2293, %v2297
    %v2299 = vadd.s32 %v2298, 536870912
    %v2300 = vshrl.u32 %v2299, 30
    %v2301 = vshll.u32 %v2300, 30
    %v2302 = vsub.s32 %v2298, %v2301
    %vm2303 = vcmp.lt.s32.totalorder %v2302, 0
    %v2304 = vsub.s32 0, %v2302
    %v2305 = vsel %vm2303, %v2304, %v2302
    %v2306 = vclz %v2305
    %v2307 = vsub.s32 %v2306, 2
    %vm2308 = vcmp.gt.s32.totalorder 0, %v2307
    %v2309 = vsel %vm2308, 0, %v2307
    %v2310 = vsub.s32 32, %v2309
    %v2311 = vshll.u32 %v2302, %v2309
    %v2312 = vshrl.u32 %v2294, %v2310
    %v2313 = vor.u32 %v2311, %v2312
    %v2314 = vsub.s32 4294967266, %v2309
    %v2315 = vadd.s32 %v2314, 127
    %v2316 = vshll.u32 %v2315, 23
    %v2317 = vor.u32 4788187, %v2316
    %v2318 = vand.u32 2147483647, %v2317
    %v2320 = vcvt.s32.f32 %v2313
    %v2321 = vmul.f32 %v2320, %v2318
    %v2322 = vxor.u32 %v2321, 2147483648
    %v2323 = vsel %vm2240, %v2322, %v2321
    %v2324 = vsub.s32 4, %v2300
    %v2325 = vsel %vm2240, %v2324, %v2300
    %v2326 = vsel %vm2239, %v2237, %v2323
    %v2327 = vsel %vm2239, 0, %v2325
    %v2328 = vcosq.f32.pop %v2326
    %v2329 = vsinq.f32.pop %v2326
    %vm2330 = vweird.f32 %v2237
    %v2331 = vand.u32 %v2327, 3
    %vm2332 = vcmp.lt.s32.totalorder %v2331, 2
    %vm2333 = vcmp.eq.s32.totalorder %v2331, 0
    %v2334 = vxor.u32 %v2329, 2147483648
    %v2335 = vsel %vm2333, %v2328, %v2334
    %vm2336 = vcmp.eq.s32.totalorder %v2331, 2
    %v2337 = vxor.u32 %v2328, 2147483648
    %v2338 = vsel %vm2336, %v2337, %v2329
    %v2339 = vsel %vm2332, %v2335, %v2338
    %v2340 = vsel %vm2330, nan, %v2339
    %v2342 = vsel %vm333, %v2340, 0
    %2344 = vmatprep.subr.mxu0 %v86
    %2345 = vmatpush1.msra.mxu0 %v85
    %2346 = vmatprep.subr.mxu0 %v88
    %2347 = vmatpush1.msra.mxu0 %v87
    %2348 = vmatprep.subr.mxu0 %v90
    %2349 = vmatpush1.msra.mxu0 %v89
    %2350 = vmatprep.subr.mxu0 %v92
    %2351 = vmatpush1.msra.mxu0 %v91
    %2352 = vmatprep.subr.mxu0 0.0
    %2353 = vmatpush1.msra.mxu0 0.0
    %2354 = vmatprep.subr.mxu0 0.0
    %2355 = vmatpush1.msra.mxu0 0.0
    %2356 = vmatprep.subr.mxu0 0.0
    %2357 = vmatpush1.msra.mxu0 0.0
    %2358 = vmatprep.subr.mxu0 0.0
    %2359 = vmatpush1.msra.mxu0 0.0
    %2360 = vmatprep.subr.mxu0 0.0
    %2361 = vmatpush1.msra.mxu0 0.0
    %2362 = vmatprep.subr.mxu0 0.0
    %2363 = vmatpush1.msra.mxu0 0.0
    %2364 = vmatprep.subr.mxu0 0.0
    %2365 = vmatpush1.msra.mxu0 0.0
    %2366 = vmatprep.subr.mxu0 0.0
    %2367 = vmatpush1.msra.mxu0 0.0
    %2368 = vmatprep.subr.mxu0 0.0
    %2369 = vmatpush1.msra.mxu0 0.0
    %2370 = vmatprep.subr.mxu0 0.0
    %2371 = vmatpush1.msra.mxu0 0.0
    %2372 = vmatprep.subr.mxu0 0.0
    %2373 = vmatpush1.msra.mxu0 0.0
    %2374 = vmatprep.subr.mxu0 0.0
    %2375 = vmatpush1.msra.mxu0 0.0
    %2376 = vmatprep.subr.mxu0 0.0
    %2377 = vmatpush1.msra.mxu0 0.0
    %2378 = vmatprep.subr.mxu0 0.0
    %2379 = vmatpush1.msra.mxu0 0.0
    %2380 = vmatprep.subr.mxu0 0.0
    %2381 = vmatpush1.msra.mxu0 0.0
    %2382 = vmatprep.subr.mxu0 0.0
    %2383 = vmatpush1.msra.mxu0 0.0
    %2384 = vmatprep.subr.mxu0 0.0
    %2385 = vmatpush1.msra.mxu0 0.0
    %2386 = vmatprep.subr.mxu0 0.0
    %2387 = vmatpush1.msra.mxu0 0.0
    %2388 = vmatprep.subr.mxu0 0.0
    %2389 = vmatpush1.msra.mxu0 0.0
    %2390 = vmatprep.subr.mxu0 0.0
    %2391 = vmatpush1.msra.mxu0 0.0
    %2392 = vmatprep.subr.mxu0 0.0
    %2393 = vmatpush1.msra.mxu0 0.0
    %2394 = vmatprep.subr.mxu0 0.0
    %2395 = vmatpush1.msra.mxu0 0.0
    %2396 = vmatprep.subr.mxu0 0.0
    %2397 = vmatpush1.msra.mxu0 0.0
    %2398 = vmatprep.subr.mxu0 0.0
    %2399 = vmatpush1.msra.mxu0 0.0
    %2400 = vmatprep.subr.mxu0 0.0
    %2401 = vmatpush1.msra.mxu0 0.0
    %2402 = vmatprep.subr.mxu0 0.0
    %2403 = vmatpush1.msra.mxu0 0.0
    %2404 = vmatprep.subr.mxu0 0.0
    %2405 = vmatpush1.msra.mxu0 0.0
    %2406 = vmatprep.subr.mxu0 0.0
    %2407 = vmatpush1.msra.mxu0 0.0
    %2408 = vmatprep.mubr.f32.mxu0 0.0
    %2409 = vmatmul.mubr.f32.gmra.mrb[0].mxu0 %v2342
    %v2410 = vpop.f32.mrb[0].mxu0
    %v2411 = vadd.f32 0.0, %v2410
    %v2412 = vpop.f32.mrb[0].mxu0
    %v2413 = vadd.f32 0.0, %v2412
    %2414 = vdwg.mxu0
    %v2415 = vmul.f32 %v2411, %v2413
    %2417 = vrot.lane.b32.xlu0 %v2415, 64
    %v2418 = vpop.permute.xlu0 %2417
    %v2420 = vmul.f32 %v2415, %v2418
    %v2422 = vsel %vm414, %v2420, 0
    %2424 = vmatprep.subr.mxu0 0.0
    %2425 = vmatpush1.msra.mxu0 %v93
    %2426 = vmatprep.subr.mxu0 0.0
    %2427 = vmatpush1.msra.mxu0 %v94
    %2428 = vmatprep.subr.mxu0 0.0
    %2429 = vmatpush1.msra.mxu0 %v95
    %2430 = vmatprep.subr.mxu0 0.0
    %2431 = vmatpush1.msra.mxu0 %v96
    %2432 = vmatprep.subr.mxu0 0.0
    %2433 = vmatpush1.msra.mxu0 %v97
    %2434 = vmatprep.subr.mxu0 0.0
    %2435 = vmatpush1.msra.mxu0 %v98
    %2436 = vmatprep.subr.mxu0 0.0
    %2437 = vmatpush1.msra.mxu0 %v99
    %2438 = vmatprep.subr.mxu0 0.0
    %2439 = vmatpush1.msra.mxu0 %v100
    %2440 = vmatprep.subr.mxu0 0.0
    %2441 = vmatpush1.msra.mxu0 0.0
    %2442 = vmatprep.subr.mxu0 0.0
    %2443 = vmatpush1.msra.mxu0 0.0
    %2444 = vmatprep.subr.mxu0 0.0
    %2445 = vmatpush1.msra.mxu0 0.0
    %2446 = vmatprep.subr.mxu0 0.0
    %2447 = vmatpush1.msra.mxu0 0.0
    %2448 = vmatprep.subr.mxu0 0.0
    %2449 = vmatpush1.msra.mxu0 0.0
    %2450 = vmatprep.subr.mxu0 0.0
    %2451 = vmatpush1.msra.mxu0 0.0
    %2452 = vmatprep.subr.mxu0 0.0
    %2453 = vmatpush1.msra.mxu0 0.0
    %2454 = vmatprep.subr.mxu0 0.0
    %2455 = vmatpush1.msra.mxu0 0.0
    %2456 = vmatprep.subr.mxu0 0.0
    %2457 = vmatpush1.msra.mxu0 0.0
    %2458 = vmatprep.subr.mxu0 0.0
    %2459 = vmatpush1.msra.mxu0 0.0
    %2460 = vmatprep.subr.mxu0 0.0
    %2461 = vmatpush1.msra.mxu0 0.0
    %2462 = vmatprep.subr.mxu0 0.0
    %2463 = vmatpush1.msra.mxu0 0.0
    %2464 = vmatprep.subr.mxu0 0.0
    %2465 = vmatpush1.msra.mxu0 0.0
    %2466 = vmatprep.subr.mxu0 0.0
    %2467 = vmatpush1.msra.mxu0 0.0
    %2468 = vmatprep.subr.mxu0 0.0
    %2469 = vmatpush1.msra.mxu0 0.0
    %2470 = vmatprep.subr.mxu0 0.0
    %2471 = vmatpush1.msra.mxu0 0.0
    %2472 = vmatprep.subr.mxu0 0.0
    %2473 = vmatpush1.msra.mxu0 0.0
    %2474 = vmatprep.subr.mxu0 0.0
    %2475 = vmatpush1.msra.mxu0 0.0
    %2476 = vmatprep.subr.mxu0 0.0
    %2477 = vmatpush1.msra.mxu0 0.0
    %2478 = vmatprep.subr.mxu0 0.0
    %2479 = vmatpush1.msra.mxu0 0.0
    %2480 = vmatprep.subr.mxu0 0.0
    %2481 = vmatpush1.msra.mxu0 0.0
    %2482 = vmatprep.subr.mxu0 0.0
    %2483 = vmatpush1.msra.mxu0 0.0
    %2484 = vmatprep.subr.mxu0 0.0
    %2485 = vmatpush1.msra.mxu0 0.0
    %2486 = vmatprep.subr.mxu0 0.0
    %2487 = vmatpush1.msra.mxu0 0.0
    %2488 = vmatprep.mubr.f32.mxu0 0.0
    %2489 = vmatmul.mubr.f32.gmra.mrb[0].mxu0 %v2422
    %v2490 = vpop.f32.mrb[0].mxu0
    %v2491 = vadd.f32 0.0, %v2490
    %v2492 = vpop.f32.mrb[0].mxu0
    %2493 = vdwg.mxu0
    %v2494 = vmul.f32 %v2491, %v2491
    %2495 = vmatprep.subr.mxu0 0.0
    %2496 = vmatpush1.msra.mxu0 %v101
    %2497 = vmatprep.subr.mxu0 0.0
    %2498 = vmatpush1.msra.mxu0 %v102
    %2499 = vmatprep.subr.mxu0 0.0
    %2500 = vmatpush1.msra.mxu0 %v103
    %2501 = vmatprep.subr.mxu0 0.0
    %2502 = vmatpush1.msra.mxu0 %v104
    %2503 = vmatprep.subr.mxu0 0.0
    %2504 = vmatpush1.msra.mxu0 %v105
    %2505 = vmatprep.subr.mxu0 0.0
    %2506 = vmatpush1.msra.mxu0 %v106
    %2507 = vmatprep.subr.mxu0 0.0
    %2508 = vmatpush1.msra.mxu0 %v107
    %2509 = vmatprep.subr.mxu0 0.0
    %2510 = vmatpush1.msra.mxu0 %v108
    %2511 = vmatprep.subr.mxu0 0.0
    %2512 = vmatpush1.msra.mxu0 %v109
    %2513 = vmatprep.subr.mxu0 0.0
    %2514 = vmatpush1.msra.mxu0 %v110
    %2515 = vmatprep.subr.mxu0 0.0
    %2516 = vmatpush1.msra.mxu0 %v111
    %2517 = vmatprep.subr.mxu0 0.0
    %2518 = vmatpush1.msra.mxu0 %v112
    %2519 = vmatprep.subr.mxu0 0.0
    %2520 = vmatpush1.msra.mxu0 %v113
    %2521 = vmatprep.subr.mxu0 0.0
    %2522 = vmatpush1.msra.mxu0 %v114
    %2523 = vmatprep.subr.mxu0 0.0
    %2524 = vmatpush1.msra.mxu0 %v115
    %2525 = vmatprep.subr.mxu0 0.0
    %2526 = vmatpush1.msra.mxu0 %v116
    %2527 = vmatprep.subr.mxu0 0.0
    %2528 = vmatpush1.msra.mxu0 0.0
    %2529 = vmatprep.subr.mxu0 0.0
    %2530 = vmatpush1.msra.mxu0 0.0
    %2531 = vmatprep.subr.mxu0 0.0
    %2532 = vmatpush1.msra.mxu0 0.0
    %2533 = vmatprep.subr.mxu0 0.0
    %2534 = vmatpush1.msra.mxu0 0.0
    %2535 = vmatprep.subr.mxu0 0.0
    %2536 = vmatpush1.msra.mxu0 0.0
    %2537 = vmatprep.subr.mxu0 0.0
    %2538 = vmatpush1.msra.mxu0 0.0
    %2539 = vmatprep.subr.mxu0 0.0
    %2540 = vmatpush1.msra.mxu0 0.0
    %2541 = vmatprep.subr.mxu0 0.0
    %2542 = vmatpush1.msra.mxu0 0.0
    %2543 = vmatprep.subr.mxu0 0.0
    %2544 = vmatpush1.msra.mxu0 0.0
    %2545 = vmatprep.subr.mxu0 0.0
    %2546 = vmatpush1.msra.mxu0 0.0
    %2547 = vmatprep.subr.mxu0 0.0
    %2548 = vmatpush1.msra.mxu0 0.0
    %2549 = vmatprep.subr.mxu0 0.0
    %2550 = vmatpush1.msra.mxu0 0.0
    %2551 = vmatprep.subr.mxu0 0.0
    %2552 = vmatpush1.msra.mxu0 0.0
    %2553 = vmatprep.subr.mxu0 0.0
    %2554 = vmatpush1.msra.mxu0 0.0
    %2555 = vmatprep.subr.mxu0 0.0
    %2556 = vmatpush1.msra.mxu0 0.0
    %2557 = vmatprep.subr.mxu0 0.0
    %2558 = vmatpush1.msra.mxu0 0.0
    %2559 = vmatprep.mubr.f32.mxu0 0.0
    %2560 = vmatmul.mubr.f32.gmra.mrb[0].mxu0 %v2494
    %v2561 = vpop.f32.mrb[0].mxu0
    %v2562 = vadd.f32 0.0, %v2561
    %v2563 = vpop.f32.mrb[0].mxu0
    %2564 = vdwg.mxu0
    %v2566 = vsel %vm565, %v2562, 0
    %2568 = vmatprep.subr.mxu0 0.0
    %2569 = vmatpush1.msra.mxu0 %v117
    %2570 = vmatprep.subr.mxu0 0.0
    %2571 = vmatpush1.msra.mxu0 %v118
    %2572 = vmatprep.subr.mxu0 0.0
    %2573 = vmatpush1.msra.mxu0 0.0
    %2574 = vmatprep.subr.mxu0 0.0
    %2575 = vmatpush1.msra.mxu0 0.0
    %2576 = vmatprep.subr.mxu0 0.0
    %2577 = vmatpush1.msra.mxu0 0.0
    %2578 = vmatprep.subr.mxu0 0.0
    %2579 = vmatpush1.msra.mxu0 0.0
    %2580 = vmatprep.subr.mxu0 0.0
    %2581 = vmatpush1.msra.mxu0 0.0
    %2582 = vmatprep.subr.mxu0 0.0
    %2583 = vmatpush1.msra.mxu0 0.0
    %2584 = vmatprep.subr.mxu0 0.0
    %2585 = vmatpush1.msra.mxu0 0.0
    %2586 = vmatprep.subr.mxu0 0.0
    %2587 = vmatpush1.msra.mxu0 0.0
    %2588 = vmatprep.subr.mxu0 0.0
    %2589 = vmatpush1.msra.mxu0 0.0
    %2590 = vmatprep.subr.mxu0 0.0
    %2591 = vmatpush1.msra.mxu0 0.0
    %2592 = vmatprep.subr.mxu0 0.0
    %2593 = vmatpush1.msra.mxu0 0.0
    %2594 = vmatprep.subr.mxu0 0.0
    %2595 = vmatpush1.msra.mxu0 0.0
    %2596 = vmatprep.subr.mxu0 0.0
    %2597 = vmatpush1.msra.mxu0 0.0
    %2598 = vmatprep.subr.mxu0 0.0
    %2599 = vmatpush1.msra.mxu0 0.0
    %2600 = vmatprep.subr.mxu0 0.0
    %2601 = vmatpush1.msra.mxu0 0.0
    %2602 = vmatprep.subr.mxu0 0.0
    %2603 = vmatpush1.msra.mxu0 0.0
    %2604 = vmatprep.subr.mxu0 0.0
    %2605 = vmatpush1.msra.mxu0 0.0
    %2606 = vmatprep.subr.mxu0 0.0
    %2607 = vmatpush1.msra.mxu0 0.0
    %2608 = vmatprep.subr.mxu0 0.0
    %2609 = vmatpush1.msra.mxu0 0.0
    %2610 = vmatprep.subr.mxu0 0.0
    %2611 = vmatpush1.msra.mxu0 0.0
    %2612 = vmatprep.subr.mxu0 0.0
    %2613 = vmatpush1.msra.mxu0 0.0
    %2614 = vmatprep.subr.mxu0 0.0
    %2615 = vmatpush1.msra.mxu0 0.0
    %2616 = vmatprep.subr.mxu0 0.0
    %2617 = vmatpush1.msra.mxu0 0.0
    %2618 = vmatprep.subr.mxu0 0.0
    %2619 = vmatpush1.msra.mxu0 0.0
    %2620 = vmatprep.subr.mxu0 0.0
    %2621 = vmatpush1.msra.mxu0 0.0
    %2622 = vmatprep.subr.mxu0 0.0
    %2623 = vmatpush1.msra.mxu0 0.0
    %2624 = vmatprep.subr.mxu0 0.0
    %2625 = vmatpush1.msra.mxu0 0.0
    %2626 = vmatprep.subr.mxu0 0.0
    %2627 = vmatpush1.msra.mxu0 0.0
    %2628 = vmatprep.subr.mxu0 0.0
    %2629 = vmatpush1.msra.mxu0 0.0
    %2630 = vmatprep.subr.mxu0 0.0
    %2631 = vmatpush1.msra.mxu0 0.0
    %2632 = vmatprep.mubr.f32.mxu0 0.0
    %2633 = vmatmul.mubr.f32.gmra.mrb[0].mxu0 %v2566
    %v2634 = vpop.f32.mrb[0].mxu0
    %v2635 = vadd.f32 %v563, %v2634
    %v2636 = vpop.f32.mrb[0].mxu0
    %2637 = vdwg.mxu0
    %v2638 = vxor.u32 %v2635, 2147483648
    %v2639 = vmul.f32 %v2638, 1.442695
    %v2640 = vpow.pop %v2639
    %v2641 = vadd.f32 %v2640, 1.0
    %v2642 = vrcp.pop %v2641
    %v2643 = vmul.f32 1.0, %v2642
    %v2644 = vtanh.pop %v2635
    %v2645 = vmul.f32 %v2643, %v1667
    %2647 = vrot.lane.b32.xlu0 %v2644, 116
    %v2648 = vpop.permute.xlu0 %2647
    %v2650 = vmul.f32 %v2643, %v2648
    %2652 = vrot.lane.b32.xlu0 %v2650, 122
    %v2653 = vpop.permute.xlu0 %2652
    %v2655 = vadd.f32 %v2645, %v2653
    %v2656 = vtanh.pop %v2655
    %2658 = vrot.lane.b32.xlu0 %v2656, 12
    %v2659 = vpop.permute.xlu0 %2658
    %v2661 = vmul.f32 %v2643, %v2659
    %2663 = vrot.lane.b32.xlu0 %v2661, 116
    %v2664 = vpop.permute.xlu0 %2663
    %v2665 = vsel %vm672, %v2664, 0
    %2667 = vmatprep.subr.mxu0 0.0
    %2668 = vmatpush1.msra.mxu0 %v677
    %2669 = vmatprep.subr.mxu0 0.0
    %2670 = vmatpush1.msra.mxu0 0.0
    %2671 = vmatprep.subr.mxu0 0.0
    %2672 = vmatpush1.msra.mxu0 0.0
    %2673 = vmatprep.subr.mxu0 0.0
    %2674 = vmatpush1.msra.mxu0 0.0
    %2675 = vmatprep.subr.mxu0 0.0
    %2676 = vmatpush1.msra.mxu0 0.0
    %2677 = vmatprep.subr.mxu0 0.0
    %2678 = vmatpush1.msra.mxu0 0.0
    %2679 = vmatprep.subr.mxu0 0.0
    %2680 = vmatpush1.msra.mxu0 0.0
    %2681 = vmatprep.subr.mxu0 0.0
    %2682 = vmatpush1.msra.mxu0 0.0
    %2683 = vmatprep.subr.mxu0 0.0
    %2684 = vmatpush1.msra.mxu0 0.0
    %2685 = vmatprep.subr.mxu0 0.0
    %2686 = vmatpush1.msra.mxu0 0.0
    %2687 = vmatprep.subr.mxu0 0.0
    %2688 = vmatpush1.msra.mxu0 0.0
    %2689 = vmatprep.subr.mxu0 0.0
    %2690 = vmatpush1.msra.mxu0 0.0
    %2691 = vmatprep.subr.mxu0 0.0
    %2692 = vmatpush1.msra.mxu0 0.0
    %2693 = vmatprep.subr.mxu0 0.0
    %2694 = vmatpush1.msra.mxu0 0.0
    %2695 = vmatprep.subr.mxu0 0.0
    %2696 = vmatpush1.msra.mxu0 0.0
    %2697 = vmatprep.subr.mxu0 0.0
    %2698 = vmatpush1.msra.mxu0 0.0
    %2699 = vmatprep.subr.mxu0 0.0
    %2700 = vmatpush1.msra.mxu0 0.0
    %2701 = vmatprep.subr.mxu0 0.0
    %2702 = vmatpush1.msra.mxu0 0.0
    %2703 = vmatprep.subr.mxu0 0.0
    %2704 = vmatpush1.msra.mxu0 0.0
    %2705 = vmatprep.subr.mxu0 0.0
    %2706 = vmatpush1.msra.mxu0 0.0
    %2707 = vmatprep.subr.mxu0 0.0
    %2708 = vmatpush1.msra.mxu0 0.0
    %2709 = vmatprep.subr.mxu0 0.0
    %2710 = vmatpush1.msra.mxu0 0.0
    %2711 = vmatprep.subr.mxu0 0.0
    %2712 = vmatpush1.msra.mxu0 0.0
    %2713 = vmatprep.subr.mxu0 0.0
    %2714 = vmatpush1.msra.mxu0 0.0
    %2715 = vmatprep.subr.mxu0 0.0
    %2716 = vmatpush1.msra.mxu0 0.0
    %2717 = vmatprep.subr.mxu0 0.0
    %2718 = vmatpush1.msra.mxu0 0.0
    %2719 = vmatprep.subr.mxu0 0.0
    %2720 = vmatpush1.msra.mxu0 0.0
    %2721 = vmatprep.subr.mxu0 0.0
    %2722 = vmatpush1.msra.mxu0 0.0
    %2723 = vmatprep.subr.mxu0 0.0
    %2724 = vmatpush1.msra.mxu0 0.0
    %2725 = vmatprep.subr.mxu0 0.0
    %2726 = vmatpush1.msra.mxu0 0.0
    %2727 = vmatprep.subr.mxu0 0.0
    %2728 = vmatpush1.msra.mxu0 0.0
    %2729 = vmatprep.subr.mxu0 0.0
    %2730 = vmatpush1.msra.mxu0 0.0
    %2731 = vmatprep.mubr.f32.mxu0 0.0
    %2732 = vmatmul.mubr.f32.gmra.mrb[0].mxu0 %v2665
    %v2733 = vpop.f32.mrb[0].mxu0
    %v2734 = vadd.f32 %v667, %v2733
    %v2735 = vpop.f32.mrb[0].mxu0
    %2736 = vdwg.mxu0
    %v2737 = vand.u32 2147483647, %v2734
    %vm2738 = vcmp.le.f32.partialorder %v2737, 0.7853982
    %vm2739 = vcmp.lt.s32.totalorder %v2734, 0
    %v2740 = vand.u32 %v2734, 2139095040
    %v2741 = vshrl.u32 %v2740, 23
    %v2742 = vsub.s32 %v2741, 127
    %v2743 = vand.u32 2147483647, %v2734
    %v2744 = vand.u32 %v2743, 8388607
    %v2745 = vor.u32 %v2744, 8388608
    %v2746 = vsub.s32 0, %v2745
    %v2747 = vadd.s32 %v2742, 1
    %vm2748 = vcmp.gt.s32.totalorder %v2747, 0
    %v2749 = vsel %vm2748, %v2747, 0
    %v2750 = vshrl.u32 %v2749, 5
    %v2751 = vand.u32 %v2749, 31
    %v2752 = vsub.s32 32, %v2751
    %v2753 = vshrl.u32 683565275, %v2752
    %v2754 = vshll.u32 683565275, %v2751
    %v2755 = vshrl.u32 2475754826, %v2752
    %v2756 = vor.u32 %v2754, %v2755
    %v2757 = vshll.u32 2475754826, %v2751
    %v2758 = vshrl.u32 2131351028, %v2752
    %v2759 = vor.u32 %v2757, %v2758
    %v2760 = vshll.u32 2131351028, %v2751
    %v2761 = vshrl.u32 2102212464, %v2752
    %v2762 = vor.u32 %v2760, %v2761
    %v2763 = vshll.u32 2102212464, %v2751
    %v2764 = vshrl.u32 920167782, %v2752
    %v2765 = vor.u32 %v2763, %v2764
    %v2766 = vshll.u32 920167782, %v2751
    %v2767 = vshrl.u32 1326507024, %v2752
    %v2768 = vor.u32 %v2766, %v2767
    %vm2769 = vcmp.lt.s32.totalorder %v2750, 1
    %vm2770 = vcmp.lt.s32.totalorder %v2750, 2
    %vm2771 = vcmp.lt.s32.totalorder %v2750, 3
    %vm2772 = vcmp.lt.s32.totalorder %v2750, 4
    %v2773 = vsel %vm2769, %v2753, %v2756
    %v2774 = vsel %vm2772, %v2762, 2102212464
    %v2775 = vsel %vm2771, %v2759, %v2774
    %v2776 = vsel %vm2770, %v2773, %v2775
    %v2777 = vsel %vm2769, %v2756, %v2759
    %v2778 = vsel %vm2772, %v2765, 920167782
    %v2779 = vsel %vm2771, %v2762, %v2778
    %v2780 = vsel %vm2770, %v2777, %v2779
    %v2781 = vsel %vm2769, %v2759, %v2762
    %v2782 = vsel %vm2772, %v2768, 1326507024
    %v2783 = vsel %vm2771, %v2765, %v2782
    %v2784 = vsel %vm2770, %v2781, %v2783
    %v2785 = vshll.u32 %v2745, 8
    %v2786 = vmul.u32.u64.compose %v2785, %v2784
    %v2787 = vextract.low.u32 %v2786
    %v2788 = vextract.high.u32 %v2786
    %v2789 = vmul.u32.u64.compose %v2785, %v2780
    %v2790 = vextract.low.u32 %v2789
    %v2791 = vextract.high.u32 %v2789
    %v2792 = vmul.u32 %v2785, %v2776
    %v2793 = vadd.s32 %v2788, %v2790
    %vm2794 = vc.u32 %v2788, %v2790
    %v2795 = vadd.s32 %v2791, 1
    %v2796 = vsel %vm2794, %v2795, %v2791
    %v2797 = vadd.s32 %v2792, %v2796
    %v2798 = vadd.s32 %v2797, 536870912
    %v2799 = vshrl.u32 %v2798, 30
    %v2800 = vshll.u32 %v2799, 30
    %v2801 = vsub.s32 %v2797, %v2800
    %vm2802 = vcmp.lt.s32.totalorder %v2801, 0
    %v2803 = vsub.s32 0, %v2801
    %v2804 = vsel %vm2802, %v2803, %v2801
    %v2805 = vclz %v2804
    %v2806 = vsub.s32 %v2805, 2
    %vm2807 = vcmp.gt.s32.totalorder 0, %v2806
    %v2808 = vsel %vm2807, 0, %v2806
    %v2809 = vsub.s32 32, %v2808
    %v2810 = vshll.u32 %v2801, %v2808
    %v2811 = vshrl.u32 %v2793, %v2809
    %v2812 = vor.u32 %v2810, %v2811
    %v2813 = vsub.s32 4294967266, %v2808
    %v2814 = vadd.s32 %v2813, 127
    %v2815 = vshll.u32 %v2814, 23
    %v2816 = vor.u32 4788187, %v2815
    %v2817 = vand.u32 2147483647, %v2816
    %v2819 = vcvt.s32.f32 %v2812
    %v2820 = vmul.f32 %v2819, %v2817
    %v2821 = vxor.u32 %v2820, 2147483648
    %v2822 = vsel %vm2739, %v2821, %v2820
    %v2823 = vsub.s32 4, %v2799
    %v2824 = vsel %vm2739, %v2823, %v2799
    %v2825 = vsel %vm2738, %v2734, %v2822
    %v2826 = vsel %vm2738, 0, %v2824
    %v2827 = vcosq.f32.pop %v2825
    %v2828 = vsinq.f32.pop %v2825
    %vm2829 = vweird.f32 %v2734
    %v2830 = vand.u32 %v2826, 3
    %vm2831 = vcmp.lt.s32.totalorder %v2830, 2
    %vm2832 = vcmp.eq.s32.totalorder %v2830, 0
    %v2833 = vxor.u32 %v2828, 2147483648
    %v2834 = vsel %vm2832, %v2827, %v2833
    %vm2835 = vcmp.eq.s32.totalorder %v2830, 2
    %v2836 = vxor.u32 %v2827, 2147483648
    %v2837 = vsel %vm2835, %v2836, %v2828
    %v2838 = vsel %vm2831, %v2834, %v2837
    %v2839 = vsel %vm2829, nan, %v2838
    %v2841 = vsel %vm852, %v2839, 0
    %2843 = vmatprep.subr.mxu0 0.0
    %2844 = vmatpush1.msra.mxu0 %v122
    %2845 = vmatprep.subr.mxu0 0.0
    %2846 = vmatpush1.msra.mxu0 0.0
    %2847 = vmatprep.subr.mxu0 0.0
    %2848 = vmatpush1.msra.mxu0 0.0
    %2849 = vmatprep.subr.mxu0 0.0
    %2850 = vmatpush1.msra.mxu0 0.0
    %2851 = vmatprep.subr.mxu0 0.0
    %2852 = vmatpush1.msra.mxu0 0.0
    %2853 = vmatprep.subr.mxu0 0.0
    %2854 = vmatpush1.msra.mxu0 0.0
    %2855 = vmatprep.subr.mxu0 0.0
    %2856 = vmatpush1.msra.mxu0 0.0
    %2857 = vmatprep.subr.mxu0 0.0
    %2858 = vmatpush1.msra.mxu0 0.0
    %2859 = vmatprep.subr.mxu0 0.0
    %2860 = vmatpush1.msra.mxu0 0.0
    %2861 = vmatprep.subr.mxu0 0.0
    %2862 = vmatpush1.msra.mxu0 0.0
    %2863 = vmatprep.subr.mxu0 0.0
    %2864 = vmatpush1.msra.mxu0 0.0
    %2865 = vmatprep.subr.mxu0 0.0
    %2866 = vmatpush1.msra.mxu0 0.0
    %2867 = vmatprep.subr.mxu0 0.0
    %2868 = vmatpush1.msra.mxu0 0.0
    %2869 = vmatprep.subr.mxu0 0.0
    %2870 = vmatpush1.msra.mxu0 0.0
    %2871 = vmatprep.subr.mxu0 0.0
    %2872 = vmatpush1.msra.mxu0 0.0
    %2873 = vmatprep.subr.mxu0 0.0
    %2874 = vmatpush1.msra.mxu0 0.0
    %2875 = vmatprep.subr.mxu0 0.0
    %2876 = vmatpush1.msra.mxu0 0.0
    %2877 = vmatprep.subr.mxu0 0.0
    %2878 = vmatpush1.msra.mxu0 0.0
    %2879 = vmatprep.subr.mxu0 0.0
    %2880 = vmatpush1.msra.mxu0 0.0
    %2881 = vmatprep.subr.mxu0 0.0
    %2882 = vmatpush1.msra.mxu0 0.0
    %2883 = vmatprep.subr.mxu0 0.0
    %2884 = vmatpush1.msra.mxu0 0.0
    %2885 = vmatprep.subr.mxu0 0.0
    %2886 = vmatpush1.msra.mxu0 0.0
    %2887 = vmatprep.subr.mxu0 0.0
    %2888 = vmatpush1.msra.mxu0 0.0
    %2889 = vmatprep.subr.mxu0 0.0
    %2890 = vmatpush1.msra.mxu0 0.0
    %2891 = vmatprep.subr.mxu0 0.0
    %2892 = vmatpush1.msra.mxu0 0.0
    %2893 = vmatprep.subr.mxu0 0.0
    %2894 = vmatpush1.msra.mxu0 0.0
    %2895 = vmatprep.subr.mxu0 0.0
    %2896 = vmatpush1.msra.mxu0 0.0
    %2897 = vmatprep.subr.mxu0 0.0
    %2898 = vmatpush1.msra.mxu0 0.0
    %2899 = vmatprep.subr.mxu0 0.0
    %2900 = vmatpush1.msra.mxu0 0.0
    %2901 = vmatprep.subr.mxu0 0.0
    %2902 = vmatpush1.msra.mxu0 0.0
    %2903 = vmatprep.subr.mxu0 0.0
    %2904 = vmatpush1.msra.mxu0 0.0
    %2905 = vmatprep.subr.mxu0 0.0
    %2906 = vmatpush1.msra.mxu0 0.0
    %2907 = vmatprep.mubr.f32.mxu0 0.0
    %2908 = vmatmul.mubr.f32.gmra.mrb[0].mxu0 %v2841
    %v2909 = vpop.f32.mrb[0].mxu0
    %v2910 = vadd.f32 0.0, %v2909
    %v2911 = vpop.f32.mrb[0].mxu0
    %2912 = vdwg.mxu0
    %2914 = vrot.lane.b32.xlu0 %v2910, 96
    %v2915 = vpop.permute.xlu0 %2914
    %v2917 = vmul.f32 %v2910, %v2915
    %2919 = vrot.lane.b32.xlu0 %v2917, 112
    %v2920 = vpop.permute.xlu0 %2919
    %v2922 = vmul.f32 %v2917, %v2920
    %v2924 = vsel %vm565, %v2922, 0
    %2926 = vmatprep.subr.mxu0 0.0
    %2927 = vmatpush1.msra.mxu0 %v123
    %2928 = vmatprep.subr.mxu0 0.0
    %2929 = vmatpush1.msra.mxu0 %v124
    %2930 = vmatprep.subr.mxu0 0.0
    %2931 = vmatpush1.msra.mxu0 0.0
    %2932 = vmatprep.subr.mxu0 0.0
    %2933 = vmatpush1.msra.mxu0 0.0
    %2934 = vmatprep.subr.mxu0 0.0
    %2935 = vmatpush1.msra.mxu0 0.0
    %2936 = vmatprep.subr.mxu0 0.0
    %2937 = vmatpush1.msra.mxu0 0.0
    %2938 = vmatprep.subr.mxu0 0.0
    %2939 = vmatpush1.msra.mxu0 0.0
    %2940 = vmatprep.subr.mxu0 0.0
    %2941 = vmatpush1.msra.mxu0 0.0
    %2942 = vmatprep.subr.mxu0 0.0
    %2943 = vmatpush1.msra.mxu0 0.0
    %2944 = vmatprep.subr.mxu0 0.0
    %2945 = vmatpush1.msra.mxu0 0.0
    %2946 = vmatprep.subr.mxu0 0.0
    %2947 = vmatpush1.msra.mxu0 0.0
    %2948 = vmatprep.subr.mxu0 0.0
    %2949 = vmatpush1.msra.mxu0 0.0
    %2950 = vmatprep.subr.mxu0 0.0
    %2951 = vmatpush1.msra.mxu0 0.0
    %2952 = vmatprep.subr.mxu0 0.0
    %2953 = vmatpush1.msra.mxu0 0.0
    %2954 = vmatprep.subr.mxu0 0.0
    %2955 = vmatpush1.msra.mxu0 0.0
    %2956 = vmatprep.subr.mxu0 0.0
    %2957 = vmatpush1.msra.mxu0 0.0
    %2958 = vmatprep.subr.mxu0 0.0
    %2959 = vmatpush1.msra.mxu0 0.0
    %2960 = vmatprep.subr.mxu0 0.0
    %2961 = vmatpush1.msra.mxu0 0.0
    %2962 = vmatprep.subr.mxu0 0.0
    %2963 = vmatpush1.msra.mxu0 0.0
    %2964 = vmatprep.subr.mxu0 0.0
    %2965 = vmatpush1.msra.mxu0 0.0
    %2966 = vmatprep.subr.mxu0 0.0
    %2967 = vmatpush1.msra.mxu0 0.0
    %2968 = vmatprep.subr.mxu0 0.0
    %2969 = vmatpush1.msra.mxu0 0.0
    %2970 = vmatprep.subr.mxu0 0.0
    %2971 = vmatpush1.msra.mxu0 0.0
    %2972 = vmatprep.subr.mxu0 0.0
    %2973 = vmatpush1.msra.mxu0 0.0
    %2974 = vmatprep.subr.mxu0 0.0
    %2975 = vmatpush1.msra.mxu0 0.0
    %2976 = vmatprep.subr.mxu0 0.0
    %2977 = vmatpush1.msra.mxu0 0.0
    %2978 = vmatprep.subr.mxu0 0.0
    %2979 = vmatpush1.msra.mxu0 0.0
    %2980 = vmatprep.subr.mxu0 0.0
    %2981 = vmatpush1.msra.mxu0 0.0
    %2982 = vmatprep.subr.mxu0 0.0
    %2983 = vmatpush1.msra.mxu0 0.0
    %2984 = vmatprep.subr.mxu0 0.0
    %2985 = vmatpush1.msra.mxu0 0.0
    %2986 = vmatprep.subr.mxu0 0.0
    %2987 = vmatpush1.msra.mxu0 0.0
    %2988 = vmatprep.subr.mxu0 0.0
    %2989 = vmatpush1.msra.mxu0 0.0
    %2990 = vmatprep.mubr.f32.mxu0 0.0
    %2991 = vmatmul.mubr.f32.gmra.mrb[0].mxu0 %v2924
    %v2992 = vpop.f32.mrb[0].mxu0
    %v2993 = vadd.f32 0.0, %v2992
    %v2994 = vpop.f32.mrb[0].mxu0
    %2995 = vdwg.mxu0
    %v2996 = vmul.f32 %v2993, %v2993
    %v2998 = vsel %vm333, %v2996, 0
    %3000 = vmatprep.subr.mxu0 0.0
    %3001 = vmatpush1.msra.mxu0 %v125
    %3002 = vmatprep.subr.mxu0 0.0
    %3003 = vmatpush1.msra.mxu0 %v126
    %3004 = vmatprep.subr.mxu0 0.0
    %3005 = vmatpush1.msra.mxu0 %v127
    %3006 = vmatprep.subr.mxu0 0.0
    %3007 = vmatpush1.msra.mxu0 %v128
    %3008 = vmatprep.subr.mxu0 0.0
    %3009 = vmatpush1.msra.mxu0 0.0
    %3010 = vmatprep.subr.mxu0 0.0
    %3011 = vmatpush1.msra.mxu0 0.0
    %3012 = vmatprep.subr.mxu0 0.0
    %3013 = vmatpush1.msra.mxu0 0.0
    %3014 = vmatprep.subr.mxu0 0.0
    %3015 = vmatpush1.msra.mxu0 0.0
    %3016 = vmatprep.subr.mxu0 0.0
    %3017 = vmatpush1.msra.mxu0 0.0
    %3018 = vmatprep.subr.mxu0 0.0
    %3019 = vmatpush1.msra.mxu0 0.0
    %3020 = vmatprep.subr.mxu0 0.0
    %3021 = vmatpush1.msra.mxu0 0.0
    %3022 = vmatprep.subr.mxu0 0.0
    %3023 = vmatpush1.msra.mxu0 0.0
    %3024 = vmatprep.subr.mxu0 0.0
    %3025 = vmatpush1.msra.mxu0 0.0
    %3026 = vmatprep.subr.mxu0 0.0
    %3027 = vmatpush1.msra.mxu0 0.0
    %3028 = vmatprep.subr.mxu0 0.0
    %3029 = vmatpush1.msra.mxu0 0.0
    %3030 = vmatprep.subr.mxu0 0.0
    %3031 = vmatpush1.msra.mxu0 0.0
    %3032 = vmatprep.subr.mxu0 0.0
    %3033 = vmatpush1.msra.mxu0 0.0
    %3034 = vmatprep.subr.mxu0 0.0
    %3035 = vmatpush1.msra.mxu0 0.0
    %3036 = vmatprep.subr.mxu0 0.0
    %3037 = vmatpush1.msra.mxu0 0.0
    %3038 = vmatprep.subr.mxu0 0.0
    %3039 = vmatpush1.msra.mxu0 0.0
    %3040 = vmatprep.subr.mxu0 0.0
    %3041 = vmatpush1.msra.mxu0 0.0
    %3042 = vmatprep.subr.mxu0 0.0
    %3043 = vmatpush1.msra.mxu0 0.0
    %3044 = vmatprep.subr.mxu0 0.0
    %3045 = vmatpush1.msra.mxu0 0.0
    %3046 = vmatprep.subr.mxu0 0.0
    %3047 = vmatpush1.msra.mxu0 0.0
    %3048 = vmatprep.subr.mxu0 0.0
    %3049 = vmatpush1.msra.mxu0 0.0
    %3050 = vmatprep.subr.mxu0 0.0
    %3051 = vmatpush1.msra.mxu0 0.0
    %3052 = vmatprep.subr.mxu0 0.0
    %3053 = vmatpush1.msra.mxu0 0.0
    %3054 = vmatprep.subr.mxu0 0.0
    %3055 = vmatpush1.msra.mxu0 0.0
    %3056 = vmatprep.subr.mxu0 0.0
    %3057 = vmatpush1.msra.mxu0 0.0
    %3058 = vmatprep.subr.mxu0 0.0
    %3059 = vmatpush1.msra.mxu0 0.0
    %3060 = vmatprep.subr.mxu0 0.0
    %3061 = vmatpush1.msra.mxu0 0.0
    %3062 = vmatprep.subr.mxu0 0.0
    %3063 = vmatpush1.msra.mxu0 0.0
    %3064 = vmatprep.mubr.f32.mxu0 0.0
    %3065 = vmatmul.mubr.f32.gmra.mrb[0].mxu0 %v2998
    %v3066 = vpop.f32.mrb[0].mxu0
    %v3067 = vadd.f32 0.0, %v3066
    %v3068 = vpop.f32.mrb[0].mxu0
    %3069 = vdwg.mxu0
    %v3071 = vsel %vm1089, %v3067, 0
    %3073 = vmatprep.subr.mxu0 0.0
    %3074 = vmatpush1.msra.mxu0 %v1095
    %3075 = vmatprep.subr.mxu0 0.0
    %3076 = vmatpush1.msra.mxu0 0.0
    %3077 = vmatprep.subr.mxu0 0.0
    %3078 = vmatpush1.msra.mxu0 0.0
    %3079 = vmatprep.subr.mxu0 0.0
    %3080 = vmatpush1.msra.mxu0 0.0
    %3081 = vmatprep.subr.mxu0 0.0
    %3082 = vmatpush1.msra.mxu0 0.0
    %3083 = vmatprep.subr.mxu0 0.0
    %3084 = vmatpush1.msra.mxu0 0.0
    %3085 = vmatprep.subr.mxu0 0.0
    %3086 = vmatpush1.msra.mxu0 0.0
    %3087 = vmatprep.subr.mxu0 0.0
    %3088 = vmatpush1.msra.mxu0 0.0
    %3089 = vmatprep.subr.mxu0 0.0
    %3090 = vmatpush1.msra.mxu0 0.0
    %3091 = vmatprep.subr.mxu0 0.0
    %3092 = vmatpush1.msra.mxu0 0.0
    %3093 = vmatprep.subr.mxu0 0.0
    %3094 = vmatpush1.msra.mxu0 0.0
    %3095 = vmatprep.subr.mxu0 0.0
    %3096 = vmatpush1.msra.mxu0 0.0
    %3097 = vmatprep.subr.mxu0 0.0
    %3098 = vmatpush1.msra.mxu0 0.0
    %3099 = vmatprep.subr.mxu0 0.0
    %3100 = vmatpush1.msra.mxu0 0.0
    %3101 = vmatprep.subr.mxu0 0.0
    %3102 = vmatpush1.msra.mxu0 0.0
    %3103 = vmatprep.subr.mxu0 0.0
    %3104 = vmatpush1.msra.mxu0 0.0
    %3105 = vmatprep.subr.mxu0 0.0
    %3106 = vmatpush1.msra.mxu0 0.0
    %3107 = vmatprep.subr.mxu0 0.0
    %3108 = vmatpush1.msra.mxu0 0.0
    %3109 = vmatprep.subr.mxu0 0.0
    %3110 = vmatpush1.msra.mxu0 0.0
    %3111 = vmatprep.subr.mxu0 0.0
    %3112 = vmatpush1.msra.mxu0 0.0
    %3113 = vmatprep.subr.mxu0 0.0
    %3114 = vmatpush1.msra.mxu0 0.0
    %3115 = vmatprep.subr.mxu0 0.0
    %3116 = vmatpush1.msra.mxu0 0.0
    %3117 = vmatprep.subr.mxu0 0.0
    %3118 = vmatpush1.msra.mxu0 0.0
    %3119 = vmatprep.subr.mxu0 0.0
    %3120 = vmatpush1.msra.mxu0 0.0
    %3121 = vmatprep.subr.mxu0 0.0
    %3122 = vmatpush1.msra.mxu0 0.0
    %3123 = vmatprep.subr.mxu0 0.0
    %3124 = vmatpush1.msra.mxu0 0.0
    %3125 = vmatprep.subr.mxu0 0.0
    %3126 = vmatpush1.msra.mxu0 0.0
    %3127 = vmatprep.subr.mxu0 0.0
    %3128 = vmatpush1.msra.mxu0 0.0
    %3129 = vmatprep.subr.mxu0 0.0
    %3130 = vmatpush1.msra.mxu0 0.0
    %3131 = vmatprep.subr.mxu0 0.0
    %3132 = vmatpush1.msra.mxu0 0.0
    %3133 = vmatprep.subr.mxu0 0.0
    %3134 = vmatpush1.msra.mxu0 0.0
    %3135 = vmatprep.subr.mxu0 0.0
    %3136 = vmatpush1.msra.mxu0 0.0
    %3137 = vmatprep.mubr.f32.mxu0 0.0
    %3138 = vmatmul.mubr.f32.gmra.mrb[0].mxu0 %v3071
    %v3139 = vpop.f32.mrb[0].mxu0
    %v3140 = vadd.f32 %v1087, %v3139
    %v3141 = vpop.f32.mrb[0].mxu0
    %3142 = vdwg.mxu0
    %s3143 = scalar_lea.vmem %s0, 6
    %v3144 = vld [vmem:[%s3143] sm:$0x3]
    %3146 = vset.pattern.permute.xlu0 0
    %3147 = vperm.xlu0 %3146, %v3144
    %v3148 = vpop.permute.xlu0 %3147
    %v3150 = vmul.f32 %v3148, %v141
    %v3152 = vsel %vm144, %v3140, 0
    %3154 = vmatprep.subr.mxu0 0.0
    %3155 = vmatpush1.msra.mxu0 %v150
    %3156 = vmatprep.subr.mxu0 0.0
    %3157 = vmatpush1.msra.mxu0 0.0
    %3158 = vmatprep.subr.mxu0 0.0
    %3159 = vmatpush1.msra.mxu0 0.0
    %3160 = vmatprep.subr.mxu0 0.0
    %3161 = vmatpush1.msra.mxu0 0.0
    %3162 = vmatprep.subr.mxu0 0.0
    %3163 = vmatpush1.msra.mxu0 0.0
    %3164 = vmatprep.subr.mxu0 0.0
    %3165 = vmatpush1.msra.mxu0 0.0
    %3166 = vmatprep.subr.mxu0 0.0
    %3167 = vmatpush1.msra.mxu0 0.0
    %3168 = vmatprep.subr.mxu0 0.0
    %3169 = vmatpush1.msra.mxu0 0.0
    %3170 = vmatprep.subr.mxu0 0.0
    %3171 = vmatpush1.msra.mxu0 0.0
    %3172 = vmatprep.subr.mxu0 0.0
    %3173 = vmatpush1.msra.mxu0 0.0
    %3174 = vmatprep.subr.mxu0 0.0
    %3175 = vmatpush1.msra.mxu0 0.0
    %3176 = vmatprep.subr.mxu0 0.0
    %3177 = vmatpush1.msra.mxu0 0.0
    %3178 = vmatprep.subr.mxu0 0.0
    %3179 = vmatpush1.msra.mxu0 0.0
    %3180 = vmatprep.subr.mxu0 0.0
    %3181 = vmatpush1.msra.mxu0 0.0
    %3182 = vmatprep.subr.mxu0 0.0
    %3183 = vmatpush1.msra.mxu0 0.0
    %3184 = vmatprep.subr.mxu0 0.0
    %3185 = vmatpush1.msra.mxu0 0.0
    %3186 = vmatprep.subr.mxu0 0.0
    %3187 = vmatpush1.msra.mxu0 0.0
    %3188 = vmatprep.subr.mxu0 0.0
    %3189 = vmatpush1.msra.mxu0 0.0
    %3190 = vmatprep.subr.mxu0 0.0
    %3191 = vmatpush1.msra.mxu0 0.0
    %3192 = vmatprep.subr.mxu0 0.0
    %3193 = vmatpush1.msra.mxu0 0.0
    %3194 = vmatprep.subr.mxu0 0.0
    %3195 = vmatpush1.msra.mxu0 0.0
    %3196 = vmatprep.subr.mxu0 0.0
    %3197 = vmatpush1.msra.mxu0 0.0
    %3198 = vmatprep.subr.mxu0 0.0
    %3199 = vmatpush1.msra.mxu0 0.0
    %3200 = vmatprep.subr.mxu0 0.0
    %3201 = vmatpush1.msra.mxu0 0.0
    %3202 = vmatprep.subr.mxu0 0.0
    %3203 = vmatpush1.msra.mxu0 0.0
    %3204 = vmatprep.subr.mxu0 0.0
    %3205 = vmatpush1.msra.mxu0 0.0
    %3206 = vmatprep.subr.mxu0 0.0
    %3207 = vmatpush1.msra.mxu0 0.0
    %3208 = vmatprep.subr.mxu0 0.0
    %3209 = vmatpush1.msra.mxu0 0.0
    %3210 = vmatprep.subr.mxu0 0.0
    %3211 = vmatpush1.msra.mxu0 0.0
    %3212 = vmatprep.subr.mxu0 0.0
    %3213 = vmatpush1.msra.mxu0 0.0
    %3214 = vmatprep.subr.mxu0 0.0
    %3215 = vmatpush1.msra.mxu0 0.0
    %3216 = vmatprep.subr.mxu0 0.0
    %3217 = vmatpush1.msra.mxu0 0.0
    %3218 = vmatprep.mubr.f32.mxu0 0.0
    %3219 = vmatmul.mubr.f32.gmra.mrb[0].mxu0 %v3152
    %v3220 = vpop.f32.mrb[0].mxu0
    %v3221 = vadd.f32 0.0, %v3220
    %v3222 = vpop.f32.mrb[0].mxu0
    %3223 = vdwg.mxu0
    %v3224 = vadd.f32 %v3150, %v3221
    %v3225 = vadd.f32 %v3224, %v227
    %v3226 = vand.u32 2147483647, %v3225
    %vm3227 = vcmp.le.f32.partialorder %v3226, 0.7853982
    %vm3228 = vcmp.lt.s32.totalorder %v3225, 0
    %v3229 = vand.u32 %v3225, 2139095040
    %v3230 = vshrl.u32 %v3229, 23
    %v3231 = vsub.s32 %v3230, 127
    %v3232 = vand.u32 2147483647, %v3225
    %v3233 = vand.u32 %v3232, 8388607
    %v3234 = vor.u32 %v3233, 8388608
    %v3235 = vsub.s32 0, %v3234
    %v3236 = vadd.s32 %v3231, 1
    %vm3237 = vcmp.gt.s32.totalorder %v3236, 0
    %v3238 = vsel %vm3237, %v3236, 0
    %v3239 = vshrl.u32 %v3238, 5
    %v3240 = vand.u32 %v3238, 31
    %v3241 = vsub.s32 32, %v3240
    %v3242 = vshrl.u32 683565275, %v3241
    %v3243 = vshll.u32 683565275, %v3240
    %v3244 = vshrl.u32 2475754826, %v3241
    %v3245 = vor.u32 %v3243, %v3244
    %v3246 = vshll.u32 2475754826, %v3240
    %v3247 = vshrl.u32 2131351028, %v3241
    %v3248 = vor.u32 %v3246, %v3247
    %v3249 = vshll.u32 2131351028, %v3240
    %v3250 = vshrl.u32 2102212464, %v3241
    %v3251 = vor.u32 %v3249, %v3250
    %v3252 = vshll.u32 2102212464, %v3240
    %v3253 = vshrl.u32 920167782, %v3241
    %v3254 = vor.u32 %v3252, %v3253
    %v3255 = vshll.u32 920167782, %v3240
    %v3256 = vshrl.u32 1326507024, %v3241
    %v3257 = vor.u32 %v3255, %v3256
    %vm3258 = vcmp.lt.s32.totalorder %v3239, 1
    %vm3259 = vcmp.lt.s32.totalorder %v3239, 2
    %vm3260 = vcmp.lt.s32.totalorder %v3239, 3
    %vm3261 = vcmp.lt.s32.totalorder %v3239, 4
    %v3262 = vsel %vm3258, %v3242, %v3245
    %v3263 = vsel %vm3261, %v3251, 2102212464
    %v3264 = vsel %vm3260, %v3248, %v3263
    %v3265 = vsel %vm3259, %v3262, %v3264
    %v3266 = vsel %vm3258, %v3245, %v3248
    %v3267 = vsel %vm3261, %v3254, 920167782
    %v3268 = vsel %vm3260, %v3251, %v3267
    %v3269 = vsel %vm3259, %v3266, %v3268
    %v3270 = vsel %vm3258, %v3248, %v3251
    %v3271 = vsel %vm3261, %v3257, 1326507024
    %v3272 = vsel %vm3260, %v3254, %v3271
    %v3273 = vsel %vm3259, %v3270, %v3272
    %v3274 = vshll.u32 %v3234, 8
    %v3275 = vmul.u32.u64.compose %v3274, %v3273
    %v3276 = vextract.low.u32 %v3275
    %v3277 = vextract.high.u32 %v3275
    %v3278 = vmul.u32.u64.compose %v3274, %v3269
    %v3279 = vextract.low.u32 %v3278
    %v3280 = vextract.high.u32 %v3278
    %v3281 = vmul.u32 %v3274, %v3265
    %v3282 = vadd.s32 %v3277, %v3279
    %vm3283 = vc.u32 %v3277, %v3279
    %v3284 = vadd.s32 %v3280, 1
    %v3285 = vsel %vm3283, %v3284, %v3280
    %v3286 = vadd.s32 %v3281, %v3285
    %v3287 = vadd.s32 %v3286, 536870912
    %v3288 = vshrl.u32 %v3287, 30
    %v3289 = vshll.u32 %v3288, 30
    %v3290 = vsub.s32 %v3286, %v3289
    %vm3291 = vcmp.lt.s32.totalorder %v3290, 0
    %v3292 = vsub.s32 0, %v3290
    %v3293 = vsel %vm3291, %v3292, %v3290
    %v3294 = vclz %v3293
    %v3295 = vsub.s32 %v3294, 2
    %vm3296 = vcmp.gt.s32.totalorder 0, %v3295
    %v3297 = vsel %vm3296, 0, %v3295
    %v3298 = vsub.s32 32, %v3297
    %v3299 = vshll.u32 %v3290, %v3297
    %v3300 = vshrl.u32 %v3282, %v3298
    %v3301 = vor.u32 %v3299, %v3300
    %v3302 = vsub.s32 4294967266, %v3297
    %v3303 = vadd.s32 %v3302, 127
    %v3304 = vshll.u32 %v3303, 23
    %v3305 = vor.u32 4788187, %v3304
    %v3306 = vand.u32 2147483647, %v3305
    %v3308 = vcvt.s32.f32 %v3301
    %v3309 = vmul.f32 %v3308, %v3306
    %v3310 = vxor.u32 %v3309, 2147483648
    %v3311 = vsel %vm3228, %v3310, %v3309
    %v3312 = vsub.s32 4, %v3288
    %v3313 = vsel %vm3228, %v3312, %v3288
    %v3314 = vsel %vm3227, %v3225, %v3311
    %v3315 = vsel %vm3227, 0, %v3313
    %v3316 = vcosq.f32.pop %v3314
    %v3317 = vsinq.f32.pop %v3314
    %vm3318 = vweird.f32 %v3225
    %v3319 = vand.u32 %v3315, 3
    %vm3320 = vcmp.lt.s32.totalorder %v3319, 2
    %vm3321 = vcmp.eq.s32.totalorder %v3319, 0
    %v3322 = vxor.u32 %v3317, 2147483648
    %v3323 = vsel %vm3321, %v3316, %v3322
    %vm3324 = vcmp.eq.s32.totalorder %v3319, 2
    %v3325 = vxor.u32 %v3316, 2147483648
    %v3326 = vsel %vm3324, %v3325, %v3317
    %v3327 = vsel %vm3320, %v3323, %v3326
    %v3328 = vsel %vm3318, nan, %v3327
    %v3330 = vsel %vm333, %v3328, 0
    %3332 = vmatprep.subr.mxu0 %v86
    %3333 = vmatpush1.msra.mxu0 %v85
    %3334 = vmatprep.subr.mxu0 %v88
    %3335 = vmatpush1.msra.mxu0 %v87
    %3336 = vmatprep.subr.mxu0 %v90
    %3337 = vmatpush1.msra.mxu0 %v89
    %3338 = vmatprep.subr.mxu0 %v92
    %3339 = vmatpush1.msra.mxu0 %v91
    %3340 = vmatprep.subr.mxu0 0.0
    %3341 = vmatpush1.msra.mxu0 0.0
    %3342 = vmatprep.subr.mxu0 0.0
    %3343 = vmatpush1.msra.mxu0 0.0
    %3344 = vmatprep.subr.mxu0 0.0
    %3345 = vmatpush1.msra.mxu0 0.0
    %3346 = vmatprep.subr.mxu0 0.0
    %3347 = vmatpush1.msra.mxu0 0.0
    %3348 = vmatprep.subr.mxu0 0.0
    %3349 = vmatpush1.msra.mxu0 0.0
    %3350 = vmatprep.subr.mxu0 0.0
    %3351 = vmatpush1.msra.mxu0 0.0
    %3352 = vmatprep.subr.mxu0 0.0
    %3353 = vmatpush1.msra.mxu0 0.0
    %3354 = vmatprep.subr.mxu0 0.0
    %3355 = vmatpush1.msra.mxu0 0.0
    %3356 = vmatprep.subr.mxu0 0.0
    %3357 = vmatpush1.msra.mxu0 0.0
    %3358 = vmatprep.subr.mxu0 0.0
    %3359 = vmatpush1.msra.mxu0 0.0
    %3360 = vmatprep.subr.mxu0 0.0
    %3361 = vmatpush1.msra.mxu0 0.0
    %3362 = vmatprep.subr.mxu0 0.0
    %3363 = vmatpush1.msra.mxu0 0.0
    %3364 = vmatprep.subr.mxu0 0.0
    %3365 = vmatpush1.msra.mxu0 0.0
    %3366 = vmatprep.subr.mxu0 0.0
    %3367 = vmatpush1.msra.mxu0 0.0
    %3368 = vmatprep.subr.mxu0 0.0
    %3369 = vmatpush1.msra.mxu0 0.0
    %3370 = vmatprep.subr.mxu0 0.0
    %3371 = vmatpush1.msra.mxu0 0.0
    %3372 = vmatprep.subr.mxu0 0.0
    %3373 = vmatpush1.msra.mxu0 0.0
    %3374 = vmatprep.subr.mxu0 0.0
    %3375 = vmatpush1.msra.mxu0 0.0
    %3376 = vmatprep.subr.mxu0 0.0
    %3377 = vmatpush1.msra.mxu0 0.0
    %3378 = vmatprep.subr.mxu0 0.0
    %3379 = vmatpush1.msra.mxu0 0.0
    %3380 = vmatprep.subr.mxu0 0.0
    %3381 = vmatpush1.msra.mxu0 0.0
    %3382 = vmatprep.subr.mxu0 0.0
    %3383 = vmatpush1.msra.mxu0 0.0
    %3384 = vmatprep.subr.mxu0 0.0
    %3385 = vmatpush1.msra.mxu0 0.0
    %3386 = vmatprep.subr.mxu0 0.0
    %3387 = vmatpush1.msra.mxu0 0.0
    %3388 = vmatprep.subr.mxu0 0.0
    %3389 = vmatpush1.msra.mxu0 0.0
    %3390 = vmatprep.subr.mxu0 0.0
    %3391 = vmatpush1.msra.mxu0 0.0
    %3392 = vmatprep.subr.mxu0 0.0
    %3393 = vmatpush1.msra.mxu0 0.0
    %3394 = vmatprep.subr.mxu0 0.0
    %3395 = vmatpush1.msra.mxu0 0.0
    %3396 = vmatprep.mubr.f32.mxu0 0.0
    %3397 = vmatmul.mubr.f32.gmra.mrb[0].mxu0 %v3330
    %v3398 = vpop.f32.mrb[0].mxu0
    %v3399 = vadd.f32 0.0, %v3398
    %v3400 = vpop.f32.mrb[0].mxu0
    %v3401 = vadd.f32 0.0, %v3400
    %3402 = vdwg.mxu0
    %v3403 = vmul.f32 %v3399, %v3401
    %3405 = vrot.lane.b32.xlu0 %v3403, 64
    %v3406 = vpop.permute.xlu0 %3405
    %v3408 = vmul.f32 %v3403, %v3406
    %v3410 = vsel %vm414, %v3408, 0
    %3412 = vmatprep.subr.mxu0 0.0
    %3413 = vmatpush1.msra.mxu0 %v93
    %3414 = vmatprep.subr.mxu0 0.0
    %3415 = vmatpush1.msra.mxu0 %v94
    %3416 = vmatprep.subr.mxu0 0.0
    %3417 = vmatpush1.msra.mxu0 %v95
    %3418 = vmatprep.subr.mxu0 0.0
    %3419 = vmatpush1.msra.mxu0 %v96
    %3420 = vmatprep.subr.mxu0 0.0
    %3421 = vmatpush1.msra.mxu0 %v97
    %3422 = vmatprep.subr.mxu0 0.0
    %3423 = vmatpush1.msra.mxu0 %v98
    %3424 = vmatprep.subr.mxu0 0.0
    %3425 = vmatpush1.msra.mxu0 %v99
    %3426 = vmatprep.subr.mxu0 0.0
    %3427 = vmatpush1.msra.mxu0 %v100
    %3428 = vmatprep.subr.mxu0 0.0
    %3429 = vmatpush1.msra.mxu0 0.0
    %3430 = vmatprep.subr.mxu0 0.0
    %3431 = vmatpush1.msra.mxu0 0.0
    %3432 = vmatprep.subr.mxu0 0.0
    %3433 = vmatpush1.msra.mxu0 0.0
    %3434 = vmatprep.subr.mxu0 0.0
    %3435 = vmatpush1.msra.mxu0 0.0
    %3436 = vmatprep.subr.mxu0 0.0
    %3437 = vmatpush1.msra.mxu0 0.0
    %3438 = vmatprep.subr.mxu0 0.0
    %3439 = vmatpush1.msra.mxu0 0.0
    %3440 = vmatprep.subr.mxu0 0.0
    %3441 = vmatpush1.msra.mxu0 0.0
    %3442 = vmatprep.subr.mxu0 0.0
    %3443 = vmatpush1.msra.mxu0 0.0
    %3444 = vmatprep.subr.mxu0 0.0
    %3445 = vmatpush1.msra.mxu0 0.0
    %3446 = vmatprep.subr.mxu0 0.0
    %3447 = vmatpush1.msra.mxu0 0.0
    %3448 = vmatprep.subr.mxu0 0.0
    %3449 = vmatpush1.msra.mxu0 0.0
    %3450 = vmatprep.subr.mxu0 0.0
    %3451 = vmatpush1.msra.mxu0 0.0
    %3452 = vmatprep.subr.mxu0 0.0
    %3453 = vmatpush1.msra.mxu0 0.0
    %3454 = vmatprep.subr.mxu0 0.0
    %3455 = vmatpush1.msra.mxu0 0.0
    %3456 = vmatprep.subr.mxu0 0.0
    %3457 = vmatpush1.msra.mxu0 0.0
    %3458 = vmatprep.subr.mxu0 0.0
    %3459 = vmatpush1.msra.mxu0 0.0
    %3460 = vmatprep.subr.mxu0 0.0
    %3461 = vmatpush1.msra.mxu0 0.0
    %3462 = vmatprep.subr.mxu0 0.0
    %3463 = vmatpush1.msra.mxu0 0.0
    %3464 = vmatprep.subr.mxu0 0.0
    %3465 = vmatpush1.msra.mxu0 0.0
    %3466 = vmatprep.subr.mxu0 0.0
    %3467 = vmatpush1.msra.mxu0 0.0
    %3468 = vmatprep.subr.mxu0 0.0
    %3469 = vmatpush1.msra.mxu0 0.0
    %3470 = vmatprep.subr.mxu0 0.0
    %3471 = vmatpush1.msra.mxu0 0.0
    %3472 = vmatprep.subr.mxu0 0.0
    %3473 = vmatpush1.msra.mxu0 0.0
    %3474 = vmatprep.subr.mxu0 0.0
    %3475 = vmatpush1.msra.mxu0 0.0
    %3476 = vmatprep.mubr.f32.mxu0 0.0
    %3477 = vmatmul.mubr.f32.gmra.mrb[0].mxu0 %v3410
    %v3478 = vpop.f32.mrb[0].mxu0
    %v3479 = vadd.f32 0.0, %v3478
    %v3480 = vpop.f32.mrb[0].mxu0
    %3481 = vdwg.mxu0
    %v3482 = vmul.f32 %v3479, %v3479
    %3483 = vmatprep.subr.mxu0 0.0
    %3484 = vmatpush1.msra.mxu0 %v101
    %3485 = vmatprep.subr.mxu0 0.0
    %3486 = vmatpush1.msra.mxu0 %v102
    %3487 = vmatprep.subr.mxu0 0.0
    %3488 = vmatpush1.msra.mxu0 %v103
    %3489 = vmatprep.subr.mxu0 0.0
    %3490 = vmatpush1.msra.mxu0 %v104
    %3491 = vmatprep.subr.mxu0 0.0
    %3492 = vmatpush1.msra.mxu0 %v105
    %3493 = vmatprep.subr.mxu0 0.0
    %3494 = vmatpush1.msra.mxu0 %v106
    %3495 = vmatprep.subr.mxu0 0.0
    %3496 = vmatpush1.msra.mxu0 %v107
    %3497 = vmatprep.subr.mxu0 0.0
    %3498 = vmatpush1.msra.mxu0 %v108
    %3499 = vmatprep.subr.mxu0 0.0
    %3500 = vmatpush1.msra.mxu0 %v109
    %3501 = vmatprep.subr.mxu0 0.0
    %3502 = vmatpush1.msra.mxu0 %v110
    %3503 = vmatprep.subr.mxu0 0.0
    %3504 = vmatpush1.msra.mxu0 %v111
    %3505 = vmatprep.subr.mxu0 0.0
    %3506 = vmatpush1.msra.mxu0 %v112
    %3507 = vmatprep.subr.mxu0 0.0
    %3508 = vmatpush1.msra.mxu0 %v113
    %3509 = vmatprep.subr.mxu0 0.0
    %3510 = vmatpush1.msra.mxu0 %v114
    %3511 = vmatprep.subr.mxu0 0.0
    %3512 = vmatpush1.msra.mxu0 %v115
    %3513 = vmatprep.subr.mxu0 0.0
    %3514 = vmatpush1.msra.mxu0 %v116
    %3515 = vmatprep.subr.mxu0 0.0
    %3516 = vmatpush1.msra.mxu0 0.0
    %3517 = vmatprep.subr.mxu0 0.0
    %3518 = vmatpush1.msra.mxu0 0.0
    %3519 = vmatprep.subr.mxu0 0.0
    %3520 = vmatpush1.msra.mxu0 0.0
    %3521 = vmatprep.subr.mxu0 0.0
    %3522 = vmatpush1.msra.mxu0 0.0
    %3523 = vmatprep.subr.mxu0 0.0
    %3524 = vmatpush1.msra.mxu0 0.0
    %3525 = vmatprep.subr.mxu0 0.0
    %3526 = vmatpush1.msra.mxu0 0.0
    %3527 = vmatprep.subr.mxu0 0.0
    %3528 = vmatpush1.msra.mxu0 0.0
    %3529 = vmatprep.subr.mxu0 0.0
    %3530 = vmatpush1.msra.mxu0 0.0
    %3531 = vmatprep.subr.mxu0 0.0
    %3532 = vmatpush1.msra.mxu0 0.0
    %3533 = vmatprep.subr.mxu0 0.0
    %3534 = vmatpush1.msra.mxu0 0.0
    %3535 = vmatprep.subr.mxu0 0.0
    %3536 = vmatpush1.msra.mxu0 0.0
    %3537 = vmatprep.subr.mxu0 0.0
    %3538 = vmatpush1.msra.mxu0 0.0
    %3539 = vmatprep.subr.mxu0 0.0
    %3540 = vmatpush1.msra.mxu0 0.0
    %3541 = vmatprep.subr.mxu0 0.0
    %3542 = vmatpush1.msra.mxu0 0.0
    %3543 = vmatprep.subr.mxu0 0.0
    %3544 = vmatpush1.msra.mxu0 0.0
    %3545 = vmatprep.subr.mxu0 0.0
    %3546 = vmatpush1.msra.mxu0 0.0
    %3547 = vmatprep.mubr.f32.mxu0 0.0
    %3548 = vmatmul.mubr.f32.gmra.mrb[0].mxu0 %v3482
    %v3549 = vpop.f32.mrb[0].mxu0
    %v3550 = vadd.f32 0.0, %v3549
    %v3551 = vpop.f32.mrb[0].mxu0
    %3552 = vdwg.mxu0
    %v3554 = vsel %vm565, %v3550, 0
    %3556 = vmatprep.subr.mxu0 0.0
    %3557 = vmatpush1.msra.mxu0 %v117
    %3558 = vmatprep.subr.mxu0 0.0
    %3559 = vmatpush1.msra.mxu0 %v118
    %3560 = vmatprep.subr.mxu0 0.0
    %3561 = vmatpush1.msra.mxu0 0.0
    %3562 = vmatprep.subr.mxu0 0.0
    %3563 = vmatpush1.msra.mxu0 0.0
    %3564 = vmatprep.subr.mxu0 0.0
    %3565 = vmatpush1.msra.mxu0 0.0
    %3566 = vmatprep.subr.mxu0 0.0
    %3567 = vmatpush1.msra.mxu0 0.0
    %3568 = vmatprep.subr.mxu0 0.0
    %3569 = vmatpush1.msra.mxu0 0.0
    %3570 = vmatprep.subr.mxu0 0.0
    %3571 = vmatpush1.msra.mxu0 0.0
    %3572 = vmatprep.subr.mxu0 0.0
    %3573 = vmatpush1.msra.mxu0 0.0
    %3574 = vmatprep.subr.mxu0 0.0
    %3575 = vmatpush1.msra.mxu0 0.0
    %3576 = vmatprep.subr.mxu0 0.0
    %3577 = vmatpush1.msra.mxu0 0.0
    %3578 = vmatprep.subr.mxu0 0.0
    %3579 = vmatpush1.msra.mxu0 0.0
    %3580 = vmatprep.subr.mxu0 0.0
    %3581 = vmatpush1.msra.mxu0 0.0
    %3582 = vmatprep.subr.mxu0 0.0
    %3583 = vmatpush1.msra.mxu0 0.0
    %3584 = vmatprep.subr.mxu0 0.0
    %3585 = vmatpush1.msra.mxu0 0.0
    %3586 = vmatprep.subr.mxu0 0.0
    %3587 = vmatpush1.msra.mxu0 0.0
    %3588 = vmatprep.subr.mxu0 0.0
    %3589 = vmatpush1.msra.mxu0 0.0
    %3590 = vmatprep.subr.mxu0 0.0
    %3591 = vmatpush1.msra.mxu0 0.0
    %3592 = vmatprep.subr.mxu0 0.0
    %3593 = vmatpush1.msra.mxu0 0.0
    %3594 = vmatprep.subr.mxu0 0.0
    %3595 = vmatpush1.msra.mxu0 0.0
    %3596 = vmatprep.subr.mxu0 0.0
    %3597 = vmatpush1.msra.mxu0 0.0
    %3598 = vmatprep.subr.mxu0 0.0
    %3599 = vmatpush1.msra.mxu0 0.0
    %3600 = vmatprep.subr.mxu0 0.0
    %3601 = vmatpush1.msra.mxu0 0.0
    %3602 = vmatprep.subr.mxu0 0.0
    %3603 = vmatpush1.msra.mxu0 0.0
    %3604 = vmatprep.subr.mxu0 0.0
    %3605 = vmatpush1.msra.mxu0 0.0
    %3606 = vmatprep.subr.mxu0 0.0
    %3607 = vmatpush1.msra.mxu0 0.0
    %3608 = vmatprep.subr.mxu0 0.0
    %3609 = vmatpush1.msra.mxu0 0.0
    %3610 = vmatprep.subr.mxu0 0.0
    %3611 = vmatpush1.msra.mxu0 0.0
    %3612 = vmatprep.subr.mxu0 0.0
    %3613 = vmatpush1.msra.mxu0 0.0
    %3614 = vmatprep.subr.mxu0 0.0
    %3615 = vmatpush1.msra.mxu0 0.0
    %3616 = vmatprep.subr.mxu0 0.0
    %3617 = vmatpush1.msra.mxu0 0.0
    %3618 = vmatprep.subr.mxu0 0.0
    %3619 = vmatpush1.msra.mxu0 0.0
    %3620 = vmatprep.mubr.f32.mxu0 0.0
    %3621 = vmatmul.mubr.f32.gmra.mrb[0].mxu0 %v3554
    %v3622 = vpop.f32.mrb[0].mxu0
    %v3623 = vadd.f32 %v563, %v3622
    %v3624 = vpop.f32.mrb[0].mxu0
    %3625 = vdwg.mxu0
    %v3626 = vxor.u32 %v3623, 2147483648
    %v3627 = vmul.f32 %v3626, 1.442695
    %v3628 = vpow.pop %v3627
    %v3629 = vadd.f32 %v3628, 1.0
    %v3630 = vrcp.pop %v3629
    %v3631 = vmul.f32 1.0, %v3630
    %v3632 = vtanh.pop %v3623
    %v3633 = vmul.f32 %v3631, %v2655
    %3635 = vrot.lane.b32.xlu0 %v3632, 116
    %v3636 = vpop.permute.xlu0 %3635
    %v3638 = vmul.f32 %v3631, %v3636
    %3640 = vrot.lane.b32.xlu0 %v3638, 122
    %v3641 = vpop.permute.xlu0 %3640
    %v3643 = vadd.f32 %v3633, %v3641
    %v3644 = vtanh.pop %v3643
    %3646 = vrot.lane.b32.xlu0 %v3644, 12
    %v3647 = vpop.permute.xlu0 %3646
    %v3649 = vmul.f32 %v3631, %v3647
    %3651 = vrot.lane.b32.xlu0 %v3649, 116
    %v3652 = vpop.permute.xlu0 %3651
    %v3653 = vsel %vm672, %v3652, 0
    %3655 = vmatprep.subr.mxu0 0.0
    %3656 = vmatpush1.msra.mxu0 %v677
    %3657 = vmatprep.subr.mxu0 0.0
    %3658 = vmatpush1.msra.mxu0 0.0
    %3659 = vmatprep.subr.mxu0 0.0
    %3660 = vmatpush1.msra.mxu0 0.0
    %3661 = vmatprep.subr.mxu0 0.0
    %3662 = vmatpush1.msra.mxu0 0.0
    %3663 = vmatprep.subr.mxu0 0.0
    %3664 = vmatpush1.msra.mxu0 0.0
    %3665 = vmatprep.subr.mxu0 0.0
    %3666 = vmatpush1.msra.mxu0 0.0
    %3667 = vmatprep.subr.mxu0 0.0
    %3668 = vmatpush1.msra.mxu0 0.0
    %3669 = vmatprep.subr.mxu0 0.0
    %3670 = vmatpush1.msra.mxu0 0.0
    %3671 = vmatprep.subr.mxu0 0.0
    %3672 = vmatpush1.msra.mxu0 0.0
    %3673 = vmatprep.subr.mxu0 0.0
    %3674 = vmatpush1.msra.mxu0 0.0
    %3675 = vmatprep.subr.mxu0 0.0
    %3676 = vmatpush1.msra.mxu0 0.0
    %3677 = vmatprep.subr.mxu0 0.0
    %3678 = vmatpush1.msra.mxu0 0.0
    %3679 = vmatprep.subr.mxu0 0.0
    %3680 = vmatpush1.msra.mxu0 0.0
    %3681 = vmatprep.subr.mxu0 0.0
    %3682 = vmatpush1.msra.mxu0 0.0
    %3683 = vmatprep.subr.mxu0 0.0
    %3684 = vmatpush1.msra.mxu0 0.0
    %3685 = vmatprep.subr.mxu0 0.0
    %3686 = vmatpush1.msra.mxu0 0.0
    %3687 = vmatprep.subr.mxu0 0.0
    %3688 = vmatpush1.msra.mxu0 0.0
    %3689 = vmatprep.subr.mxu0 0.0
    %3690 = vmatpush1.msra.mxu0 0.0
    %3691 = vmatprep.subr.mxu0 0.0
    %3692 = vmatpush1.msra.mxu0 0.0
    %3693 = vmatprep.subr.mxu0 0.0
    %3694 = vmatpush1.msra.mxu0 0.0
    %3695 = vmatprep.subr.mxu0 0.0
    %3696 = vmatpush1.msra.mxu0 0.0
    %3697 = vmatprep.subr.mxu0 0.0
    %3698 = vmatpush1.msra.mxu0 0.0
    %3699 = vmatprep.subr.mxu0 0.0
    %3700 = vmatpush1.msra.mxu0 0.0
    %3701 = vmatprep.subr.mxu0 0.0
    %3702 = vmatpush1.msra.mxu0 0.0
    %3703 = vmatprep.subr.mxu0 0.0
    %3704 = vmatpush1.msra.mxu0 0.0
    %3705 = vmatprep.subr.mxu0 0.0
    %3706 = vmatpush1.msra.mxu0 0.0
    %3707 = vmatprep.subr.mxu0 0.0
    %3708 = vmatpush1.msra.mxu0 0.0
    %3709 = vmatprep.subr.mxu0 0.0
    %3710 = vmatpush1.msra.mxu0 0.0
    %3711 = vmatprep.subr.mxu0 0.0
    %3712 = vmatpush1.msra.mxu0 0.0
    %3713 = vmatprep.subr.mxu0 0.0
    %3714 = vmatpush1.msra.mxu0 0.0
    %3715 = vmatprep.subr.mxu0 0.0
    %3716 = vmatpush1.msra.mxu0 0.0
    %3717 = vmatprep.subr.mxu0 0.0
    %3718 = vmatpush1.msra.mxu0 0.0
    %3719 = vmatprep.mubr.f32.mxu0 0.0
    %3720 = vmatmul.mubr.f32.gmra.mrb[0].mxu0 %v3653
    %v3721 = vpop.f32.mrb[0].mxu0
    %v3722 = vadd.f32 %v667, %v3721
    %v3723 = vpop.f32.mrb[0].mxu0
    %3724 = vdwg.mxu0
    %v3725 = vand.u32 2147483647, %v3722
    %vm3726 = vcmp.le.f32.partialorder %v3725, 0.7853982
    %vm3727 = vcmp.lt.s32.totalorder %v3722, 0
    %v3728 = vand.u32 %v3722, 2139095040
    %v3729 = vshrl.u32 %v3728, 23
    %v3730 = vsub.s32 %v3729, 127
    %v3731 = vand.u32 2147483647, %v3722
    %v3732 = vand.u32 %v3731, 8388607
    %v3733 = vor.u32 %v3732, 8388608
    %v3734 = vsub.s32 0, %v3733
    %v3735 = vadd.s32 %v3730, 1
    %vm3736 = vcmp.gt.s32.totalorder %v3735, 0
    %v3737 = vsel %vm3736, %v3735, 0
    %v3738 = vshrl.u32 %v3737, 5
    %v3739 = vand.u32 %v3737, 31
    %v3740 = vsub.s32 32, %v3739
    %v3741 = vshrl.u32 683565275, %v3740
    %v3742 = vshll.u32 683565275, %v3739
    %v3743 = vshrl.u32 2475754826, %v3740
    %v3744 = vor.u32 %v3742, %v3743
    %v3745 = vshll.u32 2475754826, %v3739
    %v3746 = vshrl.u32 2131351028, %v3740
    %v3747 = vor.u32 %v3745, %v3746
    %v3748 = vshll.u32 2131351028, %v3739
    %v3749 = vshrl.u32 2102212464, %v3740
    %v3750 = vor.u32 %v3748, %v3749
    %v3751 = vshll.u32 2102212464, %v3739
    %v3752 = vshrl.u32 920167782, %v3740
    %v3753 = vor.u32 %v3751, %v3752
    %v3754 = vshll.u32 920167782, %v3739
    %v3755 = vshrl.u32 1326507024, %v3740
    %v3756 = vor.u32 %v3754, %v3755
    %vm3757 = vcmp.lt.s32.totalorder %v3738, 1
    %vm3758 = vcmp.lt.s32.totalorder %v3738, 2
    %vm3759 = vcmp.lt.s32.totalorder %v3738, 3
    %vm3760 = vcmp.lt.s32.totalorder %v3738, 4
    %v3761 = vsel %vm3757, %v3741, %v3744
    %v3762 = vsel %vm3760, %v3750, 2102212464
    %v3763 = vsel %vm3759, %v3747, %v3762
    %v3764 = vsel %vm3758, %v3761, %v3763
    %v3765 = vsel %vm3757, %v3744, %v3747
    %v3766 = vsel %vm3760, %v3753, 920167782
    %v3767 = vsel %vm3759, %v3750, %v3766
    %v3768 = vsel %vm3758, %v3765, %v3767
    %v3769 = vsel %vm3757, %v3747, %v3750
    %v3770 = vsel %vm3760, %v3756, 1326507024
    %v3771 = vsel %vm3759, %v3753, %v3770
    %v3772 = vsel %vm3758, %v3769, %v3771
    %v3773 = vshll.u32 %v3733, 8
    %v3774 = vmul.u32.u64.compose %v3773, %v3772
    %v3775 = vextract.low.u32 %v3774
    %v3776 = vextract.high.u32 %v3774
    %v3777 = vmul.u32.u64.compose %v3773, %v3768
    %v3778 = vextract.low.u32 %v3777
    %v3779 = vextract.high.u32 %v3777
    %v3780 = vmul.u32 %v3773, %v3764
    %v3781 = vadd.s32 %v3776, %v3778
    %vm3782 = vc.u32 %v3776, %v3778
    %v3783 = vadd.s32 %v3779, 1
    %v3784 = vsel %vm3782, %v3783, %v3779
    %v3785 = vadd.s32 %v3780, %v3784
    %v3786 = vadd.s32 %v3785, 536870912
    %v3787 = vshrl.u32 %v3786, 30
    %v3788 = vshll.u32 %v3787, 30
    %v3789 = vsub.s32 %v3785, %v3788
    %vm3790 = vcmp.lt.s32.totalorder %v3789, 0
    %v3791 = vsub.s32 0, %v3789
    %v3792 = vsel %vm3790, %v3791, %v3789
    %v3793 = vclz %v3792
    %v3794 = vsub.s32 %v3793, 2
    %vm3795 = vcmp.gt.s32.totalorder 0, %v3794
    %v3796 = vsel %vm3795, 0, %v3794
    %v3797 = vsub.s32 32, %v3796
    %v3798 = vshll.u32 %v3789, %v3796
    %v3799 = vshrl.u32 %v3781, %v3797
    %v3800 = vor.u32 %v3798, %v3799
    %v3801 = vsub.s32 4294967266, %v3796
    %v3802 = vadd.s32 %v3801, 127
    %v3803 = vshll.u32 %v3802, 23
    %v3804 = vor.u32 4788187, %v3803
    %v3805 = vand.u32 2147483647, %v3804
    %v3807 = vcvt.s32.f32 %v3800
    %v3808 = vmul.f32 %v3807, %v3805
    %v3809 = vxor.u32 %v3808, 2147483648
    %v3810 = vsel %vm3727, %v3809, %v3808
    %v3811 = vsub.s32 4, %v3787
    %v3812 = vsel %vm3727, %v3811, %v3787
    %v3813 = vsel %vm3726, %v3722, %v3810
    %v3814 = vsel %vm3726, 0, %v3812
    %v3815 = vcosq.f32.pop %v3813
    %v3816 = vsinq.f32.pop %v3813
    %vm3817 = vweird.f32 %v3722
    %v3818 = vand.u32 %v3814, 3
    %vm3819 = vcmp.lt.s32.totalorder %v3818, 2
    %vm3820 = vcmp.eq.s32.totalorder %v3818, 0
    %v3821 = vxor.u32 %v3816, 2147483648
    %v3822 = vsel %vm3820, %v3815, %v3821
    %vm3823 = vcmp.eq.s32.totalorder %v3818, 2
    %v3824 = vxor.u32 %v3815, 2147483648
    %v3825 = vsel %vm3823, %v3824, %v3816
    %v3826 = vsel %vm3819, %v3822, %v3825
    %v3827 = vsel %vm3817, nan, %v3826
    %v3829 = vsel %vm852, %v3827, 0
    %3831 = vmatprep.subr.mxu0 0.0
    %3832 = vmatpush1.msra.mxu0 %v122
    %3833 = vmatprep.subr.mxu0 0.0
    %3834 = vmatpush1.msra.mxu0 0.0
    %3835 = vmatprep.subr.mxu0 0.0
    %3836 = vmatpush1.msra.mxu0 0.0
    %3837 = vmatprep.subr.mxu0 0.0
    %3838 = vmatpush1.msra.mxu0 0.0
    %3839 = vmatprep.subr.mxu0 0.0
    %3840 = vmatpush1.msra.mxu0 0.0
    %3841 = vmatprep.subr.mxu0 0.0
    %3842 = vmatpush1.msra.mxu0 0.0
    %3843 = vmatprep.subr.mxu0 0.0
    %3844 = vmatpush1.msra.mxu0 0.0
    %3845 = vmatprep.subr.mxu0 0.0
    %3846 = vmatpush1.msra.mxu0 0.0
    %3847 = vmatprep.subr.mxu0 0.0
    %3848 = vmatpush1.msra.mxu0 0.0
    %3849 = vmatprep.subr.mxu0 0.0
    %3850 = vmatpush1.msra.mxu0 0.0
    %3851 = vmatprep.subr.mxu0 0.0
    %3852 = vmatpush1.msra.mxu0 0.0
    %3853 = vmatprep.subr.mxu0 0.0
    %3854 = vmatpush1.msra.mxu0 0.0
    %3855 = vmatprep.subr.mxu0 0.0
    %3856 = vmatpush1.msra.mxu0 0.0
    %3857 = vmatprep.subr.mxu0 0.0
    %3858 = vmatpush1.msra.mxu0 0.0
    %3859 = vmatprep.subr.mxu0 0.0
    %3860 = vmatpush1.msra.mxu0 0.0
    %3861 = vmatprep.subr.mxu0 0.0
    %3862 = vmatpush1.msra.mxu0 0.0
    %3863 = vmatprep.subr.mxu0 0.0
    %3864 = vmatpush1.msra.mxu0 0.0
    %3865 = vmatprep.subr.mxu0 0.0
    %3866 = vmatpush1.msra.mxu0 0.0
    %3867 = vmatprep.subr.mxu0 0.0
    %3868 = vmatpush1.msra.mxu0 0.0
    %3869 = vmatprep.subr.mxu0 0.0
    %3870 = vmatpush1.msra.mxu0 0.0
    %3871 = vmatprep.subr.mxu0 0.0
    %3872 = vmatpush1.msra.mxu0 0.0
    %3873 = vmatprep.subr.mxu0 0.0
    %3874 = vmatpush1.msra.mxu0 0.0
    %3875 = vmatprep.subr.mxu0 0.0
    %3876 = vmatpush1.msra.mxu0 0.0
    %3877 = vmatprep.subr.mxu0 0.0
    %3878 = vmatpush1.msra.mxu0 0.0
    %3879 = vmatprep.subr.mxu0 0.0
    %3880 = vmatpush1.msra.mxu0 0.0
    %3881 = vmatprep.subr.mxu0 0.0
    %3882 = vmatpush1.msra.mxu0 0.0
    %3883 = vmatprep.subr.mxu0 0.0
    %3884 = vmatpush1.msra.mxu0 0.0
    %3885 = vmatprep.subr.mxu0 0.0
    %3886 = vmatpush1.msra.mxu0 0.0
    %3887 = vmatprep.subr.mxu0 0.0
    %3888 = vmatpush1.msra.mxu0 0.0
    %3889 = vmatprep.subr.mxu0 0.0
    %3890 = vmatpush1.msra.mxu0 0.0
    %3891 = vmatprep.subr.mxu0 0.0
    %3892 = vmatpush1.msra.mxu0 0.0
    %3893 = vmatprep.subr.mxu0 0.0
    %3894 = vmatpush1.msra.mxu0 0.0
    %3895 = vmatprep.mubr.f32.mxu0 0.0
    %3896 = vmatmul.mubr.f32.gmra.mrb[0].mxu0 %v3829
    %v3897 = vpop.f32.mrb[0].mxu0
    %v3898 = vadd.f32 0.0, %v3897
    %v3899 = vpop.f32.mrb[0].mxu0
    %3900 = vdwg.mxu0
    %3902 = vrot.lane.b32.xlu0 %v3898, 96
    %v3903 = vpop.permute.xlu0 %3902
    %v3905 = vmul.f32 %v3898, %v3903
    %3907 = vrot.lane.b32.xlu0 %v3905, 112
    %v3908 = vpop.permute.xlu0 %3907
    %v3910 = vmul.f32 %v3905, %v3908
    %v3912 = vsel %vm565, %v3910, 0
    %3914 = vmatprep.subr.mxu0 0.0
    %3915 = vmatpush1.msra.mxu0 %v123
    %3916 = vmatprep.subr.mxu0 0.0
    %3917 = vmatpush1.msra.mxu0 %v124
    %3918 = vmatprep.subr.mxu0 0.0
    %3919 = vmatpush1.msra.mxu0 0.0
    %3920 = vmatprep.subr.mxu0 0.0
    %3921 = vmatpush1.msra.mxu0 0.0
    %3922 = vmatprep.subr.mxu0 0.0
    %3923 = vmatpush1.msra.mxu0 0.0
    %3924 = vmatprep.subr.mxu0 0.0
    %3925 = vmatpush1.msra.mxu0 0.0
    %3926 = vmatprep.subr.mxu0 0.0
    %3927 = vmatpush1.msra.mxu0 0.0
    %3928 = vmatprep.subr.mxu0 0.0
    %3929 = vmatpush1.msra.mxu0 0.0
    %3930 = vmatprep.subr.mxu0 0.0
    %3931 = vmatpush1.msra.mxu0 0.0
    %3932 = vmatprep.subr.mxu0 0.0
    %3933 = vmatpush1.msra.mxu0 0.0
    %3934 = vmatprep.subr.mxu0 0.0
    %3935 = vmatpush1.msra.mxu0 0.0
    %3936 = vmatprep.subr.mxu0 0.0
    %3937 = vmatpush1.msra.mxu0 0.0
    %3938 = vmatprep.subr.mxu0 0.0
    %3939 = vmatpush1.msra.mxu0 0.0
    %3940 = vmatprep.subr.mxu0 0.0
    %3941 = vmatpush1.msra.mxu0 0.0
    %3942 = vmatprep.subr.mxu0 0.0
    %3943 = vmatpush1.msra.mxu0 0.0
    %3944 = vmatprep.subr.mxu0 0.0
    %3945 = vmatpush1.msra.mxu0 0.0
    %3946 = vmatprep.subr.mxu0 0.0
    %3947 = vmatpush1.msra.mxu0 0.0
    %3948 = vmatprep.subr.mxu0 0.0
    %3949 = vmatpush1.msra.mxu0 0.0
    %3950 = vmatprep.subr.mxu0 0.0
    %3951 = vmatpush1.msra.mxu0 0.0
    %3952 = vmatprep.subr.mxu0 0.0
    %3953 = vmatpush1.msra.mxu0 0.0
    %3954 = vmatprep.subr.mxu0 0.0
    %3955 = vmatpush1.msra.mxu0 0.0
    %3956 = vmatprep.subr.mxu0 0.0
    %3957 = vmatpush1.msra.mxu0 0.0
    %3958 = vmatprep.subr.mxu0 0.0
    %3959 = vmatpush1.msra.mxu0 0.0
    %3960 = vmatprep.subr.mxu0 0.0
    %3961 = vmatpush1.msra.mxu0 0.0
    %3962 = vmatprep.subr.mxu0 0.0
    %3963 = vmatpush1.msra.mxu0 0.0
    %3964 = vmatprep.subr.mxu0 0.0
    %3965 = vmatpush1.msra.mxu0 0.0
    %3966 = vmatprep.subr.mxu0 0.0
    %3967 = vmatpush1.msra.mxu0 0.0
    %3968 = vmatprep.subr.mxu0 0.0
    %3969 = vmatpush1.msra.mxu0 0.0
    %3970 = vmatprep.subr.mxu0 0.0
    %3971 = vmatpush1.msra.mxu0 0.0
    %3972 = vmatprep.subr.mxu0 0.0
    %3973 = vmatpush1.msra.mxu0 0.0
    %3974 = vmatprep.subr.mxu0 0.0
    %3975 = vmatpush1.msra.mxu0 0.0
    %3976 = vmatprep.subr.mxu0 0.0
    %3977 = vmatpush1.msra.mxu0 0.0
    %3978 = vmatprep.mubr.f32.mxu0 0.0
    %3979 = vmatmul.mubr.f32.gmra.mrb[0].mxu0 %v3912
    %v3980 = vpop.f32.mrb[0].mxu0
    %v3981 = vadd.f32 0.0, %v3980
    %v3982 = vpop.f32.mrb[0].mxu0
    %3983 = vdwg.mxu0
    %v3984 = vmul.f32 %v3981, %v3981
    %v3986 = vsel %vm333, %v3984, 0
    %3988 = vmatprep.subr.mxu0 0.0
    %3989 = vmatpush1.msra.mxu0 %v125
    %3990 = vmatprep.subr.mxu0 0.0
    %3991 = vmatpush1.msra.mxu0 %v126
    %3992 = vmatprep.subr.mxu0 0.0
    %3993 = vmatpush1.msra.mxu0 %v127
    %3994 = vmatprep.subr.mxu0 0.0
    %3995 = vmatpush1.msra.mxu0 %v128
    %3996 = vmatprep.subr.mxu0 0.0
    %3997 = vmatpush1.msra.mxu0 0.0
    %3998 = vmatprep.subr.mxu0 0.0
    %3999 = vmatpush1.msra.mxu0 0.0
    %4000 = vmatprep.subr.mxu0 0.0
    %4001 = vmatpush1.msra.mxu0 0.0
    %4002 = vmatprep.subr.mxu0 0.0
    %4003 = vmatpush1.msra.mxu0 0.0
    %4004 = vmatprep.subr.mxu0 0.0
    %4005 = vmatpush1.msra.mxu0 0.0
    %4006 = vmatprep.subr.mxu0 0.0
    %4007 = vmatpush1.msra.mxu0 0.0
    %4008 = vmatprep.subr.mxu0 0.0
    %4009 = vmatpush1.msra.mxu0 0.0
    %4010 = vmatprep.subr.mxu0 0.0
    %4011 = vmatpush1.msra.mxu0 0.0
    %4012 = vmatprep.subr.mxu0 0.0
    %4013 = vmatpush1.msra.mxu0 0.0
    %4014 = vmatprep.subr.mxu0 0.0
    %4015 = vmatpush1.msra.mxu0 0.0
    %4016 = vmatprep.subr.mxu0 0.0
    %4017 = vmatpush1.msra.mxu0 0.0
    %4018 = vmatprep.subr.mxu0 0.0
    %4019 = vmatpush1.msra.mxu0 0.0
    %4020 = vmatprep.subr.mxu0 0.0
    %4021 = vmatpush1.msra.mxu0 0.0
    %4022 = vmatprep.subr.mxu0 0.0
    %4023 = vmatpush1.msra.mxu0 0.0
    %4024 = vmatprep.subr.mxu0 0.0
    %4025 = vmatpush1.msra.mxu0 0.0
    %4026 = vmatprep.subr.mxu0 0.0
    %4027 = vmatpush1.msra.mxu0 0.0
    %4028 = vmatprep.subr.mxu0 0.0
    %4029 = vmatpush1.msra.mxu0 0.0
    %4030 = vmatprep.subr.mxu0 0.0
    %4031 = vmatpush1.msra.mxu0 0.0
    %4032 = vmatprep.subr.mxu0 0.0
    %4033 = vmatpush1.msra.mxu0 0.0
    %4034 = vmatprep.subr.mxu0 0.0
    %4035 = vmatpush1.msra.mxu0 0.0
    %4036 = vmatprep.subr.mxu0 0.0
    %4037 = vmatpush1.msra.mxu0 0.0
    %4038 = vmatprep.subr.mxu0 0.0
    %4039 = vmatpush1.msra.mxu0 0.0
    %4040 = vmatprep.subr.mxu0 0.0
    %4041 = vmatpush1.msra.mxu0 0.0
    %4042 = vmatprep.subr.mxu0 0.0
    %4043 = vmatpush1.msra.mxu0 0.0
    %4044 = vmatprep.subr.mxu0 0.0
    %4045 = vmatpush1.msra.mxu0 0.0
    %4046 = vmatprep.subr.mxu0 0.0
    %4047 = vmatpush1.msra.mxu0 0.0
    %4048 = vmatprep.subr.mxu0 0.0
    %4049 = vmatpush1.msra.mxu0 0.0
    %4050 = vmatprep.subr.mxu0 0.0
    %4051 = vmatpush1.msra.mxu0 0.0
    %4052 = vmatprep.mubr.f32.mxu0 0.0
    %4053 = vmatmul.mubr.f32.gmra.mrb[0].mxu0 %v3986
    %v4054 = vpop.f32.mrb[0].mxu0
    %v4055 = vadd.f32 0.0, %v4054
    %v4056 = vpop.f32.mrb[0].mxu0
    %4057 = vdwg.mxu0
    %v4059 = vsel %vm1089, %v4055, 0
    %4061 = vmatprep.subr.mxu0 0.0
    %4062 = vmatpush1.msra.mxu0 %v1095
    %4063 = vmatprep.subr.mxu0 0.0
    %4064 = vmatpush1.msra.mxu0 0.0
    %4065 = vmatprep.subr.mxu0 0.0
    %4066 = vmatpush1.msra.mxu0 0.0
    %4067 = vmatprep.subr.mxu0 0.0
    %4068 = vmatpush1.msra.mxu0 0.0
    %4069 = vmatprep.subr.mxu0 0.0
    %4070 = vmatpush1.msra.mxu0 0.0
    %4071 = vmatprep.subr.mxu0 0.0
    %4072 = vmatpush1.msra.mxu0 0.0
    %4073 = vmatprep.subr.mxu0 0.0
    %4074 = vmatpush1.msra.mxu0 0.0
    %4075 = vmatprep.subr.mxu0 0.0
    %4076 = vmatpush1.msra.mxu0 0.0
    %4077 = vmatprep.subr.mxu0 0.0
    %4078 = vmatpush1.msra.mxu0 0.0
    %4079 = vmatprep.subr.mxu0 0.0
    %4080 = vmatpush1.msra.mxu0 0.0
    %4081 = vmatprep.subr.mxu0 0.0
    %4082 = vmatpush1.msra.mxu0 0.0
    %4083 = vmatprep.subr.mxu0 0.0
    %4084 = vmatpush1.msra.mxu0 0.0
    %4085 = vmatprep.subr.mxu0 0.0
    %4086 = vmatpush1.msra.mxu0 0.0
    %4087 = vmatprep.subr.mxu0 0.0
    %4088 = vmatpush1.msra.mxu0 0.0
    %4089 = vmatprep.subr.mxu0 0.0
    %4090 = vmatpush1.msra.mxu0 0.0
    %4091 = vmatprep.subr.mxu0 0.0
    %4092 = vmatpush1.msra.mxu0 0.0
    %4093 = vmatprep.subr.mxu0 0.0
    %4094 = vmatpush1.msra.mxu0 0.0
    %4095 = vmatprep.subr.mxu0 0.0
    %4096 = vmatpush1.msra.mxu0 0.0
    %4097 = vmatprep.subr.mxu0 0.0
    %4098 = vmatpush1.msra.mxu0 0.0
    %4099 = vmatprep.subr.mxu0 0.0
    %4100 = vmatpush1.msra.mxu0 0.0
    %4101 = vmatprep.subr.mxu0 0.0
    %4102 = vmatpush1.msra.mxu0 0.0
    %4103 = vmatprep.subr.mxu0 0.0
    %4104 = vmatpush1.msra.mxu0 0.0
    %4105 = vmatprep.subr.mxu0 0.0
    %4106 = vmatpush1.msra.mxu0 0.0
    %4107 = vmatprep.subr.mxu0 0.0
    %4108 = vmatpush1.msra.mxu0 0.0
    %4109 = vmatprep.subr.mxu0 0.0
    %4110 = vmatpush1.msra.mxu0 0.0
    %4111 = vmatprep.subr.mxu0 0.0
    %4112 = vmatpush1.msra.mxu0 0.0
    %4113 = vmatprep.subr.mxu0 0.0
    %4114 = vmatpush1.msra.mxu0 0.0
    %4115 = vmatprep.subr.mxu0 0.0
    %4116 = vmatpush1.msra.mxu0 0.0
    %4117 = vmatprep.subr.mxu0 0.0
    %4118 = vmatpush1.msra.mxu0 0.0
    %4119 = vmatprep.subr.mxu0 0.0
    %4120 = vmatpush1.msra.mxu0 0.0
    %4121 = vmatprep.subr.mxu0 0.0
    %4122 = vmatpush1.msra.mxu0 0.0
    %4123 = vmatprep.subr.mxu0 0.0
    %4124 = vmatpush1.msra.mxu0 0.0
    %4125 = vmatprep.mubr.f32.mxu0 0.0
    %4126 = vmatmul.mubr.f32.gmra.mrb[0].mxu0 %v4059
    %v4127 = vpop.f32.mrb[0].mxu0
    %v4128 = vadd.f32 %v1087, %v4127
    %v4129 = vpop.f32.mrb[0].mxu0
    %4130 = vdwg.mxu0
    %s4131 = scalar_lea.vmem %s0, 8
    %v4132 = vld [vmem:[%s4131] sm:$0x3]
    %4134 = vset.pattern.permute.xlu0 0
    %4135 = vperm.xlu0 %4134, %v4132
    %v4136 = vpop.permute.xlu0 %4135
    %v4138 = vmul.f32 %v4136, %v141
    %v4140 = vsel %vm144, %v4128, 0
    %4142 = vmatprep.subr.mxu0 0.0
    %4143 = vmatpush1.msra.mxu0 %v150
    %4144 = vmatprep.subr.mxu0 0.0
    %4145 = vmatpush1.msra.mxu0 0.0
    %4146 = vmatprep.subr.mxu0 0.0
    %4147 = vmatpush1.msra.mxu0 0.0
    %4148 = vmatprep.subr.mxu0 0.0
    %4149 = vmatpush1.msra.mxu0 0.0
    %4150 = vmatprep.subr.mxu0 0.0
    %4151 = vmatpush1.msra.mxu0 0.0
    %4152 = vmatprep.subr.mxu0 0.0
    %4153 = vmatpush1.msra.mxu0 0.0
    %4154 = vmatprep.subr.mxu0 0.0
    %4155 = vmatpush1.msra.mxu0 0.0
    %4156 = vmatprep.subr.mxu0 0.0
    %4157 = vmatpush1.msra.mxu0 0.0
    %4158 = vmatprep.subr.mxu0 0.0
    %4159 = vmatpush1.msra.mxu0 0.0
    %4160 = vmatprep.subr.mxu0 0.0
    %4161 = vmatpush1.msra.mxu0 0.0
    %4162 = vmatprep.subr.mxu0 0.0
    %4163 = vmatpush1.msra.mxu0 0.0
    %4164 = vmatprep.subr.mxu0 0.0
    %4165 = vmatpush1.msra.mxu0 0.0
    %4166 = vmatprep.subr.mxu0 0.0
    %4167 = vmatpush1.msra.mxu0 0.0
    %4168 = vmatprep.subr.mxu0 0.0
    %4169 = vmatpush1.msra.mxu0 0.0
    %4170 = vmatprep.subr.mxu0 0.0
    %4171 = vmatpush1.msra.mxu0 0.0
    %4172 = vmatprep.subr.mxu0 0.0
    %4173 = vmatpush1.msra.mxu0 0.0
    %4174 = vmatprep.subr.mxu0 0.0
    %4175 = vmatpush1.msra.mxu0 0.0
    %4176 = vmatprep.subr.mxu0 0.0
    %4177 = vmatpush1.msra.mxu0 0.0
    %4178 = vmatprep.subr.mxu0 0.0
    %4179 = vmatpush1.msra.mxu0 0.0
    %4180 = vmatprep.subr.mxu0 0.0
    %4181 = vmatpush1.msra.mxu0 0.0
    %4182 = vmatprep.subr.mxu0 0.0
    %4183 = vmatpush1.msra.mxu0 0.0
    %4184 = vmatprep.subr.mxu0 0.0
    %4185 = vmatpush1.msra.mxu0 0.0
    %4186 = vmatprep.subr.mxu0 0.0
    %4187 = vmatpush1.msra.mxu0 0.0
    %4188 = vmatprep.subr.mxu0 0.0
    %4189 = vmatpush1.msra.mxu0 0.0
    %4190 = vmatprep.subr.mxu0 0.0
    %4191 = vmatpush1.msra.mxu0 0.0
    %4192 = vmatprep.subr.mxu0 0.0
    %4193 = vmatpush1.msra.mxu0 0.0
    %4194 = vmatprep.subr.mxu0 0.0
    %4195 = vmatpush1.msra.mxu0 0.0
    %4196 = vmatprep.subr.mxu0 0.0
    %4197 = vmatpush1.msra.mxu0 0.0
    %4198 = vmatprep.subr.mxu0 0.0
    %4199 = vmatpush1.msra.mxu0 0.0
    %4200 = vmatprep.subr.mxu0 0.0
    %4201 = vmatpush1.msra.mxu0 0.0
    %4202 = vmatprep.subr.mxu0 0.0
    %4203 = vmatpush1.msra.mxu0 0.0
    %4204 = vmatprep.subr.mxu0 0.0
    %4205 = vmatpush1.msra.mxu0 0.0
    %4206 = vmatprep.mubr.f32.mxu0 0.0
    %4207 = vmatmul.mubr.f32.gmra.mrb[0].mxu0 %v4140
    %v4208 = vpop.f32.mrb[0].mxu0
    %v4209 = vadd.f32 0.0, %v4208
    %v4210 = vpop.f32.mrb[0].mxu0
    %4211 = vdwg.mxu0
    %v4212 = vadd.f32 %v4138, %v4209
    %v4213 = vadd.f32 %v4212, %v227
    %v4214 = vand.u32 2147483647, %v4213
    %vm4215 = vcmp.le.f32.partialorder %v4214, 0.7853982
    %vm4216 = vcmp.lt.s32.totalorder %v4213, 0
    %v4217 = vand.u32 %v4213, 2139095040
    %v4218 = vshrl.u32 %v4217, 23
    %v4219 = vsub.s32 %v4218, 127
    %v4220 = vand.u32 2147483647, %v4213
    %v4221 = vand.u32 %v4220, 8388607
    %v4222 = vor.u32 %v4221, 8388608
    %v4223 = vsub.s32 0, %v4222
    %v4224 = vadd.s32 %v4219, 1
    %vm4225 = vcmp.gt.s32.totalorder %v4224, 0
    %v4226 = vsel %vm4225, %v4224, 0
    %v4227 = vshrl.u32 %v4226, 5
    %v4228 = vand.u32 %v4226, 31
    %v4229 = vsub.s32 32, %v4228
    %v4230 = vshrl.u32 683565275, %v4229
    %v4231 = vshll.u32 683565275, %v4228
    %v4232 = vshrl.u32 2475754826, %v4229
    %v4233 = vor.u32 %v4231, %v4232
    %v4234 = vshll.u32 2475754826, %v4228
    %v4235 = vshrl.u32 2131351028, %v4229
    %v4236 = vor.u32 %v4234, %v4235
    %v4237 = vshll.u32 2131351028, %v4228
    %v4238 = vshrl.u32 2102212464, %v4229
    %v4239 = vor.u32 %v4237, %v4238
    %v4240 = vshll.u32 2102212464, %v4228
    %v4241 = vshrl.u32 920167782, %v4229
    %v4242 = vor.u32 %v4240, %v4241
    %v4243 = vshll.u32 920167782, %v4228
    %v4244 = vshrl.u32 1326507024, %v4229
    %v4245 = vor.u32 %v4243, %v4244
    %vm4246 = vcmp.lt.s32.totalorder %v4227, 1
    %vm4247 = vcmp.lt.s32.totalorder %v4227, 2
    %vm4248 = vcmp.lt.s32.totalorder %v4227, 3
    %vm4249 = vcmp.lt.s32.totalorder %v4227, 4
    %v4250 = vsel %vm4246, %v4230, %v4233
    %v4251 = vsel %vm4249, %v4239, 2102212464
    %v4252 = vsel %vm4248, %v4236, %v4251
    %v4253 = vsel %vm4247, %v4250, %v4252
    %v4254 = vsel %vm4246, %v4233, %v4236
    %v4255 = vsel %vm4249, %v4242, 920167782
    %v4256 = vsel %vm4248, %v4239, %v4255
    %v4257 = vsel %vm4247, %v4254, %v4256
    %v4258 = vsel %vm4246, %v4236, %v4239
    %v4259 = vsel %vm4249, %v4245, 1326507024
    %v4260 = vsel %vm4248, %v4242, %v4259
    %v4261 = vsel %vm4247, %v4258, %v4260
    %v4262 = vshll.u32 %v4222, 8
    %v4263 = vmul.u32.u64.compose %v4262, %v4261
    %v4264 = vextract.low.u32 %v4263
    %v4265 = vextract.high.u32 %v4263
    %v4266 = vmul.u32.u64.compose %v4262, %v4257
    %v4267 = vextract.low.u32 %v4266
    %v4268 = vextract.high.u32 %v4266
    %v4269 = vmul.u32 %v4262, %v4253
    %v4270 = vadd.s32 %v4265, %v4267
    %vm4271 = vc.u32 %v4265, %v4267
    %v4272 = vadd.s32 %v4268, 1
    %v4273 = vsel %vm4271, %v4272, %v4268
    %v4274 = vadd.s32 %v4269, %v4273
    %v4275 = vadd.s32 %v4274, 536870912
    %v4276 = vshrl.u32 %v4275, 30
    %v4277 = vshll.u32 %v4276, 30
    %v4278 = vsub.s32 %v4274, %v4277
    %vm4279 = vcmp.lt.s32.totalorder %v4278, 0
    %v4280 = vsub.s32 0, %v4278
    %v4281 = vsel %vm4279, %v4280, %v4278
    %v4282 = vclz %v4281
    %v4283 = vsub.s32 %v4282, 2
    %vm4284 = vcmp.gt.s32.totalorder 0, %v4283
    %v4285 = vsel %vm4284, 0, %v4283
    %v4286 = vsub.s32 32, %v4285
    %v4287 = vshll.u32 %v4278, %v4285
    %v4288 = vshrl.u32 %v4270, %v4286
    %v4289 = vor.u32 %v4287, %v4288
    %v4290 = vsub.s32 4294967266, %v4285
    %v4291 = vadd.s32 %v4290, 127
    %v4292 = vshll.u32 %v4291, 23
    %v4293 = vor.u32 4788187, %v4292
    %v4294 = vand.u32 2147483647, %v4293
    %v4296 = vcvt.s32.f32 %v4289
    %v4297 = vmul.f32 %v4296, %v4294
    %v4298 = vxor.u32 %v4297, 2147483648
    %v4299 = vsel %vm4216, %v4298, %v4297
    %v4300 = vsub.s32 4, %v4276
    %v4301 = vsel %vm4216, %v4300, %v4276
    %v4302 = vsel %vm4215, %v4213, %v4299
    %v4303 = vsel %vm4215, 0, %v4301
    %v4304 = vcosq.f32.pop %v4302
    %v4305 = vsinq.f32.pop %v4302
    %vm4306 = vweird.f32 %v4213
    %v4307 = vand.u32 %v4303, 3
    %vm4308 = vcmp.lt.s32.totalorder %v4307, 2
    %vm4309 = vcmp.eq.s32.totalorder %v4307, 0
    %v4310 = vxor.u32 %v4305, 2147483648
    %v4311 = vsel %vm4309, %v4304, %v4310
    %vm4312 = vcmp.eq.s32.totalorder %v4307, 2
    %v4313 = vxor.u32 %v4304, 2147483648
    %v4314 = vsel %vm4312, %v4313, %v4305
    %v4315 = vsel %vm4308, %v4311, %v4314
    %v4316 = vsel %vm4306, nan, %v4315
    %v4318 = vsel %vm333, %v4316, 0
    %4320 = vmatprep.subr.mxu0 %v86
    %4321 = vmatpush1.msra.mxu0 %v85
    %4322 = vmatprep.subr.mxu0 %v88
    %4323 = vmatpush1.msra.mxu0 %v87
    %4324 = vmatprep.subr.mxu0 %v90
    %4325 = vmatpush1.msra.mxu0 %v89
    %4326 = vmatprep.subr.mxu0 %v92
    %4327 = vmatpush1.msra.mxu0 %v91
    %4328 = vmatprep.subr.mxu0 0.0
    %4329 = vmatpush1.msra.mxu0 0.0
    %4330 = vmatprep.subr.mxu0 0.0
    %4331 = vmatpush1.msra.mxu0 0.0
    %4332 = vmatprep.subr.mxu0 0.0
    %4333 = vmatpush1.msra.mxu0 0.0
    %4334 = vmatprep.subr.mxu0 0.0
    %4335 = vmatpush1.msra.mxu0 0.0
    %4336 = vmatprep.subr.mxu0 0.0
    %4337 = vmatpush1.msra.mxu0 0.0
    %4338 = vmatprep.subr.mxu0 0.0
    %4339 = vmatpush1.msra.mxu0 0.0
    %4340 = vmatprep.subr.mxu0 0.0
    %4341 = vmatpush1.msra.mxu0 0.0
    %4342 = vmatprep.subr.mxu0 0.0
    %4343 = vmatpush1.msra.mxu0 0.0
    %4344 = vmatprep.subr.mxu0 0.0
    %4345 = vmatpush1.msra.mxu0 0.0
    %4346 = vmatprep.subr.mxu0 0.0
    %4347 = vmatpush1.msra.mxu0 0.0
    %4348 = vmatprep.subr.mxu0 0.0
    %4349 = vmatpush1.msra.mxu0 0.0
    %4350 = vmatprep.subr.mxu0 0.0
    %4351 = vmatpush1.msra.mxu0 0.0
    %4352 = vmatprep.subr.mxu0 0.0
    %4353 = vmatpush1.msra.mxu0 0.0
    %4354 = vmatprep.subr.mxu0 0.0
    %4355 = vmatpush1.msra.mxu0 0.0
    %4356 = vmatprep.subr.mxu0 0.0
    %4357 = vmatpush1.msra.mxu0 0.0
    %4358 = vmatprep.subr.mxu0 0.0
    %4359 = vmatpush1.msra.mxu0 0.0
    %4360 = vmatprep.subr.mxu0 0.0
    %4361 = vmatpush1.msra.mxu0 0.0
    %4362 = vmatprep.subr.mxu0 0.0
    %4363 = vmatpush1.msra.mxu0 0.0
    %4364 = vmatprep.subr.mxu0 0.0
    %4365 = vmatpush1.msra.mxu0 0.0
    %4366 = vmatprep.subr.mxu0 0.0
    %4367 = vmatpush1.msra.mxu0 0.0
    %4368 = vmatprep.subr.mxu0 0.0
    %4369 = vmatpush1.msra.mxu0 0.0
    %4370 = vmatprep.subr.mxu0 0.0
    %4371 = vmatpush1.msra.mxu0 0.0
    %4372 = vmatprep.subr.mxu0 0.0
    %4373 = vmatpush1.msra.mxu0 0.0
    %4374 = vmatprep.subr.mxu0 0.0
    %4375 = vmatpush1.msra.mxu0 0.0
    %4376 = vmatprep.subr.mxu0 0.0
    %4377 = vmatpush1.msra.mxu0 0.0
    %4378 = vmatprep.subr.mxu0 0.0
    %4379 = vmatpush1.msra.mxu0 0.0
    %4380 = vmatprep.subr.mxu0 0.0
    %4381 = vmatpush1.msra.mxu0 0.0
    %4382 = vmatprep.subr.mxu0 0.0
    %4383 = vmatpush1.msra.mxu0 0.0
    %4384 = vmatprep.mubr.f32.mxu0 0.0
    %4385 = vmatmul.mubr.f32.gmra.mrb[0].mxu0 %v4318
    %v4386 = vpop.f32.mrb[0].mxu0
    %v4387 = vadd.f32 0.0, %v4386
    %v4388 = vpop.f32.mrb[0].mxu0
    %v4389 = vadd.f32 0.0, %v4388
    %4390 = vdwg.mxu0
    %v4391 = vmul.f32 %v4387, %v4389
    %4393 = vrot.lane.b32.xlu0 %v4391, 64
    %v4394 = vpop.permute.xlu0 %4393
    %v4396 = vmul.f32 %v4391, %v4394
    %v4398 = vsel %vm414, %v4396, 0
    %4400 = vmatprep.subr.mxu0 0.0
    %4401 = vmatpush1.msra.mxu0 %v93
    %4402 = vmatprep.subr.mxu0 0.0
    %4403 = vmatpush1.msra.mxu0 %v94
    %4404 = vmatprep.subr.mxu0 0.0
    %4405 = vmatpush1.msra.mxu0 %v95
    %4406 = vmatprep.subr.mxu0 0.0
    %4407 = vmatpush1.msra.mxu0 %v96
    %4408 = vmatprep.subr.mxu0 0.0
    %4409 = vmatpush1.msra.mxu0 %v97
    %4410 = vmatprep.subr.mxu0 0.0
    %4411 = vmatpush1.msra.mxu0 %v98
    %4412 = vmatprep.subr.mxu0 0.0
    %4413 = vmatpush1.msra.mxu0 %v99
    %4414 = vmatprep.subr.mxu0 0.0
    %4415 = vmatpush1.msra.mxu0 %v100
    %4416 = vmatprep.subr.mxu0 0.0
    %4417 = vmatpush1.msra.mxu0 0.0
    %4418 = vmatprep.subr.mxu0 0.0
    %4419 = vmatpush1.msra.mxu0 0.0
    %4420 = vmatprep.subr.mxu0 0.0
    %4421 = vmatpush1.msra.mxu0 0.0
    %4422 = vmatprep.subr.mxu0 0.0
    %4423 = vmatpush1.msra.mxu0 0.0
    %4424 = vmatprep.subr.mxu0 0.0
    %4425 = vmatpush1.msra.mxu0 0.0
    %4426 = vmatprep.subr.mxu0 0.0
    %4427 = vmatpush1.msra.mxu0 0.0
    %4428 = vmatprep.subr.mxu0 0.0
    %4429 = vmatpush1.msra.mxu0 0.0
    %4430 = vmatprep.subr.mxu0 0.0
    %4431 = vmatpush1.msra.mxu0 0.0
    %4432 = vmatprep.subr.mxu0 0.0
    %4433 = vmatpush1.msra.mxu0 0.0
    %4434 = vmatprep.subr.mxu0 0.0
    %4435 = vmatpush1.msra.mxu0 0.0
    %4436 = vmatprep.subr.mxu0 0.0
    %4437 = vmatpush1.msra.mxu0 0.0
    %4438 = vmatprep.subr.mxu0 0.0
    %4439 = vmatpush1.msra.mxu0 0.0
    %4440 = vmatprep.subr.mxu0 0.0
    %4441 = vmatpush1.msra.mxu0 0.0
    %4442 = vmatprep.subr.mxu0 0.0
    %4443 = vmatpush1.msra.mxu0 0.0
    %4444 = vmatprep.subr.mxu0 0.0
    %4445 = vmatpush1.msra.mxu0 0.0
    %4446 = vmatprep.subr.mxu0 0.0
    %4447 = vmatpush1.msra.mxu0 0.0
    %4448 = vmatprep.subr.mxu0 0.0
    %4449 = vmatpush1.msra.mxu0 0.0
    %4450 = vmatprep.subr.mxu0 0.0
    %4451 = vmatpush1.msra.mxu0 0.0
    %4452 = vmatprep.subr.mxu0 0.0
    %4453 = vmatpush1.msra.mxu0 0.0
    %4454 = vmatprep.subr.mxu0 0.0
    %4455 = vmatpush1.msra.mxu0 0.0
    %4456 = vmatprep.subr.mxu0 0.0
    %4457 = vmatpush1.msra.mxu0 0.0
    %4458 = vmatprep.subr.mxu0 0.0
    %4459 = vmatpush1.msra.mxu0 0.0
    %4460 = vmatprep.subr.mxu0 0.0
    %4461 = vmatpush1.msra.mxu0 0.0
    %4462 = vmatprep.subr.mxu0 0.0
    %4463 = vmatpush1.msra.mxu0 0.0
    %4464 = vmatprep.mubr.f32.mxu0 0.0
    %4465 = vmatmul.mubr.f32.gmra.mrb[0].mxu0 %v4398
    %v4466 = vpop.f32.mrb[0].mxu0
    %v4467 = vadd.f32 0.0, %v4466
    %v4468 = vpop.f32.mrb[0].mxu0
    %4469 = vdwg.mxu0
    %v4470 = vmul.f32 %v4467, %v4467
    %4471 = vmatprep.subr.mxu0 0.0
    %4472 = vmatpush1.msra.mxu0 %v101
    %4473 = vmatprep.subr.mxu0 0.0
    %4474 = vmatpush1.msra.mxu0 %v102
    %4475 = vmatprep.subr.mxu0 0.0
    %4476 = vmatpush1.msra.mxu0 %v103
    %4477 = vmatprep.subr.mxu0 0.0
    %4478 = vmatpush1.msra.mxu0 %v104
    %4479 = vmatprep.subr.mxu0 0.0
    %4480 = vmatpush1.msra.mxu0 %v105
    %4481 = vmatprep.subr.mxu0 0.0
    %4482 = vmatpush1.msra.mxu0 %v106
    %4483 = vmatprep.subr.mxu0 0.0
    %4484 = vmatpush1.msra.mxu0 %v107
    %4485 = vmatprep.subr.mxu0 0.0
    %4486 = vmatpush1.msra.mxu0 %v108
    %4487 = vmatprep.subr.mxu0 0.0
    %4488 = vmatpush1.msra.mxu0 %v109
    %4489 = vmatprep.subr.mxu0 0.0
    %4490 = vmatpush1.msra.mxu0 %v110
    %4491 = vmatprep.subr.mxu0 0.0
    %4492 = vmatpush1.msra.mxu0 %v111
    %4493 = vmatprep.subr.mxu0 0.0
    %4494 = vmatpush1.msra.mxu0 %v112
    %4495 = vmatprep.subr.mxu0 0.0
    %4496 = vmatpush1.msra.mxu0 %v113
    %4497 = vmatprep.subr.mxu0 0.0
    %4498 = vmatpush1.msra.mxu0 %v114
    %4499 = vmatprep.subr.mxu0 0.0
    %4500 = vmatpush1.msra.mxu0 %v115
    %4501 = vmatprep.subr.mxu0 0.0
    %4502 = vmatpush1.msra.mxu0 %v116
    %4503 = vmatprep.subr.mxu0 0.0
    %4504 = vmatpush1.msra.mxu0 0.0
    %4505 = vmatprep.subr.mxu0 0.0
    %4506 = vmatpush1.msra.mxu0 0.0
    %4507 = vmatprep.subr.mxu0 0.0
    %4508 = vmatpush1.msra.mxu0 0.0
    %4509 = vmatprep.subr.mxu0 0.0
    %4510 = vmatpush1.msra.mxu0 0.0
    %4511 = vmatprep.subr.mxu0 0.0
    %4512 = vmatpush1.msra.mxu0 0.0
    %4513 = vmatprep.subr.mxu0 0.0
    %4514 = vmatpush1.msra.mxu0 0.0
    %4515 = vmatprep.subr.mxu0 0.0
    %4516 = vmatpush1.msra.mxu0 0.0
    %4517 = vmatprep.subr.mxu0 0.0
    %4518 = vmatpush1.msra.mxu0 0.0
    %4519 = vmatprep.subr.mxu0 0.0
    %4520 = vmatpush1.msra.mxu0 0.0
    %4521 = vmatprep.subr.mxu0 0.0
    %4522 = vmatpush1.msra.mxu0 0.0
    %4523 = vmatprep.subr.mxu0 0.0
    %4524 = vmatpush1.msra.mxu0 0.0
    %4525 = vmatprep.subr.mxu0 0.0
    %4526 = vmatpush1.msra.mxu0 0.0
    %4527 = vmatprep.subr.mxu0 0.0
    %4528 = vmatpush1.msra.mxu0 0.0
    %4529 = vmatprep.subr.mxu0 0.0
    %4530 = vmatpush1.msra.mxu0 0.0
    %4531 = vmatprep.subr.mxu0 0.0
    %4532 = vmatpush1.msra.mxu0 0.0
    %4533 = vmatprep.subr.mxu0 0.0
    %4534 = vmatpush1.msra.mxu0 0.0
    %4535 = vmatprep.mubr.f32.mxu0 0.0
    %4536 = vmatmul.mubr.f32.gmra.mrb[0].mxu0 %v4470
    %v4537 = vpop.f32.mrb[0].mxu0
    %v4538 = vadd.f32 0.0, %v4537
    %v4539 = vpop.f32.mrb[0].mxu0
    %4540 = vdwg.mxu0
    %v4542 = vsel %vm565, %v4538, 0
    %4544 = vmatprep.subr.mxu0 0.0
    %4545 = vmatpush1.msra.mxu0 %v117
    %4546 = vmatprep.subr.mxu0 0.0
    %4547 = vmatpush1.msra.mxu0 %v118
    %4548 = vmatprep.subr.mxu0 0.0
    %4549 = vmatpush1.msra.mxu0 0.0
    %4550 = vmatprep.subr.mxu0 0.0
    %4551 = vmatpush1.msra.mxu0 0.0
    %4552 = vmatprep.subr.mxu0 0.0
    %4553 = vmatpush1.msra.mxu0 0.0
    %4554 = vmatprep.subr.mxu0 0.0
    %4555 = vmatpush1.msra.mxu0 0.0
    %4556 = vmatprep.subr.mxu0 0.0
    %4557 = vmatpush1.msra.mxu0 0.0
    %4558 = vmatprep.subr.mxu0 0.0
    %4559 = vmatpush1.msra.mxu0 0.0
    %4560 = vmatprep.subr.mxu0 0.0
    %4561 = vmatpush1.msra.mxu0 0.0
    %4562 = vmatprep.subr.mxu0 0.0
    %4563 = vmatpush1.msra.mxu0 0.0
    %4564 = vmatprep.subr.mxu0 0.0
    %4565 = vmatpush1.msra.mxu0 0.0
    %4566 = vmatprep.subr.mxu0 0.0
    %4567 = vmatpush1.msra.mxu0 0.0
    %4568 = vmatprep.subr.mxu0 0.0
    %4569 = vmatpush1.msra.mxu0 0.0
    %4570 = vmatprep.subr.mxu0 0.0
    %4571 = vmatpush1.msra.mxu0 0.0
    %4572 = vmatprep.subr.mxu0 0.0
    %4573 = vmatpush1.msra.mxu0 0.0
    %4574 = vmatprep.subr.mxu0 0.0
    %4575 = vmatpush1.msra.mxu0 0.0
    %4576 = vmatprep.subr.mxu0 0.0
    %4577 = vmatpush1.msra.mxu0 0.0
    %4578 = vmatprep.subr.mxu0 0.0
    %4579 = vmatpush1.msra.mxu0 0.0
    %4580 = vmatprep.subr.mxu0 0.0
    %4581 = vmatpush1.msra.mxu0 0.0
    %4582 = vmatprep.subr.mxu0 0.0
    %4583 = vmatpush1.msra.mxu0 0.0
    %4584 = vmatprep.subr.mxu0 0.0
    %4585 = vmatpush1.msra.mxu0 0.0
    %4586 = vmatprep.subr.mxu0 0.0
    %4587 = vmatpush1.msra.mxu0 0.0
    %4588 = vmatprep.subr.mxu0 0.0
    %4589 = vmatpush1.msra.mxu0 0.0
    %4590 = vmatprep.subr.mxu0 0.0
    %4591 = vmatpush1.msra.mxu0 0.0
    %4592 = vmatprep.subr.mxu0 0.0
    %4593 = vmatpush1.msra.mxu0 0.0
    %4594 = vmatprep.subr.mxu0 0.0
    %4595 = vmatpush1.msra.mxu0 0.0
    %4596 = vmatprep.subr.mxu0 0.0
    %4597 = vmatpush1.msra.mxu0 0.0
    %4598 = vmatprep.subr.mxu0 0.0
    %4599 = vmatpush1.msra.mxu0 0.0
    %4600 = vmatprep.subr.mxu0 0.0
    %4601 = vmatpush1.msra.mxu0 0.0
    %4602 = vmatprep.subr.mxu0 0.0
    %4603 = vmatpush1.msra.mxu0 0.0
    %4604 = vmatprep.subr.mxu0 0.0
    %4605 = vmatpush1.msra.mxu0 0.0
    %4606 = vmatprep.subr.mxu0 0.0
    %4607 = vmatpush1.msra.mxu0 0.0
    %4608 = vmatprep.mubr.f32.mxu0 0.0
    %4609 = vmatmul.mubr.f32.gmra.mrb[0].mxu0 %v4542
    %v4610 = vpop.f32.mrb[0].mxu0
    %v4611 = vadd.f32 %v563, %v4610
    %v4612 = vpop.f32.mrb[0].mxu0
    %4613 = vdwg.mxu0
    %v4614 = vxor.u32 %v4611, 2147483648
    %v4615 = vmul.f32 %v4614, 1.442695
    %v4616 = vpow.pop %v4615
    %v4617 = vadd.f32 %v4616, 1.0
    %v4618 = vrcp.pop %v4617
    %v4619 = vmul.f32 1.0, %v4618
    %v4620 = vtanh.pop %v4611
    %v4621 = vmul.f32 %v4619, %v3643
    %4623 = vrot.lane.b32.xlu0 %v4620, 116
    %v4624 = vpop.permute.xlu0 %4623
    %v4626 = vmul.f32 %v4619, %v4624
    %4628 = vrot.lane.b32.xlu0 %v4626, 122
    %v4629 = vpop.permute.xlu0 %4628
    %v4631 = vadd.f32 %v4621, %v4629
    %v4632 = vtanh.pop %v4631
    %4634 = vrot.lane.b32.xlu0 %v4632, 12
    %v4635 = vpop.permute.xlu0 %4634
    %v4637 = vmul.f32 %v4619, %v4635
    %4639 = vrot.lane.b32.xlu0 %v4637, 116
    %v4640 = vpop.permute.xlu0 %4639
    %v4641 = vsel %vm672, %v4640, 0
    %4643 = vmatprep.subr.mxu0 0.0
    %4644 = vmatpush1.msra.mxu0 %v677
    %4645 = vmatprep.subr.mxu0 0.0
    %4646 = vmatpush1.msra.mxu0 0.0
    %4647 = vmatprep.subr.mxu0 0.0
    %4648 = vmatpush1.msra.mxu0 0.0
    %4649 = vmatprep.subr.mxu0 0.0
    %4650 = vmatpush1.msra.mxu0 0.0
    %4651 = vmatprep.subr.mxu0 0.0
    %4652 = vmatpush1.msra.mxu0 0.0
    %4653 = vmatprep.subr.mxu0 0.0
    %4654 = vmatpush1.msra.mxu0 0.0
    %4655 = vmatprep.subr.mxu0 0.0
    %4656 = vmatpush1.msra.mxu0 0.0
    %4657 = vmatprep.subr.mxu0 0.0
    %4658 = vmatpush1.msra.mxu0 0.0
    %4659 = vmatprep.subr.mxu0 0.0
    %4660 = vmatpush1.msra.mxu0 0.0
    %4661 = vmatprep.subr.mxu0 0.0
    %4662 = vmatpush1.msra.mxu0 0.0
    %4663 = vmatprep.subr.mxu0 0.0
    %4664 = vmatpush1.msra.mxu0 0.0
    %4665 = vmatprep.subr.mxu0 0.0
    %4666 = vmatpush1.msra.mxu0 0.0
    %4667 = vmatprep.subr.mxu0 0.0
    %4668 = vmatpush1.msra.mxu0 0.0
    %4669 = vmatprep.subr.mxu0 0.0
    %4670 = vmatpush1.msra.mxu0 0.0
    %4671 = vmatprep.subr.mxu0 0.0
    %4672 = vmatpush1.msra.mxu0 0.0
    %4673 = vmatprep.subr.mxu0 0.0
    %4674 = vmatpush1.msra.mxu0 0.0
    %4675 = vmatprep.subr.mxu0 0.0
    %4676 = vmatpush1.msra.mxu0 0.0
    %4677 = vmatprep.subr.mxu0 0.0
    %4678 = vmatpush1.msra.mxu0 0.0
    %4679 = vmatprep.subr.mxu0 0.0
    %4680 = vmatpush1.msra.mxu0 0.0
    %4681 = vmatprep.subr.mxu0 0.0
    %4682 = vmatpush1.msra.mxu0 0.0
    %4683 = vmatprep.subr.mxu0 0.0
    %4684 = vmatpush1.msra.mxu0 0.0
    %4685 = vmatprep.subr.mxu0 0.0
    %4686 = vmatpush1.msra.mxu0 0.0
    %4687 = vmatprep.subr.mxu0 0.0
    %4688 = vmatpush1.msra.mxu0 0.0
    %4689 = vmatprep.subr.mxu0 0.0
    %4690 = vmatpush1.msra.mxu0 0.0
    %4691 = vmatprep.subr.mxu0 0.0
    %4692 = vmatpush1.msra.mxu0 0.0
    %4693 = vmatprep.subr.mxu0 0.0
    %4694 = vmatpush1.msra.mxu0 0.0
    %4695 = vmatprep.subr.mxu0 0.0
    %4696 = vmatpush1.msra.mxu0 0.0
    %4697 = vmatprep.subr.mxu0 0.0
    %4698 = vmatpush1.msra.mxu0 0.0
    %4699 = vmatprep.subr.mxu0 0.0
    %4700 = vmatpush1.msra.mxu0 0.0
    %4701 = vmatprep.subr.mxu0 0.0
    %4702 = vmatpush1.msra.mxu0 0.0
    %4703 = vmatprep.subr.mxu0 0.0
    %4704 = vmatpush1.msra.mxu0 0.0
    %4705 = vmatprep.subr.mxu0 0.0
    %4706 = vmatpush1.msra.mxu0 0.0
    %4707 = vmatprep.mubr.f32.mxu0 0.0
    %4708 = vmatmul.mubr.f32.gmra.mrb[0].mxu0 %v4641
    %v4709 = vpop.f32.mrb[0].mxu0
    %v4710 = vadd.f32 %v667, %v4709
    %v4711 = vpop.f32.mrb[0].mxu0
    %4712 = vdwg.mxu0
    %v4713 = vand.u32 2147483647, %v4710
    %vm4714 = vcmp.le.f32.partialorder %v4713, 0.7853982
    %vm4715 = vcmp.lt.s32.totalorder %v4710, 0
    %v4716 = vand.u32 %v4710, 2139095040
    %v4717 = vshrl.u32 %v4716, 23
    %v4718 = vsub.s32 %v4717, 127
    %v4719 = vand.u32 2147483647, %v4710
    %v4720 = vand.u32 %v4719, 8388607
    %v4721 = vor.u32 %v4720, 8388608
    %v4722 = vsub.s32 0, %v4721
    %v4723 = vadd.s32 %v4718, 1
    %vm4724 = vcmp.gt.s32.totalorder %v4723, 0
    %v4725 = vsel %vm4724, %v4723, 0
    %v4726 = vshrl.u32 %v4725, 5
    %v4727 = vand.u32 %v4725, 31
    %v4728 = vsub.s32 32, %v4727
    %v4729 = vshrl.u32 683565275, %v4728
    %v4730 = vshll.u32 683565275, %v4727
    %v4731 = vshrl.u32 2475754826, %v4728
    %v4732 = vor.u32 %v4730, %v4731
    %v4733 = vshll.u32 2475754826, %v4727
    %v4734 = vshrl.u32 2131351028, %v4728
    %v4735 = vor.u32 %v4733, %v4734
    %v4736 = vshll.u32 2131351028, %v4727
    %v4737 = vshrl.u32 2102212464, %v4728
    %v4738 = vor.u32 %v4736, %v4737
    %v4739 = vshll.u32 2102212464, %v4727
    %v4740 = vshrl.u32 920167782, %v4728
    %v4741 = vor.u32 %v4739, %v4740
    %v4742 = vshll.u32 920167782, %v4727
    %v4743 = vshrl.u32 1326507024, %v4728
    %v4744 = vor.u32 %v4742, %v4743
    %vm4745 = vcmp.lt.s32.totalorder %v4726, 1
    %vm4746 = vcmp.lt.s32.totalorder %v4726, 2
    %vm4747 = vcmp.lt.s32.totalorder %v4726, 3
    %vm4748 = vcmp.lt.s32.totalorder %v4726, 4
    %v4749 = vsel %vm4745, %v4729, %v4732
    %v4750 = vsel %vm4748, %v4738, 2102212464
    %v4751 = vsel %vm4747, %v4735, %v4750
    %v4752 = vsel %vm4746, %v4749, %v4751
    %v4753 = vsel %vm4745, %v4732, %v4735
    %v4754 = vsel %vm4748, %v4741, 920167782
    %v4755 = vsel %vm4747, %v4738, %v4754
    %v4756 = vsel %vm4746, %v4753, %v4755
    %v4757 = vsel %vm4745, %v4735, %v4738
    %v4758 = vsel %vm4748, %v4744, 1326507024
    %v4759 = vsel %vm4747, %v4741, %v4758
    %v4760 = vsel %vm4746, %v4757, %v4759
    %v4761 = vshll.u32 %v4721, 8
    %v4762 = vmul.u32.u64.compose %v4761, %v4760
    %v4763 = vextract.low.u32 %v4762
    %v4764 = vextract.high.u32 %v4762
    %v4765 = vmul.u32.u64.compose %v4761, %v4756
    %v4766 = vextract.low.u32 %v4765
    %v4767 = vextract.high.u32 %v4765
    %v4768 = vmul.u32 %v4761, %v4752
    %v4769 = vadd.s32 %v4764, %v4766
    %vm4770 = vc.u32 %v4764, %v4766
    %v4771 = vadd.s32 %v4767, 1
    %v4772 = vsel %vm4770, %v4771, %v4767
    %v4773 = vadd.s32 %v4768, %v4772
    %v4774 = vadd.s32 %v4773, 536870912
    %v4775 = vshrl.u32 %v4774, 30
    %v4776 = vshll.u32 %v4775, 30
    %v4777 = vsub.s32 %v4773, %v4776
    %vm4778 = vcmp.lt.s32.totalorder %v4777, 0
    %v4779 = vsub.s32 0, %v4777
    %v4780 = vsel %vm4778, %v4779, %v4777
    %v4781 = vclz %v4780
    %v4782 = vsub.s32 %v4781, 2
    %vm4783 = vcmp.gt.s32.totalorder 0, %v4782
    %v4784 = vsel %vm4783, 0, %v4782
    %v4785 = vsub.s32 32, %v4784
    %v4786 = vshll.u32 %v4777, %v4784
    %v4787 = vshrl.u32 %v4769, %v4785
    %v4788 = vor.u32 %v4786, %v4787
    %v4789 = vsub.s32 4294967266, %v4784
    %v4790 = vadd.s32 %v4789, 127
    %v4791 = vshll.u32 %v4790, 23
    %v4792 = vor.u32 4788187, %v4791
    %v4793 = vand.u32 2147483647, %v4792
    %v4795 = vcvt.s32.f32 %v4788
    %v4796 = vmul.f32 %v4795, %v4793
    %v4797 = vxor.u32 %v4796, 2147483648
    %v4798 = vsel %vm4715, %v4797, %v4796
    %v4799 = vsub.s32 4, %v4775
    %v4800 = vsel %vm4715, %v4799, %v4775
    %v4801 = vsel %vm4714, %v4710, %v4798
    %v4802 = vsel %vm4714, 0, %v4800
    %v4803 = vcosq.f32.pop %v4801
    %v4804 = vsinq.f32.pop %v4801
    %vm4805 = vweird.f32 %v4710
    %v4806 = vand.u32 %v4802, 3
    %vm4807 = vcmp.lt.s32.totalorder %v4806, 2
    %vm4808 = vcmp.eq.s32.totalorder %v4806, 0
    %v4809 = vxor.u32 %v4804, 2147483648
    %v4810 = vsel %vm4808, %v4803, %v4809
    %vm4811 = vcmp.eq.s32.totalorder %v4806, 2
    %v4812 = vxor.u32 %v4803, 2147483648
    %v4813 = vsel %vm4811, %v4812, %v4804
    %v4814 = vsel %vm4807, %v4810, %v4813
    %v4815 = vsel %vm4805, nan, %v4814
    %v4817 = vsel %vm852, %v4815, 0
    %4819 = vmatprep.subr.mxu0 0.0
    %4820 = vmatpush1.msra.mxu0 %v122
    %4821 = vmatprep.subr.mxu0 0.0
    %4822 = vmatpush1.msra.mxu0 0.0
    %4823 = vmatprep.subr.mxu0 0.0
    %4824 = vmatpush1.msra.mxu0 0.0
    %4825 = vmatprep.subr.mxu0 0.0
    %4826 = vmatpush1.msra.mxu0 0.0
    %4827 = vmatprep.subr.mxu0 0.0
    %4828 = vmatpush1.msra.mxu0 0.0
    %4829 = vmatprep.subr.mxu0 0.0
    %4830 = vmatpush1.msra.mxu0 0.0
    %4831 = vmatprep.subr.mxu0 0.0
    %4832 = vmatpush1.msra.mxu0 0.0
    %4833 = vmatprep.subr.mxu0 0.0
    %4834 = vmatpush1.msra.mxu0 0.0
    %4835 = vmatprep.subr.mxu0 0.0
    %4836 = vmatpush1.msra.mxu0 0.0
    %4837 = vmatprep.subr.mxu0 0.0
    %4838 = vmatpush1.msra.mxu0 0.0
    %4839 = vmatprep.subr.mxu0 0.0
    %4840 = vmatpush1.msra.mxu0 0.0
    %4841 = vmatprep.subr.mxu0 0.0
    %4842 = vmatpush1.msra.mxu0 0.0
    %4843 = vmatprep.subr.mxu0 0.0
    %4844 = vmatpush1.msra.mxu0 0.0
    %4845 = vmatprep.subr.mxu0 0.0
    %4846 = vmatpush1.msra.mxu0 0.0
    %4847 = vmatprep.subr.mxu0 0.0
    %4848 = vmatpush1.msra.mxu0 0.0
    %4849 = vmatprep.subr.mxu0 0.0
    %4850 = vmatpush1.msra.mxu0 0.0
    %4851 = vmatprep.subr.mxu0 0.0
    %4852 = vmatpush1.msra.mxu0 0.0
    %4853 = vmatprep.subr.mxu0 0.0
    %4854 = vmatpush1.msra.mxu0 0.0
    %4855 = vmatprep.subr.mxu0 0.0
    %4856 = vmatpush1.msra.mxu0 0.0
    %4857 = vmatprep.subr.mxu0 0.0
    %4858 = vmatpush1.msra.mxu0 0.0
    %4859 = vmatprep.subr.mxu0 0.0
    %4860 = vmatpush1.msra.mxu0 0.0
    %4861 = vmatprep.subr.mxu0 0.0
    %4862 = vmatpush1.msra.mxu0 0.0
    %4863 = vmatprep.subr.mxu0 0.0
    %4864 = vmatpush1.msra.mxu0 0.0
    %4865 = vmatprep.subr.mxu0 0.0
    %4866 = vmatpush1.msra.mxu0 0.0
    %4867 = vmatprep.subr.mxu0 0.0
    %4868 = vmatpush1.msra.mxu0 0.0
    %4869 = vmatprep.subr.mxu0 0.0
    %4870 = vmatpush1.msra.mxu0 0.0
    %4871 = vmatprep.subr.mxu0 0.0
    %4872 = vmatpush1.msra.mxu0 0.0
    %4873 = vmatprep.subr.mxu0 0.0
    %4874 = vmatpush1.msra.mxu0 0.0
    %4875 = vmatprep.subr.mxu0 0.0
    %4876 = vmatpush1.msra.mxu0 0.0
    %4877 = vmatprep.subr.mxu0 0.0
    %4878 = vmatpush1.msra.mxu0 0.0
    %4879 = vmatprep.subr.mxu0 0.0
    %4880 = vmatpush1.msra.mxu0 0.0
    %4881 = vmatprep.subr.mxu0 0.0
    %4882 = vmatpush1.msra.mxu0 0.0
    %4883 = vmatprep.mubr.f32.mxu0 0.0
    %4884 = vmatmul.mubr.f32.gmra.mrb[0].mxu0 %v4817
    %v4885 = vpop.f32.mrb[0].mxu0
    %v4886 = vadd.f32 0.0, %v4885
    %v4887 = vpop.f32.mrb[0].mxu0
    %4888 = vdwg.mxu0
    %4890 = vrot.lane.b32.xlu0 %v4886, 96
    %v4891 = vpop.permute.xlu0 %4890
    %v4893 = vmul.f32 %v4886, %v4891
    %4895 = vrot.lane.b32.xlu0 %v4893, 112
    %v4896 = vpop.permute.xlu0 %4895
    %v4898 = vmul.f32 %v4893, %v4896
    %v4900 = vsel %vm565, %v4898, 0
    %4902 = vmatprep.subr.mxu0 0.0
    %4903 = vmatpush1.msra.mxu0 %v123
    %4904 = vmatprep.subr.mxu0 0.0
    %4905 = vmatpush1.msra.mxu0 %v124
    %4906 = vmatprep.subr.mxu0 0.0
    %4907 = vmatpush1.msra.mxu0 0.0
    %4908 = vmatprep.subr.mxu0 0.0
    %4909 = vmatpush1.msra.mxu0 0.0
    %4910 = vmatprep.subr.mxu0 0.0
    %4911 = vmatpush1.msra.mxu0 0.0
    %4912 = vmatprep.subr.mxu0 0.0
    %4913 = vmatpush1.msra.mxu0 0.0
    %4914 = vmatprep.subr.mxu0 0.0
    %4915 = vmatpush1.msra.mxu0 0.0
    %4916 = vmatprep.subr.mxu0 0.0
    %4917 = vmatpush1.msra.mxu0 0.0
    %4918 = vmatprep.subr.mxu0 0.0
    %4919 = vmatpush1.msra.mxu0 0.0
    %4920 = vmatprep.subr.mxu0 0.0
    %4921 = vmatpush1.msra.mxu0 0.0
    %4922 = vmatprep.subr.mxu0 0.0
    %4923 = vmatpush1.msra.mxu0 0.0
    %4924 = vmatprep.subr.mxu0 0.0
    %4925 = vmatpush1.msra.mxu0 0.0
    %4926 = vmatprep.subr.mxu0 0.0
    %4927 = vmatpush1.msra.mxu0 0.0
    %4928 = vmatprep.subr.mxu0 0.0
    %4929 = vmatpush1.msra.mxu0 0.0
    %4930 = vmatprep.subr.mxu0 0.0
    %4931 = vmatpush1.msra.mxu0 0.0
    %4932 = vmatprep.subr.mxu0 0.0
    %4933 = vmatpush1.msra.mxu0 0.0
    %4934 = vmatprep.subr.mxu0 0.0
    %4935 = vmatpush1.msra.mxu0 0.0
    %4936 = vmatprep.subr.mxu0 0.0
    %4937 = vmatpush1.msra.mxu0 0.0
    %4938 = vmatprep.subr.mxu0 0.0
    %4939 = vmatpush1.msra.mxu0 0.0
    %4940 = vmatprep.subr.mxu0 0.0
    %4941 = vmatpush1.msra.mxu0 0.0
    %4942 = vmatprep.subr.mxu0 0.0
    %4943 = vmatpush1.msra.mxu0 0.0
    %4944 = vmatprep.subr.mxu0 0.0
    %4945 = vmatpush1.msra.mxu0 0.0
    %4946 = vmatprep.subr.mxu0 0.0
    %4947 = vmatpush1.msra.mxu0 0.0
    %4948 = vmatprep.subr.mxu0 0.0
    %4949 = vmatpush1.msra.mxu0 0.0
    %4950 = vmatprep.subr.mxu0 0.0
    %4951 = vmatpush1.msra.mxu0 0.0
    %4952 = vmatprep.subr.mxu0 0.0
    %4953 = vmatpush1.msra.mxu0 0.0
    %4954 = vmatprep.subr.mxu0 0.0
    %4955 = vmatpush1.msra.mxu0 0.0
    %4956 = vmatprep.subr.mxu0 0.0
    %4957 = vmatpush1.msra.mxu0 0.0
    %4958 = vmatprep.subr.mxu0 0.0
    %4959 = vmatpush1.msra.mxu0 0.0
    %4960 = vmatprep.subr.mxu0 0.0
    %4961 = vmatpush1.msra.mxu0 0.0
    %4962 = vmatprep.subr.mxu0 0.0
    %4963 = vmatpush1.msra.mxu0 0.0
    %4964 = vmatprep.subr.mxu0 0.0
    %4965 = vmatpush1.msra.mxu0 0.0
    %4966 = vmatprep.mubr.f32.mxu0 0.0
    %4967 = vmatmul.mubr.f32.gmra.mrb[0].mxu0 %v4900
    %v4968 = vpop.f32.mrb[0].mxu0
    %v4969 = vadd.f32 0.0, %v4968
    %v4970 = vpop.f32.mrb[0].mxu0
    %4971 = vdwg.mxu0
    %v4972 = vmul.f32 %v4969, %v4969
    %v4974 = vsel %vm333, %v4972, 0
    %4976 = vmatprep.subr.mxu0 0.0
    %4977 = vmatpush1.msra.mxu0 %v125
    %4978 = vmatprep.subr.mxu0 0.0
    %4979 = vmatpush1.msra.mxu0 %v126
    %4980 = vmatprep.subr.mxu0 0.0
    %4981 = vmatpush1.msra.mxu0 %v127
    %4982 = vmatprep.subr.mxu0 0.0
    %4983 = vmatpush1.msra.mxu0 %v128
    %4984 = vmatprep.subr.mxu0 0.0
    %4985 = vmatpush1.msra.mxu0 0.0
    %4986 = vmatprep.subr.mxu0 0.0
    %4987 = vmatpush1.msra.mxu0 0.0
    %4988 = vmatprep.subr.mxu0 0.0
    %4989 = vmatpush1.msra.mxu0 0.0
    %4990 = vmatprep.subr.mxu0 0.0
    %4991 = vmatpush1.msra.mxu0 0.0
    %4992 = vmatprep.subr.mxu0 0.0
    %4993 = vmatpush1.msra.mxu0 0.0
    %4994 = vmatprep.subr.mxu0 0.0
    %4995 = vmatpush1.msra.mxu0 0.0
    %4996 = vmatprep.subr.mxu0 0.0
    %4997 = vmatpush1.msra.mxu0 0.0
    %4998 = vmatprep.subr.mxu0 0.0
    %4999 = vmatpush1.msra.mxu0 0.0
    %5000 = vmatprep.subr.mxu0 0.0
    %5001 = vmatpush1.msra.mxu0 0.0
    %5002 = vmatprep.subr.mxu0 0.0
    %5003 = vmatpush1.msra.mxu0 0.0
    %5004 = vmatprep.subr.mxu0 0.0
    %5005 = vmatpush1.msra.mxu0 0.0
    %5006 = vmatprep.subr.mxu0 0.0
    %5007 = vmatpush1.msra.mxu0 0.0
    %5008 = vmatprep.subr.mxu0 0.0
    %5009 = vmatpush1.msra.mxu0 0.0
    %5010 = vmatprep.subr.mxu0 0.0
    %5011 = vmatpush1.msra.mxu0 0.0
    %5012 = vmatprep.subr.mxu0 0.0
    %5013 = vmatpush1.msra.mxu0 0.0
    %5014 = vmatprep.subr.mxu0 0.0
    %5015 = vmatpush1.msra.mxu0 0.0
    %5016 = vmatprep.subr.mxu0 0.0
    %5017 = vmatpush1.msra.mxu0 0.0
    %5018 = vmatprep.subr.mxu0 0.0
    %5019 = vmatpush1.msra.mxu0 0.0
    %5020 = vmatprep.subr.mxu0 0.0
    %5021 = vmatpush1.msra.mxu0 0.0
    %5022 = vmatprep.subr.mxu0 0.0
    %5023 = vmatpush1.msra.mxu0 0.0
    %5024 = vmatprep.subr.mxu0 0.0
    %5025 = vmatpush1.msra.mxu0 0.0
    %5026 = vmatprep.subr.mxu0 0.0
    %5027 = vmatpush1.msra.mxu0 0.0
    %5028 = vmatprep.subr.mxu0 0.0
    %5029 = vmatpush1.msra.mxu0 0.0
    %5030 = vmatprep.subr.mxu0 0.0
    %5031 = vmatpush1.msra.mxu0 0.0
    %5032 = vmatprep.subr.mxu0 0.0
    %5033 = vmatpush1.msra.mxu0 0.0
    %5034 = vmatprep.subr.mxu0 0.0
    %5035 = vmatpush1.msra.mxu0 0.0
    %5036 = vmatprep.subr.mxu0 0.0
    %5037 = vmatpush1.msra.mxu0 0.0
    %5038 = vmatprep.subr.mxu0 0.0
    %5039 = vmatpush1.msra.mxu0 0.0
    %5040 = vmatprep.mubr.f32.mxu0 0.0
    %5041 = vmatmul.mubr.f32.gmra.mrb[0].mxu0 %v4974
    %v5042 = vpop.f32.mrb[0].mxu0
    %v5043 = vadd.f32 0.0, %v5042
    %v5044 = vpop.f32.mrb[0].mxu0
    %5045 = vdwg.mxu0
    %v5047 = vsel %vm1089, %v5043, 0
    %5049 = vmatprep.subr.mxu0 0.0
    %5050 = vmatpush1.msra.mxu0 %v1095
    %5051 = vmatprep.subr.mxu0 0.0
    %5052 = vmatpush1.msra.mxu0 0.0
    %5053 = vmatprep.subr.mxu0 0.0
    %5054 = vmatpush1.msra.mxu0 0.0
    %5055 = vmatprep.subr.mxu0 0.0
    %5056 = vmatpush1.msra.mxu0 0.0
    %5057 = vmatprep.subr.mxu0 0.0
    %5058 = vmatpush1.msra.mxu0 0.0
    %5059 = vmatprep.subr.mxu0 0.0
    %5060 = vmatpush1.msra.mxu0 0.0
    %5061 = vmatprep.subr.mxu0 0.0
    %5062 = vmatpush1.msra.mxu0 0.0
    %5063 = vmatprep.subr.mxu0 0.0
    %5064 = vmatpush1.msra.mxu0 0.0
    %5065 = vmatprep.subr.mxu0 0.0
    %5066 = vmatpush1.msra.mxu0 0.0
    %5067 = vmatprep.subr.mxu0 0.0
    %5068 = vmatpush1.msra.mxu0 0.0
    %5069 = vmatprep.subr.mxu0 0.0
    %5070 = vmatpush1.msra.mxu0 0.0
    %5071 = vmatprep.subr.mxu0 0.0
    %5072 = vmatpush1.msra.mxu0 0.0
    %5073 = vmatprep.subr.mxu0 0.0
    %5074 = vmatpush1.msra.mxu0 0.0
    %5075 = vmatprep.subr.mxu0 0.0
    %5076 = vmatpush1.msra.mxu0 0.0
    %5077 = vmatprep.subr.mxu0 0.0
    %5078 = vmatpush1.msra.mxu0 0.0
    %5079 = vmatprep.subr.mxu0 0.0
    %5080 = vmatpush1.msra.mxu0 0.0
    %5081 = vmatprep.subr.mxu0 0.0
    %5082 = vmatpush1.msra.mxu0 0.0
    %5083 = vmatprep.subr.mxu0 0.0
    %5084 = vmatpush1.msra.mxu0 0.0
    %5085 = vmatprep.subr.mxu0 0.0
    %5086 = vmatpush1.msra.mxu0 0.0
    %5087 = vmatprep.subr.mxu0 0.0
    %5088 = vmatpush1.msra.mxu0 0.0
    %5089 = vmatprep.subr.mxu0 0.0
    %5090 = vmatpush1.msra.mxu0 0.0
    %5091 = vmatprep.subr.mxu0 0.0
    %5092 = vmatpush1.msra.mxu0 0.0
    %5093 = vmatprep.subr.mxu0 0.0
    %5094 = vmatpush1.msra.mxu0 0.0
    %5095 = vmatprep.subr.mxu0 0.0
    %5096 = vmatpush1.msra.mxu0 0.0
    %5097 = vmatprep.subr.mxu0 0.0
    %5098 = vmatpush1.msra.mxu0 0.0
    %5099 = vmatprep.subr.mxu0 0.0
    %5100 = vmatpush1.msra.mxu0 0.0
    %5101 = vmatprep.subr.mxu0 0.0
    %5102 = vmatpush1.msra.mxu0 0.0
    %5103 = vmatprep.subr.mxu0 0.0
    %5104 = vmatpush1.msra.mxu0 0.0
    %5105 = vmatprep.subr.mxu0 0.0
    %5106 = vmatpush1.msra.mxu0 0.0
    %5107 = vmatprep.subr.mxu0 0.0
    %5108 = vmatpush1.msra.mxu0 0.0
    %5109 = vmatprep.subr.mxu0 0.0
    %5110 = vmatpush1.msra.mxu0 0.0
    %5111 = vmatprep.subr.mxu0 0.0
    %5112 = vmatpush1.msra.mxu0 0.0
    %5113 = vmatprep.mubr.f32.mxu0 0.0
    %5114 = vmatmul.mubr.f32.gmra.mrb[0].mxu0 %v5047
    %v5115 = vpop.f32.mrb[0].mxu0
    %v5116 = vadd.f32 %v1087, %v5115
    %v5117 = vpop.f32.mrb[0].mxu0
    %5118 = vdwg.mxu0
    %s5119 = scalar_lea.vmem %s0, 10
    %v5120 = vld [vmem:[%s5119] sm:$0x3]
    %5122 = vset.pattern.permute.xlu0 0
    %5123 = vperm.xlu0 %5122, %v5120
    %v5124 = vpop.permute.xlu0 %5123
    %v5126 = vmul.f32 %v5124, %v141
    %v5128 = vsel %vm144, %v5116, 0
    %5130 = vmatprep.subr.mxu0 0.0
    %5131 = vmatpush1.msra.mxu0 %v150
    %5132 = vmatprep.subr.mxu0 0.0
    %5133 = vmatpush1.msra.mxu0 0.0
    %5134 = vmatprep.subr.mxu0 0.0
    %5135 = vmatpush1.msra.mxu0 0.0
    %5136 = vmatprep.subr.mxu0 0.0
    %5137 = vmatpush1.msra.mxu0 0.0
    %5138 = vmatprep.subr.mxu0 0.0
    %5139 = vmatpush1.msra.mxu0 0.0
    %5140 = vmatprep.subr.mxu0 0.0
    %5141 = vmatpush1.msra.mxu0 0.0
    %5142 = vmatprep.subr.mxu0 0.0
    %5143 = vmatpush1.msra.mxu0 0.0
    %5144 = vmatprep.subr.mxu0 0.0
    %5145 = vmatpush1.msra.mxu0 0.0
    %5146 = vmatprep.subr.mxu0 0.0
    %5147 = vmatpush1.msra.mxu0 0.0
    %5148 = vmatprep.subr.mxu0 0.0
    %5149 = vmatpush1.msra.mxu0 0.0
    %5150 = vmatprep.subr.mxu0 0.0
    %5151 = vmatpush1.msra.mxu0 0.0
    %5152 = vmatprep.subr.mxu0 0.0
    %5153 = vmatpush1.msra.mxu0 0.0
    %5154 = vmatprep.subr.mxu0 0.0
    %5155 = vmatpush1.msra.mxu0 0.0
    %5156 = vmatprep.subr.mxu0 0.0
    %5157 = vmatpush1.msra.mxu0 0.0
    %5158 = vmatprep.subr.mxu0 0.0
    %5159 = vmatpush1.msra.mxu0 0.0
    %5160 = vmatprep.subr.mxu0 0.0
    %5161 = vmatpush1.msra.mxu0 0.0
    %5162 = vmatprep.subr.mxu0 0.0
    %5163 = vmatpush1.msra.mxu0 0.0
    %5164 = vmatprep.subr.mxu0 0.0
    %5165 = vmatpush1.msra.mxu0 0.0
    %5166 = vmatprep.subr.mxu0 0.0
    %5167 = vmatpush1.msra.mxu0 0.0
    %5168 = vmatprep.subr.mxu0 0.0
    %5169 = vmatpush1.msra.mxu0 0.0
    %5170 = vmatprep.subr.mxu0 0.0
    %5171 = vmatpush1.msra.mxu0 0.0
    %5172 = vmatprep.subr.mxu0 0.0
    %5173 = vmatpush1.msra.mxu0 0.0
    %5174 = vmatprep.subr.mxu0 0.0
    %5175 = vmatpush1.msra.mxu0 0.0
    %5176 = vmatprep.subr.mxu0 0.0
    %5177 = vmatpush1.msra.mxu0 0.0
    %5178 = vmatprep.subr.mxu0 0.0
    %5179 = vmatpush1.msra.mxu0 0.0
    %5180 = vmatprep.subr.mxu0 0.0
    %5181 = vmatpush1.msra.mxu0 0.0
    %5182 = vmatprep.subr.mxu0 0.0
    %5183 = vmatpush1.msra.mxu0 0.0
    %5184 = vmatprep.subr.mxu0 0.0
    %5185 = vmatpush1.msra.mxu0 0.0
    %5186 = vmatprep.subr.mxu0 0.0
    %5187 = vmatpush1.msra.mxu0 0.0
    %5188 = vmatprep.subr.mxu0 0.0
    %5189 = vmatpush1.msra.mxu0 0.0
    %5190 = vmatprep.subr.mxu0 0.0
    %5191 = vmatpush1.msra.mxu0 0.0
    %5192 = vmatprep.subr.mxu0 0.0
    %5193 = vmatpush1.msra.mxu0 0.0
    %5194 = vmatprep.mubr.f32.mxu0 0.0
    %5195 = vmatmul.mubr.f32.gmra.mrb[0].mxu0 %v5128
    %v5196 = vpop.f32.mrb[0].mxu0
    %v5197 = vadd.f32 0.0, %v5196
    %v5198 = vpop.f32.mrb[0].mxu0
    %5199 = vdwg.mxu0
    %v5200 = vadd.f32 %v5126, %v5197
    %v5201 = vadd.f32 %v5200, %v227
    %v5202 = vand.u32 2147483647, %v5201
    %vm5203 = vcmp.le.f32.partialorder %v5202, 0.7853982
    %vm5204 = vcmp.lt.s32.totalorder %v5201, 0
    %v5205 = vand.u32 %v5201, 2139095040
    %v5206 = vshrl.u32 %v5205, 23
    %v5207 = vsub.s32 %v5206, 127
    %v5208 = vand.u32 2147483647, %v5201
    %v5209 = vand.u32 %v5208, 8388607
    %v5210 = vor.u32 %v5209, 8388608
    %v5211 = vsub.s32 0, %v5210
    %v5212 = vadd.s32 %v5207, 1
    %vm5213 = vcmp.gt.s32.totalorder %v5212, 0
    %v5214 = vsel %vm5213, %v5212, 0
    %v5215 = vshrl.u32 %v5214, 5
    %v5216 = vand.u32 %v5214, 31
    %v5217 = vsub.s32 32, %v5216
    %v5218 = vshrl.u32 683565275, %v5217
    %v5219 = vshll.u32 683565275, %v5216
    %v5220 = vshrl.u32 2475754826, %v5217
    %v5221 = vor.u32 %v5219, %v5220
    %v5222 = vshll.u32 2475754826, %v5216
    %v5223 = vshrl.u32 2131351028, %v5217
    %v5224 = vor.u32 %v5222, %v5223
    %v5225 = vshll.u32 2131351028, %v5216
    %v5226 = vshrl.u32 2102212464, %v5217
    %v5227 = vor.u32 %v5225, %v5226
    %v5228 = vshll.u32 2102212464, %v5216
    %v5229 = vshrl.u32 920167782, %v5217
    %v5230 = vor.u32 %v5228, %v5229
    %v5231 = vshll.u32 920167782, %v5216
    %v5232 = vshrl.u32 1326507024, %v5217
    %v5233 = vor.u32 %v5231, %v5232
    %vm5234 = vcmp.lt.s32.totalorder %v5215, 1
    %vm5235 = vcmp.lt.s32.totalorder %v5215, 2
    %vm5236 = vcmp.lt.s32.totalorder %v5215, 3
    %vm5237 = vcmp.lt.s32.totalorder %v5215, 4
    %v5238 = vsel %vm5234, %v5218, %v5221
    %v5239 = vsel %vm5237, %v5227, 2102212464
    %v5240 = vsel %vm5236, %v5224, %v5239
    %v5241 = vsel %vm5235, %v5238, %v5240
    %v5242 = vsel %vm5234, %v5221, %v5224
    %v5243 = vsel %vm5237, %v5230, 920167782
    %v5244 = vsel %vm5236, %v5227, %v5243
    %v5245 = vsel %vm5235, %v5242, %v5244
    %v5246 = vsel %vm5234, %v5224, %v5227
    %v5247 = vsel %vm5237, %v5233, 1326507024
    %v5248 = vsel %vm5236, %v5230, %v5247
    %v5249 = vsel %vm5235, %v5246, %v5248
    %v5250 = vshll.u32 %v5210, 8
    %v5251 = vmul.u32.u64.compose %v5250, %v5249
    %v5252 = vextract.low.u32 %v5251
    %v5253 = vextract.high.u32 %v5251
    %v5254 = vmul.u32.u64.compose %v5250, %v5245
    %v5255 = vextract.low.u32 %v5254
    %v5256 = vextract.high.u32 %v5254
    %v5257 = vmul.u32 %v5250, %v5241
    %v5258 = vadd.s32 %v5253, %v5255
    %vm5259 = vc.u32 %v5253, %v5255
    %v5260 = vadd.s32 %v5256, 1
    %v5261 = vsel %vm5259, %v5260, %v5256
    %v5262 = vadd.s32 %v5257, %v5261
    %v5263 = vadd.s32 %v5262, 536870912
    %v5264 = vshrl.u32 %v5263, 30
    %v5265 = vshll.u32 %v5264, 30
    %v5266 = vsub.s32 %v5262, %v5265
    %vm5267 = vcmp.lt.s32.totalorder %v5266, 0
    %v5268 = vsub.s32 0, %v5266
    %v5269 = vsel %vm5267, %v5268, %v5266
    %v5270 = vclz %v5269
    %v5271 = vsub.s32 %v5270, 2
    %vm5272 = vcmp.gt.s32.totalorder 0, %v5271
    %v5273 = vsel %vm5272, 0, %v5271
    %v5274 = vsub.s32 32, %v5273
    %v5275 = vshll.u32 %v5266, %v5273
    %v5276 = vshrl.u32 %v5258, %v5274
    %v5277 = vor.u32 %v5275, %v5276
    %v5278 = vsub.s32 4294967266, %v5273
    %v5279 = vadd.s32 %v5278, 127
    %v5280 = vshll.u32 %v5279, 23
    %v5281 = vor.u32 4788187, %v5280
    %v5282 = vand.u32 2147483647, %v5281
    %v5284 = vcvt.s32.f32 %v5277
    %v5285 = vmul.f32 %v5284, %v5282
    %v5286 = vxor.u32 %v5285, 2147483648
    %v5287 = vsel %vm5204, %v5286, %v5285
    %v5288 = vsub.s32 4, %v5264
    %v5289 = vsel %vm5204, %v5288, %v5264
    %v5290 = vsel %vm5203, %v5201, %v5287
    %v5291 = vsel %vm5203, 0, %v5289
    %v5292 = vcosq.f32.pop %v5290
    %v5293 = vsinq.f32.pop %v5290
    %vm5294 = vweird.f32 %v5201
    %v5295 = vand.u32 %v5291, 3
    %vm5296 = vcmp.lt.s32.totalorder %v5295, 2
    %vm5297 = vcmp.eq.s32.totalorder %v5295, 0
    %v5298 = vxor.u32 %v5293, 2147483648
    %v5299 = vsel %vm5297, %v5292, %v5298
    %vm5300 = vcmp.eq.s32.totalorder %v5295, 2
    %v5301 = vxor.u32 %v5292, 2147483648
    %v5302 = vsel %vm5300, %v5301, %v5293
    %v5303 = vsel %vm5296, %v5299, %v5302
    %v5304 = vsel %vm5294, nan, %v5303
    %v5306 = vsel %vm333, %v5304, 0
    %5308 = vmatprep.subr.mxu0 %v86
    %5309 = vmatpush1.msra.mxu0 %v85
    %5310 = vmatprep.subr.mxu0 %v88
    %5311 = vmatpush1.msra.mxu0 %v87
    %5312 = vmatprep.subr.mxu0 %v90
    %5313 = vmatpush1.msra.mxu0 %v89
    %5314 = vmatprep.subr.mxu0 %v92
    %5315 = vmatpush1.msra.mxu0 %v91
    %5316 = vmatprep.subr.mxu0 0.0
    %5317 = vmatpush1.msra.mxu0 0.0
    %5318 = vmatprep.subr.mxu0 0.0
    %5319 = vmatpush1.msra.mxu0 0.0
    %5320 = vmatprep.subr.mxu0 0.0
    %5321 = vmatpush1.msra.mxu0 0.0
    %5322 = vmatprep.subr.mxu0 0.0
    %5323 = vmatpush1.msra.mxu0 0.0
    %5324 = vmatprep.subr.mxu0 0.0
    %5325 = vmatpush1.msra.mxu0 0.0
    %5326 = vmatprep.subr.mxu0 0.0
    %5327 = vmatpush1.msra.mxu0 0.0
    %5328 = vmatprep.subr.mxu0 0.0
    %5329 = vmatpush1.msra.mxu0 0.0
    %5330 = vmatprep.subr.mxu0 0.0
    %5331 = vmatpush1.msra.mxu0 0.0
    %5332 = vmatprep.subr.mxu0 0.0
    %5333 = vmatpush1.msra.mxu0 0.0
    %5334 = vmatprep.subr.mxu0 0.0
    %5335 = vmatpush1.msra.mxu0 0.0
    %5336 = vmatprep.subr.mxu0 0.0
    %5337 = vmatpush1.msra.mxu0 0.0
    %5338 = vmatprep.subr.mxu0 0.0
    %5339 = vmatpush1.msra.mxu0 0.0
    %5340 = vmatprep.subr.mxu0 0.0
    %5341 = vmatpush1.msra.mxu0 0.0
    %5342 = vmatprep.subr.mxu0 0.0
    %5343 = vmatpush1.msra.mxu0 0.0
    %5344 = vmatprep.subr.mxu0 0.0
    %5345 = vmatpush1.msra.mxu0 0.0
    %5346 = vmatprep.subr.mxu0 0.0
    %5347 = vmatpush1.msra.mxu0 0.0
    %5348 = vmatprep.subr.mxu0 0.0
    %5349 = vmatpush1.msra.mxu0 0.0
    %5350 = vmatprep.subr.mxu0 0.0
    %5351 = vmatpush1.msra.mxu0 0.0
    %5352 = vmatprep.subr.mxu0 0.0
    %5353 = vmatpush1.msra.mxu0 0.0
    %5354 = vmatprep.subr.mxu0 0.0
    %5355 = vmatpush1.msra.mxu0 0.0
    %5356 = vmatprep.subr.mxu0 0.0
    %5357 = vmatpush1.msra.mxu0 0.0
    %5358 = vmatprep.subr.mxu0 0.0
    %5359 = vmatpush1.msra.mxu0 0.0
    %5360 = vmatprep.subr.mxu0 0.0
    %5361 = vmatpush1.msra.mxu0 0.0
    %5362 = vmatprep.subr.mxu0 0.0
    %5363 = vmatpush1.msra.mxu0 0.0
    %5364 = vmatprep.subr.mxu0 0.0
    %5365 = vmatpush1.msra.mxu0 0.0
    %5366 = vmatprep.subr.mxu0 0.0
    %5367 = vmatpush1.msra.mxu0 0.0
    %5368 = vmatprep.subr.mxu0 0.0
    %5369 = vmatpush1.msra.mxu0 0.0
    %5370 = vmatprep.subr.mxu0 0.0
    %5371 = vmatpush1.msra.mxu0 0.0
    %5372 = vmatprep.mubr.f32.mxu0 0.0
    %5373 = vmatmul.mubr.f32.gmra.mrb[0].mxu0 %v5306
    %v5374 = vpop.f32.mrb[0].mxu0
    %v5375 = vadd.f32 0.0, %v5374
    %v5376 = vpop.f32.mrb[0].mxu0
    %v5377 = vadd.f32 0.0, %v5376
    %5378 = vdwg.mxu0
    %v5379 = vmul.f32 %v5375, %v5377
    %5381 = vrot.lane.b32.xlu0 %v5379, 64
    %v5382 = vpop.permute.xlu0 %5381
    %v5384 = vmul.f32 %v5379, %v5382
    %v5386 = vsel %vm414, %v5384, 0
    %5388 = vmatprep.subr.mxu0 0.0
    %5389 = vmatpush1.msra.mxu0 %v93
    %5390 = vmatprep.subr.mxu0 0.0
    %5391 = vmatpush1.msra.mxu0 %v94
    %5392 = vmatprep.subr.mxu0 0.0
    %5393 = vmatpush1.msra.mxu0 %v95
    %5394 = vmatprep.subr.mxu0 0.0
    %5395 = vmatpush1.msra.mxu0 %v96
    %5396 = vmatprep.subr.mxu0 0.0
    %5397 = vmatpush1.msra.mxu0 %v97
    %5398 = vmatprep.subr.mxu0 0.0
    %5399 = vmatpush1.msra.mxu0 %v98
    %5400 = vmatprep.subr.mxu0 0.0
    %5401 = vmatpush1.msra.mxu0 %v99
    %5402 = vmatprep.subr.mxu0 0.0
    %5403 = vmatpush1.msra.mxu0 %v100
    %5404 = vmatprep.subr.mxu0 0.0
    %5405 = vmatpush1.msra.mxu0 0.0
    %5406 = vmatprep.subr.mxu0 0.0
    %5407 = vmatpush1.msra.mxu0 0.0
    %5408 = vmatprep.subr.mxu0 0.0
    %5409 = vmatpush1.msra.mxu0 0.0
    %5410 = vmatprep.subr.mxu0 0.0
    %5411 = vmatpush1.msra.mxu0 0.0
    %5412 = vmatprep.subr.mxu0 0.0
    %5413 = vmatpush1.msra.mxu0 0.0
    %5414 = vmatprep.subr.mxu0 0.0
    %5415 = vmatpush1.msra.mxu0 0.0
    %5416 = vmatprep.subr.mxu0 0.0
    %5417 = vmatpush1.msra.mxu0 0.0
    %5418 = vmatprep.subr.mxu0 0.0
    %5419 = vmatpush1.msra.mxu0 0.0
    %5420 = vmatprep.subr.mxu0 0.0
    %5421 = vmatpush1.msra.mxu0 0.0
    %5422 = vmatprep.subr.mxu0 0.0
    %5423 = vmatpush1.msra.mxu0 0.0
    %5424 = vmatprep.subr.mxu0 0.0
    %5425 = vmatpush1.msra.mxu0 0.0
    %5426 = vmatprep.subr.mxu0 0.0
    %5427 = vmatpush1.msra.mxu0 0.0
    %5428 = vmatprep.subr.mxu0 0.0
    %5429 = vmatpush1.msra.mxu0 0.0
    %5430 = vmatprep.subr.mxu0 0.0
    %5431 = vmatpush1.msra.mxu0 0.0
    %5432 = vmatprep.subr.mxu0 0.0
    %5433 = vmatpush1.msra.mxu0 0.0
    %5434 = vmatprep.subr.mxu0 0.0
    %5435 = vmatpush1.msra.mxu0 0.0
    %5436 = vmatprep.subr.mxu0 0.0
    %5437 = vmatpush1.msra.mxu0 0.0
    %5438 = vmatprep.subr.mxu0 0.0
    %5439 = vmatpush1.msra.mxu0 0.0
    %5440 = vmatprep.subr.mxu0 0.0
    %5441 = vmatpush1.msra.mxu0 0.0
    %5442 = vmatprep.subr.mxu0 0.0
    %5443 = vmatpush1.msra.mxu0 0.0
    %5444 = vmatprep.subr.mxu0 0.0
    %5445 = vmatpush1.msra.mxu0 0.0
    %5446 = vmatprep.subr.mxu0 0.0
    %5447 = vmatpush1.msra.mxu0 0.0
    %5448 = vmatprep.subr.mxu0 0.0
    %5449 = vmatpush1.msra.mxu0 0.0
    %5450 = vmatprep.subr.mxu0 0.0
    %5451 = vmatpush1.msra.mxu0 0.0
    %5452 = vmatprep.mubr.f32.mxu0 0.0
    %5453 = vmatmul.mubr.f32.gmra.mrb[0].mxu0 %v5386
    %v5454 = vpop.f32.mrb[0].mxu0
    %v5455 = vadd.f32 0.0, %v5454
    %v5456 = vpop.f32.mrb[0].mxu0
    %5457 = vdwg.mxu0
    %v5458 = vmul.f32 %v5455, %v5455
    %5459 = vmatprep.subr.mxu0 0.0
    %5460 = vmatpush1.msra.mxu0 %v101
    %5461 = vmatprep.subr.mxu0 0.0
    %5462 = vmatpush1.msra.mxu0 %v102
    %5463 = vmatprep.subr.mxu0 0.0
    %5464 = vmatpush1.msra.mxu0 %v103
    %5465 = vmatprep.subr.mxu0 0.0
    %5466 = vmatpush1.msra.mxu0 %v104
    %5467 = vmatprep.subr.mxu0 0.0
    %5468 = vmatpush1.msra.mxu0 %v105
    %5469 = vmatprep.subr.mxu0 0.0
    %5470 = vmatpush1.msra.mxu0 %v106
    %5471 = vmatprep.subr.mxu0 0.0
    %5472 = vmatpush1.msra.mxu0 %v107
    %5473 = vmatprep.subr.mxu0 0.0
    %5474 = vmatpush1.msra.mxu0 %v108
    %5475 = vmatprep.subr.mxu0 0.0
    %5476 = vmatpush1.msra.mxu0 %v109
    %5477 = vmatprep.subr.mxu0 0.0
    %5478 = vmatpush1.msra.mxu0 %v110
    %5479 = vmatprep.subr.mxu0 0.0
    %5480 = vmatpush1.msra.mxu0 %v111
    %5481 = vmatprep.subr.mxu0 0.0
    %5482 = vmatpush1.msra.mxu0 %v112
    %5483 = vmatprep.subr.mxu0 0.0
    %5484 = vmatpush1.msra.mxu0 %v113
    %5485 = vmatprep.subr.mxu0 0.0
    %5486 = vmatpush1.msra.mxu0 %v114
    %5487 = vmatprep.subr.mxu0 0.0
    %5488 = vmatpush1.msra.mxu0 %v115
    %5489 = vmatprep.subr.mxu0 0.0
    %5490 = vmatpush1.msra.mxu0 %v116
    %5491 = vmatprep.subr.mxu0 0.0
    %5492 = vmatpush1.msra.mxu0 0.0
    %5493 = vmatprep.subr.mxu0 0.0
    %5494 = vmatpush1.msra.mxu0 0.0
    %5495 = vmatprep.subr.mxu0 0.0
    %5496 = vmatpush1.msra.mxu0 0.0
    %5497 = vmatprep.subr.mxu0 0.0
    %5498 = vmatpush1.msra.mxu0 0.0
    %5499 = vmatprep.subr.mxu0 0.0
    %5500 = vmatpush1.msra.mxu0 0.0
    %5501 = vmatprep.subr.mxu0 0.0
    %5502 = vmatpush1.msra.mxu0 0.0
    %5503 = vmatprep.subr.mxu0 0.0
    %5504 = vmatpush1.msra.mxu0 0.0
    %5505 = vmatprep.subr.mxu0 0.0
    %5506 = vmatpush1.msra.mxu0 0.0
    %5507 = vmatprep.subr.mxu0 0.0
    %5508 = vmatpush1.msra.mxu0 0.0
    %5509 = vmatprep.subr.mxu0 0.0
    %5510 = vmatpush1.msra.mxu0 0.0
    %5511 = vmatprep.subr.mxu0 0.0
    %5512 = vmatpush1.msra.mxu0 0.0
    %5513 = vmatprep.subr.mxu0 0.0
    %5514 = vmatpush1.msra.mxu0 0.0
    %5515 = vmatprep.subr.mxu0 0.0
    %5516 = vmatpush1.msra.mxu0 0.0
    %5517 = vmatprep.subr.mxu0 0.0
    %5518 = vmatpush1.msra.mxu0 0.0
    %5519 = vmatprep.subr.mxu0 0.0
    %5520 = vmatpush1.msra.mxu0 0.0
    %5521 = vmatprep.subr.mxu0 0.0
    %5522 = vmatpush1.msra.mxu0 0.0
    %5523 = vmatprep.mubr.f32.mxu0 0.0
    %5524 = vmatmul.mubr.f32.gmra.mrb[0].mxu0 %v5458
    %v5525 = vpop.f32.mrb[0].mxu0
    %v5526 = vadd.f32 0.0, %v5525
    %v5527 = vpop.f32.mrb[0].mxu0
    %5528 = vdwg.mxu0
    %v5530 = vsel %vm565, %v5526, 0
    %5532 = vmatprep.subr.mxu0 0.0
    %5533 = vmatpush1.msra.mxu0 %v117
    %5534 = vmatprep.subr.mxu0 0.0
    %5535 = vmatpush1.msra.mxu0 %v118
    %5536 = vmatprep.subr.mxu0 0.0
    %5537 = vmatpush1.msra.mxu0 0.0
    %5538 = vmatprep.subr.mxu0 0.0
    %5539 = vmatpush1.msra.mxu0 0.0
    %5540 = vmatprep.subr.mxu0 0.0
    %5541 = vmatpush1.msra.mxu0 0.0
    %5542 = vmatprep.subr.mxu0 0.0
    %5543 = vmatpush1.msra.mxu0 0.0
    %5544 = vmatprep.subr.mxu0 0.0
    %5545 = vmatpush1.msra.mxu0 0.0
    %5546 = vmatprep.subr.mxu0 0.0
    %5547 = vmatpush1.msra.mxu0 0.0
    %5548 = vmatprep.subr.mxu0 0.0
    %5549 = vmatpush1.msra.mxu0 0.0
    %5550 = vmatprep.subr.mxu0 0.0
    %5551 = vmatpush1.msra.mxu0 0.0
    %5552 = vmatprep.subr.mxu0 0.0
    %5553 = vmatpush1.msra.mxu0 0.0
    %5554 = vmatprep.subr.mxu0 0.0
    %5555 = vmatpush1.msra.mxu0 0.0
    %5556 = vmatprep.subr.mxu0 0.0
    %5557 = vmatpush1.msra.mxu0 0.0
    %5558 = vmatprep.subr.mxu0 0.0
    %5559 = vmatpush1.msra.mxu0 0.0
    %5560 = vmatprep.subr.mxu0 0.0
    %5561 = vmatpush1.msra.mxu0 0.0
    %5562 = vmatprep.subr.mxu0 0.0
    %5563 = vmatpush1.msra.mxu0 0.0
    %5564 = vmatprep.subr.mxu0 0.0
    %5565 = vmatpush1.msra.mxu0 0.0
    %5566 = vmatprep.subr.mxu0 0.0
    %5567 = vmatpush1.msra.mxu0 0.0
    %5568 = vmatprep.subr.mxu0 0.0
    %5569 = vmatpush1.msra.mxu0 0.0
    %5570 = vmatprep.subr.mxu0 0.0
    %5571 = vmatpush1.msra.mxu0 0.0
    %5572 = vmatprep.subr.mxu0 0.0
    %5573 = vmatpush1.msra.mxu0 0.0
    %5574 = vmatprep.subr.mxu0 0.0
    %5575 = vmatpush1.msra.mxu0 0.0
    %5576 = vmatprep.subr.mxu0 0.0
    %5577 = vmatpush1.msra.mxu0 0.0
    %5578 = vmatprep.subr.mxu0 0.0
    %5579 = vmatpush1.msra.mxu0 0.0
    %5580 = vmatprep.subr.mxu0 0.0
    %5581 = vmatpush1.msra.mxu0 0.0
    %5582 = vmatprep.subr.mxu0 0.0
    %5583 = vmatpush1.msra.mxu0 0.0
    %5584 = vmatprep.subr.mxu0 0.0
    %5585 = vmatpush1.msra.mxu0 0.0
    %5586 = vmatprep.subr.mxu0 0.0
    %5587 = vmatpush1.msra.mxu0 0.0
    %5588 = vmatprep.subr.mxu0 0.0
    %5589 = vmatpush1.msra.mxu0 0.0
    %5590 = vmatprep.subr.mxu0 0.0
    %5591 = vmatpush1.msra.mxu0 0.0
    %5592 = vmatprep.subr.mxu0 0.0
    %5593 = vmatpush1.msra.mxu0 0.0
    %5594 = vmatprep.subr.mxu0 0.0
    %5595 = vmatpush1.msra.mxu0 0.0
    %5596 = vmatprep.mubr.f32.mxu0 0.0
    %5597 = vmatmul.mubr.f32.gmra.mrb[0].mxu0 %v5530
    %v5598 = vpop.f32.mrb[0].mxu0
    %v5599 = vadd.f32 %v563, %v5598
    %v5600 = vpop.f32.mrb[0].mxu0
    %5601 = vdwg.mxu0
    %v5602 = vxor.u32 %v5599, 2147483648
    %v5603 = vmul.f32 %v5602, 1.442695
    %v5604 = vpow.pop %v5603
    %v5605 = vadd.f32 %v5604, 1.0
    %v5606 = vrcp.pop %v5605
    %v5607 = vmul.f32 1.0, %v5606
    %v5608 = vtanh.pop %v5599
    %v5609 = vmul.f32 %v5607, %v4631
    %5611 = vrot.lane.b32.xlu0 %v5608, 116
    %v5612 = vpop.permute.xlu0 %5611
    %v5614 = vmul.f32 %v5607, %v5612
    %5616 = vrot.lane.b32.xlu0 %v5614, 122
    %v5617 = vpop.permute.xlu0 %5616
    %v5619 = vadd.f32 %v5609, %v5617
    %v5620 = vtanh.pop %v5619
    %5622 = vrot.lane.b32.xlu0 %v5620, 12
    %v5623 = vpop.permute.xlu0 %5622
    %v5625 = vmul.f32 %v5607, %v5623
    %5627 = vrot.lane.b32.xlu0 %v5625, 116
    %v5628 = vpop.permute.xlu0 %5627
    %v5629 = vsel %vm672, %v5628, 0
    %5631 = vmatprep.subr.mxu0 0.0
    %5632 = vmatpush1.msra.mxu0 %v677
    %5633 = vmatprep.subr.mxu0 0.0
    %5634 = vmatpush1.msra.mxu0 0.0
    %5635 = vmatprep.subr.mxu0 0.0
    %5636 = vmatpush1.msra.mxu0 0.0
    %5637 = vmatprep.subr.mxu0 0.0
    %5638 = vmatpush1.msra.mxu0 0.0
    %5639 = vmatprep.subr.mxu0 0.0
    %5640 = vmatpush1.msra.mxu0 0.0
    %5641 = vmatprep.subr.mxu0 0.0
    %5642 = vmatpush1.msra.mxu0 0.0
    %5643 = vmatprep.subr.mxu0 0.0
    %5644 = vmatpush1.msra.mxu0 0.0
    %5645 = vmatprep.subr.mxu0 0.0
    %5646 = vmatpush1.msra.mxu0 0.0
    %5647 = vmatprep.subr.mxu0 0.0
    %5648 = vmatpush1.msra.mxu0 0.0
    %5649 = vmatprep.subr.mxu0 0.0
    %5650 = vmatpush1.msra.mxu0 0.0
    %5651 = vmatprep.subr.mxu0 0.0
    %5652 = vmatpush1.msra.mxu0 0.0
    %5653 = vmatprep.subr.mxu0 0.0
    %5654 = vmatpush1.msra.mxu0 0.0
    %5655 = vmatprep.subr.mxu0 0.0
    %5656 = vmatpush1.msra.mxu0 0.0
    %5657 = vmatprep.subr.mxu0 0.0
    %5658 = vmatpush1.msra.mxu0 0.0
    %5659 = vmatprep.subr.mxu0 0.0
    %5660 = vmatpush1.msra.mxu0 0.0
    %5661 = vmatprep.subr.mxu0 0.0
    %5662 = vmatpush1.msra.mxu0 0.0
    %5663 = vmatprep.subr.mxu0 0.0
    %5664 = vmatpush1.msra.mxu0 0.0
    %5665 = vmatprep.subr.mxu0 0.0
    %5666 = vmatpush1.msra.mxu0 0.0
    %5667 = vmatprep.subr.mxu0 0.0
    %5668 = vmatpush1.msra.mxu0 0.0
    %5669 = vmatprep.subr.mxu0 0.0
    %5670 = vmatpush1.msra.mxu0 0.0
    %5671 = vmatprep.subr.mxu0 0.0
    %5672 = vmatpush1.msra.mxu0 0.0
    %5673 = vmatprep.subr.mxu0 0.0
    %5674 = vmatpush1.msra.mxu0 0.0
    %5675 = vmatprep.subr.mxu0 0.0
    %5676 = vmatpush1.msra.mxu0 0.0
    %5677 = vmatprep.subr.mxu0 0.0
    %5678 = vmatpush1.msra.mxu0 0.0
    %5679 = vmatprep.subr.mxu0 0.0
    %5680 = vmatpush1.msra.mxu0 0.0
    %5681 = vmatprep.subr.mxu0 0.0
    %5682 = vmatpush1.msra.mxu0 0.0
    %5683 = vmatprep.subr.mxu0 0.0
    %5684 = vmatpush1.msra.mxu0 0.0
    %5685 = vmatprep.subr.mxu0 0.0
    %5686 = vmatpush1.msra.mxu0 0.0
    %5687 = vmatprep.subr.mxu0 0.0
    %5688 = vmatpush1.msra.mxu0 0.0
    %5689 = vmatprep.subr.mxu0 0.0
    %5690 = vmatpush1.msra.mxu0 0.0
    %5691 = vmatprep.subr.mxu0 0.0
    %5692 = vmatpush1.msra.mxu0 0.0
    %5693 = vmatprep.subr.mxu0 0.0
    %5694 = vmatpush1.msra.mxu0 0.0
    %5695 = vmatprep.mubr.f32.mxu0 0.0
    %5696 = vmatmul.mubr.f32.gmra.mrb[0].mxu0 %v5629
    %v5697 = vpop.f32.mrb[0].mxu0
    %v5698 = vadd.f32 %v667, %v5697
    %v5699 = vpop.f32.mrb[0].mxu0
    %5700 = vdwg.mxu0
    %v5701 = vand.u32 2147483647, %v5698
    %vm5702 = vcmp.le.f32.partialorder %v5701, 0.7853982
    %vm5703 = vcmp.lt.s32.totalorder %v5698, 0
    %v5704 = vand.u32 %v5698, 2139095040
    %v5705 = vshrl.u32 %v5704, 23
    %v5706 = vsub.s32 %v5705, 127
    %v5707 = vand.u32 2147483647, %v5698
    %v5708 = vand.u32 %v5707, 8388607
    %v5709 = vor.u32 %v5708, 8388608
    %v5710 = vsub.s32 0, %v5709
    %v5711 = vadd.s32 %v5706, 1
    %vm5712 = vcmp.gt.s32.totalorder %v5711, 0
    %v5713 = vsel %vm5712, %v5711, 0
    %v5714 = vshrl.u32 %v5713, 5
    %v5715 = vand.u32 %v5713, 31
    %v5716 = vsub.s32 32, %v5715
    %v5717 = vshrl.u32 683565275, %v5716
    %v5718 = vshll.u32 683565275, %v5715
    %v5719 = vshrl.u32 2475754826, %v5716
    %v5720 = vor.u32 %v5718, %v5719
    %v5721 = vshll.u32 2475754826, %v5715
    %v5722 = vshrl.u32 2131351028, %v5716
    %v5723 = vor.u32 %v5721, %v5722
    %v5724 = vshll.u32 2131351028, %v5715
    %v5725 = vshrl.u32 2102212464, %v5716
    %v5726 = vor.u32 %v5724, %v5725
    %v5727 = vshll.u32 2102212464, %v5715
    %v5728 = vshrl.u32 920167782, %v5716
    %v5729 = vor.u32 %v5727, %v5728
    %v5730 = vshll.u32 920167782, %v5715
    %v5731 = vshrl.u32 1326507024, %v5716
    %v5732 = vor.u32 %v5730, %v5731
    %vm5733 = vcmp.lt.s32.totalorder %v5714, 1
    %vm5734 = vcmp.lt.s32.totalorder %v5714, 2
    %vm5735 = vcmp.lt.s32.totalorder %v5714, 3
    %vm5736 = vcmp.lt.s32.totalorder %v5714, 4
    %v5737 = vsel %vm5733, %v5717, %v5720
    %v5738 = vsel %vm5736, %v5726, 2102212464
    %v5739 = vsel %vm5735, %v5723, %v5738
    %v5740 = vsel %vm5734, %v5737, %v5739
    %v5741 = vsel %vm5733, %v5720, %v5723
    %v5742 = vsel %vm5736, %v5729, 920167782
    %v5743 = vsel %vm5735, %v5726, %v5742
    %v5744 = vsel %vm5734, %v5741, %v5743
    %v5745 = vsel %vm5733, %v5723, %v5726
    %v5746 = vsel %vm5736, %v5732, 1326507024
    %v5747 = vsel %vm5735, %v5729, %v5746
    %v5748 = vsel %vm5734, %v5745, %v5747
    %v5749 = vshll.u32 %v5709, 8
    %v5750 = vmul.u32.u64.compose %v5749, %v5748
    %v5751 = vextract.low.u32 %v5750
    %v5752 = vextract.high.u32 %v5750
    %v5753 = vmul.u32.u64.compose %v5749, %v5744
    %v5754 = vextract.low.u32 %v5753
    %v5755 = vextract.high.u32 %v5753
    %v5756 = vmul.u32 %v5749, %v5740
    %v5757 = vadd.s32 %v5752, %v5754
    %vm5758 = vc.u32 %v5752, %v5754
    %v5759 = vadd.s32 %v5755, 1
    %v5760 = vsel %vm5758, %v5759, %v5755
    %v5761 = vadd.s32 %v5756, %v5760
    %v5762 = vadd.s32 %v5761, 536870912
    %v5763 = vshrl.u32 %v5762, 30
    %v5764 = vshll.u32 %v5763, 30
    %v5765 = vsub.s32 %v5761, %v5764
    %vm5766 = vcmp.lt.s32.totalorder %v5765, 0
    %v5767 = vsub.s32 0, %v5765
    %v5768 = vsel %vm5766, %v5767, %v5765
    %v5769 = vclz %v5768
    %v5770 = vsub.s32 %v5769, 2
    %vm5771 = vcmp.gt.s32.totalorder 0, %v5770
    %v5772 = vsel %vm5771, 0, %v5770
    %v5773 = vsub.s32 32, %v5772
    %v5774 = vshll.u32 %v5765, %v5772
    %v5775 = vshrl.u32 %v5757, %v5773
    %v5776 = vor.u32 %v5774, %v5775
    %v5777 = vsub.s32 4294967266, %v5772
    %v5778 = vadd.s32 %v5777, 127
    %v5779 = vshll.u32 %v5778, 23
    %v5780 = vor.u32 4788187, %v5779
    %v5781 = vand.u32 2147483647, %v5780
    %v5783 = vcvt.s32.f32 %v5776
    %v5784 = vmul.f32 %v5783, %v5781
    %v5785 = vxor.u32 %v5784, 2147483648
    %v5786 = vsel %vm5703, %v5785, %v5784
    %v5787 = vsub.s32 4, %v5763
    %v5788 = vsel %vm5703, %v5787, %v5763
    %v5789 = vsel %vm5702, %v5698, %v5786
    %v5790 = vsel %vm5702, 0, %v5788
    %v5791 = vcosq.f32.pop %v5789
    %v5792 = vsinq.f32.pop %v5789
    %vm5793 = vweird.f32 %v5698
    %v5794 = vand.u32 %v5790, 3
    %vm5795 = vcmp.lt.s32.totalorder %v5794, 2
    %vm5796 = vcmp.eq.s32.totalorder %v5794, 0
    %v5797 = vxor.u32 %v5792, 2147483648
    %v5798 = vsel %vm5796, %v5791, %v5797
    %vm5799 = vcmp.eq.s32.totalorder %v5794, 2
    %v5800 = vxor.u32 %v5791, 2147483648
    %v5801 = vsel %vm5799, %v5800, %v5792
    %v5802 = vsel %vm5795, %v5798, %v5801
    %v5803 = vsel %vm5793, nan, %v5802
    %v5805 = vsel %vm852, %v5803, 0
    %5807 = vmatprep.subr.mxu0 0.0
    %5808 = vmatpush1.msra.mxu0 %v122
    %5809 = vmatprep.subr.mxu0 0.0
    %5810 = vmatpush1.msra.mxu0 0.0
    %5811 = vmatprep.subr.mxu0 0.0
    %5812 = vmatpush1.msra.mxu0 0.0
    %5813 = vmatprep.subr.mxu0 0.0
    %5814 = vmatpush1.msra.mxu0 0.0
    %5815 = vmatprep.subr.mxu0 0.0
    %5816 = vmatpush1.msra.mxu0 0.0
    %5817 = vmatprep.subr.mxu0 0.0
    %5818 = vmatpush1.msra.mxu0 0.0
    %5819 = vmatprep.subr.mxu0 0.0
    %5820 = vmatpush1.msra.mxu0 0.0
    %5821 = vmatprep.subr.mxu0 0.0
    %5822 = vmatpush1.msra.mxu0 0.0
    %5823 = vmatprep.subr.mxu0 0.0
    %5824 = vmatpush1.msra.mxu0 0.0
    %5825 = vmatprep.subr.mxu0 0.0
    %5826 = vmatpush1.msra.mxu0 0.0
    %5827 = vmatprep.subr.mxu0 0.0
    %5828 = vmatpush1.msra.mxu0 0.0
    %5829 = vmatprep.subr.mxu0 0.0
    %5830 = vmatpush1.msra.mxu0 0.0
    %5831 = vmatprep.subr.mxu0 0.0
    %5832 = vmatpush1.msra.mxu0 0.0
    %5833 = vmatprep.subr.mxu0 0.0
    %5834 = vmatpush1.msra.mxu0 0.0
    %5835 = vmatprep.subr.mxu0 0.0
    %5836 = vmatpush1.msra.mxu0 0.0
    %5837 = vmatprep.subr.mxu0 0.0
    %5838 = vmatpush1.msra.mxu0 0.0
    %5839 = vmatprep.subr.mxu0 0.0
    %5840 = vmatpush1.msra.mxu0 0.0
    %5841 = vmatprep.subr.mxu0 0.0
    %5842 = vmatpush1.msra.mxu0 0.0
    %5843 = vmatprep.subr.mxu0 0.0
    %5844 = vmatpush1.msra.mxu0 0.0
    %5845 = vmatprep.subr.mxu0 0.0
    %5846 = vmatpush1.msra.mxu0 0.0
    %5847 = vmatprep.subr.mxu0 0.0
    %5848 = vmatpush1.msra.mxu0 0.0
    %5849 = vmatprep.subr.mxu0 0.0
    %5850 = vmatpush1.msra.mxu0 0.0
    %5851 = vmatprep.subr.mxu0 0.0
    %5852 = vmatpush1.msra.mxu0 0.0
    %5853 = vmatprep.subr.mxu0 0.0
    %5854 = vmatpush1.msra.mxu0 0.0
    %5855 = vmatprep.subr.mxu0 0.0
    %5856 = vmatpush1.msra.mxu0 0.0
    %5857 = vmatprep.subr.mxu0 0.0
    %5858 = vmatpush1.msra.mxu0 0.0
    %5859 = vmatprep.subr.mxu0 0.0
    %5860 = vmatpush1.msra.mxu0 0.0
    %5861 = vmatprep.subr.mxu0 0.0
    %5862 = vmatpush1.msra.mxu0 0.0
    %5863 = vmatprep.subr.mxu0 0.0
    %5864 = vmatpush1.msra.mxu0 0.0
    %5865 = vmatprep.subr.mxu0 0.0
    %5866 = vmatpush1.msra.mxu0 0.0
    %5867 = vmatprep.subr.mxu0 0.0
    %5868 = vmatpush1.msra.mxu0 0.0
    %5869 = vmatprep.subr.mxu0 0.0
    %5870 = vmatpush1.msra.mxu0 0.0
    %5871 = vmatprep.mubr.f32.mxu0 0.0
    %5872 = vmatmul.mubr.f32.gmra.mrb[0].mxu0 %v5805
    %v5873 = vpop.f32.mrb[0].mxu0
    %v5874 = vadd.f32 0.0, %v5873
    %v5875 = vpop.f32.mrb[0].mxu0
    %5876 = vdwg.mxu0
    %5878 = vrot.lane.b32.xlu0 %v5874, 96
    %v5879 = vpop.permute.xlu0 %5878
    %v5881 = vmul.f32 %v5874, %v5879
    %5883 = vrot.lane.b32.xlu0 %v5881, 112
    %v5884 = vpop.permute.xlu0 %5883
    %v5886 = vmul.f32 %v5881, %v5884
    %v5888 = vsel %vm565, %v5886, 0
    %5890 = vmatprep.subr.mxu0 0.0
    %5891 = vmatpush1.msra.mxu0 %v123
    %5892 = vmatprep.subr.mxu0 0.0
    %5893 = vmatpush1.msra.mxu0 %v124
    %5894 = vmatprep.subr.mxu0 0.0
    %5895 = vmatpush1.msra.mxu0 0.0
    %5896 = vmatprep.subr.mxu0 0.0
    %5897 = vmatpush1.msra.mxu0 0.0
    %5898 = vmatprep.subr.mxu0 0.0
    %5899 = vmatpush1.msra.mxu0 0.0
    %5900 = vmatprep.subr.mxu0 0.0
    %5901 = vmatpush1.msra.mxu0 0.0
    %5902 = vmatprep.subr.mxu0 0.0
    %5903 = vmatpush1.msra.mxu0 0.0
    %5904 = vmatprep.subr.mxu0 0.0
    %5905 = vmatpush1.msra.mxu0 0.0
    %5906 = vmatprep.subr.mxu0 0.0
    %5907 = vmatpush1.msra.mxu0 0.0
    %5908 = vmatprep.subr.mxu0 0.0
    %5909 = vmatpush1.msra.mxu0 0.0
    %5910 = vmatprep.subr.mxu0 0.0
    %5911 = vmatpush1.msra.mxu0 0.0
    %5912 = vmatprep.subr.mxu0 0.0
    %5913 = vmatpush1.msra.mxu0 0.0
    %5914 = vmatprep.subr.mxu0 0.0
    %5915 = vmatpush1.msra.mxu0 0.0
    %5916 = vmatprep.subr.mxu0 0.0
    %5917 = vmatpush1.msra.mxu0 0.0
    %5918 = vmatprep.subr.mxu0 0.0
    %5919 = vmatpush1.msra.mxu0 0.0
    %5920 = vmatprep.subr.mxu0 0.0
    %5921 = vmatpush1.msra.mxu0 0.0
    %5922 = vmatprep.subr.mxu0 0.0
    %5923 = vmatpush1.msra.mxu0 0.0
    %5924 = vmatprep.subr.mxu0 0.0
    %5925 = vmatpush1.msra.mxu0 0.0
    %5926 = vmatprep.subr.mxu0 0.0
    %5927 = vmatpush1.msra.mxu0 0.0
    %5928 = vmatprep.subr.mxu0 0.0
    %5929 = vmatpush1.msra.mxu0 0.0
    %5930 = vmatprep.subr.mxu0 0.0
    %5931 = vmatpush1.msra.mxu0 0.0
    %5932 = vmatprep.subr.mxu0 0.0
    %5933 = vmatpush1.msra.mxu0 0.0
    %5934 = vmatprep.subr.mxu0 0.0
    %5935 = vmatpush1.msra.mxu0 0.0
    %5936 = vmatprep.subr.mxu0 0.0
    %5937 = vmatpush1.msra.mxu0 0.0
    %5938 = vmatprep.subr.mxu0 0.0
    %5939 = vmatpush1.msra.mxu0 0.0
    %5940 = vmatprep.subr.mxu0 0.0
    %5941 = vmatpush1.msra.mxu0 0.0
    %5942 = vmatprep.subr.mxu0 0.0
    %5943 = vmatpush1.msra.mxu0 0.0
    %5944 = vmatprep.subr.mxu0 0.0
    %5945 = vmatpush1.msra.mxu0 0.0
    %5946 = vmatprep.subr.mxu0 0.0
    %5947 = vmatpush1.msra.mxu0 0.0
    %5948 = vmatprep.subr.mxu0 0.0
    %5949 = vmatpush1.msra.mxu0 0.0
    %5950 = vmatprep.subr.mxu0 0.0
    %5951 = vmatpush1.msra.mxu0 0.0
    %5952 = vmatprep.subr.mxu0 0.0
    %5953 = vmatpush1.msra.mxu0 0.0
    %5954 = vmatprep.mubr.f32.mxu0 0.0
    %5955 = vmatmul.mubr.f32.gmra.mrb[0].mxu0 %v5888
    %v5956 = vpop.f32.mrb[0].mxu0
    %v5957 = vadd.f32 0.0, %v5956
    %v5958 = vpop.f32.mrb[0].mxu0
    %5959 = vdwg.mxu0
    %v5960 = vmul.f32 %v5957, %v5957
    %v5962 = vsel %vm333, %v5960, 0
    %5964 = vmatprep.subr.mxu0 0.0
    %5965 = vmatpush1.msra.mxu0 %v125
    %5966 = vmatprep.subr.mxu0 0.0
    %5967 = vmatpush1.msra.mxu0 %v126
    %5968 = vmatprep.subr.mxu0 0.0
    %5969 = vmatpush1.msra.mxu0 %v127
    %5970 = vmatprep.subr.mxu0 0.0
    %5971 = vmatpush1.msra.mxu0 %v128
    %5972 = vmatprep.subr.mxu0 0.0
    %5973 = vmatpush1.msra.mxu0 0.0
    %5974 = vmatprep.subr.mxu0 0.0
    %5975 = vmatpush1.msra.mxu0 0.0
    %5976 = vmatprep.subr.mxu0 0.0
    %5977 = vmatpush1.msra.mxu0 0.0
    %5978 = vmatprep.subr.mxu0 0.0
    %5979 = vmatpush1.msra.mxu0 0.0
    %5980 = vmatprep.subr.mxu0 0.0
    %5981 = vmatpush1.msra.mxu0 0.0
    %5982 = vmatprep.subr.mxu0 0.0
    %5983 = vmatpush1.msra.mxu0 0.0
    %5984 = vmatprep.subr.mxu0 0.0
    %5985 = vmatpush1.msra.mxu0 0.0
    %5986 = vmatprep.subr.mxu0 0.0
    %5987 = vmatpush1.msra.mxu0 0.0
    %5988 = vmatprep.subr.mxu0 0.0
    %5989 = vmatpush1.msra.mxu0 0.0
    %5990 = vmatprep.subr.mxu0 0.0
    %5991 = vmatpush1.msra.mxu0 0.0
    %5992 = vmatprep.subr.mxu0 0.0
    %5993 = vmatpush1.msra.mxu0 0.0
    %5994 = vmatprep.subr.mxu0 0.0
    %5995 = vmatpush1.msra.mxu0 0.0
    %5996 = vmatprep.subr.mxu0 0.0
    %5997 = vmatpush1.msra.mxu0 0.0
    %5998 = vmatprep.subr.mxu0 0.0
    %5999 = vmatpush1.msra.mxu0 0.0
    %6000 = vmatprep.subr.mxu0 0.0
    %6001 = vmatpush1.msra.mxu0 0.0
    %6002 = vmatprep.subr.mxu0 0.0
    %6003 = vmatpush1.msra.mxu0 0.0
    %6004 = vmatprep.subr.mxu0 0.0
    %6005 = vmatpush1.msra.mxu0 0.0
    %6006 = vmatprep.subr.mxu0 0.0
    %6007 = vmatpush1.msra.mxu0 0.0
    %6008 = vmatprep.subr.mxu0 0.0
    %6009 = vmatpush1.msra.mxu0 0.0
    %6010 = vmatprep.subr.mxu0 0.0
    %6011 = vmatpush1.msra.mxu0 0.0
    %6012 = vmatprep.subr.mxu0 0.0
    %6013 = vmatpush1.msra.mxu0 0.0
    %6014 = vmatprep.subr.mxu0 0.0
    %6015 = vmatpush1.msra.mxu0 0.0
    %6016 = vmatprep.subr.mxu0 0.0
    %6017 = vmatpush1.msra.mxu0 0.0
    %6018 = vmatprep.subr.mxu0 0.0
    %6019 = vmatpush1.msra.mxu0 0.0
    %6020 = vmatprep.subr.mxu0 0.0
    %6021 = vmatpush1.msra.mxu0 0.0
    %6022 = vmatprep.subr.mxu0 0.0
    %6023 = vmatpush1.msra.mxu0 0.0
    %6024 = vmatprep.subr.mxu0 0.0
    %6025 = vmatpush1.msra.mxu0 0.0
    %6026 = vmatprep.subr.mxu0 0.0
    %6027 = vmatpush1.msra.mxu0 0.0
    %6028 = vmatprep.mubr.f32.mxu0 0.0
    %6029 = vmatmul.mubr.f32.gmra.mrb[0].mxu0 %v5962
    %v6030 = vpop.f32.mrb[0].mxu0
    %v6031 = vadd.f32 0.0, %v6030
    %v6032 = vpop.f32.mrb[0].mxu0
    %6033 = vdwg.mxu0
    %v6035 = vsel %vm1089, %v6031, 0
    %6037 = vmatprep.subr.mxu0 0.0
    %6038 = vmatpush1.msra.mxu0 %v1095
    %6039 = vmatprep.subr.mxu0 0.0
    %6040 = vmatpush1.msra.mxu0 0.0
    %6041 = vmatprep.subr.mxu0 0.0
    %6042 = vmatpush1.msra.mxu0 0.0
    %6043 = vmatprep.subr.mxu0 0.0
    %6044 = vmatpush1.msra.mxu0 0.0
    %6045 = vmatprep.subr.mxu0 0.0
    %6046 = vmatpush1.msra.mxu0 0.0
    %6047 = vmatprep.subr.mxu0 0.0
    %6048 = vmatpush1.msra.mxu0 0.0
    %6049 = vmatprep.subr.mxu0 0.0
    %6050 = vmatpush1.msra.mxu0 0.0
    %6051 = vmatprep.subr.mxu0 0.0
    %6052 = vmatpush1.msra.mxu0 0.0
    %6053 = vmatprep.subr.mxu0 0.0
    %6054 = vmatpush1.msra.mxu0 0.0
    %6055 = vmatprep.subr.mxu0 0.0
    %6056 = vmatpush1.msra.mxu0 0.0
    %6057 = vmatprep.subr.mxu0 0.0
    %6058 = vmatpush1.msra.mxu0 0.0
    %6059 = vmatprep.subr.mxu0 0.0
    %6060 = vmatpush1.msra.mxu0 0.0
    %6061 = vmatprep.subr.mxu0 0.0
    %6062 = vmatpush1.msra.mxu0 0.0
    %6063 = vmatprep.subr.mxu0 0.0
    %6064 = vmatpush1.msra.mxu0 0.0
    %6065 = vmatprep.subr.mxu0 0.0
    %6066 = vmatpush1.msra.mxu0 0.0
    %6067 = vmatprep.subr.mxu0 0.0
    %6068 = vmatpush1.msra.mxu0 0.0
    %6069 = vmatprep.subr.mxu0 0.0
    %6070 = vmatpush1.msra.mxu0 0.0
    %6071 = vmatprep.subr.mxu0 0.0
    %6072 = vmatpush1.msra.mxu0 0.0
    %6073 = vmatprep.subr.mxu0 0.0
    %6074 = vmatpush1.msra.mxu0 0.0
    %6075 = vmatprep.subr.mxu0 0.0
    %6076 = vmatpush1.msra.mxu0 0.0
    %6077 = vmatprep.subr.mxu0 0.0
    %6078 = vmatpush1.msra.mxu0 0.0
    %6079 = vmatprep.subr.mxu0 0.0
    %6080 = vmatpush1.msra.mxu0 0.0
    %6081 = vmatprep.subr.mxu0 0.0
    %6082 = vmatpush1.msra.mxu0 0.0
    %6083 = vmatprep.subr.mxu0 0.0
    %6084 = vmatpush1.msra.mxu0 0.0
    %6085 = vmatprep.subr.mxu0 0.0
    %6086 = vmatpush1.msra.mxu0 0.0
    %6087 = vmatprep.subr.mxu0 0.0
    %6088 = vmatpush1.msra.mxu0 0.0
    %6089 = vmatprep.subr.mxu0 0.0
    %6090 = vmatpush1.msra.mxu0 0.0
    %6091 = vmatprep.subr.mxu0 0.0
    %6092 = vmatpush1.msra.mxu0 0.0
    %6093 = vmatprep.subr.mxu0 0.0
    %6094 = vmatpush1.msra.mxu0 0.0
    %6095 = vmatprep.subr.mxu0 0.0
    %6096 = vmatpush1.msra.mxu0 0.0
    %6097 = vmatprep.subr.mxu0 0.0
    %6098 = vmatpush1.msra.mxu0 0.0
    %6099 = vmatprep.subr.mxu0 0.0
    %6100 = vmatpush1.msra.mxu0 0.0
    %6101 = vmatprep.mubr.f32.mxu0 0.0
    %6102 = vmatmul.mubr.f32.gmra.mrb[0].mxu0 %v6035
    %v6103 = vpop.f32.mrb[0].mxu0
    %v6104 = vadd.f32 %v1087, %v6103
    %v6105 = vpop.f32.mrb[0].mxu0
    %6106 = vdwg.mxu0
    %s6107 = scalar_lea.vmem %s0, 12
    %v6108 = vld [vmem:[%s6107] sm:$0x3]
    %6110 = vset.pattern.permute.xlu0 0
    %6111 = vperm.xlu0 %6110, %v6108
    %v6112 = vpop.permute.xlu0 %6111
    %v6114 = vmul.f32 %v6112, %v141
    %v6116 = vsel %vm144, %v6104, 0
    %6118 = vmatprep.subr.mxu0 0.0
    %6119 = vmatpush1.msra.mxu0 %v150
    %6120 = vmatprep.subr.mxu0 0.0
    %6121 = vmatpush1.msra.mxu0 0.0
    %6122 = vmatprep.subr.mxu0 0.0
    %6123 = vmatpush1.msra.mxu0 0.0
    %6124 = vmatprep.subr.mxu0 0.0
    %6125 = vmatpush1.msra.mxu0 0.0
    %6126 = vmatprep.subr.mxu0 0.0
    %6127 = vmatpush1.msra.mxu0 0.0
    %6128 = vmatprep.subr.mxu0 0.0
    %6129 = vmatpush1.msra.mxu0 0.0
    %6130 = vmatprep.subr.mxu0 0.0
    %6131 = vmatpush1.msra.mxu0 0.0
    %6132 = vmatprep.subr.mxu0 0.0
    %6133 = vmatpush1.msra.mxu0 0.0
    %6134 = vmatprep.subr.mxu0 0.0
    %6135 = vmatpush1.msra.mxu0 0.0
    %6136 = vmatprep.subr.mxu0 0.0
    %6137 = vmatpush1.msra.mxu0 0.0
    %6138 = vmatprep.subr.mxu0 0.0
    %6139 = vmatpush1.msra.mxu0 0.0
    %6140 = vmatprep.subr.mxu0 0.0
    %6141 = vmatpush1.msra.mxu0 0.0
    %6142 = vmatprep.subr.mxu0 0.0
    %6143 = vmatpush1.msra.mxu0 0.0
    %6144 = vmatprep.subr.mxu0 0.0
    %6145 = vmatpush1.msra.mxu0 0.0
    %6146 = vmatprep.subr.mxu0 0.0
    %6147 = vmatpush1.msra.mxu0 0.0
    %6148 = vmatprep.subr.mxu0 0.0
    %6149 = vmatpush1.msra.mxu0 0.0
    %6150 = vmatprep.subr.mxu0 0.0
    %6151 = vmatpush1.msra.mxu0 0.0
    %6152 = vmatprep.subr.mxu0 0.0
    %6153 = vmatpush1.msra.mxu0 0.0
    %6154 = vmatprep.subr.mxu0 0.0
    %6155 = vmatpush1.msra.mxu0 0.0
    %6156 = vmatprep.subr.mxu0 0.0
    %6157 = vmatpush1.msra.mxu0 0.0
    %6158 = vmatprep.subr.mxu0 0.0
    %6159 = vmatpush1.msra.mxu0 0.0
    %6160 = vmatprep.subr.mxu0 0.0
    %6161 = vmatpush1.msra.mxu0 0.0
    %6162 = vmatprep.subr.mxu0 0.0
    %6163 = vmatpush1.msra.mxu0 0.0
    %6164 = vmatprep.subr.mxu0 0.0
    %6165 = vmatpush1.msra.mxu0 0.0
    %6166 = vmatprep.subr.mxu0 0.0
    %6167 = vmatpush1.msra.mxu0 0.0
    %6168 = vmatprep.subr.mxu0 0.0
    %6169 = vmatpush1.msra.mxu0 0.0
    %6170 = vmatprep.subr.mxu0 0.0
    %6171 = vmatpush1.msra.mxu0 0.0
    %6172 = vmatprep.subr.mxu0 0.0
    %6173 = vmatpush1.msra.mxu0 0.0
    %6174 = vmatprep.subr.mxu0 0.0
    %6175 = vmatpush1.msra.mxu0 0.0
    %6176 = vmatprep.subr.mxu0 0.0
    %6177 = vmatpush1.msra.mxu0 0.0
    %6178 = vmatprep.subr.mxu0 0.0
    %6179 = vmatpush1.msra.mxu0 0.0
    %6180 = vmatprep.subr.mxu0 0.0
    %6181 = vmatpush1.msra.mxu0 0.0
    %6182 = vmatprep.mubr.f32.mxu0 0.0
    %6183 = vmatmul.mubr.f32.gmra.mrb[0].mxu0 %v6116
    %v6184 = vpop.f32.mrb[0].mxu0
    %v6185 = vadd.f32 0.0, %v6184
    %v6186 = vpop.f32.mrb[0].mxu0
    %6187 = vdwg.mxu0
    %v6188 = vadd.f32 %v6114, %v6185
    %v6189 = vadd.f32 %v6188, %v227
    %v6190 = vand.u32 2147483647, %v6189
    %vm6191 = vcmp.le.f32.partialorder %v6190, 0.7853982
    %vm6192 = vcmp.lt.s32.totalorder %v6189, 0
    %v6193 = vand.u32 %v6189, 2139095040
    %v6194 = vshrl.u32 %v6193, 23
    %v6195 = vsub.s32 %v6194, 127
    %v6196 = vand.u32 2147483647, %v6189
    %v6197 = vand.u32 %v6196, 8388607
    %v6198 = vor.u32 %v6197, 8388608
    %v6199 = vsub.s32 0, %v6198
    %v6200 = vadd.s32 %v6195, 1
    %vm6201 = vcmp.gt.s32.totalorder %v6200, 0
    %v6202 = vsel %vm6201, %v6200, 0
    %v6203 = vshrl.u32 %v6202, 5
    %v6204 = vand.u32 %v6202, 31
    %v6205 = vsub.s32 32, %v6204
    %v6206 = vshrl.u32 683565275, %v6205
    %v6207 = vshll.u32 683565275, %v6204
    %v6208 = vshrl.u32 2475754826, %v6205
    %v6209 = vor.u32 %v6207, %v6208
    %v6210 = vshll.u32 2475754826, %v6204
    %v6211 = vshrl.u32 2131351028, %v6205
    %v6212 = vor.u32 %v6210, %v6211
    %v6213 = vshll.u32 2131351028, %v6204
    %v6214 = vshrl.u32 2102212464, %v6205
    %v6215 = vor.u32 %v6213, %v6214
    %v6216 = vshll.u32 2102212464, %v6204
    %v6217 = vshrl.u32 920167782, %v6205
    %v6218 = vor.u32 %v6216, %v6217
    %v6219 = vshll.u32 920167782, %v6204
    %v6220 = vshrl.u32 1326507024, %v6205
    %v6221 = vor.u32 %v6219, %v6220
    %vm6222 = vcmp.lt.s32.totalorder %v6203, 1
    %vm6223 = vcmp.lt.s32.totalorder %v6203, 2
    %vm6224 = vcmp.lt.s32.totalorder %v6203, 3
    %vm6225 = vcmp.lt.s32.totalorder %v6203, 4
    %v6226 = vsel %vm6222, %v6206, %v6209
    %v6227 = vsel %vm6225, %v6215, 2102212464
    %v6228 = vsel %vm6224, %v6212, %v6227
    %v6229 = vsel %vm6223, %v6226, %v6228
    %v6230 = vsel %vm6222, %v6209, %v6212
    %v6231 = vsel %vm6225, %v6218, 920167782
    %v6232 = vsel %vm6224, %v6215, %v6231
    %v6233 = vsel %vm6223, %v6230, %v6232
    %v6234 = vsel %vm6222, %v6212, %v6215
    %v6235 = vsel %vm6225, %v6221, 1326507024
    %v6236 = vsel %vm6224, %v6218, %v6235
    %v6237 = vsel %vm6223, %v6234, %v6236
    %v6238 = vshll.u32 %v6198, 8
    %v6239 = vmul.u32.u64.compose %v6238, %v6237
    %v6240 = vextract.low.u32 %v6239
    %v6241 = vextract.high.u32 %v6239
    %v6242 = vmul.u32.u64.compose %v6238, %v6233
    %v6243 = vextract.low.u32 %v6242
    %v6244 = vextract.high.u32 %v6242
    %v6245 = vmul.u32 %v6238, %v6229
    %v6246 = vadd.s32 %v6241, %v6243
    %vm6247 = vc.u32 %v6241, %v6243
    %v6248 = vadd.s32 %v6244, 1
    %v6249 = vsel %vm6247, %v6248, %v6244
    %v6250 = vadd.s32 %v6245, %v6249
    %v6251 = vadd.s32 %v6250, 536870912
    %v6252 = vshrl.u32 %v6251, 30
    %v6253 = vshll.u32 %v6252, 30
    %v6254 = vsub.s32 %v6250, %v6253
    %vm6255 = vcmp.lt.s32.totalorder %v6254, 0
    %v6256 = vsub.s32 0, %v6254
    %v6257 = vsel %vm6255, %v6256, %v6254
    %v6258 = vclz %v6257
    %v6259 = vsub.s32 %v6258, 2
    %vm6260 = vcmp.gt.s32.totalorder 0, %v6259
    %v6261 = vsel %vm6260, 0, %v6259
    %v6262 = vsub.s32 32, %v6261
    %v6263 = vshll.u32 %v6254, %v6261
    %v6264 = vshrl.u32 %v6246, %v6262
    %v6265 = vor.u32 %v6263, %v6264
    %v6266 = vsub.s32 4294967266, %v6261
    %v6267 = vadd.s32 %v6266, 127
    %v6268 = vshll.u32 %v6267, 23
    %v6269 = vor.u32 4788187, %v6268
    %v6270 = vand.u32 2147483647, %v6269
    %v6272 = vcvt.s32.f32 %v6265
    %v6273 = vmul.f32 %v6272, %v6270
    %v6274 = vxor.u32 %v6273, 2147483648
    %v6275 = vsel %vm6192, %v6274, %v6273
    %v6276 = vsub.s32 4, %v6252
    %v6277 = vsel %vm6192, %v6276, %v6252
    %v6278 = vsel %vm6191, %v6189, %v6275
    %v6279 = vsel %vm6191, 0, %v6277
    %v6280 = vcosq.f32.pop %v6278
    %v6281 = vsinq.f32.pop %v6278
    %vm6282 = vweird.f32 %v6189
    %v6283 = vand.u32 %v6279, 3
    %vm6284 = vcmp.lt.s32.totalorder %v6283, 2
    %vm6285 = vcmp.eq.s32.totalorder %v6283, 0
    %v6286 = vxor.u32 %v6281, 2147483648
    %v6287 = vsel %vm6285, %v6280, %v6286
    %vm6288 = vcmp.eq.s32.totalorder %v6283, 2
    %v6289 = vxor.u32 %v6280, 2147483648
    %v6290 = vsel %vm6288, %v6289, %v6281
    %v6291 = vsel %vm6284, %v6287, %v6290
    %v6292 = vsel %vm6282, nan, %v6291
    %v6294 = vsel %vm333, %v6292, 0
    %6296 = vmatprep.subr.mxu0 %v86
    %6297 = vmatpush1.msra.mxu0 %v85
    %6298 = vmatprep.subr.mxu0 %v88
    %6299 = vmatpush1.msra.mxu0 %v87
    %6300 = vmatprep.subr.mxu0 %v90
    %6301 = vmatpush1.msra.mxu0 %v89
    %6302 = vmatprep.subr.mxu0 %v92
    %6303 = vmatpush1.msra.mxu0 %v91
    %6304 = vmatprep.subr.mxu0 0.0
    %6305 = vmatpush1.msra.mxu0 0.0
    %6306 = vmatprep.subr.mxu0 0.0
    %6307 = vmatpush1.msra.mxu0 0.0
    %6308 = vmatprep.subr.mxu0 0.0
    %6309 = vmatpush1.msra.mxu0 0.0
    %6310 = vmatprep.subr.mxu0 0.0
    %6311 = vmatpush1.msra.mxu0 0.0
    %6312 = vmatprep.subr.mxu0 0.0
    %6313 = vmatpush1.msra.mxu0 0.0
    %6314 = vmatprep.subr.mxu0 0.0
    %6315 = vmatpush1.msra.mxu0 0.0
    %6316 = vmatprep.subr.mxu0 0.0
    %6317 = vmatpush1.msra.mxu0 0.0
    %6318 = vmatprep.subr.mxu0 0.0
    %6319 = vmatpush1.msra.mxu0 0.0
    %6320 = vmatprep.subr.mxu0 0.0
    %6321 = vmatpush1.msra.mxu0 0.0
    %6322 = vmatprep.subr.mxu0 0.0
    %6323 = vmatpush1.msra.mxu0 0.0
    %6324 = vmatprep.subr.mxu0 0.0
    %6325 = vmatpush1.msra.mxu0 0.0
    %6326 = vmatprep.subr.mxu0 0.0
    %6327 = vmatpush1.msra.mxu0 0.0
    %6328 = vmatprep.subr.mxu0 0.0
    %6329 = vmatpush1.msra.mxu0 0.0
    %6330 = vmatprep.subr.mxu0 0.0
    %6331 = vmatpush1.msra.mxu0 0.0
    %6332 = vmatprep.subr.mxu0 0.0
    %6333 = vmatpush1.msra.mxu0 0.0
    %6334 = vmatprep.subr.mxu0 0.0
    %6335 = vmatpush1.msra.mxu0 0.0
    %6336 = vmatprep.subr.mxu0 0.0
    %6337 = vmatpush1.msra.mxu0 0.0
    %6338 = vmatprep.subr.mxu0 0.0
    %6339 = vmatpush1.msra.mxu0 0.0
    %6340 = vmatprep.subr.mxu0 0.0
    %6341 = vmatpush1.msra.mxu0 0.0
    %6342 = vmatprep.subr.mxu0 0.0
    %6343 = vmatpush1.msra.mxu0 0.0
    %6344 = vmatprep.subr.mxu0 0.0
    %6345 = vmatpush1.msra.mxu0 0.0
    %6346 = vmatprep.subr.mxu0 0.0
    %6347 = vmatpush1.msra.mxu0 0.0
    %6348 = vmatprep.subr.mxu0 0.0
    %6349 = vmatpush1.msra.mxu0 0.0
    %6350 = vmatprep.subr.mxu0 0.0
    %6351 = vmatpush1.msra.mxu0 0.0
    %6352 = vmatprep.subr.mxu0 0.0
    %6353 = vmatpush1.msra.mxu0 0.0
    %6354 = vmatprep.subr.mxu0 0.0
    %6355 = vmatpush1.msra.mxu0 0.0
    %6356 = vmatprep.subr.mxu0 0.0
    %6357 = vmatpush1.msra.mxu0 0.0
    %6358 = vmatprep.subr.mxu0 0.0
    %6359 = vmatpush1.msra.mxu0 0.0
    %6360 = vmatprep.mubr.f32.mxu0 0.0
    %6361 = vmatmul.mubr.f32.gmra.mrb[0].mxu0 %v6294
    %v6362 = vpop.f32.mrb[0].mxu0
    %v6363 = vadd.f32 0.0, %v6362
    %v6364 = vpop.f32.mrb[0].mxu0
    %v6365 = vadd.f32 0.0, %v6364
    %6366 = vdwg.mxu0
    %v6367 = vmul.f32 %v6363, %v6365
    %6369 = vrot.lane.b32.xlu0 %v6367, 64
    %v6370 = vpop.permute.xlu0 %6369
    %v6372 = vmul.f32 %v6367, %v6370
    %v6374 = vsel %vm414, %v6372, 0
    %6376 = vmatprep.subr.mxu0 0.0
    %6377 = vmatpush1.msra.mxu0 %v93
    %6378 = vmatprep.subr.mxu0 0.0
    %6379 = vmatpush1.msra.mxu0 %v94
    %6380 = vmatprep.subr.mxu0 0.0
    %6381 = vmatpush1.msra.mxu0 %v95
    %6382 = vmatprep.subr.mxu0 0.0
    %6383 = vmatpush1.msra.mxu0 %v96
    %6384 = vmatprep.subr.mxu0 0.0
    %6385 = vmatpush1.msra.mxu0 %v97
    %6386 = vmatprep.subr.mxu0 0.0
    %6387 = vmatpush1.msra.mxu0 %v98
    %6388 = vmatprep.subr.mxu0 0.0
    %6389 = vmatpush1.msra.mxu0 %v99
    %6390 = vmatprep.subr.mxu0 0.0
    %6391 = vmatpush1.msra.mxu0 %v100
    %6392 = vmatprep.subr.mxu0 0.0
    %6393 = vmatpush1.msra.mxu0 0.0
    %6394 = vmatprep.subr.mxu0 0.0
    %6395 = vmatpush1.msra.mxu0 0.0
    %6396 = vmatprep.subr.mxu0 0.0
    %6397 = vmatpush1.msra.mxu0 0.0
    %6398 = vmatprep.subr.mxu0 0.0
    %6399 = vmatpush1.msra.mxu0 0.0
    %6400 = vmatprep.subr.mxu0 0.0
    %6401 = vmatpush1.msra.mxu0 0.0
    %6402 = vmatprep.subr.mxu0 0.0
    %6403 = vmatpush1.msra.mxu0 0.0
    %6404 = vmatprep.subr.mxu0 0.0
    %6405 = vmatpush1.msra.mxu0 0.0
    %6406 = vmatprep.subr.mxu0 0.0
    %6407 = vmatpush1.msra.mxu0 0.0
    %6408 = vmatprep.subr.mxu0 0.0
    %6409 = vmatpush1.msra.mxu0 0.0
    %6410 = vmatprep.subr.mxu0 0.0
    %6411 = vmatpush1.msra.mxu0 0.0
    %6412 = vmatprep.subr.mxu0 0.0
    %6413 = vmatpush1.msra.mxu0 0.0
    %6414 = vmatprep.subr.mxu0 0.0
    %6415 = vmatpush1.msra.mxu0 0.0
    %6416 = vmatprep.subr.mxu0 0.0
    %6417 = vmatpush1.msra.mxu0 0.0
    %6418 = vmatprep.subr.mxu0 0.0
    %6419 = vmatpush1.msra.mxu0 0.0
    %6420 = vmatprep.subr.mxu0 0.0
    %6421 = vmatpush1.msra.mxu0 0.0
    %6422 = vmatprep.subr.mxu0 0.0
    %6423 = vmatpush1.msra.mxu0 0.0
    %6424 = vmatprep.subr.mxu0 0.0
    %6425 = vmatpush1.msra.mxu0 0.0
    %6426 = vmatprep.subr.mxu0 0.0
    %6427 = vmatpush1.msra.mxu0 0.0
    %6428 = vmatprep.subr.mxu0 0.0
    %6429 = vmatpush1.msra.mxu0 0.0
    %6430 = vmatprep.subr.mxu0 0.0
    %6431 = vmatpush1.msra.mxu0 0.0
    %6432 = vmatprep.subr.mxu0 0.0
    %6433 = vmatpush1.msra.mxu0 0.0
    %6434 = vmatprep.subr.mxu0 0.0
    %6435 = vmatpush1.msra.mxu0 0.0
    %6436 = vmatprep.subr.mxu0 0.0
    %6437 = vmatpush1.msra.mxu0 0.0
    %6438 = vmatprep.subr.mxu0 0.0
    %6439 = vmatpush1.msra.mxu0 0.0
    %6440 = vmatprep.mubr.f32.mxu0 0.0
    %6441 = vmatmul.mubr.f32.gmra.mrb[0].mxu0 %v6374
    %v6442 = vpop.f32.mrb[0].mxu0
    %v6443 = vadd.f32 0.0, %v6442
    %v6444 = vpop.f32.mrb[0].mxu0
    %6445 = vdwg.mxu0
    %v6446 = vmul.f32 %v6443, %v6443
    %6447 = vmatprep.subr.mxu0 0.0
    %6448 = vmatpush1.msra.mxu0 %v101
    %6449 = vmatprep.subr.mxu0 0.0
    %6450 = vmatpush1.msra.mxu0 %v102
    %6451 = vmatprep.subr.mxu0 0.0
    %6452 = vmatpush1.msra.mxu0 %v103
    %6453 = vmatprep.subr.mxu0 0.0
    %6454 = vmatpush1.msra.mxu0 %v104
    %6455 = vmatprep.subr.mxu0 0.0
    %6456 = vmatpush1.msra.mxu0 %v105
    %6457 = vmatprep.subr.mxu0 0.0
    %6458 = vmatpush1.msra.mxu0 %v106
    %6459 = vmatprep.subr.mxu0 0.0
    %6460 = vmatpush1.msra.mxu0 %v107
    %6461 = vmatprep.subr.mxu0 0.0
    %6462 = vmatpush1.msra.mxu0 %v108
    %6463 = vmatprep.subr.mxu0 0.0
    %6464 = vmatpush1.msra.mxu0 %v109
    %6465 = vmatprep.subr.mxu0 0.0
    %6466 = vmatpush1.msra.mxu0 %v110
    %6467 = vmatprep.subr.mxu0 0.0
    %6468 = vmatpush1.msra.mxu0 %v111
    %6469 = vmatprep.subr.mxu0 0.0
    %6470 = vmatpush1.msra.mxu0 %v112
    %6471 = vmatprep.subr.mxu0 0.0
    %6472 = vmatpush1.msra.mxu0 %v113
    %6473 = vmatprep.subr.mxu0 0.0
    %6474 = vmatpush1.msra.mxu0 %v114
    %6475 = vmatprep.subr.mxu0 0.0
    %6476 = vmatpush1.msra.mxu0 %v115
    %6477 = vmatprep.subr.mxu0 0.0
    %6478 = vmatpush1.msra.mxu0 %v116
    %6479 = vmatprep.subr.mxu0 0.0
    %6480 = vmatpush1.msra.mxu0 0.0
    %6481 = vmatprep.subr.mxu0 0.0
    %6482 = vmatpush1.msra.mxu0 0.0
    %6483 = vmatprep.subr.mxu0 0.0
    %6484 = vmatpush1.msra.mxu0 0.0
    %6485 = vmatprep.subr.mxu0 0.0
    %6486 = vmatpush1.msra.mxu0 0.0
    %6487 = vmatprep.subr.mxu0 0.0
    %6488 = vmatpush1.msra.mxu0 0.0
    %6489 = vmatprep.subr.mxu0 0.0
    %6490 = vmatpush1.msra.mxu0 0.0
    %6491 = vmatprep.subr.mxu0 0.0
    %6492 = vmatpush1.msra.mxu0 0.0
    %6493 = vmatprep.subr.mxu0 0.0
    %6494 = vmatpush1.msra.mxu0 0.0
    %6495 = vmatprep.subr.mxu0 0.0
    %6496 = vmatpush1.msra.mxu0 0.0
    %6497 = vmatprep.subr.mxu0 0.0
    %6498 = vmatpush1.msra.mxu0 0.0
    %6499 = vmatprep.subr.mxu0 0.0
    %6500 = vmatpush1.msra.mxu0 0.0
    %6501 = vmatprep.subr.mxu0 0.0
    %6502 = vmatpush1.msra.mxu0 0.0
    %6503 = vmatprep.subr.mxu0 0.0
    %6504 = vmatpush1.msra.mxu0 0.0
    %6505 = vmatprep.subr.mxu0 0.0
    %6506 = vmatpush1.msra.mxu0 0.0
    %6507 = vmatprep.subr.mxu0 0.0
    %6508 = vmatpush1.msra.mxu0 0.0
    %6509 = vmatprep.subr.mxu0 0.0
    %6510 = vmatpush1.msra.mxu0 0.0
    %6511 = vmatprep.mubr.f32.mxu0 0.0
    %6512 = vmatmul.mubr.f32.gmra.mrb[0].mxu0 %v6446
    %v6513 = vpop.f32.mrb[0].mxu0
    %v6514 = vadd.f32 0.0, %v6513
    %v6515 = vpop.f32.mrb[0].mxu0
    %6516 = vdwg.mxu0
    %v6518 = vsel %vm565, %v6514, 0
    %6520 = vmatprep.subr.mxu0 0.0
    %6521 = vmatpush1.msra.mxu0 %v117
    %6522 = vmatprep.subr.mxu0 0.0
    %6523 = vmatpush1.msra.mxu0 %v118
    %6524 = vmatprep.subr.mxu0 0.0
    %6525 = vmatpush1.msra.mxu0 0.0
    %6526 = vmatprep.subr.mxu0 0.0
    %6527 = vmatpush1.msra.mxu0 0.0
    %6528 = vmatprep.subr.mxu0 0.0
    %6529 = vmatpush1.msra.mxu0 0.0
    %6530 = vmatprep.subr.mxu0 0.0
    %6531 = vmatpush1.msra.mxu0 0.0
    %6532 = vmatprep.subr.mxu0 0.0
    %6533 = vmatpush1.msra.mxu0 0.0
    %6534 = vmatprep.subr.mxu0 0.0
    %6535 = vmatpush1.msra.mxu0 0.0
    %6536 = vmatprep.subr.mxu0 0.0
    %6537 = vmatpush1.msra.mxu0 0.0
    %6538 = vmatprep.subr.mxu0 0.0
    %6539 = vmatpush1.msra.mxu0 0.0
    %6540 = vmatprep.subr.mxu0 0.0
    %6541 = vmatpush1.msra.mxu0 0.0
    %6542 = vmatprep.subr.mxu0 0.0
    %6543 = vmatpush1.msra.mxu0 0.0
    %6544 = vmatprep.subr.mxu0 0.0
    %6545 = vmatpush1.msra.mxu0 0.0
    %6546 = vmatprep.subr.mxu0 0.0
    %6547 = vmatpush1.msra.mxu0 0.0
    %6548 = vmatprep.subr.mxu0 0.0
    %6549 = vmatpush1.msra.mxu0 0.0
    %6550 = vmatprep.subr.mxu0 0.0
    %6551 = vmatpush1.msra.mxu0 0.0
    %6552 = vmatprep.subr.mxu0 0.0
    %6553 = vmatpush1.msra.mxu0 0.0
    %6554 = vmatprep.subr.mxu0 0.0
    %6555 = vmatpush1.msra.mxu0 0.0
    %6556 = vmatprep.subr.mxu0 0.0
    %6557 = vmatpush1.msra.mxu0 0.0
    %6558 = vmatprep.subr.mxu0 0.0
    %6559 = vmatpush1.msra.mxu0 0.0
    %6560 = vmatprep.subr.mxu0 0.0
    %6561 = vmatpush1.msra.mxu0 0.0
    %6562 = vmatprep.subr.mxu0 0.0
    %6563 = vmatpush1.msra.mxu0 0.0
    %6564 = vmatprep.subr.mxu0 0.0
    %6565 = vmatpush1.msra.mxu0 0.0
    %6566 = vmatprep.subr.mxu0 0.0
    %6567 = vmatpush1.msra.mxu0 0.0
    %6568 = vmatprep.subr.mxu0 0.0
    %6569 = vmatpush1.msra.mxu0 0.0
    %6570 = vmatprep.subr.mxu0 0.0
    %6571 = vmatpush1.msra.mxu0 0.0
    %6572 = vmatprep.subr.mxu0 0.0
    %6573 = vmatpush1.msra.mxu0 0.0
    %6574 = vmatprep.subr.mxu0 0.0
    %6575 = vmatpush1.msra.mxu0 0.0
    %6576 = vmatprep.subr.mxu0 0.0
    %6577 = vmatpush1.msra.mxu0 0.0
    %6578 = vmatprep.subr.mxu0 0.0
    %6579 = vmatpush1.msra.mxu0 0.0
    %6580 = vmatprep.subr.mxu0 0.0
    %6581 = vmatpush1.msra.mxu0 0.0
    %6582 = vmatprep.subr.mxu0 0.0
    %6583 = vmatpush1.msra.mxu0 0.0
    %6584 = vmatprep.mubr.f32.mxu0 0.0
    %6585 = vmatmul.mubr.f32.gmra.mrb[0].mxu0 %v6518
    %v6586 = vpop.f32.mrb[0].mxu0
    %v6587 = vadd.f32 %v563, %v6586
    %v6588 = vpop.f32.mrb[0].mxu0
    %6589 = vdwg.mxu0
    %v6590 = vxor.u32 %v6587, 2147483648
    %v6591 = vmul.f32 %v6590, 1.442695
    %v6592 = vpow.pop %v6591
    %v6593 = vadd.f32 %v6592, 1.0
    %v6594 = vrcp.pop %v6593
    %v6595 = vmul.f32 1.0, %v6594
    %v6596 = vtanh.pop %v6587
    %v6597 = vmul.f32 %v6595, %v5619
    %6599 = vrot.lane.b32.xlu0 %v6596, 116
    %v6600 = vpop.permute.xlu0 %6599
    %v6602 = vmul.f32 %v6595, %v6600
    %6604 = vrot.lane.b32.xlu0 %v6602, 122
    %v6605 = vpop.permute.xlu0 %6604
    %v6607 = vadd.f32 %v6597, %v6605
    %v6608 = vtanh.pop %v6607
    %6610 = vrot.lane.b32.xlu0 %v6608, 12
    %v6611 = vpop.permute.xlu0 %6610
    %v6613 = vmul.f32 %v6595, %v6611
    %6615 = vrot.lane.b32.xlu0 %v6613, 116
    %v6616 = vpop.permute.xlu0 %6615
    %v6617 = vsel %vm672, %v6616, 0
    %6619 = vmatprep.subr.mxu0 0.0
    %6620 = vmatpush1.msra.mxu0 %v677
    %6621 = vmatprep.subr.mxu0 0.0
    %6622 = vmatpush1.msra.mxu0 0.0
    %6623 = vmatprep.subr.mxu0 0.0
    %6624 = vmatpush1.msra.mxu0 0.0
    %6625 = vmatprep.subr.mxu0 0.0
    %6626 = vmatpush1.msra.mxu0 0.0
    %6627 = vmatprep.subr.mxu0 0.0
    %6628 = vmatpush1.msra.mxu0 0.0
    %6629 = vmatprep.subr.mxu0 0.0
    %6630 = vmatpush1.msra.mxu0 0.0
    %6631 = vmatprep.subr.mxu0 0.0
    %6632 = vmatpush1.msra.mxu0 0.0
    %6633 = vmatprep.subr.mxu0 0.0
    %6634 = vmatpush1.msra.mxu0 0.0
    %6635 = vmatprep.subr.mxu0 0.0
    %6636 = vmatpush1.msra.mxu0 0.0
    %6637 = vmatprep.subr.mxu0 0.0
    %6638 = vmatpush1.msra.mxu0 0.0
    %6639 = vmatprep.subr.mxu0 0.0
    %6640 = vmatpush1.msra.mxu0 0.0
    %6641 = vmatprep.subr.mxu0 0.0
    %6642 = vmatpush1.msra.mxu0 0.0
    %6643 = vmatprep.subr.mxu0 0.0
    %6644 = vmatpush1.msra.mxu0 0.0
    %6645 = vmatprep.subr.mxu0 0.0
    %6646 = vmatpush1.msra.mxu0 0.0
    %6647 = vmatprep.subr.mxu0 0.0
    %6648 = vmatpush1.msra.mxu0 0.0
    %6649 = vmatprep.subr.mxu0 0.0
    %6650 = vmatpush1.msra.mxu0 0.0
    %6651 = vmatprep.subr.mxu0 0.0
    %6652 = vmatpush1.msra.mxu0 0.0
    %6653 = vmatprep.subr.mxu0 0.0
    %6654 = vmatpush1.msra.mxu0 0.0
    %6655 = vmatprep.subr.mxu0 0.0
    %6656 = vmatpush1.msra.mxu0 0.0
    %6657 = vmatprep.subr.mxu0 0.0
    %6658 = vmatpush1.msra.mxu0 0.0
    %6659 = vmatprep.subr.mxu0 0.0
    %6660 = vmatpush1.msra.mxu0 0.0
    %6661 = vmatprep.subr.mxu0 0.0
    %6662 = vmatpush1.msra.mxu0 0.0
    %6663 = vmatprep.subr.mxu0 0.0
    %6664 = vmatpush1.msra.mxu0 0.0
    %6665 = vmatprep.subr.mxu0 0.0
    %6666 = vmatpush1.msra.mxu0 0.0
    %6667 = vmatprep.subr.mxu0 0.0
    %6668 = vmatpush1.msra.mxu0 0.0
    %6669 = vmatprep.subr.mxu0 0.0
    %6670 = vmatpush1.msra.mxu0 0.0
    %6671 = vmatprep.subr.mxu0 0.0
    %6672 = vmatpush1.msra.mxu0 0.0
    %6673 = vmatprep.subr.mxu0 0.0
    %6674 = vmatpush1.msra.mxu0 0.0
    %6675 = vmatprep.subr.mxu0 0.0
    %6676 = vmatpush1.msra.mxu0 0.0
    %6677 = vmatprep.subr.mxu0 0.0
    %6678 = vmatpush1.msra.mxu0 0.0
    %6679 = vmatprep.subr.mxu0 0.0
    %6680 = vmatpush1.msra.mxu0 0.0
    %6681 = vmatprep.subr.mxu0 0.0
    %6682 = vmatpush1.msra.mxu0 0.0
    %6683 = vmatprep.mubr.f32.mxu0 0.0
    %6684 = vmatmul.mubr.f32.gmra.mrb[0].mxu0 %v6617
    %v6685 = vpop.f32.mrb[0].mxu0
    %v6686 = vadd.f32 %v667, %v6685
    %v6687 = vpop.f32.mrb[0].mxu0
    %6688 = vdwg.mxu0
    %v6689 = vand.u32 2147483647, %v6686
    %vm6690 = vcmp.le.f32.partialorder %v6689, 0.7853982
    %vm6691 = vcmp.lt.s32.totalorder %v6686, 0
    %v6692 = vand.u32 %v6686, 2139095040
    %v6693 = vshrl.u32 %v6692, 23
    %v6694 = vsub.s32 %v6693, 127
    %v6695 = vand.u32 2147483647, %v6686
    %v6696 = vand.u32 %v6695, 8388607
    %v6697 = vor.u32 %v6696, 8388608
    %v6698 = vsub.s32 0, %v6697
    %v6699 = vadd.s32 %v6694, 1
    %vm6700 = vcmp.gt.s32.totalorder %v6699, 0
    %v6701 = vsel %vm6700, %v6699, 0
    %v6702 = vshrl.u32 %v6701, 5
    %v6703 = vand.u32 %v6701, 31
    %v6704 = vsub.s32 32, %v6703
    %v6705 = vshrl.u32 683565275, %v6704
    %v6706 = vshll.u32 683565275, %v6703
    %v6707 = vshrl.u32 2475754826, %v6704
    %v6708 = vor.u32 %v6706, %v6707
    %v6709 = vshll.u32 2475754826, %v6703
    %v6710 = vshrl.u32 2131351028, %v6704
    %v6711 = vor.u32 %v6709, %v6710
    %v6712 = vshll.u32 2131351028, %v6703
    %v6713 = vshrl.u32 2102212464, %v6704
    %v6714 = vor.u32 %v6712, %v6713
    %v6715 = vshll.u32 2102212464, %v6703
    %v6716 = vshrl.u32 920167782, %v6704
    %v6717 = vor.u32 %v6715, %v6716
    %v6718 = vshll.u32 920167782, %v6703
    %v6719 = vshrl.u32 1326507024, %v6704
    %v6720 = vor.u32 %v6718, %v6719
    %vm6721 = vcmp.lt.s32.totalorder %v6702, 1
    %vm6722 = vcmp.lt.s32.totalorder %v6702, 2
    %vm6723 = vcmp.lt.s32.totalorder %v6702, 3
    %vm6724 = vcmp.lt.s32.totalorder %v6702, 4
    %v6725 = vsel %vm6721, %v6705, %v6708
    %v6726 = vsel %vm6724, %v6714, 2102212464
    %v6727 = vsel %vm6723, %v6711, %v6726
    %v6728 = vsel %vm6722, %v6725, %v6727
    %v6729 = vsel %vm6721, %v6708, %v6711
    %v6730 = vsel %vm6724, %v6717, 920167782
    %v6731 = vsel %vm6723, %v6714, %v6730
    %v6732 = vsel %vm6722, %v6729, %v6731
    %v6733 = vsel %vm6721, %v6711, %v6714
    %v6734 = vsel %vm6724, %v6720, 1326507024
    %v6735 = vsel %vm6723, %v6717, %v6734
    %v6736 = vsel %vm6722, %v6733, %v6735
    %v6737 = vshll.u32 %v6697, 8
    %v6738 = vmul.u32.u64.compose %v6737, %v6736
    %v6739 = vextract.low.u32 %v6738
    %v6740 = vextract.high.u32 %v6738
    %v6741 = vmul.u32.u64.compose %v6737, %v6732
    %v6742 = vextract.low.u32 %v6741
    %v6743 = vextract.high.u32 %v6741
    %v6744 = vmul.u32 %v6737, %v6728
    %v6745 = vadd.s32 %v6740, %v6742
    %vm6746 = vc.u32 %v6740, %v6742
    %v6747 = vadd.s32 %v6743, 1
    %v6748 = vsel %vm6746, %v6747, %v6743
    %v6749 = vadd.s32 %v6744, %v6748
    %v6750 = vadd.s32 %v6749, 536870912
    %v6751 = vshrl.u32 %v6750, 30
    %v6752 = vshll.u32 %v6751, 30
    %v6753 = vsub.s32 %v6749, %v6752
    %vm6754 = vcmp.lt.s32.totalorder %v6753, 0
    %v6755 = vsub.s32 0, %v6753
    %v6756 = vsel %vm6754, %v6755, %v6753
    %v6757 = vclz %v6756
    %v6758 = vsub.s32 %v6757, 2
    %vm6759 = vcmp.gt.s32.totalorder 0, %v6758
    %v6760 = vsel %vm6759, 0, %v6758
    %v6761 = vsub.s32 32, %v6760
    %v6762 = vshll.u32 %v6753, %v6760
    %v6763 = vshrl.u32 %v6745, %v6761
    %v6764 = vor.u32 %v6762, %v6763
    %v6765 = vsub.s32 4294967266, %v6760
    %v6766 = vadd.s32 %v6765, 127
    %v6767 = vshll.u32 %v6766, 23
    %v6768 = vor.u32 4788187, %v6767
    %v6769 = vand.u32 2147483647, %v6768
    %v6771 = vcvt.s32.f32 %v6764
    %v6772 = vmul.f32 %v6771, %v6769
    %v6773 = vxor.u32 %v6772, 2147483648
    %v6774 = vsel %vm6691, %v6773, %v6772
    %v6775 = vsub.s32 4, %v6751
    %v6776 = vsel %vm6691, %v6775, %v6751
    %v6777 = vsel %vm6690, %v6686, %v6774
    %v6778 = vsel %vm6690, 0, %v6776
    %v6779 = vcosq.f32.pop %v6777
    %v6780 = vsinq.f32.pop %v6777
    %vm6781 = vweird.f32 %v6686
    %v6782 = vand.u32 %v6778, 3
    %vm6783 = vcmp.lt.s32.totalorder %v6782, 2
    %vm6784 = vcmp.eq.s32.totalorder %v6782, 0
    %v6785 = vxor.u32 %v6780, 2147483648
    %v6786 = vsel %vm6784, %v6779, %v6785
    %vm6787 = vcmp.eq.s32.totalorder %v6782, 2
    %v6788 = vxor.u32 %v6779, 2147483648
    %v6789 = vsel %vm6787, %v6788, %v6780
    %v6790 = vsel %vm6783, %v6786, %v6789
    %v6791 = vsel %vm6781, nan, %v6790
    %v6793 = vsel %vm852, %v6791, 0
    %6795 = vmatprep.subr.mxu0 0.0
    %6796 = vmatpush1.msra.mxu0 %v122
    %6797 = vmatprep.subr.mxu0 0.0
    %6798 = vmatpush1.msra.mxu0 0.0
    %6799 = vmatprep.subr.mxu0 0.0
    %6800 = vmatpush1.msra.mxu0 0.0
    %6801 = vmatprep.subr.mxu0 0.0
    %6802 = vmatpush1.msra.mxu0 0.0
    %6803 = vmatprep.subr.mxu0 0.0
    %6804 = vmatpush1.msra.mxu0 0.0
    %6805 = vmatprep.subr.mxu0 0.0
    %6806 = vmatpush1.msra.mxu0 0.0
    %6807 = vmatprep.subr.mxu0 0.0
    %6808 = vmatpush1.msra.mxu0 0.0
    %6809 = vmatprep.subr.mxu0 0.0
    %6810 = vmatpush1.msra.mxu0 0.0
    %6811 = vmatprep.subr.mxu0 0.0
    %6812 = vmatpush1.msra.mxu0 0.0
    %6813 = vmatprep.subr.mxu0 0.0
    %6814 = vmatpush1.msra.mxu0 0.0
    %6815 = vmatprep.subr.mxu0 0.0
    %6816 = vmatpush1.msra.mxu0 0.0
    %6817 = vmatprep.subr.mxu0 0.0
    %6818 = vmatpush1.msra.mxu0 0.0
    %6819 = vmatprep.subr.mxu0 0.0
    %6820 = vmatpush1.msra.mxu0 0.0
    %6821 = vmatprep.subr.mxu0 0.0
    %6822 = vmatpush1.msra.mxu0 0.0
    %6823 = vmatprep.subr.mxu0 0.0
    %6824 = vmatpush1.msra.mxu0 0.0
    %6825 = vmatprep.subr.mxu0 0.0
    %6826 = vmatpush1.msra.mxu0 0.0
    %6827 = vmatprep.subr.mxu0 0.0
    %6828 = vmatpush1.msra.mxu0 0.0
    %6829 = vmatprep.subr.mxu0 0.0
    %6830 = vmatpush1.msra.mxu0 0.0
    %6831 = vmatprep.subr.mxu0 0.0
    %6832 = vmatpush1.msra.mxu0 0.0
    %6833 = vmatprep.subr.mxu0 0.0
    %6834 = vmatpush1.msra.mxu0 0.0
    %6835 = vmatprep.subr.mxu0 0.0
    %6836 = vmatpush1.msra.mxu0 0.0
    %6837 = vmatprep.subr.mxu0 0.0
    %6838 = vmatpush1.msra.mxu0 0.0
    %6839 = vmatprep.subr.mxu0 0.0
    %6840 = vmatpush1.msra.mxu0 0.0
    %6841 = vmatprep.subr.mxu0 0.0
    %6842 = vmatpush1.msra.mxu0 0.0
    %6843 = vmatprep.subr.mxu0 0.0
    %6844 = vmatpush1.msra.mxu0 0.0
    %6845 = vmatprep.subr.mxu0 0.0
    %6846 = vmatpush1.msra.mxu0 0.0
    %6847 = vmatprep.subr.mxu0 0.0
    %6848 = vmatpush1.msra.mxu0 0.0
    %6849 = vmatprep.subr.mxu0 0.0
    %6850 = vmatpush1.msra.mxu0 0.0
    %6851 = vmatprep.subr.mxu0 0.0
    %6852 = vmatpush1.msra.mxu0 0.0
    %6853 = vmatprep.subr.mxu0 0.0
    %6854 = vmatpush1.msra.mxu0 0.0
    %6855 = vmatprep.subr.mxu0 0.0
    %6856 = vmatpush1.msra.mxu0 0.0
    %6857 = vmatprep.subr.mxu0 0.0
    %6858 = vmatpush1.msra.mxu0 0.0
    %6859 = vmatprep.mubr.f32.mxu0 0.0
    %6860 = vmatmul.mubr.f32.gmra.mrb[0].mxu0 %v6793
    %v6861 = vpop.f32.mrb[0].mxu0
    %v6862 = vadd.f32 0.0, %v6861
    %v6863 = vpop.f32.mrb[0].mxu0
    %6864 = vdwg.mxu0
    %6866 = vrot.lane.b32.xlu0 %v6862, 96
    %v6867 = vpop.permute.xlu0 %6866
    %v6869 = vmul.f32 %v6862, %v6867
    %6871 = vrot.lane.b32.xlu0 %v6869, 112
    %v6872 = vpop.permute.xlu0 %6871
    %v6874 = vmul.f32 %v6869, %v6872
    %v6876 = vsel %vm565, %v6874, 0
    %6878 = vmatprep.subr.mxu0 0.0
    %6879 = vmatpush1.msra.mxu0 %v123
    %6880 = vmatprep.subr.mxu0 0.0
    %6881 = vmatpush1.msra.mxu0 %v124
    %6882 = vmatprep.subr.mxu0 0.0
    %6883 = vmatpush1.msra.mxu0 0.0
    %6884 = vmatprep.subr.mxu0 0.0
    %6885 = vmatpush1.msra.mxu0 0.0
    %6886 = vmatprep.subr.mxu0 0.0
    %6887 = vmatpush1.msra.mxu0 0.0
    %6888 = vmatprep.subr.mxu0 0.0
    %6889 = vmatpush1.msra.mxu0 0.0
    %6890 = vmatprep.subr.mxu0 0.0
    %6891 = vmatpush1.msra.mxu0 0.0
    %6892 = vmatprep.subr.mxu0 0.0
    %6893 = vmatpush1.msra.mxu0 0.0
    %6894 = vmatprep.subr.mxu0 0.0
    %6895 = vmatpush1.msra.mxu0 0.0
    %6896 = vmatprep.subr.mxu0 0.0
    %6897 = vmatpush1.msra.mxu0 0.0
    %6898 = vmatprep.subr.mxu0 0.0
    %6899 = vmatpush1.msra.mxu0 0.0
    %6900 = vmatprep.subr.mxu0 0.0
    %6901 = vmatpush1.msra.mxu0 0.0
    %6902 = vmatprep.subr.mxu0 0.0
    %6903 = vmatpush1.msra.mxu0 0.0
    %6904 = vmatprep.subr.mxu0 0.0
    %6905 = vmatpush1.msra.mxu0 0.0
    %6906 = vmatprep.subr.mxu0 0.0
    %6907 = vmatpush1.msra.mxu0 0.0
    %6908 = vmatprep.subr.mxu0 0.0
    %6909 = vmatpush1.msra.mxu0 0.0
    %6910 = vmatprep.subr.mxu0 0.0
    %6911 = vmatpush1.msra.mxu0 0.0
    %6912 = vmatprep.subr.mxu0 0.0
    %6913 = vmatpush1.msra.mxu0 0.0
    %6914 = vmatprep.subr.mxu0 0.0
    %6915 = vmatpush1.msra.mxu0 0.0
    %6916 = vmatprep.subr.mxu0 0.0
    %6917 = vmatpush1.msra.mxu0 0.0
    %6918 = vmatprep.subr.mxu0 0.0
    %6919 = vmatpush1.msra.mxu0 0.0
    %6920 = vmatprep.subr.mxu0 0.0
    %6921 = vmatpush1.msra.mxu0 0.0
    %6922 = vmatprep.subr.mxu0 0.0
    %6923 = vmatpush1.msra.mxu0 0.0
    %6924 = vmatprep.subr.mxu0 0.0
    %6925 = vmatpush1.msra.mxu0 0.0
    %6926 = vmatprep.subr.mxu0 0.0
    %6927 = vmatpush1.msra.mxu0 0.0
    %6928 = vmatprep.subr.mxu0 0.0
    %6929 = vmatpush1.msra.mxu0 0.0
    %6930 = vmatprep.subr.mxu0 0.0
    %6931 = vmatpush1.msra.mxu0 0.0
    %6932 = vmatprep.subr.mxu0 0.0
    %6933 = vmatpush1.msra.mxu0 0.0
    %6934 = vmatprep.subr.mxu0 0.0
    %6935 = vmatpush1.msra.mxu0 0.0
    %6936 = vmatprep.subr.mxu0 0.0
    %6937 = vmatpush1.msra.mxu0 0.0
    %6938 = vmatprep.subr.mxu0 0.0
    %6939 = vmatpush1.msra.mxu0 0.0
    %6940 = vmatprep.subr.mxu0 0.0
    %6941 = vmatpush1.msra.mxu0 0.0
    %6942 = vmatprep.mubr.f32.mxu0 0.0
    %6943 = vmatmul.mubr.f32.gmra.mrb[0].mxu0 %v6876
    %v6944 = vpop.f32.mrb[0].mxu0
    %v6945 = vadd.f32 0.0, %v6944
    %v6946 = vpop.f32.mrb[0].mxu0
    %6947 = vdwg.mxu0
    %v6948 = vmul.f32 %v6945, %v6945
    %v6950 = vsel %vm333, %v6948, 0
    %6952 = vmatprep.subr.mxu0 0.0
    %6953 = vmatpush1.msra.mxu0 %v125
    %6954 = vmatprep.subr.mxu0 0.0
    %6955 = vmatpush1.msra.mxu0 %v126
    %6956 = vmatprep.subr.mxu0 0.0
    %6957 = vmatpush1.msra.mxu0 %v127
    %6958 = vmatprep.subr.mxu0 0.0
    %6959 = vmatpush1.msra.mxu0 %v128
    %6960 = vmatprep.subr.mxu0 0.0
    %6961 = vmatpush1.msra.mxu0 0.0
    %6962 = vmatprep.subr.mxu0 0.0
    %6963 = vmatpush1.msra.mxu0 0.0
    %6964 = vmatprep.subr.mxu0 0.0
    %6965 = vmatpush1.msra.mxu0 0.0
    %6966 = vmatprep.subr.mxu0 0.0
    %6967 = vmatpush1.msra.mxu0 0.0
    %6968 = vmatprep.subr.mxu0 0.0
    %6969 = vmatpush1.msra.mxu0 0.0
    %6970 = vmatprep.subr.mxu0 0.0
    %6971 = vmatpush1.msra.mxu0 0.0
    %6972 = vmatprep.subr.mxu0 0.0
    %6973 = vmatpush1.msra.mxu0 0.0
    %6974 = vmatprep.subr.mxu0 0.0
    %6975 = vmatpush1.msra.mxu0 0.0
    %6976 = vmatprep.subr.mxu0 0.0
    %6977 = vmatpush1.msra.mxu0 0.0
    %6978 = vmatprep.subr.mxu0 0.0
    %6979 = vmatpush1.msra.mxu0 0.0
    %6980 = vmatprep.subr.mxu0 0.0
    %6981 = vmatpush1.msra.mxu0 0.0
    %6982 = vmatprep.subr.mxu0 0.0
    %6983 = vmatpush1.msra.mxu0 0.0
    %6984 = vmatprep.subr.mxu0 0.0
    %6985 = vmatpush1.msra.mxu0 0.0
    %6986 = vmatprep.subr.mxu0 0.0
    %6987 = vmatpush1.msra.mxu0 0.0
    %6988 = vmatprep.subr.mxu0 0.0
    %6989 = vmatpush1.msra.mxu0 0.0
    %6990 = vmatprep.subr.mxu0 0.0
    %6991 = vmatpush1.msra.mxu0 0.0
    %6992 = vmatprep.subr.mxu0 0.0
    %6993 = vmatpush1.msra.mxu0 0.0
    %6994 = vmatprep.subr.mxu0 0.0
    %6995 = vmatpush1.msra.mxu0 0.0
    %6996 = vmatprep.subr.mxu0 0.0
    %6997 = vmatpush1.msra.mxu0 0.0
    %6998 = vmatprep.subr.mxu0 0.0
    %6999 = vmatpush1.msra.mxu0 0.0
    %7000 = vmatprep.subr.mxu0 0.0
    %7001 = vmatpush1.msra.mxu0 0.0
    %7002 = vmatprep.subr.mxu0 0.0
    %7003 = vmatpush1.msra.mxu0 0.0
    %7004 = vmatprep.subr.mxu0 0.0
    %7005 = vmatpush1.msra.mxu0 0.0
    %7006 = vmatprep.subr.mxu0 0.0
    %7007 = vmatpush1.msra.mxu0 0.0
    %7008 = vmatprep.subr.mxu0 0.0
    %7009 = vmatpush1.msra.mxu0 0.0
    %7010 = vmatprep.subr.mxu0 0.0
    %7011 = vmatpush1.msra.mxu0 0.0
    %7012 = vmatprep.subr.mxu0 0.0
    %7013 = vmatpush1.msra.mxu0 0.0
    %7014 = vmatprep.subr.mxu0 0.0
    %7015 = vmatpush1.msra.mxu0 0.0
    %7016 = vmatprep.mubr.f32.mxu0 0.0
    %7017 = vmatmul.mubr.f32.gmra.mrb[0].mxu0 %v6950
    %v7018 = vpop.f32.mrb[0].mxu0
    %v7019 = vadd.f32 0.0, %v7018
    %v7020 = vpop.f32.mrb[0].mxu0
    %7021 = vdwg.mxu0
    %v7023 = vsel %vm1089, %v7019, 0
    %7025 = vmatprep.subr.mxu0 0.0
    %7026 = vmatpush1.msra.mxu0 %v1095
    %7027 = vmatprep.subr.mxu0 0.0
    %7028 = vmatpush1.msra.mxu0 0.0
    %7029 = vmatprep.subr.mxu0 0.0
    %7030 = vmatpush1.msra.mxu0 0.0
    %7031 = vmatprep.subr.mxu0 0.0
    %7032 = vmatpush1.msra.mxu0 0.0
    %7033 = vmatprep.subr.mxu0 0.0
    %7034 = vmatpush1.msra.mxu0 0.0
    %7035 = vmatprep.subr.mxu0 0.0
    %7036 = vmatpush1.msra.mxu0 0.0
    %7037 = vmatprep.subr.mxu0 0.0
    %7038 = vmatpush1.msra.mxu0 0.0
    %7039 = vmatprep.subr.mxu0 0.0
    %7040 = vmatpush1.msra.mxu0 0.0
    %7041 = vmatprep.subr.mxu0 0.0
    %7042 = vmatpush1.msra.mxu0 0.0
    %7043 = vmatprep.subr.mxu0 0.0
    %7044 = vmatpush1.msra.mxu0 0.0
    %7045 = vmatprep.subr.mxu0 0.0
    %7046 = vmatpush1.msra.mxu0 0.0
    %7047 = vmatprep.subr.mxu0 0.0
    %7048 = vmatpush1.msra.mxu0 0.0
    %7049 = vmatprep.subr.mxu0 0.0
    %7050 = vmatpush1.msra.mxu0 0.0
    %7051 = vmatprep.subr.mxu0 0.0
    %7052 = vmatpush1.msra.mxu0 0.0
    %7053 = vmatprep.subr.mxu0 0.0
    %7054 = vmatpush1.msra.mxu0 0.0
    %7055 = vmatprep.subr.mxu0 0.0
    %7056 = vmatpush1.msra.mxu0 0.0
    %7057 = vmatprep.subr.mxu0 0.0
    %7058 = vmatpush1.msra.mxu0 0.0
    %7059 = vmatprep.subr.mxu0 0.0
    %7060 = vmatpush1.msra.mxu0 0.0
    %7061 = vmatprep.subr.mxu0 0.0
    %7062 = vmatpush1.msra.mxu0 0.0
    %7063 = vmatprep.subr.mxu0 0.0
    %7064 = vmatpush1.msra.mxu0 0.0
    %7065 = vmatprep.subr.mxu0 0.0
    %7066 = vmatpush1.msra.mxu0 0.0
    %7067 = vmatprep.subr.mxu0 0.0
    %7068 = vmatpush1.msra.mxu0 0.0
    %7069 = vmatprep.subr.mxu0 0.0
    %7070 = vmatpush1.msra.mxu0 0.0
    %7071 = vmatprep.subr.mxu0 0.0
    %7072 = vmatpush1.msra.mxu0 0.0
    %7073 = vmatprep.subr.mxu0 0.0
    %7074 = vmatpush1.msra.mxu0 0.0
    %7075 = vmatprep.subr.mxu0 0.0
    %7076 = vmatpush1.msra.mxu0 0.0
    %7077 = vmatprep.subr.mxu0 0.0
    %7078 = vmatpush1.msra.mxu0 0.0
    %7079 = vmatprep.subr.mxu0 0.0
    %7080 = vmatpush1.msra.mxu0 0.0
    %7081 = vmatprep.subr.mxu0 0.0
    %7082 = vmatpush1.msra.mxu0 0.0
    %7083 = vmatprep.subr.mxu0 0.0
    %7084 = vmatpush1.msra.mxu0 0.0
    %7085 = vmatprep.subr.mxu0 0.0
    %7086 = vmatpush1.msra.mxu0 0.0
    %7087 = vmatprep.subr.mxu0 0.0
    %7088 = vmatpush1.msra.mxu0 0.0
    %7089 = vmatprep.mubr.f32.mxu0 0.0
    %7090 = vmatmul.mubr.f32.gmra.mrb[0].mxu0 %v7023
    %v7091 = vpop.f32.mrb[0].mxu0
    %v7092 = vadd.f32 %v1087, %v7091
    %v7093 = vpop.f32.mrb[0].mxu0
    %7094 = vdwg.mxu0
    %s7095 = scalar_lea.vmem %s0, 14
    %v7096 = vld [vmem:[%s7095] sm:$0x3]
    %7098 = vset.pattern.permute.xlu0 0
    %7099 = vperm.xlu0 %7098, %v7096
    %v7100 = vpop.permute.xlu0 %7099
    %v7102 = vmul.f32 %v7100, %v141
    %v7104 = vsel %vm144, %v7092, 0
    %7106 = vmatprep.subr.mxu0 0.0
    %7107 = vmatpush1.msra.mxu0 %v150
    %7108 = vmatprep.subr.mxu0 0.0
    %7109 = vmatpush1.msra.mxu0 0.0
    %7110 = vmatprep.subr.mxu0 0.0
    %7111 = vmatpush1.msra.mxu0 0.0
    %7112 = vmatprep.subr.mxu0 0.0
    %7113 = vmatpush1.msra.mxu0 0.0
    %7114 = vmatprep.subr.mxu0 0.0
    %7115 = vmatpush1.msra.mxu0 0.0
    %7116 = vmatprep.subr.mxu0 0.0
    %7117 = vmatpush1.msra.mxu0 0.0
    %7118 = vmatprep.subr.mxu0 0.0
    %7119 = vmatpush1.msra.mxu0 0.0
    %7120 = vmatprep.subr.mxu0 0.0
    %7121 = vmatpush1.msra.mxu0 0.0
    %7122 = vmatprep.subr.mxu0 0.0
    %7123 = vmatpush1.msra.mxu0 0.0
    %7124 = vmatprep.subr.mxu0 0.0
    %7125 = vmatpush1.msra.mxu0 0.0
    %7126 = vmatprep.subr.mxu0 0.0
    %7127 = vmatpush1.msra.mxu0 0.0
    %7128 = vmatprep.subr.mxu0 0.0
    %7129 = vmatpush1.msra.mxu0 0.0
    %7130 = vmatprep.subr.mxu0 0.0
    %7131 = vmatpush1.msra.mxu0 0.0
    %7132 = vmatprep.subr.mxu0 0.0
    %7133 = vmatpush1.msra.mxu0 0.0
    %7134 = vmatprep.subr.mxu0 0.0
    %7135 = vmatpush1.msra.mxu0 0.0
    %7136 = vmatprep.subr.mxu0 0.0
    %7137 = vmatpush1.msra.mxu0 0.0
    %7138 = vmatprep.subr.mxu0 0.0
    %7139 = vmatpush1.msra.mxu0 0.0
    %7140 = vmatprep.subr.mxu0 0.0
    %7141 = vmatpush1.msra.mxu0 0.0
    %7142 = vmatprep.subr.mxu0 0.0
    %7143 = vmatpush1.msra.mxu0 0.0
    %7144 = vmatprep.subr.mxu0 0.0
    %7145 = vmatpush1.msra.mxu0 0.0
    %7146 = vmatprep.subr.mxu0 0.0
    %7147 = vmatpush1.msra.mxu0 0.0
    %7148 = vmatprep.subr.mxu0 0.0
    %7149 = vmatpush1.msra.mxu0 0.0
    %7150 = vmatprep.subr.mxu0 0.0
    %7151 = vmatpush1.msra.mxu0 0.0
    %7152 = vmatprep.subr.mxu0 0.0
    %7153 = vmatpush1.msra.mxu0 0.0
    %7154 = vmatprep.subr.mxu0 0.0
    %7155 = vmatpush1.msra.mxu0 0.0
    %7156 = vmatprep.subr.mxu0 0.0
    %7157 = vmatpush1.msra.mxu0 0.0
    %7158 = vmatprep.subr.mxu0 0.0
    %7159 = vmatpush1.msra.mxu0 0.0
    %7160 = vmatprep.subr.mxu0 0.0
    %7161 = vmatpush1.msra.mxu0 0.0
    %7162 = vmatprep.subr.mxu0 0.0
    %7163 = vmatpush1.msra.mxu0 0.0
    %7164 = vmatprep.subr.mxu0 0.0
    %7165 = vmatpush1.msra.mxu0 0.0
    %7166 = vmatprep.subr.mxu0 0.0
    %7167 = vmatpush1.msra.mxu0 0.0
    %7168 = vmatprep.subr.mxu0 0.0
    %7169 = vmatpush1.msra.mxu0 0.0
    %7170 = vmatprep.mubr.f32.mxu0 0.0
    %7171 = vmatmul.mubr.f32.gmra.mrb[0].mxu0 %v7104
    %v7172 = vpop.f32.mrb[0].mxu0
    %v7173 = vadd.f32 0.0, %v7172
    %v7174 = vpop.f32.mrb[0].mxu0
    %7175 = vdwg.mxu0
    %v7176 = vadd.f32 %v7102, %v7173
    %v7177 = vadd.f32 %v7176, %v227
    %v7178 = vand.u32 2147483647, %v7177
    %vm7179 = vcmp.le.f32.partialorder %v7178, 0.7853982
    %vm7180 = vcmp.lt.s32.totalorder %v7177, 0
    %v7181 = vand.u32 %v7177, 2139095040
    %v7182 = vshrl.u32 %v7181, 23
    %v7183 = vsub.s32 %v7182, 127
    %v7184 = vand.u32 2147483647, %v7177
    %v7185 = vand.u32 %v7184, 8388607
    %v7186 = vor.u32 %v7185, 8388608
    %v7187 = vsub.s32 0, %v7186
    %v7188 = vadd.s32 %v7183, 1
    %vm7189 = vcmp.gt.s32.totalorder %v7188, 0
    %v7190 = vsel %vm7189, %v7188, 0
    %v7191 = vshrl.u32 %v7190, 5
    %v7192 = vand.u32 %v7190, 31
    %v7193 = vsub.s32 32, %v7192
    %v7194 = vshrl.u32 683565275, %v7193
    %v7195 = vshll.u32 683565275, %v7192
    %v7196 = vshrl.u32 2475754826, %v7193
    %v7197 = vor.u32 %v7195, %v7196
    %v7198 = vshll.u32 2475754826, %v7192
    %v7199 = vshrl.u32 2131351028, %v7193
    %v7200 = vor.u32 %v7198, %v7199
    %v7201 = vshll.u32 2131351028, %v7192
    %v7202 = vshrl.u32 2102212464, %v7193
    %v7203 = vor.u32 %v7201, %v7202
    %v7204 = vshll.u32 2102212464, %v7192
    %v7205 = vshrl.u32 920167782, %v7193
    %v7206 = vor.u32 %v7204, %v7205
    %v7207 = vshll.u32 920167782, %v7192
    %v7208 = vshrl.u32 1326507024, %v7193
    %v7209 = vor.u32 %v7207, %v7208
    %vm7210 = vcmp.lt.s32.totalorder %v7191, 1
    %vm7211 = vcmp.lt.s32.totalorder %v7191, 2
    %vm7212 = vcmp.lt.s32.totalorder %v7191, 3
    %vm7213 = vcmp.lt.s32.totalorder %v7191, 4
    %v7214 = vsel %vm7210, %v7194, %v7197
    %v7215 = vsel %vm7213, %v7203, 2102212464
    %v7216 = vsel %vm7212, %v7200, %v7215
    %v7217 = vsel %vm7211, %v7214, %v7216
    %v7218 = vsel %vm7210, %v7197, %v7200
    %v7219 = vsel %vm7213, %v7206, 920167782
    %v7220 = vsel %vm7212, %v7203, %v7219
    %v7221 = vsel %vm7211, %v7218, %v7220
    %v7222 = vsel %vm7210, %v7200, %v7203
    %v7223 = vsel %vm7213, %v7209, 1326507024
    %v7224 = vsel %vm7212, %v7206, %v7223
    %v7225 = vsel %vm7211, %v7222, %v7224
    %v7226 = vshll.u32 %v7186, 8
    %v7227 = vmul.u32.u64.compose %v7226, %v7225
    %v7228 = vextract.low.u32 %v7227
    %v7229 = vextract.high.u32 %v7227
    %v7230 = vmul.u32.u64.compose %v7226, %v7221
    %v7231 = vextract.low.u32 %v7230
    %v7232 = vextract.high.u32 %v7230
    %v7233 = vmul.u32 %v7226, %v7217
    %v7234 = vadd.s32 %v7229, %v7231
    %vm7235 = vc.u32 %v7229, %v7231
    %v7236 = vadd.s32 %v7232, 1
    %v7237 = vsel %vm7235, %v7236, %v7232
    %v7238 = vadd.s32 %v7233, %v7237
    %v7239 = vadd.s32 %v7238, 536870912
    %v7240 = vshrl.u32 %v7239, 30
    %v7241 = vshll.u32 %v7240, 30
    %v7242 = vsub.s32 %v7238, %v7241
    %vm7243 = vcmp.lt.s32.totalorder %v7242, 0
    %v7244 = vsub.s32 0, %v7242
    %v7245 = vsel %vm7243, %v7244, %v7242
    %v7246 = vclz %v7245
    %v7247 = vsub.s32 %v7246, 2
    %vm7248 = vcmp.gt.s32.totalorder 0, %v7247
    %v7249 = vsel %vm7248, 0, %v7247
    %v7250 = vsub.s32 32, %v7249
    %v7251 = vshll.u32 %v7242, %v7249
    %v7252 = vshrl.u32 %v7234, %v7250
    %v7253 = vor.u32 %v7251, %v7252
    %v7254 = vsub.s32 4294967266, %v7249
    %v7255 = vadd.s32 %v7254, 127
    %v7256 = vshll.u32 %v7255, 23
    %v7257 = vor.u32 4788187, %v7256
    %v7258 = vand.u32 2147483647, %v7257
    %v7260 = vcvt.s32.f32 %v7253
    %v7261 = vmul.f32 %v7260, %v7258
    %v7262 = vxor.u32 %v7261, 2147483648
    %v7263 = vsel %vm7180, %v7262, %v7261
    %v7264 = vsub.s32 4, %v7240
    %v7265 = vsel %vm7180, %v7264, %v7240
    %v7266 = vsel %vm7179, %v7177, %v7263
    %v7267 = vsel %vm7179, 0, %v7265
    %v7268 = vcosq.f32.pop %v7266
    %v7269 = vsinq.f32.pop %v7266
    %vm7270 = vweird.f32 %v7177
    %v7271 = vand.u32 %v7267, 3
    %vm7272 = vcmp.lt.s32.totalorder %v7271, 2
    %vm7273 = vcmp.eq.s32.totalorder %v7271, 0
    %v7274 = vxor.u32 %v7269, 2147483648
    %v7275 = vsel %vm7273, %v7268, %v7274
    %vm7276 = vcmp.eq.s32.totalorder %v7271, 2
    %v7277 = vxor.u32 %v7268, 2147483648
    %v7278 = vsel %vm7276, %v7277, %v7269
    %v7279 = vsel %vm7272, %v7275, %v7278
    %v7280 = vsel %vm7270, nan, %v7279
    %v7282 = vsel %vm333, %v7280, 0
    %7284 = vmatprep.subr.mxu0 %v86
    %7285 = vmatpush1.msra.mxu0 %v85
    %7286 = vmatprep.subr.mxu0 %v88
    %7287 = vmatpush1.msra.mxu0 %v87
    %7288 = vmatprep.subr.mxu0 %v90
    %7289 = vmatpush1.msra.mxu0 %v89
    %7290 = vmatprep.subr.mxu0 %v92
    %7291 = vmatpush1.msra.mxu0 %v91
    %7292 = vmatprep.subr.mxu0 0.0
    %7293 = vmatpush1.msra.mxu0 0.0
    %7294 = vmatprep.subr.mxu0 0.0
    %7295 = vmatpush1.msra.mxu0 0.0
    %7296 = vmatprep.subr.mxu0 0.0
    %7297 = vmatpush1.msra.mxu0 0.0
    %7298 = vmatprep.subr.mxu0 0.0
    %7299 = vmatpush1.msra.mxu0 0.0
    %7300 = vmatprep.subr.mxu0 0.0
    %7301 = vmatpush1.msra.mxu0 0.0
    %7302 = vmatprep.subr.mxu0 0.0
    %7303 = vmatpush1.msra.mxu0 0.0
    %7304 = vmatprep.subr.mxu0 0.0
    %7305 = vmatpush1.msra.mxu0 0.0
    %7306 = vmatprep.subr.mxu0 0.0
    %7307 = vmatpush1.msra.mxu0 0.0
    %7308 = vmatprep.subr.mxu0 0.0
    %7309 = vmatpush1.msra.mxu0 0.0
    %7310 = vmatprep.subr.mxu0 0.0
    %7311 = vmatpush1.msra.mxu0 0.0
    %7312 = vmatprep.subr.mxu0 0.0
    %7313 = vmatpush1.msra.mxu0 0.0
    %7314 = vmatprep.subr.mxu0 0.0
    %7315 = vmatpush1.msra.mxu0 0.0
    %7316 = vmatprep.subr.mxu0 0.0
    %7317 = vmatpush1.msra.mxu0 0.0
    %7318 = vmatprep.subr.mxu0 0.0
    %7319 = vmatpush1.msra.mxu0 0.0
    %7320 = vmatprep.subr.mxu0 0.0
    %7321 = vmatpush1.msra.mxu0 0.0
    %7322 = vmatprep.subr.mxu0 0.0
    %7323 = vmatpush1.msra.mxu0 0.0
    %7324 = vmatprep.subr.mxu0 0.0
    %7325 = vmatpush1.msra.mxu0 0.0
    %7326 = vmatprep.subr.mxu0 0.0
    %7327 = vmatpush1.msra.mxu0 0.0
    %7328 = vmatprep.subr.mxu0 0.0
    %7329 = vmatpush1.msra.mxu0 0.0
    %7330 = vmatprep.subr.mxu0 0.0
    %7331 = vmatpush1.msra.mxu0 0.0
    %7332 = vmatprep.subr.mxu0 0.0
    %7333 = vmatpush1.msra.mxu0 0.0
    %7334 = vmatprep.subr.mxu0 0.0
    %7335 = vmatpush1.msra.mxu0 0.0
    %7336 = vmatprep.subr.mxu0 0.0
    %7337 = vmatpush1.msra.mxu0 0.0
    %7338 = vmatprep.subr.mxu0 0.0
    %7339 = vmatpush1.msra.mxu0 0.0
    %7340 = vmatprep.subr.mxu0 0.0
    %7341 = vmatpush1.msra.mxu0 0.0
    %7342 = vmatprep.subr.mxu0 0.0
    %7343 = vmatpush1.msra.mxu0 0.0
    %7344 = vmatprep.subr.mxu0 0.0
    %7345 = vmatpush1.msra.mxu0 0.0
    %7346 = vmatprep.subr.mxu0 0.0
    %7347 = vmatpush1.msra.mxu0 0.0
    %7348 = vmatprep.mubr.f32.mxu0 0.0
    %7349 = vmatmul.mubr.f32.gmra.mrb[0].mxu0 %v7282
    %v7350 = vpop.f32.mrb[0].mxu0
    %v7351 = vadd.f32 0.0, %v7350
    %v7352 = vpop.f32.mrb[0].mxu0
    %v7353 = vadd.f32 0.0, %v7352
    %7354 = vdwg.mxu0
    %v7355 = vmul.f32 %v7351, %v7353
    %7357 = vrot.lane.b32.xlu0 %v7355, 64
    %v7358 = vpop.permute.xlu0 %7357
    %v7360 = vmul.f32 %v7355, %v7358
    %v7362 = vsel %vm414, %v7360, 0
    %7364 = vmatprep.subr.mxu0 0.0
    %7365 = vmatpush1.msra.mxu0 %v93
    %7366 = vmatprep.subr.mxu0 0.0
    %7367 = vmatpush1.msra.mxu0 %v94
    %7368 = vmatprep.subr.mxu0 0.0
    %7369 = vmatpush1.msra.mxu0 %v95
    %7370 = vmatprep.subr.mxu0 0.0
    %7371 = vmatpush1.msra.mxu0 %v96
    %7372 = vmatprep.subr.mxu0 0.0
    %7373 = vmatpush1.msra.mxu0 %v97
    %7374 = vmatprep.subr.mxu0 0.0
    %7375 = vmatpush1.msra.mxu0 %v98
    %7376 = vmatprep.subr.mxu0 0.0
    %7377 = vmatpush1.msra.mxu0 %v99
    %7378 = vmatprep.subr.mxu0 0.0
    %7379 = vmatpush1.msra.mxu0 %v100
    %7380 = vmatprep.subr.mxu0 0.0
    %7381 = vmatpush1.msra.mxu0 0.0
    %7382 = vmatprep.subr.mxu0 0.0
    %7383 = vmatpush1.msra.mxu0 0.0
    %7384 = vmatprep.subr.mxu0 0.0
    %7385 = vmatpush1.msra.mxu0 0.0
    %7386 = vmatprep.subr.mxu0 0.0
    %7387 = vmatpush1.msra.mxu0 0.0
    %7388 = vmatprep.subr.mxu0 0.0
    %7389 = vmatpush1.msra.mxu0 0.0
    %7390 = vmatprep.subr.mxu0 0.0
    %7391 = vmatpush1.msra.mxu0 0.0
    %7392 = vmatprep.subr.mxu0 0.0
    %7393 = vmatpush1.msra.mxu0 0.0
    %7394 = vmatprep.subr.mxu0 0.0
    %7395 = vmatpush1.msra.mxu0 0.0
    %7396 = vmatprep.subr.mxu0 0.0
    %7397 = vmatpush1.msra.mxu0 0.0
    %7398 = vmatprep.subr.mxu0 0.0
    %7399 = vmatpush1.msra.mxu0 0.0
    %7400 = vmatprep.subr.mxu0 0.0
    %7401 = vmatpush1.msra.mxu0 0.0
    %7402 = vmatprep.subr.mxu0 0.0
    %7403 = vmatpush1.msra.mxu0 0.0
    %7404 = vmatprep.subr.mxu0 0.0
    %7405 = vmatpush1.msra.mxu0 0.0
    %7406 = vmatprep.subr.mxu0 0.0
    %7407 = vmatpush1.msra.mxu0 0.0
    %7408 = vmatprep.subr.mxu0 0.0
    %7409 = vmatpush1.msra.mxu0 0.0
    %7410 = vmatprep.subr.mxu0 0.0
    %7411 = vmatpush1.msra.mxu0 0.0
    %7412 = vmatprep.subr.mxu0 0.0
    %7413 = vmatpush1.msra.mxu0 0.0
    %7414 = vmatprep.subr.mxu0 0.0
    %7415 = vmatpush1.msra.mxu0 0.0
    %7416 = vmatprep.subr.mxu0 0.0
    %7417 = vmatpush1.msra.mxu0 0.0
    %7418 = vmatprep.subr.mxu0 0.0
    %7419 = vmatpush1.msra.mxu0 0.0
    %7420 = vmatprep.subr.mxu0 0.0
    %7421 = vmatpush1.msra.mxu0 0.0
    %7422 = vmatprep.subr.mxu0 0.0
    %7423 = vmatpush1.msra.mxu0 0.0
    %7424 = vmatprep.subr.mxu0 0.0
    %7425 = vmatpush1.msra.mxu0 0.0
    %7426 = vmatprep.subr.mxu0 0.0
    %7427 = vmatpush1.msra.mxu0 0.0
    %7428 = vmatprep.mubr.f32.mxu0 0.0
    %7429 = vmatmul.mubr.f32.gmra.mrb[0].mxu0 %v7362
    %v7430 = vpop.f32.mrb[0].mxu0
    %v7431 = vadd.f32 0.0, %v7430
    %v7432 = vpop.f32.mrb[0].mxu0
    %7433 = vdwg.mxu0
    %v7434 = vmul.f32 %v7431, %v7431
    %7435 = vmatprep.subr.mxu0 0.0
    %7436 = vmatpush1.msra.mxu0 %v101
    %7437 = vmatprep.subr.mxu0 0.0
    %7438 = vmatpush1.msra.mxu0 %v102
    %7439 = vmatprep.subr.mxu0 0.0
    %7440 = vmatpush1.msra.mxu0 %v103
    %7441 = vmatprep.subr.mxu0 0.0
    %7442 = vmatpush1.msra.mxu0 %v104
    %7443 = vmatprep.subr.mxu0 0.0
    %7444 = vmatpush1.msra.mxu0 %v105
    %7445 = vmatprep.subr.mxu0 0.0
    %7446 = vmatpush1.msra.mxu0 %v106
    %7447 = vmatprep.subr.mxu0 0.0
    %7448 = vmatpush1.msra.mxu0 %v107
    %7449 = vmatprep.subr.mxu0 0.0
    %7450 = vmatpush1.msra.mxu0 %v108
    %7451 = vmatprep.subr.mxu0 0.0
    %7452 = vmatpush1.msra.mxu0 %v109
    %7453 = vmatprep.subr.mxu0 0.0
    %7454 = vmatpush1.msra.mxu0 %v110
    %7455 = vmatprep.subr.mxu0 0.0
    %7456 = vmatpush1.msra.mxu0 %v111
    %7457 = vmatprep.subr.mxu0 0.0
    %7458 = vmatpush1.msra.mxu0 %v112
    %7459 = vmatprep.subr.mxu0 0.0
    %7460 = vmatpush1.msra.mxu0 %v113
    %7461 = vmatprep.subr.mxu0 0.0
    %7462 = vmatpush1.msra.mxu0 %v114
    %7463 = vmatprep.subr.mxu0 0.0
    %7464 = vmatpush1.msra.mxu0 %v115
    %7465 = vmatprep.subr.mxu0 0.0
    %7466 = vmatpush1.msra.mxu0 %v116
    %7467 = vmatprep.subr.mxu0 0.0
    %7468 = vmatpush1.msra.mxu0 0.0
    %7469 = vmatprep.subr.mxu0 0.0
    %7470 = vmatpush1.msra.mxu0 0.0
    %7471 = vmatprep.subr.mxu0 0.0
    %7472 = vmatpush1.msra.mxu0 0.0
    %7473 = vmatprep.subr.mxu0 0.0
    %7474 = vmatpush1.msra.mxu0 0.0
    %7475 = vmatprep.subr.mxu0 0.0
    %7476 = vmatpush1.msra.mxu0 0.0
    %7477 = vmatprep.subr.mxu0 0.0
    %7478 = vmatpush1.msra.mxu0 0.0
    %7479 = vmatprep.subr.mxu0 0.0
    %7480 = vmatpush1.msra.mxu0 0.0
    %7481 = vmatprep.subr.mxu0 0.0
    %7482 = vmatpush1.msra.mxu0 0.0
    %7483 = vmatprep.subr.mxu0 0.0
    %7484 = vmatpush1.msra.mxu0 0.0
    %7485 = vmatprep.subr.mxu0 0.0
    %7486 = vmatpush1.msra.mxu0 0.0
    %7487 = vmatprep.subr.mxu0 0.0
    %7488 = vmatpush1.msra.mxu0 0.0
    %7489 = vmatprep.subr.mxu0 0.0
    %7490 = vmatpush1.msra.mxu0 0.0
    %7491 = vmatprep.subr.mxu0 0.0
    %7492 = vmatpush1.msra.mxu0 0.0
    %7493 = vmatprep.subr.mxu0 0.0
    %7494 = vmatpush1.msra.mxu0 0.0
    %7495 = vmatprep.subr.mxu0 0.0
    %7496 = vmatpush1.msra.mxu0 0.0
    %7497 = vmatprep.subr.mxu0 0.0
    %7498 = vmatpush1.msra.mxu0 0.0
    %7499 = vmatprep.mubr.f32.mxu0 0.0
    %7500 = vmatmul.mubr.f32.gmra.mrb[0].mxu0 %v7434
    %v7501 = vpop.f32.mrb[0].mxu0
    %v7502 = vadd.f32 0.0, %v7501
    %v7503 = vpop.f32.mrb[0].mxu0
    %7504 = vdwg.mxu0
    %v7506 = vsel %vm565, %v7502, 0
    %7508 = vmatprep.subr.mxu0 0.0
    %7509 = vmatpush1.msra.mxu0 %v117
    %7510 = vmatprep.subr.mxu0 0.0
    %7511 = vmatpush1.msra.mxu0 %v118
    %7512 = vmatprep.subr.mxu0 0.0
    %7513 = vmatpush1.msra.mxu0 0.0
    %7514 = vmatprep.subr.mxu0 0.0
    %7515 = vmatpush1.msra.mxu0 0.0
    %7516 = vmatprep.subr.mxu0 0.0
    %7517 = vmatpush1.msra.mxu0 0.0
    %7518 = vmatprep.subr.mxu0 0.0
    %7519 = vmatpush1.msra.mxu0 0.0
    %7520 = vmatprep.subr.mxu0 0.0
    %7521 = vmatpush1.msra.mxu0 0.0
    %7522 = vmatprep.subr.mxu0 0.0
    %7523 = vmatpush1.msra.mxu0 0.0
    %7524 = vmatprep.subr.mxu0 0.0
    %7525 = vmatpush1.msra.mxu0 0.0
    %7526 = vmatprep.subr.mxu0 0.0
    %7527 = vmatpush1.msra.mxu0 0.0
    %7528 = vmatprep.subr.mxu0 0.0
    %7529 = vmatpush1.msra.mxu0 0.0
    %7530 = vmatprep.subr.mxu0 0.0
    %7531 = vmatpush1.msra.mxu0 0.0
    %7532 = vmatprep.subr.mxu0 0.0
    %7533 = vmatpush1.msra.mxu0 0.0
    %7534 = vmatprep.subr.mxu0 0.0
    %7535 = vmatpush1.msra.mxu0 0.0
    %7536 = vmatprep.subr.mxu0 0.0
    %7537 = vmatpush1.msra.mxu0 0.0
    %7538 = vmatprep.subr.mxu0 0.0
    %7539 = vmatpush1.msra.mxu0 0.0
    %7540 = vmatprep.subr.mxu0 0.0
    %7541 = vmatpush1.msra.mxu0 0.0
    %7542 = vmatprep.subr.mxu0 0.0
    %7543 = vmatpush1.msra.mxu0 0.0
    %7544 = vmatprep.subr.mxu0 0.0
    %7545 = vmatpush1.msra.mxu0 0.0
    %7546 = vmatprep.subr.mxu0 0.0
    %7547 = vmatpush1.msra.mxu0 0.0
    %7548 = vmatprep.subr.mxu0 0.0
    %7549 = vmatpush1.msra.mxu0 0.0
    %7550 = vmatprep.subr.mxu0 0.0
    %7551 = vmatpush1.msra.mxu0 0.0
    %7552 = vmatprep.subr.mxu0 0.0
    %7553 = vmatpush1.msra.mxu0 0.0
    %7554 = vmatprep.subr.mxu0 0.0
    %7555 = vmatpush1.msra.mxu0 0.0
    %7556 = vmatprep.subr.mxu0 0.0
    %7557 = vmatpush1.msra.mxu0 0.0
    %7558 = vmatprep.subr.mxu0 0.0
    %7559 = vmatpush1.msra.mxu0 0.0
    %7560 = vmatprep.subr.mxu0 0.0
    %7561 = vmatpush1.msra.mxu0 0.0
    %7562 = vmatprep.subr.mxu0 0.0
    %7563 = vmatpush1.msra.mxu0 0.0
    %7564 = vmatprep.subr.mxu0 0.0
    %7565 = vmatpush1.msra.mxu0 0.0
    %7566 = vmatprep.subr.mxu0 0.0
    %7567 = vmatpush1.msra.mxu0 0.0
    %7568 = vmatprep.subr.mxu0 0.0
    %7569 = vmatpush1.msra.mxu0 0.0
    %7570 = vmatprep.subr.mxu0 0.0
    %7571 = vmatpush1.msra.mxu0 0.0
    %7572 = vmatprep.mubr.f32.mxu0 0.0
    %7573 = vmatmul.mubr.f32.gmra.mrb[0].mxu0 %v7506
    %v7574 = vpop.f32.mrb[0].mxu0
    %v7575 = vadd.f32 %v563, %v7574
    %v7576 = vpop.f32.mrb[0].mxu0
    %7577 = vdwg.mxu0
    %v7578 = vxor.u32 %v7575, 2147483648
    %v7579 = vmul.f32 %v7578, 1.442695
    %v7580 = vpow.pop %v7579
    %v7581 = vadd.f32 %v7580, 1.0
    %v7582 = vrcp.pop %v7581
    %v7583 = vmul.f32 1.0, %v7582
    %v7584 = vtanh.pop %v7575
    %v7585 = vmul.f32 %v7583, %v6607
    %7587 = vrot.lane.b32.xlu0 %v7584, 116
    %v7588 = vpop.permute.xlu0 %7587
    %v7590 = vmul.f32 %v7583, %v7588
    %7592 = vrot.lane.b32.xlu0 %v7590, 122
    %v7593 = vpop.permute.xlu0 %7592
    %v7595 = vadd.f32 %v7585, %v7593
    %v7596 = vtanh.pop %v7595
    %7598 = vrot.lane.b32.xlu0 %v7596, 12
    %v7599 = vpop.permute.xlu0 %7598
    %v7601 = vmul.f32 %v7583, %v7599
    %v7602 = vld [vmem:[%s16] sm:$0x3f]
    %v7603 = vld [vmem:[%s17] sm:$0x1]
    %v7605 = vlaneseq
    %v7606 = vshrl.u32 %v7605, 7
    %v7607 = vsub.s32 0, %v7606
    %v7608 = vrot.slane %v7603, %v7607
    %7611 = vrot.lane.b32.xlu0 %v7601, 116
    %v7612 = vpop.permute.xlu0 %7611
    %v7613 = vsel %vm672, %v7612, 0
    %v7616 = vsel %vm675, %v7602, 0
    %7618 = vmatprep.subr.mxu0 0.0
    %7619 = vmatpush1.msra.mxu0 %v7616
    %7620 = vmatprep.subr.mxu0 0.0
    %7621 = vmatpush1.msra.mxu0 0.0
    %7622 = vmatprep.subr.mxu0 0.0
    %7623 = vmatpush1.msra.mxu0 0.0
    %7624 = vmatprep.subr.mxu0 0.0
    %7625 = vmatpush1.msra.mxu0 0.0
    %7626 = vmatprep.subr.mxu0 0.0
    %7627 = vmatpush1.msra.mxu0 0.0
    %7628 = vmatprep.subr.mxu0 0.0
    %7629 = vmatpush1.msra.mxu0 0.0
    %7630 = vmatprep.subr.mxu0 0.0
    %7631 = vmatpush1.msra.mxu0 0.0
    %7632 = vmatprep.subr.mxu0 0.0
    %7633 = vmatpush1.msra.mxu0 0.0
    %7634 = vmatprep.subr.mxu0 0.0
    %7635 = vmatpush1.msra.mxu0 0.0
    %7636 = vmatprep.subr.mxu0 0.0
    %7637 = vmatpush1.msra.mxu0 0.0
    %7638 = vmatprep.subr.mxu0 0.0
    %7639 = vmatpush1.msra.mxu0 0.0
    %7640 = vmatprep.subr.mxu0 0.0
    %7641 = vmatpush1.msra.mxu0 0.0
    %7642 = vmatprep.subr.mxu0 0.0
    %7643 = vmatpush1.msra.mxu0 0.0
    %7644 = vmatprep.subr.mxu0 0.0
    %7645 = vmatpush1.msra.mxu0 0.0
    %7646 = vmatprep.subr.mxu0 0.0
    %7647 = vmatpush1.msra.mxu0 0.0
    %7648 = vmatprep.subr.mxu0 0.0
    %7649 = vmatpush1.msra.mxu0 0.0
    %7650 = vmatprep.subr.mxu0 0.0
    %7651 = vmatpush1.msra.mxu0 0.0
    %7652 = vmatprep.subr.mxu0 0.0
    %7653 = vmatpush1.msra.mxu0 0.0
    %7654 = vmatprep.subr.mxu0 0.0
    %7655 = vmatpush1.msra.mxu0 0.0
    %7656 = vmatprep.subr.mxu0 0.0
    %7657 = vmatpush1.msra.mxu0 0.0
    %7658 = vmatprep.subr.mxu0 0.0
    %7659 = vmatpush1.msra.mxu0 0.0
    %7660 = vmatprep.subr.mxu0 0.0
    %7661 = vmatpush1.msra.mxu0 0.0
    %7662 = vmatprep.subr.mxu0 0.0
    %7663 = vmatpush1.msra.mxu0 0.0
    %7664 = vmatprep.subr.mxu0 0.0
    %7665 = vmatpush1.msra.mxu0 0.0
    %7666 = vmatprep.subr.mxu0 0.0
    %7667 = vmatpush1.msra.mxu0 0.0
    %7668 = vmatprep.subr.mxu0 0.0
    %7669 = vmatpush1.msra.mxu0 0.0
    %7670 = vmatprep.subr.mxu0 0.0
    %7671 = vmatpush1.msra.mxu0 0.0
    %7672 = vmatprep.subr.mxu0 0.0
    %7673 = vmatpush1.msra.mxu0 0.0
    %7674 = vmatprep.subr.mxu0 0.0
    %7675 = vmatpush1.msra.mxu0 0.0
    %7676 = vmatprep.subr.mxu0 0.0
    %7677 = vmatpush1.msra.mxu0 0.0
    %7678 = vmatprep.subr.mxu0 0.0
    %7679 = vmatpush1.msra.mxu0 0.0
    %7680 = vmatprep.subr.mxu0 0.0
    %7681 = vmatpush1.msra.mxu0 0.0
    %7682 = vmatprep.mubr.f32.mxu0 0.0
    %7683 = vmatmul.mubr.f32.gmra.mrb[0].mxu0 %v7613
    %v7684 = vpop.f32.mrb[0].mxu0
    %v7685 = vadd.f32 %v7608, %v7684
    %v7686 = vpop.f32.mrb[0].mxu0
    %7687 = vdwg.mxu0
    %v7688 = vand.u32 2147483647, %v7685
    %vm7689 = vcmp.le.f32.partialorder %v7688, 0.7853982
    %vm7690 = vcmp.lt.s32.totalorder %v7685, 0
    %v7691 = vand.u32 %v7685, 2139095040
    %v7692 = vshrl.u32 %v7691, 23
    %v7693 = vsub.s32 %v7692, 127
    %v7694 = vand.u32 2147483647, %v7685
    %v7695 = vand.u32 %v7694, 8388607
    %v7696 = vor.u32 %v7695, 8388608
    %v7697 = vsub.s32 0, %v7696
    %v7698 = vadd.s32 %v7693, 1
    %vm7699 = vcmp.gt.s32.totalorder %v7698, 0
    %v7700 = vsel %vm7699, %v7698, 0
    %v7701 = vshrl.u32 %v7700, 5
    %v7702 = vand.u32 %v7700, 31
    %v7703 = vsub.s32 32, %v7702
    %v7704 = vshrl.u32 683565275, %v7703
    %v7705 = vshll.u32 683565275, %v7702
    %v7706 = vshrl.u32 2475754826, %v7703
    %v7707 = vor.u32 %v7705, %v7706
    %v7708 = vshll.u32 2475754826, %v7702
    %v7709 = vshrl.u32 2131351028, %v7703
    %v7710 = vor.u32 %v7708, %v7709
    %v7711 = vshll.u32 2131351028, %v7702
    %v7712 = vshrl.u32 2102212464, %v7703
    %v7713 = vor.u32 %v7711, %v7712
    %v7714 = vshll.u32 2102212464, %v7702
    %v7715 = vshrl.u32 920167782, %v7703
    %v7716 = vor.u32 %v7714, %v7715
    %v7717 = vshll.u32 920167782, %v7702
    %v7718 = vshrl.u32 1326507024, %v7703
    %v7719 = vor.u32 %v7717, %v7718
    %vm7720 = vcmp.lt.s32.totalorder %v7701, 1
    %vm7721 = vcmp.lt.s32.totalorder %v7701, 2
    %vm7722 = vcmp.lt.s32.totalorder %v7701, 3
    %vm7723 = vcmp.lt.s32.totalorder %v7701, 4
    %v7724 = vsel %vm7720, %v7704, %v7707
    %v7725 = vsel %vm7723, %v7713, 2102212464
    %v7726 = vsel %vm7722, %v7710, %v7725
    %v7727 = vsel %vm7721, %v7724, %v7726
    %v7728 = vsel %vm7720, %v7707, %v7710
    %v7729 = vsel %vm7723, %v7716, 920167782
    %v7730 = vsel %vm7722, %v7713, %v7729
    %v7731 = vsel %vm7721, %v7728, %v7730
    %v7732 = vsel %vm7720, %v7710, %v7713
    %v7733 = vsel %vm7723, %v7719, 1326507024
    %v7734 = vsel %vm7722, %v7716, %v7733
    %v7735 = vsel %vm7721, %v7732, %v7734
    %v7736 = vshll.u32 %v7696, 8
    %v7737 = vmul.u32.u64.compose %v7736, %v7735
    %v7738 = vextract.low.u32 %v7737
    %v7739 = vextract.high.u32 %v7737
    %v7740 = vmul.u32.u64.compose %v7736, %v7731
    %v7741 = vextract.low.u32 %v7740
    %v7742 = vextract.high.u32 %v7740
    %v7743 = vmul.u32 %v7736, %v7727
    %v7744 = vadd.s32 %v7739, %v7741
    %vm7745 = vc.u32 %v7739, %v7741
    %v7746 = vadd.s32 %v7742, 1
    %v7747 = vsel %vm7745, %v7746, %v7742
    %v7748 = vadd.s32 %v7743, %v7747
    %v7749 = vadd.s32 %v7748, 536870912
    %v7750 = vshrl.u32 %v7749, 30
    %v7751 = vshll.u32 %v7750, 30
    %v7752 = vsub.s32 %v7748, %v7751
    %vm7753 = vcmp.lt.s32.totalorder %v7752, 0
    %v7754 = vsub.s32 0, %v7752
    %v7755 = vsel %vm7753, %v7754, %v7752
    %v7756 = vclz %v7755
    %v7757 = vsub.s32 %v7756, 2
    %vm7758 = vcmp.gt.s32.totalorder 0, %v7757
    %v7759 = vsel %vm7758, 0, %v7757
    %v7760 = vsub.s32 32, %v7759
    %v7761 = vshll.u32 %v7752, %v7759
    %v7762 = vshrl.u32 %v7744, %v7760
    %v7763 = vor.u32 %v7761, %v7762
    %v7764 = vsub.s32 4294967266, %v7759
    %v7765 = vadd.s32 %v7764, 127
    %v7766 = vshll.u32 %v7765, 23
    %v7767 = vor.u32 4788187, %v7766
    %v7768 = vand.u32 2147483647, %v7767
    %v7770 = vcvt.s32.f32 %v7763
    %v7771 = vmul.f32 %v7770, %v7768
    %v7772 = vxor.u32 %v7771, 2147483648
    %v7773 = vsel %vm7690, %v7772, %v7771
    %v7774 = vsub.s32 4, %v7750
    %v7775 = vsel %vm7690, %v7774, %v7750
    %v7776 = vsel %vm7689, %v7685, %v7773
    %v7777 = vsel %vm7689, 0, %v7775
    %v7778 = vcosq.f32.pop %v7776
    %v7779 = vsinq.f32.pop %v7776
    %vm7780 = vweird.f32 %v7685
    %v7781 = vand.u32 %v7777, 3
    %vm7782 = vcmp.lt.s32.totalorder %v7781, 2
    %vm7783 = vcmp.eq.s32.totalorder %v7781, 0
    %v7784 = vxor.u32 %v7779, 2147483648
    %v7785 = vsel %vm7783, %v7778, %v7784
    %vm7786 = vcmp.eq.s32.totalorder %v7781, 2
    %v7787 = vxor.u32 %v7778, 2147483648
    %v7788 = vsel %vm7786, %v7787, %v7779
    %v7789 = vsel %vm7782, %v7785, %v7788
    %v7790 = vsel %vm7780, nan, %v7789
    %v7791 = vld [vmem:[%s18] sm:$0xff]
    %v7792 = vld [vmem:[%s18 + $0x8] sm:$0xff]
    %v7794 = vsel %vm852, %v7790, 0
    %7796 = vmatprep.subr.mxu0 0.0
    %7797 = vmatpush1.msra.mxu0 %v122
    %7798 = vmatprep.subr.mxu0 0.0
    %7799 = vmatpush1.msra.mxu0 0.0
    %7800 = vmatprep.subr.mxu0 0.0
    %7801 = vmatpush1.msra.mxu0 0.0
    %7802 = vmatprep.subr.mxu0 0.0
    %7803 = vmatpush1.msra.mxu0 0.0
    %7804 = vmatprep.subr.mxu0 0.0
    %7805 = vmatpush1.msra.mxu0 0.0
    %7806 = vmatprep.subr.mxu0 0.0
    %7807 = vmatpush1.msra.mxu0 0.0
    %7808 = vmatprep.subr.mxu0 0.0
    %7809 = vmatpush1.msra.mxu0 0.0
    %7810 = vmatprep.subr.mxu0 0.0
    %7811 = vmatpush1.msra.mxu0 0.0
    %7812 = vmatprep.subr.mxu0 0.0
    %7813 = vmatpush1.msra.mxu0 0.0
    %7814 = vmatprep.subr.mxu0 0.0
    %7815 = vmatpush1.msra.mxu0 0.0
    %7816 = vmatprep.subr.mxu0 0.0
    %7817 = vmatpush1.msra.mxu0 0.0
    %7818 = vmatprep.subr.mxu0 0.0
    %7819 = vmatpush1.msra.mxu0 0.0
    %7820 = vmatprep.subr.mxu0 0.0
    %7821 = vmatpush1.msra.mxu0 0.0
    %7822 = vmatprep.subr.mxu0 0.0
    %7823 = vmatpush1.msra.mxu0 0.0
    %7824 = vmatprep.subr.mxu0 0.0
    %7825 = vmatpush1.msra.mxu0 0.0
    %7826 = vmatprep.subr.mxu0 0.0
    %7827 = vmatpush1.msra.mxu0 0.0
    %7828 = vmatprep.subr.mxu0 0.0
    %7829 = vmatpush1.msra.mxu0 0.0
    %7830 = vmatprep.subr.mxu0 0.0
    %7831 = vmatpush1.msra.mxu0 0.0
    %7832 = vmatprep.subr.mxu0 0.0
    %7833 = vmatpush1.msra.mxu0 0.0
    %7834 = vmatprep.subr.mxu0 0.0
    %7835 = vmatpush1.msra.mxu0 0.0
    %7836 = vmatprep.subr.mxu0 0.0
    %7837 = vmatpush1.msra.mxu0 0.0
    %7838 = vmatprep.subr.mxu0 0.0
    %7839 = vmatpush1.msra.mxu0 0.0
    %7840 = vmatprep.subr.mxu0 0.0
    %7841 = vmatpush1.msra.mxu0 0.0
    %7842 = vmatprep.subr.mxu0 0.0
    %7843 = vmatpush1.msra.mxu0 0.0
    %7844 = vmatprep.subr.mxu0 0.0
    %7845 = vmatpush1.msra.mxu0 0.0
    %7846 = vmatprep.subr.mxu0 0.0
    %7847 = vmatpush1.msra.mxu0 0.0
    %7848 = vmatprep.subr.mxu0 0.0
    %7849 = vmatpush1.msra.mxu0 0.0
    %7850 = vmatprep.subr.mxu0 0.0
    %7851 = vmatpush1.msra.mxu0 0.0
    %7852 = vmatprep.subr.mxu0 0.0
    %7853 = vmatpush1.msra.mxu0 0.0
    %7854 = vmatprep.subr.mxu0 0.0
    %7855 = vmatpush1.msra.mxu0 0.0
    %7856 = vmatprep.subr.mxu0 0.0
    %7857 = vmatpush1.msra.mxu0 0.0
    %7858 = vmatprep.subr.mxu0 0.0
    %7859 = vmatpush1.msra.mxu0 0.0
    %7860 = vmatprep.mubr.f32.mxu0 0.0
    %7861 = vmatmul.mubr.f32.gmra.mrb[0].mxu0 %v7794
    %v7862 = vpop.f32.mrb[0].mxu0
    %v7863 = vadd.f32 0.0, %v7862
    %v7864 = vpop.f32.mrb[0].mxu0
    %7865 = vdwg.mxu0
    %7867 = vrot.lane.b32.xlu0 %v7863, 96
    %v7868 = vpop.permute.xlu0 %7867
    %v7870 = vmul.f32 %v7863, %v7868
    %7872 = vrot.lane.b32.xlu0 %v7870, 112
    %v7873 = vpop.permute.xlu0 %7872
    %v7875 = vmul.f32 %v7870, %v7873
    %v7877 = vsel %vm565, %v7875, 0
    %7879 = vmatprep.subr.mxu0 0.0
    %7880 = vmatpush1.msra.mxu0 %v7791
    %7881 = vmatprep.subr.mxu0 0.0
    %7882 = vmatpush1.msra.mxu0 %v7792
    %7883 = vmatprep.subr.mxu0 0.0
    %7884 = vmatpush1.msra.mxu0 0.0
    %7885 = vmatprep.subr.mxu0 0.0
    %7886 = vmatpush1.msra.mxu0 0.0
    %7887 = vmatprep.subr.mxu0 0.0
    %7888 = vmatpush1.msra.mxu0 0.0
    %7889 = vmatprep.subr.mxu0 0.0
    %7890 = vmatpush1.msra.mxu0 0.0
    %7891 = vmatprep.subr.mxu0 0.0
    %7892 = vmatpush1.msra.mxu0 0.0
    %7893 = vmatprep.subr.mxu0 0.0
    %7894 = vmatpush1.msra.mxu0 0.0
    %7895 = vmatprep.subr.mxu0 0.0
    %7896 = vmatpush1.msra.mxu0 0.0
    %7897 = vmatprep.subr.mxu0 0.0
    %7898 = vmatpush1.msra.mxu0 0.0
    %7899 = vmatprep.subr.mxu0 0.0
    %7900 = vmatpush1.msra.mxu0 0.0
    %7901 = vmatprep.subr.mxu0 0.0
    %7902 = vmatpush1.msra.mxu0 0.0
    %7903 = vmatprep.subr.mxu0 0.0
    %7904 = vmatpush1.msra.mxu0 0.0
    %7905 = vmatprep.subr.mxu0 0.0
    %7906 = vmatpush1.msra.mxu0 0.0
    %7907 = vmatprep.subr.mxu0 0.0
    %7908 = vmatpush1.msra.mxu0 0.0
    %7909 = vmatprep.subr.mxu0 0.0
    %7910 = vmatpush1.msra.mxu0 0.0
    %7911 = vmatprep.subr.mxu0 0.0
    %7912 = vmatpush1.msra.mxu0 0.0
    %7913 = vmatprep.subr.mxu0 0.0
    %7914 = vmatpush1.msra.mxu0 0.0
    %7915 = vmatprep.subr.mxu0 0.0
    %7916 = vmatpush1.msra.mxu0 0.0
    %7917 = vmatprep.subr.mxu0 0.0
    %7918 = vmatpush1.msra.mxu0 0.0
    %7919 = vmatprep.subr.mxu0 0.0
    %7920 = vmatpush1.msra.mxu0 0.0
    %7921 = vmatprep.subr.mxu0 0.0
    %7922 = vmatpush1.msra.mxu0 0.0
    %7923 = vmatprep.subr.mxu0 0.0
    %7924 = vmatpush1.msra.mxu0 0.0
    %7925 = vmatprep.subr.mxu0 0.0
    %7926 = vmatpush1.msra.mxu0 0.0
    %7927 = vmatprep.subr.mxu0 0.0
    %7928 = vmatpush1.msra.mxu0 0.0
    %7929 = vmatprep.subr.mxu0 0.0
    %7930 = vmatpush1.msra.mxu0 0.0
    %7931 = vmatprep.subr.mxu0 0.0
    %7932 = vmatpush1.msra.mxu0 0.0
    %7933 = vmatprep.subr.mxu0 0.0
    %7934 = vmatpush1.msra.mxu0 0.0
    %7935 = vmatprep.subr.mxu0 0.0
    %7936 = vmatpush1.msra.mxu0 0.0
    %7937 = vmatprep.subr.mxu0 0.0
    %7938 = vmatpush1.msra.mxu0 0.0
    %7939 = vmatprep.subr.mxu0 0.0
    %7940 = vmatpush1.msra.mxu0 0.0
    %7941 = vmatprep.subr.mxu0 0.0
    %7942 = vmatpush1.msra.mxu0 0.0
    %7943 = vmatprep.mubr.f32.mxu0 0.0
    %7944 = vmatmul.mubr.f32.gmra.mrb[0].mxu0 %v7877
    %v7945 = vpop.f32.mrb[0].mxu0
    %v7946 = vadd.f32 0.0, %v7945
    %v7947 = vpop.f32.mrb[0].mxu0
    %7948 = vdwg.mxu0
    %v7949 = vmul.f32 %v7946, %v7946
    %v7951 = vsel %vm333, %v7949, 0
    %7953 = vmatprep.subr.mxu0 0.0
    %7954 = vmatpush1.msra.mxu0 %v125
    %7955 = vmatprep.subr.mxu0 0.0
    %7956 = vmatpush1.msra.mxu0 %v126
    %7957 = vmatprep.subr.mxu0 0.0
    %7958 = vmatpush1.msra.mxu0 %v127
    %7959 = vmatprep.subr.mxu0 0.0
    %7960 = vmatpush1.msra.mxu0 %v128
    %7961 = vmatprep.subr.mxu0 0.0
    %7962 = vmatpush1.msra.mxu0 0.0
    %7963 = vmatprep.subr.mxu0 0.0
    %7964 = vmatpush1.msra.mxu0 0.0
    %7965 = vmatprep.subr.mxu0 0.0
    %7966 = vmatpush1.msra.mxu0 0.0
    %7967 = vmatprep.subr.mxu0 0.0
    %7968 = vmatpush1.msra.mxu0 0.0
    %7969 = vmatprep.subr.mxu0 0.0
    %7970 = vmatpush1.msra.mxu0 0.0
    %7971 = vmatprep.subr.mxu0 0.0
    %7972 = vmatpush1.msra.mxu0 0.0
    %7973 = vmatprep.subr.mxu0 0.0
    %7974 = vmatpush1.msra.mxu0 0.0
    %7975 = vmatprep.subr.mxu0 0.0
    %7976 = vmatpush1.msra.mxu0 0.0
    %7977 = vmatprep.subr.mxu0 0.0
    %7978 = vmatpush1.msra.mxu0 0.0
    %7979 = vmatprep.subr.mxu0 0.0
    %7980 = vmatpush1.msra.mxu0 0.0
    %7981 = vmatprep.subr.mxu0 0.0
    %7982 = vmatpush1.msra.mxu0 0.0
    %7983 = vmatprep.subr.mxu0 0.0
    %7984 = vmatpush1.msra.mxu0 0.0
    %7985 = vmatprep.subr.mxu0 0.0
    %7986 = vmatpush1.msra.mxu0 0.0
    %7987 = vmatprep.subr.mxu0 0.0
    %7988 = vmatpush1.msra.mxu0 0.0
    %7989 = vmatprep.subr.mxu0 0.0
    %7990 = vmatpush1.msra.mxu0 0.0
    %7991 = vmatprep.subr.mxu0 0.0
    %7992 = vmatpush1.msra.mxu0 0.0
    %7993 = vmatprep.subr.mxu0 0.0
    %7994 = vmatpush1.msra.mxu0 0.0
    %7995 = vmatprep.subr.mxu0 0.0
    %7996 = vmatpush1.msra.mxu0 0.0
    %7997 = vmatprep.subr.mxu0 0.0
    %7998 = vmatpush1.msra.mxu0 0.0
    %7999 = vmatprep.subr.mxu0 0.0
    %8000 = vmatpush1.msra.mxu0 0.0
    %8001 = vmatprep.subr.mxu0 0.0
    %8002 = vmatpush1.msra.mxu0 0.0
    %8003 = vmatprep.subr.mxu0 0.0
    %8004 = vmatpush1.msra.mxu0 0.0
    %8005 = vmatprep.subr.mxu0 0.0
    %8006 = vmatpush1.msra.mxu0 0.0
    %8007 = vmatprep.subr.mxu0 0.0
    %8008 = vmatpush1.msra.mxu0 0.0
    %8009 = vmatprep.subr.mxu0 0.0
    %8010 = vmatpush1.msra.mxu0 0.0
    %8011 = vmatprep.subr.mxu0 0.0
    %8012 = vmatpush1.msra.mxu0 0.0
    %8013 = vmatprep.subr.mxu0 0.0
    %8014 = vmatpush1.msra.mxu0 0.0
    %8015 = vmatprep.subr.mxu0 0.0
    %8016 = vmatpush1.msra.mxu0 0.0
    %8017 = vmatprep.mubr.f32.mxu0 0.0
    %8018 = vmatmul.mubr.f32.gmra.mrb[0].mxu0 %v7951
    %v8019 = vpop.f32.mrb[0].mxu0
    %v8020 = vadd.f32 0.0, %v8019
    %v8021 = vpop.f32.mrb[0].mxu0
    %8022 = vdwg.mxu0
    %v8023 = vld [vmem:[%s19] sm:$0xf]
    %v8024 = vld [vmem:[#allocation2] sm:$0x1]
    %v8026 = vlaneseq
    %v8027 = vshrl.u32 %v8026, 7
    %v8028 = vsub.s32 0, %v8027
    %v8029 = vrot.slane %v8024, %v8028
    %v8032 = vsel %vm1089, %v8020, 0
    %v8035 = vsel %vm1093, %v8023, 0
    %8037 = vmatprep.subr.mxu0 0.0
    %8038 = vmatpush1.msra.mxu0 %v8035
    %8039 = vmatprep.subr.mxu0 0.0
    %8040 = vmatpush1.msra.mxu0 0.0
    %8041 = vmatprep.subr.mxu0 0.0
    %8042 = vmatpush1.msra.mxu0 0.0
    %8043 = vmatprep.subr.mxu0 0.0
    %8044 = vmatpush1.msra.mxu0 0.0
    %8045 = vmatprep.subr.mxu0 0.0
    %8046 = vmatpush1.msra.mxu0 0.0
    %8047 = vmatprep.subr.mxu0 0.0
    %8048 = vmatpush1.msra.mxu0 0.0
    %8049 = vmatprep.subr.mxu0 0.0
    %8050 = vmatpush1.msra.mxu0 0.0
    %8051 = vmatprep.subr.mxu0 0.0
    %8052 = vmatpush1.msra.mxu0 0.0
    %8053 = vmatprep.subr.mxu0 0.0
    %8054 = vmatpush1.msra.mxu0 0.0
    %8055 = vmatprep.subr.mxu0 0.0
    %8056 = vmatpush1.msra.mxu0 0.0
    %8057 = vmatprep.subr.mxu0 0.0
    %8058 = vmatpush1.msra.mxu0 0.0
    %8059 = vmatprep.subr.mxu0 0.0
    %8060 = vmatpush1.msra.mxu0 0.0
    %8061 = vmatprep.subr.mxu0 0.0
    %8062 = vmatpush1.msra.mxu0 0.0
    %8063 = vmatprep.subr.mxu0 0.0
    %8064 = vmatpush1.msra.mxu0 0.0
    %8065 = vmatprep.subr.mxu0 0.0
    %8066 = vmatpush1.msra.mxu0 0.0
    %8067 = vmatprep.subr.mxu0 0.0
    %8068 = vmatpush1.msra.mxu0 0.0
    %8069 = vmatprep.subr.mxu0 0.0
    %8070 = vmatpush1.msra.mxu0 0.0
    %8071 = vmatprep.subr.mxu0 0.0
    %8072 = vmatpush1.msra.mxu0 0.0
    %8073 = vmatprep.subr.mxu0 0.0
    %8074 = vmatpush1.msra.mxu0 0.0
    %8075 = vmatprep.subr.mxu0 0.0
    %8076 = vmatpush1.msra.mxu0 0.0
    %8077 = vmatprep.subr.mxu0 0.0
    %8078 = vmatpush1.msra.mxu0 0.0
    %8079 = vmatprep.subr.mxu0 0.0
    %8080 = vmatpush1.msra.mxu0 0.0
    %8081 = vmatprep.subr.mxu0 0.0
    %8082 = vmatpush1.msra.mxu0 0.0
    %8083 = vmatprep.subr.mxu0 0.0
    %8084 = vmatpush1.msra.mxu0 0.0
    %8085 = vmatprep.subr.mxu0 0.0
    %8086 = vmatpush1.msra.mxu0 0.0
    %8087 = vmatprep.subr.mxu0 0.0
    %8088 = vmatpush1.msra.mxu0 0.0
    %8089 = vmatprep.subr.mxu0 0.0
    %8090 = vmatpush1.msra.mxu0 0.0
    %8091 = vmatprep.subr.mxu0 0.0
    %8092 = vmatpush1.msra.mxu0 0.0
    %8093 = vmatprep.subr.mxu0 0.0
    %8094 = vmatpush1.msra.mxu0 0.0
    %8095 = vmatprep.subr.mxu0 0.0
    %8096 = vmatpush1.msra.mxu0 0.0
    %8097 = vmatprep.subr.mxu0 0.0
    %8098 = vmatpush1.msra.mxu0 0.0
    %8099 = vmatprep.subr.mxu0 0.0
    %8100 = vmatpush1.msra.mxu0 0.0
    %8101 = vmatprep.mubr.f32.mxu0 0.0
    %8102 = vmatmul.mubr.f32.gmra.mrb[0].mxu0 %v8032
    %v8103 = vpop.f32.mrb[0].mxu0
    %v8104 = vadd.f32 %v8029, %v8103
    %v8105 = vpop.f32.mrb[0].mxu0
    %8106 = vdwg.mxu0
    %vm8107 = vcmask 1024
    %8108 = vst.msk [vmem:[%s21] sm:$0x3] %vm8107, %v8104
    // Predicated region
    $region90: #{tpu_custom_call.1} parent=1 // pred_check
      _
    $region91: #{tpu_custom_call.1} parent=1 // pred_check_branch
      %8110 = sbr.rel (0) target = $region93
    $region92: #{tpu_custom_call.1} parent=1 // pred_region
      _
    $region93: #{tpu_custom_call.1} parent=1 // pred_fallthru
      _
    // Predicated region
    $region94: #{tpu_custom_call.1} parent=1 // pred_check
      _
    $region95: #{tpu_custom_call.1} parent=1 // pred_check_branch
      %8112 = sbr.rel (0) target = $region97
    $region96: #{tpu_custom_call.1} parent=1 // pred_region
      _
    $region97: #{tpu_custom_call.1} parent=1 // pred_fallthru
      _
    %8113 = vsyncpa [#allocation4], 1

</llo_original>
